<compile_context>
chip_gen: v7x
topology: tpu7x:2x2x1
jax: 0.10.0
libtpu: 0.0.40
codegen_flags: <defaults>
</compile_context>

<pallas_src>
import functools

import jax
import jax.numpy as jnp
from jax.experimental import pallas as pl
from jax.experimental.pallas import tpu as pltpu


def _relu_dilated_conv_kernel(x_ref, w_ref, o_ref, *, R, Wp, KH, dilation):
    """One tile of R output rows, flattened with the padded row stride Wp.

    x_ref: (Hp*Wp, KW*Cin)    whole ReLU'd, padded, kw-folded input (bf16), VMEM resident
    w_ref: (KH, KW*Cin, Cout) whole fused weight (bf16), VMEM resident
    o_ref: (R*Wp, Cout)       one tile of flattened output rows (f32)
    """
    M = R * Wp                                  # matmul rows per step (incl. wrap cols)
    base = pl.multiple_of(pl.program_id(0) * M, Wp)
    for kh in range(KH):                        # static, unrolled: 3 MXU dots per step
        start = pl.multiple_of(base + kh * dilation * Wp, Wp)
        contrib = jnp.dot(x_ref[pl.ds(start, M), :], w_ref[kh],
                          preferred_element_type=jnp.float32)
        if kh == 0:
            o_ref[...] = contrib.astype(o_ref.dtype)
        else:
            o_ref[...] += contrib.astype(o_ref.dtype)


def relu_conv2d_dilated(x_nchw, w_oihw, *, padding=2, dilation=2):
    """ReLU followed by stride-1 dilated 3x3 conv (bias=False). NCHW in / NCHW out."""
    N, Cin, H, W = x_nchw.shape
    Cout, Cin_w, KH, KW = w_oihw.shape
    assert N == 1 and Cin == Cin_w              # module is batch-1
    H_out = H + 2 * padding - dilation * (KH - 1)
    W_out = W + 2 * padding - dilation * (KW - 1)
    Hp, Wp = H + 2 * padding, W + 2 * padding
    halo = (KW - 1) * dilation

    # 2 grid steps when possible: one per v7x TensorCore, minimal fixed overhead on
    # single-TC v5e/v6e; otherwise a single step.
    R = H_out // 2 if H_out % 2 == 0 else H_out
    n_steps = H_out // R
    M = R * Wp

    # Glue (pure layout, fused by XLA): NCHW -> HWC (channels on lanes), ReLU,
    # zero-pad, bf16 cast, flatten spatial, and pre-fold the KW taps into the
    # contraction axis so every kernel load is a contiguous, sublane-aligned slice.
    # TODO(synk): keep activations channels-last (and bf16) across adjacent layers to
    # drop the NCHW<->HWC transposes and casts entirely (they are pure layout glue).
    x_hwc = jnp.maximum(jnp.transpose(x_nchw[0], (1, 2, 0)), 0).astype(jnp.bfloat16)
    x_pad = jnp.pad(x_hwc, ((padding, padding), (padding, padding), (0, 0)))
    x_flat = jnp.pad(x_pad.reshape(Hp * Wp, Cin), ((0, halo), (0, 0)))
    x_kw = jnp.concatenate(
        [x_flat[kw * dilation: kw * dilation + Hp * Wp, :] for kw in range(KW)],
        axis=-1)                                              # (Hp*Wp, KW*Cin)

    # OIHW -> (KH, KW*Cin, Cout), bf16 (kw taps folded into the contraction axis)
    w_fused = (jnp.transpose(w_oihw, (2, 3, 1, 0))
               .reshape(KH, KW * Cin, Cout).astype(jnp.bfloat16))

    kernel = functools.partial(_relu_dilated_conv_kernel,
                               R=R, Wp=Wp, KH=KH, dilation=dilation)

    flops = 2 * (H_out * Wp) * (KH * KW * Cin) * Cout         # ~1.06e9
    bytes_accessed = (x_kw.size * 2 + w_fused.size * 2 + H_out * Wp * Cout * 4)

    out_flat = pl.pallas_call(
        kernel,
        out_shape=jax.ShapeDtypeStruct((H_out * Wp, Cout), x_nchw.dtype),
        grid=(n_steps,),
        in_specs=[
            # whole arrays, constant block index -> DMA'd into VMEM once
            pl.BlockSpec((Hp * Wp, KW * Cin), lambda i: (0, 0)),
            pl.BlockSpec((KH, KW * Cin, Cout), lambda i: (0, 0, 0)),
        ],
        out_specs=pl.BlockSpec((M, Cout), lambda i: (i, 0)),
        compiler_params=pltpu.CompilerParams(
            dimension_semantics=("parallel",)),
        cost_estimate=pl.CostEstimate(flops=flops, transcendentals=0,
                                      bytes_accessed=bytes_accessed),
    )(x_kw, w_fused)

    # glue: drop the Wp - W_out wrap columns, back to NCHW
    out_hwc = out_flat.reshape(H_out, Wp, Cout)[:, :W_out, :]
    return jnp.transpose(out_hwc, (2, 0, 1))[None]


if __name__ == "__main__":
    key = jax.random.PRNGKey(0)
    kx, kw_key = jax.random.split(key)

    # shapes implied by the module: x174 = randn([1, 256, 28, 28])
    N, C, H, W = 1, 256, 28, 28
    KH = KW = 3

    x = jax.random.normal(kx, (N, C, H, W), dtype=jnp.float32)
    # deterministic kaiming-like init for Conv2d(256, 256, 3, 3), bias=False
    fan_in = C * KH * KW
    w_oihw = jax.random.normal(kw_key, (C, C, KH, KW), dtype=jnp.float32) * (2.0 / fan_in) ** 0.5

    out = jax.block_until_ready(relu_conv2d_dilated(x, w_oihw, padding=2, dilation=2))
    assert out.shape == (N, C, H, W), out.shape

    # correctness check against XLA's dilated conv on relu(x)
    ref = jax.lax.conv_general_dilated(
        jnp.maximum(x, 0.0), w_oihw,
        window_strides=(1, 1), padding=((2, 2), (2, 2)), rhs_dilation=(2, 2),
        dimension_numbers=("NCHW", "OIHW", "NCHW"))
    max_err = float(jnp.max(jnp.abs(out - ref)))
    assert jnp.allclose(out, ref, atol=1e-1, rtol=1e-2), max_err

    print("KERNEL_OK")
</pallas_src>

<mosaic_0001>
module attributes {stable_mosaic.version = 11 : i64} {
  func.func @_relu_dilated_conv_kernel(%arg0: i32, %arg1: memref<1024x768xbf16, #tpu.memory_space<vmem>>, %arg2: memref<3x768x256xbf16, #tpu.memory_space<vmem>>, %arg3: memref<448x256xf32, #tpu.memory_space<vmem>>) attributes {dimension_semantics = [#tpu.dimension_semantics<parallel>], iteration_bounds = array<i64: 2>, scalar_prefetch = 0 : i64, scratch_operands = 0 : i64, tpu.core_type = #tpu.core_type<tc>, window_params = [{pipeline_mode = #tpu.pipeline_mode<synchronous>, transform_indices = @transform_0, window_bounds = array<i64: 1024, 768>}, {pipeline_mode = #tpu.pipeline_mode<synchronous>, transform_indices = @transform_1, window_bounds = array<i64: 3, 768, 256>}, {transform_indices = @transform_2, window_bounds = array<i64: 448, 256>}]} {
    %c448_i32 = arith.constant 448 : i32
    %0 = arith.muli %arg0, %c448_i32 : i32
    %1 = tpu.assume_multiple %0, 32 : i32
    %c0_i32 = arith.constant 0 : i32
    %2 = arith.addi %1, %c0_i32 : i32
    %3 = tpu.assume_multiple %2, 32 : i32
    %4 = arith.index_cast %3 : i32 to index
    %c0 = arith.constant 0 : index
    %5 = vector.load %arg1[%4, %c0] : memref<1024x768xbf16, #tpu.memory_space<vmem>>, vector<448x768xbf16>
    %c0_0 = arith.constant 0 : index
    %c0_1 = arith.constant 0 : index
    %c0_2 = arith.constant 0 : index
    %6 = vector.load %arg2[%c0_0, %c0_1, %c0_2] : memref<3x768x256xbf16, #tpu.memory_space<vmem>>, vector<1x768x256xbf16>
    %7 = vector.shape_cast %6 : vector<1x768x256xbf16> to vector<768x256xbf16>
    %cst = arith.constant dense<0.000000e+00> : vector<448x256xf32>
    %8 = tpu.matmul %5, %7, %cst {dimension_numbers = #tpu.dot_dimension_numbers<[1], [0], [0], [1], [0, 0, 1, 1], [], []>} : vector<448x768xbf16>, vector<768x256xbf16>, vector<448x256xf32> -> vector<448x256xf32>
    %c0_3 = arith.constant 0 : index
    %c0_4 = arith.constant 0 : index
    %9 = vector.load %arg3[%c0_3, %c0_4] : memref<448x256xf32, #tpu.memory_space<vmem>>, vector<448x256xf32>
    tpu.vector_store %arg3[%c0_3, %c0_4], %8 {strides = array<i32>} : memref<448x256xf32, #tpu.memory_space<vmem>>, vector<448x256xf32>,
    %c64_i32 = arith.constant 64 : i32
    %10 = arith.addi %1, %c64_i32 : i32
    %11 = tpu.assume_multiple %10, 32 : i32
    %12 = arith.index_cast %11 : i32 to index
    %c0_5 = arith.constant 0 : index
    %13 = vector.load %arg1[%12, %c0_5] : memref<1024x768xbf16, #tpu.memory_space<vmem>>, vector<448x768xbf16>
    %c1 = arith.constant 1 : index
    %c0_6 = arith.constant 0 : index
    %c0_7 = arith.constant 0 : index
    %14 = vector.load %arg2[%c1, %c0_6, %c0_7] : memref<3x768x256xbf16, #tpu.memory_space<vmem>>, vector<1x768x256xbf16>
    %15 = vector.shape_cast %14 : vector<1x768x256xbf16> to vector<768x256xbf16>
    %cst_8 = arith.constant dense<0.000000e+00> : vector<448x256xf32>
    %16 = tpu.matmul %13, %15, %cst_8 {dimension_numbers = #tpu.dot_dimension_numbers<[1], [0], [0], [1], [0, 0, 1, 1], [], []>} : vector<448x768xbf16>, vector<768x256xbf16>, vector<448x256xf32> -> vector<448x256xf32>
    %c0_9 = arith.constant 0 : index
    %c0_10 = arith.constant 0 : index
    %17 = vector.load %arg3[%c0_9, %c0_10] : memref<448x256xf32, #tpu.memory_space<vmem>>, vector<448x256xf32>
    %18 = arith.addf %17, %16 : vector<448x256xf32>
    %c0_11 = arith.constant 0 : index
    %c0_12 = arith.constant 0 : index
    %19 = vector.load %arg3[%c0_11, %c0_12] : memref<448x256xf32, #tpu.memory_space<vmem>>, vector<448x256xf32>
    tpu.vector_store %arg3[%c0_11, %c0_12], %18 {strides = array<i32>} : memref<448x256xf32, #tpu.memory_space<vmem>>, vector<448x256xf32>,
    %c128_i32 = arith.constant 128 : i32
    %20 = arith.addi %1, %c128_i32 : i32
    %21 = tpu.assume_multiple %20, 32 : i32
    %22 = arith.index_cast %21 : i32 to index
    %c0_13 = arith.constant 0 : index
    %23 = vector.load %arg1[%22, %c0_13] : memref<1024x768xbf16, #tpu.memory_space<vmem>>, vector<448x768xbf16>
    %c2 = arith.constant 2 : index
    %c0_14 = arith.constant 0 : index
    %c0_15 = arith.constant 0 : index
    %24 = vector.load %arg2[%c2, %c0_14, %c0_15] : memref<3x768x256xbf16, #tpu.memory_space<vmem>>, vector<1x768x256xbf16>
    %25 = vector.shape_cast %24 : vector<1x768x256xbf16> to vector<768x256xbf16>
    %cst_16 = arith.constant dense<0.000000e+00> : vector<448x256xf32>
    %26 = tpu.matmul %23, %25, %cst_16 {dimension_numbers = #tpu.dot_dimension_numbers<[1], [0], [0], [1], [0, 0, 1, 1], [], []>} : vector<448x768xbf16>, vector<768x256xbf16>, vector<448x256xf32> -> vector<448x256xf32>
    %c0_17 = arith.constant 0 : index
    %c0_18 = arith.constant 0 : index
    %27 = vector.load %arg3[%c0_17, %c0_18] : memref<448x256xf32, #tpu.memory_space<vmem>>, vector<448x256xf32>
    %28 = arith.addf %27, %26 : vector<448x256xf32>
    %c0_19 = arith.constant 0 : index
    %c0_20 = arith.constant 0 : index
    %29 = vector.load %arg3[%c0_19, %c0_20] : memref<448x256xf32, #tpu.memory_space<vmem>>, vector<448x256xf32>
    tpu.vector_store %arg3[%c0_19, %c0_20], %28 {strides = array<i32>} : memref<448x256xf32, #tpu.memory_space<vmem>>, vector<448x256xf32>,
    return
  }
  func.func @transform_0(%arg0: i32) -> (i32, i32) {
    %c0_i32 = arith.constant 0 : i32
    %c0_i32_0 = arith.constant 0 : i32
    %c0_i32_1 = arith.constant 0 : i32
    return %c0_i32, %c0_i32_0 : i32, i32
  }
  func.func @transform_1(%arg0: i32) -> (i32, i32, i32) {
    %c0_i32 = arith.constant 0 : i32
    %c0_i32_0 = arith.constant 0 : i32
    %c0_i32_1 = arith.constant 0 : i32
    %c0_i32_2 = arith.constant 0 : i32
    return %c0_i32, %c0_i32_0, %c0_i32_1 : i32, i32, i32
  }
  func.func @transform_2(%arg0: i32) -> (i32, i32) {
    %c0_i32 = arith.constant 0 : i32
    %c0_i32_0 = arith.constant 0 : i32
    return %arg0, %c0_i32 : i32, i32
  }
}

</mosaic_0001>

<llo_original>
// kernel: tpu_custom_call.1
$region0: #{tpu_custom_call.1}
  #allocation0 [shape = 'u32[]', space=smem, size = 0x4, offset = 0x4, fixed_abs, tag = 'smem constant byte address 0x4 - core index']
  #allocation1 [shape = 'u32[144,128]{1,0:T(1,128)}', space=vmem, size = 0x12000, scoped, tag = 'internal scratch']
  %s0 = inlined_call_operand.hbm [shape: bf16[1024,768], index: 0, kind: input, shape index: {}]
  %s1 = inlined_call_operand.hbm [shape: bf16[3,768,256], index: 1, kind: input, shape index: {}]
  %s2 = inlined_call_operand.hbm [shape: f32[896,256], index: 2, kind: output, shape index: {}]
  %s3 = sld [smem:[#allocation0]]
  $region49: #{tpu_custom_call.1} parent=0
    _
  %s5 = ssub.s32 1, %s3
  %s6 = scalar_select 0, %s5, %s3
  $region1: #{tpu_custom_call.1} parent=0
    #allocation2 [shape = 'u8[1572864]{0}', space=vmem, size = 0x180000, scoped, tag = 'input window, operand 0, single buffered']
    #allocation3 [shape = 's32[2]{0}', space=sflag, size = 0x8, scoped, tag = 'scoped memory for tpu_custom_call.1']
    #allocation4 [shape = 's32[2]{0}', space=sflag, size = 0x8, scoped, tag = 'scoped memory for tpu_custom_call.1']
    #allocation5 [shape = 'u8[1179648]{0}', space=vmem, size = 0x120000, scoped, tag = 'input window, operand 1, single buffered']
    #allocation6 [shape = 's32[1]{0}', space=sflag, size = 0x4, scoped, tag = 'scoped memory for tpu_custom_call.1']
    #allocation7 [shape = 'u8[917504]{0}', space=vmem, size = 0xe0000, scoped, tag = 'output window, operand 0']
    %7 = vsyncpa [#allocation3], 0
    %8 = vsyncpa [#allocation6], 0
    %9 = vsyncpa [#allocation4], 0
    %s10 = scalar_lea.sflag [#allocation4], 1
    %11 = vsyncpa %s10, 0
    loop: start=0, step=1, limit=4
    $region2: #{tpu_custom_call.1} parent=1 // loop_pre_header
      _
    $region3: #{tpu_custom_call.1} parent=1 // loop_header
      %s13 = sphi 0, %s17
      %p14 = scmp.ge.s32.totalorder %s13, 4
      %s21 = sphi 0, %s21
      %s23 = sphi 0, %s21
      %s24 = sphi 0, %s23
      %s38 = sphi 0, %s24
      %s42 = sphi 0, %s42
      %s44 = sphi 0, %s42
      %s45 = sphi 0, %s44
      %s59 = sphi 0, %s45
      %s65 = sphi 0, %s67
      %s68 = sphi 0, %s65
      %s69 = sphi 0, %s68
      %s85 = sphi 0, %s69
    $region4: #{tpu_custom_call.1} parent=1 // loop_header_branch
      %16 = sbr.rel (%p14) target = $region8
    $region5: #{tpu_custom_call.1} parent=1 // loop_body
      %s18 = ssub.s32 %s13, 1
      %s19 = ssub.s32 %s13, 2
      %s20 = sadd.s32 %s13, 1
      %s22 = sadd.s32 %s21, 1
      %p25 = scmp.eq.s32.totalorder %s13, 1
      %p26 = scmp.ne.s32.totalorder %s21, %s23
      %p27 = scmp.eq.s32.totalorder %s13, 0
      %p28 = por %p26, %p27
      %p29 = scmp.ne.s32.totalorder %s21, %s23
      %p30 = scmp.eq.s32.totalorder %s18, 1
      %p31 = por %p29, %p30
      %p32 = scmp.ne.s32.totalorder %s23, %s24
      %p33 = scmp.eq.s32.totalorder %s18, 0
      %p34 = por %p32, %p33
      %p35 = scmp.ne.s32.totalorder %s23, %s24
      %p36 = scmp.eq.s32.totalorder %s19, 1
      %p37 = por %p35, %p36
      %p39 = scmp.ne.s32.totalorder %s24, %s38
      %p40 = scmp.eq.s32.totalorder %s19, 0
      %p41 = por %p39, %p40
      %s43 = sadd.s32 %s42, 1
      %p46 = scmp.eq.s32.totalorder %s13, 1
      %p47 = scmp.ne.s32.totalorder %s42, %s44
      %p48 = scmp.eq.s32.totalorder %s13, 0
      %p49 = por %p47, %p48
      %p50 = scmp.ne.s32.totalorder %s42, %s44
      %p51 = scmp.eq.s32.totalorder %s18, 1
      %p52 = por %p50, %p51
      %p53 = scmp.ne.s32.totalorder %s44, %s45
      %p54 = scmp.eq.s32.totalorder %s18, 0
      %p55 = por %p53, %p54
      %p56 = scmp.ne.s32.totalorder %s44, %s45
      %p57 = scmp.eq.s32.totalorder %s19, 1
      %p58 = por %p56, %p57
      %p60 = scmp.ne.s32.totalorder %s45, %s59
      %p61 = scmp.eq.s32.totalorder %s19, 0
      %p62 = por %p60, %p61
      %s63 = ssub.s32 %s13, %s20
      %p64 = scmp.eq.s32.totalorder %s63, 0
      %s66 = sadd.s32 %s65, 1
      %s67 = scalar_select %p64, %s65, %s66
      %p70 = pneg %p64
      %p71 = scmp.eq.s32.totalorder %s13, 1
      %p72 = por %p70, %p71
      %p73 = scmp.ne.s32.totalorder %s65, %s68
      %p74 = scmp.eq.s32.totalorder %s13, 0
      %p75 = por %p73, %p74
      %p76 = scmp.ne.s32.totalorder %s65, %s68
      %p77 = scmp.eq.s32.totalorder %s18, 1
      %p78 = por %p76, %p77
      %p79 = scmp.ne.s32.totalorder %s68, %s69
      %p80 = scmp.eq.s32.totalorder %s18, 0
      %p81 = por %p79, %p80
      %p82 = scmp.ne.s32.totalorder %s68, %s69
      %p83 = scmp.eq.s32.totalorder %s19, 1
      %p84 = por %p82, %p83
      %p86 = scmp.ne.s32.totalorder %s69, %s85
      %p87 = scmp.eq.s32.totalorder %s19, 0
      %p88 = por %p86, %p87
      %p89 = scmp.le.s32.totalorder 1, %s13
      %p90 = scmp.lt.s32.totalorder %s13, 3
      %p91 = pnand %p89, %p90
      %p92 = pneg %p91
      // Predicated region
      $region9: #{tpu_custom_call.1} parent=5 // pred_check
        _
      $region10: #{tpu_custom_call.1} parent=5 // pred_check_branch
        %94 = sbr.rel (%p91) target = $region12
      $region11: #{tpu_custom_call.1} parent=5 // pred_region
        %s95 = ssub.s32 %s13, 1
        // Predicated region
        $region13: #{tpu_custom_call.1} parent=11 // pred_check
          %p96 = pneg %p34
        $region14: #{tpu_custom_call.1} parent=11 // pred_check_branch
          %98 = sbr.rel (%p96) target = $region16
        $region15: #{tpu_custom_call.1} parent=11 // pred_region
          %s100 = ssub.s32 49152, 49152
          %101 = vsyncadd [#allocation3], %s100
          %s102 = sshll.u32 [#allocation2], 4
          %s103 = int_to_ptr.vmem [resolvable:$true] %s102
          %108 = dma.hbm_to_vmem [thread:$0]  %s0, 49152, %s103, [#allocation3], 384, 384, 24
        $region16: #{tpu_custom_call.1} parent=11 // pred_fallthru
          _
        // Predicated region
        $region17: #{tpu_custom_call.1} parent=11 // pred_check
          %p109 = pneg %p55
        $region18: #{tpu_custom_call.1} parent=11 // pred_check_branch
          %111 = sbr.rel (%p109) target = $region20
        $region19: #{tpu_custom_call.1} parent=11 // pred_region
          %s113 = ssub.s32 36864, 36864
          %114 = vsyncadd [#allocation6], %s113
          %s115 = sshll.u32 [#allocation5], 4
          %s116 = int_to_ptr.vmem [resolvable:$true] %s115
          %121 = dma.hbm_to_vmem [thread:$0]  %s1, 36864, %s116, [#allocation6], 128, 128, 8
        $region20: #{tpu_custom_call.1} parent=11 // pred_fallthru
          _
      $region12: #{tpu_custom_call.1} parent=5 // pred_fallthru
        _
      %p122 = scmp.lt.s32.totalorder %s13, 2
      // Predicated region
      $region21: #{tpu_custom_call.1} parent=5 // pred_check
        %p123 = pneg %p122
      $region22: #{tpu_custom_call.1} parent=5 // pred_check_branch
        %125 = sbr.rel (%p123) target = $region24
      $region23: #{tpu_custom_call.1} parent=5 // pred_region
        _
      $region24: #{tpu_custom_call.1} parent=5 // pred_fallthru
        _
      %p126 = scmp.le.s32.totalorder 1, %s13
      %p127 = scmp.lt.s32.totalorder %s13, 3
      %p128 = pnand %p126, %p127
      %p129 = pneg %p128
      // Predicated region
      $region25: #{tpu_custom_call.1} parent=5 // pred_check
        _
      $region26: #{tpu_custom_call.1} parent=5 // pred_check_branch
        %131 = sbr.rel (%p128) target = $region28
      $region27: #{tpu_custom_call.1} parent=5 // pred_region
        %s132 = ssub.s32 %s13, 1
        // Predicated region
        $region29: #{tpu_custom_call.1} parent=27 // pred_check
          %p133 = pneg %p34
        $region30: #{tpu_custom_call.1} parent=27 // pred_check_branch
          %135 = sbr.rel (%p133) target = $region32
        $region31: #{tpu_custom_call.1} parent=27 // pred_region
          %136 = dma.done [#allocation3], 49152
        $region32: #{tpu_custom_call.1} parent=27 // pred_fallthru
          _
        // Predicated region
        $region33: #{tpu_custom_call.1} parent=27 // pred_check
          %p137 = pneg %p55
        $region34: #{tpu_custom_call.1} parent=27 // pred_check_branch
          %139 = sbr.rel (%p137) target = $region36
        $region35: #{tpu_custom_call.1} parent=27 // pred_region
          %140 = dma.done [#allocation6], 36864
        $region36: #{tpu_custom_call.1} parent=27 // pred_fallthru
          _
        %p141 = pneg %p34
        %p142 = pneg %p31
        %p143 = pneg %p55
        %p144 = pneg %p52
        %p145 = pneg %p81
        %p146 = pneg %p78
        %s147 = sand.u32 %s68, 1
        %s148 = scalar_lea.sflag [#allocation4], %s147
        %s149 = sand.u32 %s68, 1
        %s150 = smul.addr %s149, 896
        %s151 = scalar_lea.vmem [#allocation7], %s150
        %s152 = smul.u32 56, %s18
        %s153 = smul.u32 %s18, 448
        %s154 = sshra.s32 %s153, 3
        %s155 = sand.u32 %s153, 7
        %s156 = smul.u32 %s154, 6
        %s157 = smul.addr %s156, 4
        %s158 = scalar_lea.vmem [#allocation2], %s157
        %v159 = vld [vmem:[%s158] sm:$0xff]
        %v160 = vld [vmem:[%s158 + $0x8] sm:$0xff]
        %v161 = vld [vmem:[%s158 + $0x10] sm:$0xff]
        %v162 = vld [vmem:[%s158 + $0x18] sm:$0xff]
        %v163 = vld [vmem:[%s158 + $0x20] sm:$0xff]
        %v164 = vld [vmem:[%s158 + $0x28] sm:$0xff]
        %v165 = vld [vmem:[%s158 + $0x30] sm:$0xff]
        %v166 = vld [vmem:[%s158 + $0x38] sm:$0xff]
        %v167 = vld [vmem:[%s158 + $0x40] sm:$0xff]
        %v168 = vld [vmem:[%s158 + $0x48] sm:$0xff]
        %v169 = vld [vmem:[%s158 + $0x50] sm:$0xff]
        %v170 = vld [vmem:[%s158 + $0x58] sm:$0xff]
        %v171 = vld [vmem:[%s158 + $0x60] sm:$0xff]
        %v172 = vld [vmem:[%s158 + $0x68] sm:$0xff]
        %v173 = vld [vmem:[%s158 + $0x70] sm:$0xff]
        %v174 = vld [vmem:[%s158 + $0x78] sm:$0xff]
        %v175 = vld [vmem:[%s158 + $0x80] sm:$0xff]
        %v176 = vld [vmem:[%s158 + $0x88] sm:$0xff]
        %v177 = vld [vmem:[%s158 + $0x90] sm:$0xff]
        %v178 = vld [vmem:[%s158 + $0x98] sm:$0xff]
        %v179 = vld [vmem:[%s158 + $0xa0] sm:$0xff]
        %v180 = vld [vmem:[%s158 + $0xa8] sm:$0xff]
        %v181 = vld [vmem:[%s158 + $0xb0] sm:$0xff]
        %v182 = vld [vmem:[%s158 + $0xb8] sm:$0xff]
        %v183 = vld [vmem:[%s158 + $0xc0] sm:$0xff]
        %v184 = vld [vmem:[%s158 + $0xc8] sm:$0xff]
        %v185 = vld [vmem:[%s158 + $0xd0] sm:$0xff]
        %v186 = vld [vmem:[%s158 + $0xd8] sm:$0xff]
        %v187 = vld [vmem:[%s158 + $0xe0] sm:$0xff]
        %v188 = vld [vmem:[%s158 + $0xe8] sm:$0xff]
        %v189 = vld [vmem:[%s158 + $0xf0] sm:$0xff]
        %v190 = vld [vmem:[%s158 + $0xf8] sm:$0xff]
        %v191 = vld [vmem:[%s158 + $0x100] sm:$0xff]
        %v192 = vld [vmem:[%s158 + $0x108] sm:$0xff]
        %v193 = vld [vmem:[%s158 + $0x110] sm:$0xff]
        %v194 = vld [vmem:[%s158 + $0x118] sm:$0xff]
        %v195 = vld [vmem:[%s158 + $0x120] sm:$0xff]
        %v196 = vld [vmem:[%s158 + $0x128] sm:$0xff]
        %v197 = vld [vmem:[%s158 + $0x130] sm:$0xff]
        %v198 = vld [vmem:[%s158 + $0x138] sm:$0xff]
        %v199 = vld [vmem:[%s158 + $0x140] sm:$0xff]
        %v200 = vld [vmem:[%s158 + $0x148] sm:$0xff]
        %v201 = vld [vmem:[%s158 + $0x150] sm:$0xff]
        %v202 = vld [vmem:[%s158 + $0x158] sm:$0xff]
        %v203 = vld [vmem:[%s158 + $0x160] sm:$0xff]
        %v204 = vld [vmem:[%s158 + $0x168] sm:$0xff]
        %v205 = vld [vmem:[%s158 + $0x170] sm:$0xff]
        %v206 = vld [vmem:[%s158 + $0x178] sm:$0xff]
        %v207 = vld [vmem:[%s158 + $0x180] sm:$0xff]
        %v208 = vld [vmem:[%s158 + $0x188] sm:$0xff]
        %v209 = vld [vmem:[%s158 + $0x190] sm:$0xff]
        %v210 = vld [vmem:[%s158 + $0x198] sm:$0xff]
        %v211 = vld [vmem:[%s158 + $0x1a0] sm:$0xff]
        %v212 = vld [vmem:[%s158 + $0x1a8] sm:$0xff]
        %v213 = vld [vmem:[%s158 + $0x1b0] sm:$0xff]
        %v214 = vld [vmem:[%s158 + $0x1b8] sm:$0xff]
        %v215 = vld [vmem:[%s158 + $0x1c0] sm:$0xff]
        %v216 = vld [vmem:[%s158 + $0x1c8] sm:$0xff]
        %v217 = vld [vmem:[%s158 + $0x1d0] sm:$0xff]
        %v218 = vld [vmem:[%s158 + $0x1d8] sm:$0xff]
        %v219 = vld [vmem:[%s158 + $0x1e0] sm:$0xff]
        %v220 = vld [vmem:[%s158 + $0x1e8] sm:$0xff]
        %v221 = vld [vmem:[%s158 + $0x1f0] sm:$0xff]
        %v222 = vld [vmem:[%s158 + $0x1f8] sm:$0xff]
        %v223 = vld [vmem:[%s158 + $0x200] sm:$0xff]
        %v224 = vld [vmem:[%s158 + $0x208] sm:$0xff]
        %v225 = vld [vmem:[%s158 + $0x210] sm:$0xff]
        %v226 = vld [vmem:[%s158 + $0x218] sm:$0xff]
        %v227 = vld [vmem:[%s158 + $0x220] sm:$0xff]
        %v228 = vld [vmem:[%s158 + $0x228] sm:$0xff]
        %v229 = vld [vmem:[%s158 + $0x230] sm:$0xff]
        %v230 = vld [vmem:[%s158 + $0x238] sm:$0xff]
        %v231 = vld [vmem:[%s158 + $0x240] sm:$0xff]
        %v232 = vld [vmem:[%s158 + $0x248] sm:$0xff]
        %v233 = vld [vmem:[%s158 + $0x250] sm:$0xff]
        %v234 = vld [vmem:[%s158 + $0x258] sm:$0xff]
        %v235 = vld [vmem:[%s158 + $0x260] sm:$0xff]
        %v236 = vld [vmem:[%s158 + $0x268] sm:$0xff]
        %v237 = vld [vmem:[%s158 + $0x270] sm:$0xff]
        %v238 = vld [vmem:[%s158 + $0x278] sm:$0xff]
        %v239 = vld [vmem:[%s158 + $0x280] sm:$0xff]
        %v240 = vld [vmem:[%s158 + $0x288] sm:$0xff]
        %v241 = vld [vmem:[%s158 + $0x290] sm:$0xff]
        %v242 = vld [vmem:[%s158 + $0x298] sm:$0xff]
        %v243 = vld [vmem:[%s158 + $0x2a0] sm:$0xff]
        %v244 = vld [vmem:[%s158 + $0x2a8] sm:$0xff]
        %v245 = vld [vmem:[%s158 + $0x2b0] sm:$0xff]
        %v246 = vld [vmem:[%s158 + $0x2b8] sm:$0xff]
        %v247 = vld [vmem:[%s158 + $0x2c0] sm:$0xff]
        %v248 = vld [vmem:[%s158 + $0x2c8] sm:$0xff]
        %v249 = vld [vmem:[%s158 + $0x2d0] sm:$0xff]
        %v250 = vld [vmem:[%s158 + $0x2d8] sm:$0xff]
        %v251 = vld [vmem:[%s158 + $0x2e0] sm:$0xff]
        %v252 = vld [vmem:[%s158 + $0x2e8] sm:$0xff]
        %v253 = vld [vmem:[%s158 + $0x2f0] sm:$0xff]
        %v254 = vld [vmem:[%s158 + $0x2f8] sm:$0xff]
        %v255 = vld [vmem:[%s158 + $0x300] sm:$0xff]
        %v256 = vld [vmem:[%s158 + $0x308] sm:$0xff]
        %v257 = vld [vmem:[%s158 + $0x310] sm:$0xff]
        %v258 = vld [vmem:[%s158 + $0x318] sm:$0xff]
        %v259 = vld [vmem:[%s158 + $0x320] sm:$0xff]
        %v260 = vld [vmem:[%s158 + $0x328] sm:$0xff]
        %v261 = vld [vmem:[%s158 + $0x330] sm:$0xff]
        %v262 = vld [vmem:[%s158 + $0x338] sm:$0xff]
        %v263 = vld [vmem:[%s158 + $0x340] sm:$0xff]
        %v264 = vld [vmem:[%s158 + $0x348] sm:$0xff]
        %v265 = vld [vmem:[%s158 + $0x350] sm:$0xff]
        %v266 = vld [vmem:[%s158 + $0x358] sm:$0xff]
        %v267 = vld [vmem:[%s158 + $0x360] sm:$0xff]
        %v268 = vld [vmem:[%s158 + $0x368] sm:$0xff]
        %v269 = vld [vmem:[%s158 + $0x370] sm:$0xff]
        %v270 = vld [vmem:[%s158 + $0x378] sm:$0xff]
        %v271 = vld [vmem:[%s158 + $0x380] sm:$0xff]
        %v272 = vld [vmem:[%s158 + $0x388] sm:$0xff]
        %v273 = vld [vmem:[%s158 + $0x390] sm:$0xff]
        %v274 = vld [vmem:[%s158 + $0x398] sm:$0xff]
        %v275 = vld [vmem:[%s158 + $0x3a0] sm:$0xff]
        %v276 = vld [vmem:[%s158 + $0x3a8] sm:$0xff]
        %v277 = vld [vmem:[%s158 + $0x3b0] sm:$0xff]
        %v278 = vld [vmem:[%s158 + $0x3b8] sm:$0xff]
        %v279 = vld [vmem:[%s158 + $0x3c0] sm:$0xff]
        %v280 = vld [vmem:[%s158 + $0x3c8] sm:$0xff]
        %v281 = vld [vmem:[%s158 + $0x3d0] sm:$0xff]
        %v282 = vld [vmem:[%s158 + $0x3d8] sm:$0xff]
        %v283 = vld [vmem:[%s158 + $0x3e0] sm:$0xff]
        %v284 = vld [vmem:[%s158 + $0x3e8] sm:$0xff]
        %v285 = vld [vmem:[%s158 + $0x3f0] sm:$0xff]
        %v286 = vld [vmem:[%s158 + $0x3f8] sm:$0xff]
        %v287 = vld [vmem:[%s158 + $0x400] sm:$0xff]
        %v288 = vld [vmem:[%s158 + $0x408] sm:$0xff]
        %v289 = vld [vmem:[%s158 + $0x410] sm:$0xff]
        %v290 = vld [vmem:[%s158 + $0x418] sm:$0xff]
        %v291 = vld [vmem:[%s158 + $0x420] sm:$0xff]
        %v292 = vld [vmem:[%s158 + $0x428] sm:$0xff]
        %v293 = vld [vmem:[%s158 + $0x430] sm:$0xff]
        %v294 = vld [vmem:[%s158 + $0x438] sm:$0xff]
        %v295 = vld [vmem:[%s158 + $0x440] sm:$0xff]
        %v296 = vld [vmem:[%s158 + $0x448] sm:$0xff]
        %v297 = vld [vmem:[%s158 + $0x450] sm:$0xff]
        %v298 = vld [vmem:[%s158 + $0x458] sm:$0xff]
        %v299 = vld [vmem:[%s158 + $0x460] sm:$0xff]
        %v300 = vld [vmem:[%s158 + $0x468] sm:$0xff]
        %v301 = vld [vmem:[%s158 + $0x470] sm:$0xff]
        %v302 = vld [vmem:[%s158 + $0x478] sm:$0xff]
        %v303 = vld [vmem:[%s158 + $0x480] sm:$0xff]
        %v304 = vld [vmem:[%s158 + $0x488] sm:$0xff]
        %v305 = vld [vmem:[%s158 + $0x490] sm:$0xff]
        %v306 = vld [vmem:[%s158 + $0x498] sm:$0xff]
        %v307 = vld [vmem:[%s158 + $0x4a0] sm:$0xff]
        %v308 = vld [vmem:[%s158 + $0x4a8] sm:$0xff]
        %v309 = vld [vmem:[%s158 + $0x4b0] sm:$0xff]
        %v310 = vld [vmem:[%s158 + $0x4b8] sm:$0xff]
        %v311 = vld [vmem:[%s158 + $0x4c0] sm:$0xff]
        %v312 = vld [vmem:[%s158 + $0x4c8] sm:$0xff]
        %v313 = vld [vmem:[%s158 + $0x4d0] sm:$0xff]
        %v314 = vld [vmem:[%s158 + $0x4d8] sm:$0xff]
        %v315 = vld [vmem:[%s158 + $0x4e0] sm:$0xff]
        %v316 = vld [vmem:[%s158 + $0x4e8] sm:$0xff]
        %v317 = vld [vmem:[%s158 + $0x4f0] sm:$0xff]
        %v318 = vld [vmem:[%s158 + $0x4f8] sm:$0xff]
        %v319 = vld [vmem:[%s158 + $0x500] sm:$0xff]
        %v320 = vld [vmem:[%s158 + $0x508] sm:$0xff]
        %v321 = vld [vmem:[%s158 + $0x510] sm:$0xff]
        %v322 = vld [vmem:[%s158 + $0x518] sm:$0xff]
        %v323 = vld [vmem:[%s158 + $0x520] sm:$0xff]
        %v324 = vld [vmem:[%s158 + $0x528] sm:$0xff]
        %v325 = vld [vmem:[%s158 + $0x530] sm:$0xff]
        %v326 = vld [vmem:[%s158 + $0x538] sm:$0xff]
        %v327 = vld [vmem:[#allocation5] sm:$0xff]
        %v328 = vld [vmem:[#allocation5 + $0x8] sm:$0xff]
        %v329 = vld [vmem:[#allocation5 + $0x10] sm:$0xff]
        %v330 = vld [vmem:[#allocation5 + $0x18] sm:$0xff]
        %v331 = vld [vmem:[#allocation5 + $0x20] sm:$0xff]
        %v332 = vld [vmem:[#allocation5 + $0x28] sm:$0xff]
        %v333 = vld [vmem:[#allocation5 + $0x30] sm:$0xff]
        %v334 = vld [vmem:[#allocation5 + $0x38] sm:$0xff]
        %v335 = vld [vmem:[#allocation5 + $0x40] sm:$0xff]
        %v336 = vld [vmem:[#allocation5 + $0x48] sm:$0xff]
        %v337 = vld [vmem:[#allocation5 + $0x50] sm:$0xff]
        %v338 = vld [vmem:[#allocation5 + $0x58] sm:$0xff]
        %v339 = vld [vmem:[#allocation5 + $0x60] sm:$0xff]
        %v340 = vld [vmem:[#allocation5 + $0x68] sm:$0xff]
        %v341 = vld [vmem:[#allocation5 + $0x70] sm:$0xff]
        %v342 = vld [vmem:[#allocation5 + $0x78] sm:$0xff]
        %v343 = vld [vmem:[#allocation5 + $0x80] sm:$0xff]
        %v344 = vld [vmem:[#allocation5 + $0x88] sm:$0xff]
        %v345 = vld [vmem:[#allocation5 + $0x90] sm:$0xff]
        %v346 = vld [vmem:[#allocation5 + $0x98] sm:$0xff]
        %v347 = vld [vmem:[#allocation5 + $0xa0] sm:$0xff]
        %v348 = vld [vmem:[#allocation5 + $0xa8] sm:$0xff]
        %v349 = vld [vmem:[#allocation5 + $0xb0] sm:$0xff]
        %v350 = vld [vmem:[#allocation5 + $0xb8] sm:$0xff]
        %v351 = vld [vmem:[#allocation5 + $0xc0] sm:$0xff]
        %v352 = vld [vmem:[#allocation5 + $0xc8] sm:$0xff]
        %v353 = vld [vmem:[#allocation5 + $0xd0] sm:$0xff]
        %v354 = vld [vmem:[#allocation5 + $0xd8] sm:$0xff]
        %v355 = vld [vmem:[#allocation5 + $0xe0] sm:$0xff]
        %v356 = vld [vmem:[#allocation5 + $0xe8] sm:$0xff]
        %v357 = vld [vmem:[#allocation5 + $0xf0] sm:$0xff]
        %v358 = vld [vmem:[#allocation5 + $0xf8] sm:$0xff]
        %v359 = vld [vmem:[#allocation5 + $0x100] sm:$0xff]
        %v360 = vld [vmem:[#allocation5 + $0x108] sm:$0xff]
        %v361 = vld [vmem:[#allocation5 + $0x110] sm:$0xff]
        %v362 = vld [vmem:[#allocation5 + $0x118] sm:$0xff]
        %v363 = vld [vmem:[#allocation5 + $0x120] sm:$0xff]
        %v364 = vld [vmem:[#allocation5 + $0x128] sm:$0xff]
        %v365 = vld [vmem:[#allocation5 + $0x130] sm:$0xff]
        %v366 = vld [vmem:[#allocation5 + $0x138] sm:$0xff]
        %v367 = vld [vmem:[#allocation5 + $0x140] sm:$0xff]
        %v368 = vld [vmem:[#allocation5 + $0x148] sm:$0xff]
        %v369 = vld [vmem:[#allocation5 + $0x150] sm:$0xff]
        %v370 = vld [vmem:[#allocation5 + $0x158] sm:$0xff]
        %v371 = vld [vmem:[#allocation5 + $0x160] sm:$0xff]
        %v372 = vld [vmem:[#allocation5 + $0x168] sm:$0xff]
        %v373 = vld [vmem:[#allocation5 + $0x170] sm:$0xff]
        %v374 = vld [vmem:[#allocation5 + $0x178] sm:$0xff]
        %v375 = vld [vmem:[#allocation5 + $0x180] sm:$0xff]
        %v376 = vld [vmem:[#allocation5 + $0x188] sm:$0xff]
        %v377 = vld [vmem:[#allocation5 + $0x190] sm:$0xff]
        %v378 = vld [vmem:[#allocation5 + $0x198] sm:$0xff]
        %v379 = vld [vmem:[#allocation5 + $0x1a0] sm:$0xff]
        %v380 = vld [vmem:[#allocation5 + $0x1a8] sm:$0xff]
        %v381 = vld [vmem:[#allocation5 + $0x1b0] sm:$0xff]
        %v382 = vld [vmem:[#allocation5 + $0x1b8] sm:$0xff]
        %v383 = vld [vmem:[#allocation5 + $0x1c0] sm:$0xff]
        %v384 = vld [vmem:[#allocation5 + $0x1c8] sm:$0xff]
        %v385 = vld [vmem:[#allocation5 + $0x1d0] sm:$0xff]
        %v386 = vld [vmem:[#allocation5 + $0x1d8] sm:$0xff]
        %v387 = vld [vmem:[#allocation5 + $0x1e0] sm:$0xff]
        %v388 = vld [vmem:[#allocation5 + $0x1e8] sm:$0xff]
        %v389 = vld [vmem:[#allocation5 + $0x1f0] sm:$0xff]
        %v390 = vld [vmem:[#allocation5 + $0x1f8] sm:$0xff]
        %v391 = vld [vmem:[#allocation5 + $0x200] sm:$0xff]
        %v392 = vld [vmem:[#allocation5 + $0x208] sm:$0xff]
        %v393 = vld [vmem:[#allocation5 + $0x210] sm:$0xff]
        %v394 = vld [vmem:[#allocation5 + $0x218] sm:$0xff]
        %v395 = vld [vmem:[#allocation5 + $0x220] sm:$0xff]
        %v396 = vld [vmem:[#allocation5 + $0x228] sm:$0xff]
        %v397 = vld [vmem:[#allocation5 + $0x230] sm:$0xff]
        %v398 = vld [vmem:[#allocation5 + $0x238] sm:$0xff]
        %v399 = vld [vmem:[#allocation5 + $0x240] sm:$0xff]
        %v400 = vld [vmem:[#allocation5 + $0x248] sm:$0xff]
        %v401 = vld [vmem:[#allocation5 + $0x250] sm:$0xff]
        %v402 = vld [vmem:[#allocation5 + $0x258] sm:$0xff]
        %v403 = vld [vmem:[#allocation5 + $0x260] sm:$0xff]
        %v404 = vld [vmem:[#allocation5 + $0x268] sm:$0xff]
        %v405 = vld [vmem:[#allocation5 + $0x270] sm:$0xff]
        %v406 = vld [vmem:[#allocation5 + $0x278] sm:$0xff]
        %v407 = vld [vmem:[#allocation5 + $0x280] sm:$0xff]
        %v408 = vld [vmem:[#allocation5 + $0x288] sm:$0xff]
        %v409 = vld [vmem:[#allocation5 + $0x290] sm:$0xff]
        %v410 = vld [vmem:[#allocation5 + $0x298] sm:$0xff]
        %v411 = vld [vmem:[#allocation5 + $0x2a0] sm:$0xff]
        %v412 = vld [vmem:[#allocation5 + $0x2a8] sm:$0xff]
        %v413 = vld [vmem:[#allocation5 + $0x2b0] sm:$0xff]
        %v414 = vld [vmem:[#allocation5 + $0x2b8] sm:$0xff]
        %v415 = vld [vmem:[#allocation5 + $0x2c0] sm:$0xff]
        %v416 = vld [vmem:[#allocation5 + $0x2c8] sm:$0xff]
        %v417 = vld [vmem:[#allocation5 + $0x2d0] sm:$0xff]
        %v418 = vld [vmem:[#allocation5 + $0x2d8] sm:$0xff]
        %v419 = vld [vmem:[#allocation5 + $0x2e0] sm:$0xff]
        %v420 = vld [vmem:[#allocation5 + $0x2e8] sm:$0xff]
        %v421 = vld [vmem:[#allocation5 + $0x2f0] sm:$0xff]
        %v422 = vld [vmem:[#allocation5 + $0x2f8] sm:$0xff]
        %v591 = vunpack.c.l.b16 %v159
        %v592 = vunpack.c.h.b16 %v159
        %v593 = vunpack.c.l.b16 %v160
        %v594 = vunpack.c.h.b16 %v160
        %v595 = vunpack.c.l.b16 %v161
        %v596 = vunpack.c.h.b16 %v161
        %v597 = vunpack.c.l.b16 %v162
        %v598 = vunpack.c.h.b16 %v162
        %v599 = vunpack.c.l.b16 %v163
        %v600 = vunpack.c.h.b16 %v163
        %v601 = vunpack.c.l.b16 %v164
        %v602 = vunpack.c.h.b16 %v164
        %v603 = vunpack.c.l.b16 %v165
        %v604 = vunpack.c.h.b16 %v165
        %v605 = vunpack.c.l.b16 %v166
        %v606 = vunpack.c.h.b16 %v166
        %v607 = vunpack.c.l.b16 %v167
        %v608 = vunpack.c.h.b16 %v167
        %v609 = vunpack.c.l.b16 %v168
        %v610 = vunpack.c.h.b16 %v168
        %v611 = vunpack.c.l.b16 %v169
        %v612 = vunpack.c.h.b16 %v169
        %v613 = vunpack.c.l.b16 %v170
        %v614 = vunpack.c.h.b16 %v170
        %v615 = vunpack.c.l.b16 %v171
        %v616 = vunpack.c.h.b16 %v171
        %v617 = vunpack.c.l.b16 %v172
        %v618 = vunpack.c.h.b16 %v172
        %v619 = vunpack.c.l.b16 %v173
        %v620 = vunpack.c.h.b16 %v173
        %v621 = vunpack.c.l.b16 %v174
        %v622 = vunpack.c.h.b16 %v174
        %v623 = vunpack.c.l.b16 %v175
        %v624 = vunpack.c.h.b16 %v175
        %v625 = vunpack.c.l.b16 %v176
        %v626 = vunpack.c.h.b16 %v176
        %v627 = vunpack.c.l.b16 %v177
        %v628 = vunpack.c.h.b16 %v177
        %v629 = vunpack.c.l.b16 %v178
        %v630 = vunpack.c.h.b16 %v178
        %v631 = vunpack.c.l.b16 %v179
        %v632 = vunpack.c.h.b16 %v179
        %v633 = vunpack.c.l.b16 %v180
        %v634 = vunpack.c.h.b16 %v180
        %v635 = vunpack.c.l.b16 %v181
        %v636 = vunpack.c.h.b16 %v181
        %v637 = vunpack.c.l.b16 %v182
        %v638 = vunpack.c.h.b16 %v182
        %v639 = vunpack.c.l.b16 %v183
        %v640 = vunpack.c.h.b16 %v183
        %v641 = vunpack.c.l.b16 %v184
        %v642 = vunpack.c.h.b16 %v184
        %v643 = vunpack.c.l.b16 %v185
        %v644 = vunpack.c.h.b16 %v185
        %v645 = vunpack.c.l.b16 %v186
        %v646 = vunpack.c.h.b16 %v186
        %v647 = vunpack.c.l.b16 %v187
        %v648 = vunpack.c.h.b16 %v187
        %v649 = vunpack.c.l.b16 %v188
        %v650 = vunpack.c.h.b16 %v188
        %v651 = vunpack.c.l.b16 %v189
        %v652 = vunpack.c.h.b16 %v189
        %v653 = vunpack.c.l.b16 %v190
        %v654 = vunpack.c.h.b16 %v190
        %v655 = vunpack.c.l.b16 %v191
        %v656 = vunpack.c.h.b16 %v191
        %v657 = vunpack.c.l.b16 %v192
        %v658 = vunpack.c.h.b16 %v192
        %v659 = vunpack.c.l.b16 %v193
        %v660 = vunpack.c.h.b16 %v193
        %v661 = vunpack.c.l.b16 %v194
        %v662 = vunpack.c.h.b16 %v194
        %v663 = vunpack.c.l.b16 %v195
        %v664 = vunpack.c.h.b16 %v195
        %v665 = vunpack.c.l.b16 %v196
        %v666 = vunpack.c.h.b16 %v196
        %v667 = vunpack.c.l.b16 %v197
        %v668 = vunpack.c.h.b16 %v197
        %v669 = vunpack.c.l.b16 %v198
        %v670 = vunpack.c.h.b16 %v198
        %v671 = vunpack.c.l.b16 %v199
        %v672 = vunpack.c.h.b16 %v199
        %v673 = vunpack.c.l.b16 %v200
        %v674 = vunpack.c.h.b16 %v200
        %v675 = vunpack.c.l.b16 %v201
        %v676 = vunpack.c.h.b16 %v201
        %v677 = vunpack.c.l.b16 %v202
        %v678 = vunpack.c.h.b16 %v202
        %v679 = vunpack.c.l.b16 %v203
        %v680 = vunpack.c.h.b16 %v203
        %v681 = vunpack.c.l.b16 %v204
        %v682 = vunpack.c.h.b16 %v204
        %v683 = vunpack.c.l.b16 %v205
        %v684 = vunpack.c.h.b16 %v205
        %v685 = vunpack.c.l.b16 %v206
        %v686 = vunpack.c.h.b16 %v206
        %v687 = vunpack.c.l.b16 %v207
        %v688 = vunpack.c.h.b16 %v207
        %v689 = vunpack.c.l.b16 %v208
        %v690 = vunpack.c.h.b16 %v208
        %v691 = vunpack.c.l.b16 %v209
        %v692 = vunpack.c.h.b16 %v209
        %v693 = vunpack.c.l.b16 %v210
        %v694 = vunpack.c.h.b16 %v210
        %v695 = vunpack.c.l.b16 %v211
        %v696 = vunpack.c.h.b16 %v211
        %v697 = vunpack.c.l.b16 %v212
        %v698 = vunpack.c.h.b16 %v212
        %v699 = vunpack.c.l.b16 %v213
        %v700 = vunpack.c.h.b16 %v213
        %v701 = vunpack.c.l.b16 %v214
        %v702 = vunpack.c.h.b16 %v214
        %v703 = vunpack.c.l.b16 %v215
        %v704 = vunpack.c.h.b16 %v215
        %v705 = vunpack.c.l.b16 %v216
        %v706 = vunpack.c.h.b16 %v216
        %v707 = vunpack.c.l.b16 %v217
        %v708 = vunpack.c.h.b16 %v217
        %v709 = vunpack.c.l.b16 %v218
        %v710 = vunpack.c.h.b16 %v218
        %v711 = vunpack.c.l.b16 %v219
        %v712 = vunpack.c.h.b16 %v219
        %v713 = vunpack.c.l.b16 %v220
        %v714 = vunpack.c.h.b16 %v220
        %v715 = vunpack.c.l.b16 %v221
        %v716 = vunpack.c.h.b16 %v221
        %v717 = vunpack.c.l.b16 %v222
        %v718 = vunpack.c.h.b16 %v222
        %v719 = vunpack.c.l.b16 %v223
        %v720 = vunpack.c.h.b16 %v223
        %v721 = vunpack.c.l.b16 %v224
        %v722 = vunpack.c.h.b16 %v224
        %v723 = vunpack.c.l.b16 %v225
        %v724 = vunpack.c.h.b16 %v225
        %v725 = vunpack.c.l.b16 %v226
        %v726 = vunpack.c.h.b16 %v226
        %v727 = vunpack.c.l.b16 %v227
        %v728 = vunpack.c.h.b16 %v227
        %v729 = vunpack.c.l.b16 %v228
        %v730 = vunpack.c.h.b16 %v228
        %v731 = vunpack.c.l.b16 %v229
        %v732 = vunpack.c.h.b16 %v229
        %v733 = vunpack.c.l.b16 %v230
        %v734 = vunpack.c.h.b16 %v230
        %v735 = vunpack.c.l.b16 %v231
        %v736 = vunpack.c.h.b16 %v231
        %v737 = vunpack.c.l.b16 %v232
        %v738 = vunpack.c.h.b16 %v232
        %v739 = vunpack.c.l.b16 %v233
        %v740 = vunpack.c.h.b16 %v233
        %v741 = vunpack.c.l.b16 %v234
        %v742 = vunpack.c.h.b16 %v234
        %v743 = vunpack.c.l.b16 %v235
        %v744 = vunpack.c.h.b16 %v235
        %v745 = vunpack.c.l.b16 %v236
        %v746 = vunpack.c.h.b16 %v236
        %v747 = vunpack.c.l.b16 %v237
        %v748 = vunpack.c.h.b16 %v237
        %v749 = vunpack.c.l.b16 %v238
        %v750 = vunpack.c.h.b16 %v238
        %v751 = vunpack.c.l.b16 %v239
        %v752 = vunpack.c.h.b16 %v239
        %v753 = vunpack.c.l.b16 %v240
        %v754 = vunpack.c.h.b16 %v240
        %v755 = vunpack.c.l.b16 %v241
        %v756 = vunpack.c.h.b16 %v241
        %v757 = vunpack.c.l.b16 %v242
        %v758 = vunpack.c.h.b16 %v242
        %v759 = vunpack.c.l.b16 %v243
        %v760 = vunpack.c.h.b16 %v243
        %v761 = vunpack.c.l.b16 %v244
        %v762 = vunpack.c.h.b16 %v244
        %v763 = vunpack.c.l.b16 %v245
        %v764 = vunpack.c.h.b16 %v245
        %v765 = vunpack.c.l.b16 %v246
        %v766 = vunpack.c.h.b16 %v246
        %v767 = vunpack.c.l.b16 %v247
        %v768 = vunpack.c.h.b16 %v247
        %v769 = vunpack.c.l.b16 %v248
        %v770 = vunpack.c.h.b16 %v248
        %v771 = vunpack.c.l.b16 %v249
        %v772 = vunpack.c.h.b16 %v249
        %v773 = vunpack.c.l.b16 %v250
        %v774 = vunpack.c.h.b16 %v250
        %v775 = vunpack.c.l.b16 %v251
        %v776 = vunpack.c.h.b16 %v251
        %v777 = vunpack.c.l.b16 %v252
        %v778 = vunpack.c.h.b16 %v252
        %v779 = vunpack.c.l.b16 %v253
        %v780 = vunpack.c.h.b16 %v253
        %v781 = vunpack.c.l.b16 %v254
        %v782 = vunpack.c.h.b16 %v254
        %v783 = vunpack.c.l.b16 %v255
        %v784 = vunpack.c.h.b16 %v255
        %v785 = vunpack.c.l.b16 %v256
        %v786 = vunpack.c.h.b16 %v256
        %v787 = vunpack.c.l.b16 %v257
        %v788 = vunpack.c.h.b16 %v257
        %v789 = vunpack.c.l.b16 %v258
        %v790 = vunpack.c.h.b16 %v258
        %v791 = vunpack.c.l.b16 %v259
        %v792 = vunpack.c.h.b16 %v259
        %v793 = vunpack.c.l.b16 %v260
        %v794 = vunpack.c.h.b16 %v260
        %v795 = vunpack.c.l.b16 %v261
        %v796 = vunpack.c.h.b16 %v261
        %v797 = vunpack.c.l.b16 %v262
        %v798 = vunpack.c.h.b16 %v262
        %v799 = vunpack.c.l.b16 %v263
        %v800 = vunpack.c.h.b16 %v263
        %v801 = vunpack.c.l.b16 %v264
        %v802 = vunpack.c.h.b16 %v264
        %v803 = vunpack.c.l.b16 %v265
        %v804 = vunpack.c.h.b16 %v265
        %v805 = vunpack.c.l.b16 %v266
        %v806 = vunpack.c.h.b16 %v266
        %v807 = vunpack.c.l.b16 %v267
        %v808 = vunpack.c.h.b16 %v267
        %v809 = vunpack.c.l.b16 %v268
        %v810 = vunpack.c.h.b16 %v268
        %v811 = vunpack.c.l.b16 %v269
        %v812 = vunpack.c.h.b16 %v269
        %v813 = vunpack.c.l.b16 %v270
        %v814 = vunpack.c.h.b16 %v270
        %v815 = vunpack.c.l.b16 %v271
        %v816 = vunpack.c.h.b16 %v271
        %v817 = vunpack.c.l.b16 %v272
        %v818 = vunpack.c.h.b16 %v272
        %v819 = vunpack.c.l.b16 %v273
        %v820 = vunpack.c.h.b16 %v273
        %v821 = vunpack.c.l.b16 %v274
        %v822 = vunpack.c.h.b16 %v274
        %v823 = vunpack.c.l.b16 %v275
        %v824 = vunpack.c.h.b16 %v275
        %v825 = vunpack.c.l.b16 %v276
        %v826 = vunpack.c.h.b16 %v276
        %v827 = vunpack.c.l.b16 %v277
        %v828 = vunpack.c.h.b16 %v277
        %v829 = vunpack.c.l.b16 %v278
        %v830 = vunpack.c.h.b16 %v278
        %v831 = vunpack.c.l.b16 %v279
        %v832 = vunpack.c.h.b16 %v279
        %v833 = vunpack.c.l.b16 %v280
        %v834 = vunpack.c.h.b16 %v280
        %v835 = vunpack.c.l.b16 %v281
        %v836 = vunpack.c.h.b16 %v281
        %v837 = vunpack.c.l.b16 %v282
        %v838 = vunpack.c.h.b16 %v282
        %v839 = vunpack.c.l.b16 %v283
        %v840 = vunpack.c.h.b16 %v283
        %v841 = vunpack.c.l.b16 %v284
        %v842 = vunpack.c.h.b16 %v284
        %v843 = vunpack.c.l.b16 %v285
        %v844 = vunpack.c.h.b16 %v285
        %v845 = vunpack.c.l.b16 %v286
        %v846 = vunpack.c.h.b16 %v286
        %v847 = vunpack.c.l.b16 %v287
        %v848 = vunpack.c.h.b16 %v287
        %v849 = vunpack.c.l.b16 %v288
        %v850 = vunpack.c.h.b16 %v288
        %v851 = vunpack.c.l.b16 %v289
        %v852 = vunpack.c.h.b16 %v289
        %v853 = vunpack.c.l.b16 %v290
        %v854 = vunpack.c.h.b16 %v290
        %v855 = vunpack.c.l.b16 %v291
        %v856 = vunpack.c.h.b16 %v291
        %v857 = vunpack.c.l.b16 %v292
        %v858 = vunpack.c.h.b16 %v292
        %v859 = vunpack.c.l.b16 %v293
        %v860 = vunpack.c.h.b16 %v293
        %v861 = vunpack.c.l.b16 %v294
        %v862 = vunpack.c.h.b16 %v294
        %v863 = vunpack.c.l.b16 %v295
        %v864 = vunpack.c.h.b16 %v295
        %v865 = vunpack.c.l.b16 %v296
        %v866 = vunpack.c.h.b16 %v296
        %v867 = vunpack.c.l.b16 %v297
        %v868 = vunpack.c.h.b16 %v297
        %v869 = vunpack.c.l.b16 %v298
        %v870 = vunpack.c.h.b16 %v298
        %v871 = vunpack.c.l.b16 %v299
        %v872 = vunpack.c.h.b16 %v299
        %v873 = vunpack.c.l.b16 %v300
        %v874 = vunpack.c.h.b16 %v300
        %v875 = vunpack.c.l.b16 %v301
        %v876 = vunpack.c.h.b16 %v301
        %v877 = vunpack.c.l.b16 %v302
        %v878 = vunpack.c.h.b16 %v302
        %v879 = vunpack.c.l.b16 %v303
        %v880 = vunpack.c.h.b16 %v303
        %v881 = vunpack.c.l.b16 %v304
        %v882 = vunpack.c.h.b16 %v304
        %v883 = vunpack.c.l.b16 %v305
        %v884 = vunpack.c.h.b16 %v305
        %v885 = vunpack.c.l.b16 %v306
        %v886 = vunpack.c.h.b16 %v306
        %v887 = vunpack.c.l.b16 %v307
        %v888 = vunpack.c.h.b16 %v307
        %v889 = vunpack.c.l.b16 %v308
        %v890 = vunpack.c.h.b16 %v308
        %v891 = vunpack.c.l.b16 %v309
        %v892 = vunpack.c.h.b16 %v309
        %v893 = vunpack.c.l.b16 %v310
        %v894 = vunpack.c.h.b16 %v310
        %v895 = vunpack.c.l.b16 %v311
        %v896 = vunpack.c.h.b16 %v311
        %v897 = vunpack.c.l.b16 %v312
        %v898 = vunpack.c.h.b16 %v312
        %v899 = vunpack.c.l.b16 %v313
        %v900 = vunpack.c.h.b16 %v313
        %v901 = vunpack.c.l.b16 %v314
        %v902 = vunpack.c.h.b16 %v314
        %v903 = vunpack.c.l.b16 %v315
        %v904 = vunpack.c.h.b16 %v315
        %v905 = vunpack.c.l.b16 %v316
        %v906 = vunpack.c.h.b16 %v316
        %v907 = vunpack.c.l.b16 %v317
        %v908 = vunpack.c.h.b16 %v317
        %v909 = vunpack.c.l.b16 %v318
        %v910 = vunpack.c.h.b16 %v318
        %v911 = vunpack.c.l.b16 %v319
        %v912 = vunpack.c.h.b16 %v319
        %v913 = vunpack.c.l.b16 %v320
        %v914 = vunpack.c.h.b16 %v320
        %v915 = vunpack.c.l.b16 %v321
        %v916 = vunpack.c.h.b16 %v321
        %v917 = vunpack.c.l.b16 %v322
        %v918 = vunpack.c.h.b16 %v322
        %v919 = vunpack.c.l.b16 %v323
        %v920 = vunpack.c.h.b16 %v323
        %v921 = vunpack.c.l.b16 %v324
        %v922 = vunpack.c.h.b16 %v324
        %v923 = vunpack.c.l.b16 %v325
        %v924 = vunpack.c.h.b16 %v325
        %v925 = vunpack.c.l.b16 %v326
        %v926 = vunpack.c.h.b16 %v326
        %v927 = vpack.c.b16 %v597, %v591
        %v928 = vpack.c.b16 %v598, %v592
        %v929 = vpack.c.b16 %v599, %v593
        %v930 = vpack.c.b16 %v600, %v594
        %v931 = vpack.c.b16 %v601, %v595
        %v932 = vpack.c.b16 %v602, %v596
        %v933 = vpack.c.b16 %v609, %v603
        %v934 = vpack.c.b16 %v610, %v604
        %v935 = vpack.c.b16 %v611, %v605
        %v936 = vpack.c.b16 %v612, %v606
        %v937 = vpack.c.b16 %v613, %v607
        %v938 = vpack.c.b16 %v614, %v608
        %v939 = vpack.c.b16 %v621, %v615
        %v940 = vpack.c.b16 %v622, %v616
        %v941 = vpack.c.b16 %v623, %v617
        %v942 = vpack.c.b16 %v624, %v618
        %v943 = vpack.c.b16 %v625, %v619
        %v944 = vpack.c.b16 %v626, %v620
        %v945 = vpack.c.b16 %v633, %v627
        %v946 = vpack.c.b16 %v634, %v628
        %v947 = vpack.c.b16 %v635, %v629
        %v948 = vpack.c.b16 %v636, %v630
        %v949 = vpack.c.b16 %v637, %v631
        %v950 = vpack.c.b16 %v638, %v632
        %v951 = vpack.c.b16 %v645, %v639
        %v952 = vpack.c.b16 %v646, %v640
        %v953 = vpack.c.b16 %v647, %v641
        %v954 = vpack.c.b16 %v648, %v642
        %v955 = vpack.c.b16 %v649, %v643
        %v956 = vpack.c.b16 %v650, %v644
        %v957 = vpack.c.b16 %v657, %v651
        %v958 = vpack.c.b16 %v658, %v652
        %v959 = vpack.c.b16 %v659, %v653
        %v960 = vpack.c.b16 %v660, %v654
        %v961 = vpack.c.b16 %v661, %v655
        %v962 = vpack.c.b16 %v662, %v656
        %v963 = vpack.c.b16 %v669, %v663
        %v964 = vpack.c.b16 %v670, %v664
        %v965 = vpack.c.b16 %v671, %v665
        %v966 = vpack.c.b16 %v672, %v666
        %v967 = vpack.c.b16 %v673, %v667
        %v968 = vpack.c.b16 %v674, %v668
        %v969 = vpack.c.b16 %v681, %v675
        %v970 = vpack.c.b16 %v682, %v676
        %v971 = vpack.c.b16 %v683, %v677
        %v972 = vpack.c.b16 %v684, %v678
        %v973 = vpack.c.b16 %v685, %v679
        %v974 = vpack.c.b16 %v686, %v680
        %v975 = vpack.c.b16 %v693, %v687
        %v976 = vpack.c.b16 %v694, %v688
        %v977 = vpack.c.b16 %v695, %v689
        %v978 = vpack.c.b16 %v696, %v690
        %v979 = vpack.c.b16 %v697, %v691
        %v980 = vpack.c.b16 %v698, %v692
        %v981 = vpack.c.b16 %v705, %v699
        %v982 = vpack.c.b16 %v706, %v700
        %v983 = vpack.c.b16 %v707, %v701
        %v984 = vpack.c.b16 %v708, %v702
        %v985 = vpack.c.b16 %v709, %v703
        %v986 = vpack.c.b16 %v710, %v704
        %v987 = vpack.c.b16 %v717, %v711
        %v988 = vpack.c.b16 %v718, %v712
        %v989 = vpack.c.b16 %v719, %v713
        %v990 = vpack.c.b16 %v720, %v714
        %v991 = vpack.c.b16 %v721, %v715
        %v992 = vpack.c.b16 %v722, %v716
        %v993 = vpack.c.b16 %v729, %v723
        %v994 = vpack.c.b16 %v730, %v724
        %v995 = vpack.c.b16 %v731, %v725
        %v996 = vpack.c.b16 %v732, %v726
        %v997 = vpack.c.b16 %v733, %v727
        %v998 = vpack.c.b16 %v734, %v728
        %v999 = vpack.c.b16 %v741, %v735
        %v1000 = vpack.c.b16 %v742, %v736
        %v1001 = vpack.c.b16 %v743, %v737
        %v1002 = vpack.c.b16 %v744, %v738
        %v1003 = vpack.c.b16 %v745, %v739
        %v1004 = vpack.c.b16 %v746, %v740
        %v1005 = vpack.c.b16 %v753, %v747
        %v1006 = vpack.c.b16 %v754, %v748
        %v1007 = vpack.c.b16 %v755, %v749
        %v1008 = vpack.c.b16 %v756, %v750
        %v1009 = vpack.c.b16 %v757, %v751
        %v1010 = vpack.c.b16 %v758, %v752
        %v1011 = vpack.c.b16 %v765, %v759
        %v1012 = vpack.c.b16 %v766, %v760
        %v1013 = vpack.c.b16 %v767, %v761
        %v1014 = vpack.c.b16 %v768, %v762
        %v1015 = vpack.c.b16 %v769, %v763
        %v1016 = vpack.c.b16 %v770, %v764
        %v1017 = vpack.c.b16 %v777, %v771
        %v1018 = vpack.c.b16 %v778, %v772
        %v1019 = vpack.c.b16 %v779, %v773
        %v1020 = vpack.c.b16 %v780, %v774
        %v1021 = vpack.c.b16 %v781, %v775
        %v1022 = vpack.c.b16 %v782, %v776
        %v1023 = vpack.c.b16 %v789, %v783
        %v1024 = vpack.c.b16 %v790, %v784
        %v1025 = vpack.c.b16 %v791, %v785
        %v1026 = vpack.c.b16 %v792, %v786
        %v1027 = vpack.c.b16 %v793, %v787
        %v1028 = vpack.c.b16 %v794, %v788
        %v1029 = vpack.c.b16 %v801, %v795
        %v1030 = vpack.c.b16 %v802, %v796
        %v1031 = vpack.c.b16 %v803, %v797
        %v1032 = vpack.c.b16 %v804, %v798
        %v1033 = vpack.c.b16 %v805, %v799
        %v1034 = vpack.c.b16 %v806, %v800
        %v1035 = vpack.c.b16 %v813, %v807
        %v1036 = vpack.c.b16 %v814, %v808
        %v1037 = vpack.c.b16 %v815, %v809
        %v1038 = vpack.c.b16 %v816, %v810
        %v1039 = vpack.c.b16 %v817, %v811
        %v1040 = vpack.c.b16 %v818, %v812
        %v1041 = vpack.c.b16 %v825, %v819
        %v1042 = vpack.c.b16 %v826, %v820
        %v1043 = vpack.c.b16 %v827, %v821
        %v1044 = vpack.c.b16 %v828, %v822
        %v1045 = vpack.c.b16 %v829, %v823
        %v1046 = vpack.c.b16 %v830, %v824
        %v1047 = vpack.c.b16 %v837, %v831
        %v1048 = vpack.c.b16 %v838, %v832
        %v1049 = vpack.c.b16 %v839, %v833
        %v1050 = vpack.c.b16 %v840, %v834
        %v1051 = vpack.c.b16 %v841, %v835
        %v1052 = vpack.c.b16 %v842, %v836
        %v1053 = vpack.c.b16 %v849, %v843
        %v1054 = vpack.c.b16 %v850, %v844
        %v1055 = vpack.c.b16 %v851, %v845
        %v1056 = vpack.c.b16 %v852, %v846
        %v1057 = vpack.c.b16 %v853, %v847
        %v1058 = vpack.c.b16 %v854, %v848
        %v1059 = vpack.c.b16 %v861, %v855
        %v1060 = vpack.c.b16 %v862, %v856
        %v1061 = vpack.c.b16 %v863, %v857
        %v1062 = vpack.c.b16 %v864, %v858
        %v1063 = vpack.c.b16 %v865, %v859
        %v1064 = vpack.c.b16 %v866, %v860
        %v1065 = vpack.c.b16 %v873, %v867
        %v1066 = vpack.c.b16 %v874, %v868
        %v1067 = vpack.c.b16 %v875, %v869
        %v1068 = vpack.c.b16 %v876, %v870
        %v1069 = vpack.c.b16 %v877, %v871
        %v1070 = vpack.c.b16 %v878, %v872
        %v1071 = vpack.c.b16 %v885, %v879
        %v1072 = vpack.c.b16 %v886, %v880
        %v1073 = vpack.c.b16 %v887, %v881
        %v1074 = vpack.c.b16 %v888, %v882
        %v1075 = vpack.c.b16 %v889, %v883
        %v1076 = vpack.c.b16 %v890, %v884
        %v1077 = vpack.c.b16 %v897, %v891
        %v1078 = vpack.c.b16 %v898, %v892
        %v1079 = vpack.c.b16 %v899, %v893
        %v1080 = vpack.c.b16 %v900, %v894
        %v1081 = vpack.c.b16 %v901, %v895
        %v1082 = vpack.c.b16 %v902, %v896
        %v1083 = vpack.c.b16 %v909, %v903
        %v1084 = vpack.c.b16 %v910, %v904
        %v1085 = vpack.c.b16 %v911, %v905
        %v1086 = vpack.c.b16 %v912, %v906
        %v1087 = vpack.c.b16 %v913, %v907
        %v1088 = vpack.c.b16 %v914, %v908
        %v1089 = vpack.c.b16 %v921, %v915
        %v1090 = vpack.c.b16 %v922, %v916
        %v1091 = vpack.c.b16 %v923, %v917
        %v1092 = vpack.c.b16 %v924, %v918
        %v1093 = vpack.c.b16 %v925, %v919
        %v1094 = vpack.c.b16 %v926, %v920
        %v1359 = vunpack.c.l.b16 %v327
        %v1360 = vunpack.c.h.b16 %v327
        %v1361 = vunpack.c.l.b16 %v328
        %v1362 = vunpack.c.h.b16 %v328
        %v1363 = vunpack.c.l.b16 %v329
        %v1364 = vunpack.c.h.b16 %v329
        %v1365 = vunpack.c.l.b16 %v330
        %v1366 = vunpack.c.h.b16 %v330
        %v1367 = vunpack.c.l.b16 %v331
        %v1368 = vunpack.c.h.b16 %v331
        %v1369 = vunpack.c.l.b16 %v332
        %v1370 = vunpack.c.h.b16 %v332
        %v1371 = vunpack.c.l.b16 %v333
        %v1372 = vunpack.c.h.b16 %v333
        %v1373 = vunpack.c.l.b16 %v334
        %v1374 = vunpack.c.h.b16 %v334
        %v1375 = vunpack.c.l.b16 %v335
        %v1376 = vunpack.c.h.b16 %v335
        %v1377 = vunpack.c.l.b16 %v336
        %v1378 = vunpack.c.h.b16 %v336
        %v1379 = vunpack.c.l.b16 %v337
        %v1380 = vunpack.c.h.b16 %v337
        %v1381 = vunpack.c.l.b16 %v338
        %v1382 = vunpack.c.h.b16 %v338
        %v1383 = vunpack.c.l.b16 %v339
        %v1384 = vunpack.c.h.b16 %v339
        %v1385 = vunpack.c.l.b16 %v340
        %v1386 = vunpack.c.h.b16 %v340
        %v1387 = vunpack.c.l.b16 %v341
        %v1388 = vunpack.c.h.b16 %v341
        %v1389 = vunpack.c.l.b16 %v342
        %v1390 = vunpack.c.h.b16 %v342
        %v1391 = vunpack.c.l.b16 %v343
        %v1392 = vunpack.c.h.b16 %v343
        %v1393 = vunpack.c.l.b16 %v344
        %v1394 = vunpack.c.h.b16 %v344
        %v1395 = vunpack.c.l.b16 %v345
        %v1396 = vunpack.c.h.b16 %v345
        %v1397 = vunpack.c.l.b16 %v346
        %v1398 = vunpack.c.h.b16 %v346
        %v1399 = vunpack.c.l.b16 %v347
        %v1400 = vunpack.c.h.b16 %v347
        %v1401 = vunpack.c.l.b16 %v348
        %v1402 = vunpack.c.h.b16 %v348
        %v1403 = vunpack.c.l.b16 %v349
        %v1404 = vunpack.c.h.b16 %v349
        %v1405 = vunpack.c.l.b16 %v350
        %v1406 = vunpack.c.h.b16 %v350
        %v1407 = vunpack.c.l.b16 %v351
        %v1408 = vunpack.c.h.b16 %v351
        %v1409 = vunpack.c.l.b16 %v352
        %v1410 = vunpack.c.h.b16 %v352
        %v1411 = vunpack.c.l.b16 %v353
        %v1412 = vunpack.c.h.b16 %v353
        %v1413 = vunpack.c.l.b16 %v354
        %v1414 = vunpack.c.h.b16 %v354
        %v1415 = vunpack.c.l.b16 %v355
        %v1416 = vunpack.c.h.b16 %v355
        %v1417 = vunpack.c.l.b16 %v356
        %v1418 = vunpack.c.h.b16 %v356
        %v1419 = vunpack.c.l.b16 %v357
        %v1420 = vunpack.c.h.b16 %v357
        %v1421 = vunpack.c.l.b16 %v358
        %v1422 = vunpack.c.h.b16 %v358
        %v1423 = vunpack.c.l.b16 %v359
        %v1424 = vunpack.c.h.b16 %v359
        %v1425 = vunpack.c.l.b16 %v360
        %v1426 = vunpack.c.h.b16 %v360
        %v1427 = vunpack.c.l.b16 %v361
        %v1428 = vunpack.c.h.b16 %v361
        %v1429 = vunpack.c.l.b16 %v362
        %v1430 = vunpack.c.h.b16 %v362
        %v1431 = vunpack.c.l.b16 %v363
        %v1432 = vunpack.c.h.b16 %v363
        %v1433 = vunpack.c.l.b16 %v364
        %v1434 = vunpack.c.h.b16 %v364
        %v1435 = vunpack.c.l.b16 %v365
        %v1436 = vunpack.c.h.b16 %v365
        %v1437 = vunpack.c.l.b16 %v366
        %v1438 = vunpack.c.h.b16 %v366
        %v1439 = vunpack.c.l.b16 %v367
        %v1440 = vunpack.c.h.b16 %v367
        %v1441 = vunpack.c.l.b16 %v368
        %v1442 = vunpack.c.h.b16 %v368
        %v1443 = vunpack.c.l.b16 %v369
        %v1444 = vunpack.c.h.b16 %v369
        %v1445 = vunpack.c.l.b16 %v370
        %v1446 = vunpack.c.h.b16 %v370
        %v1447 = vunpack.c.l.b16 %v371
        %v1448 = vunpack.c.h.b16 %v371
        %v1449 = vunpack.c.l.b16 %v372
        %v1450 = vunpack.c.h.b16 %v372
        %v1451 = vunpack.c.l.b16 %v373
        %v1452 = vunpack.c.h.b16 %v373
        %v1453 = vunpack.c.l.b16 %v374
        %v1454 = vunpack.c.h.b16 %v374
        %v1455 = vunpack.c.l.b16 %v375
        %v1456 = vunpack.c.h.b16 %v375
        %v1457 = vunpack.c.l.b16 %v376
        %v1458 = vunpack.c.h.b16 %v376
        %v1459 = vunpack.c.l.b16 %v377
        %v1460 = vunpack.c.h.b16 %v377
        %v1461 = vunpack.c.l.b16 %v378
        %v1462 = vunpack.c.h.b16 %v378
        %v1463 = vunpack.c.l.b16 %v379
        %v1464 = vunpack.c.h.b16 %v379
        %v1465 = vunpack.c.l.b16 %v380
        %v1466 = vunpack.c.h.b16 %v380
        %v1467 = vunpack.c.l.b16 %v381
        %v1468 = vunpack.c.h.b16 %v381
        %v1469 = vunpack.c.l.b16 %v382
        %v1470 = vunpack.c.h.b16 %v382
        %v1471 = vunpack.c.l.b16 %v383
        %v1472 = vunpack.c.h.b16 %v383
        %v1473 = vunpack.c.l.b16 %v384
        %v1474 = vunpack.c.h.b16 %v384
        %v1475 = vunpack.c.l.b16 %v385
        %v1476 = vunpack.c.h.b16 %v385
        %v1477 = vunpack.c.l.b16 %v386
        %v1478 = vunpack.c.h.b16 %v386
        %v1479 = vunpack.c.l.b16 %v387
        %v1480 = vunpack.c.h.b16 %v387
        %v1481 = vunpack.c.l.b16 %v388
        %v1482 = vunpack.c.h.b16 %v388
        %v1483 = vunpack.c.l.b16 %v389
        %v1484 = vunpack.c.h.b16 %v389
        %v1485 = vunpack.c.l.b16 %v390
        %v1486 = vunpack.c.h.b16 %v390
        %v1487 = vunpack.c.l.b16 %v391
        %v1488 = vunpack.c.h.b16 %v391
        %v1489 = vunpack.c.l.b16 %v392
        %v1490 = vunpack.c.h.b16 %v392
        %v1491 = vunpack.c.l.b16 %v393
        %v1492 = vunpack.c.h.b16 %v393
        %v1493 = vunpack.c.l.b16 %v394
        %v1494 = vunpack.c.h.b16 %v394
        %v1495 = vunpack.c.l.b16 %v395
        %v1496 = vunpack.c.h.b16 %v395
        %v1497 = vunpack.c.l.b16 %v396
        %v1498 = vunpack.c.h.b16 %v396
        %v1499 = vunpack.c.l.b16 %v397
        %v1500 = vunpack.c.h.b16 %v397
        %v1501 = vunpack.c.l.b16 %v398
        %v1502 = vunpack.c.h.b16 %v398
        %v1503 = vunpack.c.l.b16 %v399
        %v1504 = vunpack.c.h.b16 %v399
        %v1505 = vunpack.c.l.b16 %v400
        %v1506 = vunpack.c.h.b16 %v400
        %v1507 = vunpack.c.l.b16 %v401
        %v1508 = vunpack.c.h.b16 %v401
        %v1509 = vunpack.c.l.b16 %v402
        %v1510 = vunpack.c.h.b16 %v402
        %v1511 = vunpack.c.l.b16 %v403
        %v1512 = vunpack.c.h.b16 %v403
        %v1513 = vunpack.c.l.b16 %v404
        %v1514 = vunpack.c.h.b16 %v404
        %v1515 = vunpack.c.l.b16 %v405
        %v1516 = vunpack.c.h.b16 %v405
        %v1517 = vunpack.c.l.b16 %v406
        %v1518 = vunpack.c.h.b16 %v406
        %v1519 = vunpack.c.l.b16 %v407
        %v1520 = vunpack.c.h.b16 %v407
        %v1521 = vunpack.c.l.b16 %v408
        %v1522 = vunpack.c.h.b16 %v408
        %v1523 = vunpack.c.l.b16 %v409
        %v1524 = vunpack.c.h.b16 %v409
        %v1525 = vunpack.c.l.b16 %v410
        %v1526 = vunpack.c.h.b16 %v410
        %v1527 = vunpack.c.l.b16 %v411
        %v1528 = vunpack.c.h.b16 %v411
        %v1529 = vunpack.c.l.b16 %v412
        %v1530 = vunpack.c.h.b16 %v412
        %v1531 = vunpack.c.l.b16 %v413
        %v1532 = vunpack.c.h.b16 %v413
        %v1533 = vunpack.c.l.b16 %v414
        %v1534 = vunpack.c.h.b16 %v414
        %v1535 = vunpack.c.l.b16 %v415
        %v1536 = vunpack.c.h.b16 %v415
        %v1537 = vunpack.c.l.b16 %v416
        %v1538 = vunpack.c.h.b16 %v416
        %v1539 = vunpack.c.l.b16 %v417
        %v1540 = vunpack.c.h.b16 %v417
        %v1541 = vunpack.c.l.b16 %v418
        %v1542 = vunpack.c.h.b16 %v418
        %v1543 = vunpack.c.l.b16 %v419
        %v1544 = vunpack.c.h.b16 %v419
        %v1545 = vunpack.c.l.b16 %v420
        %v1546 = vunpack.c.h.b16 %v420
        %v1547 = vunpack.c.l.b16 %v421
        %v1548 = vunpack.c.h.b16 %v421
        %v1549 = vunpack.c.l.b16 %v422
        %v1550 = vunpack.c.h.b16 %v422
        %v1551 = vpack.c.b16 %v1361, %v1359
        %v1552 = vpack.c.b16 %v1362, %v1360
        %v1553 = vpack.c.b16 %v1365, %v1363
        %v1554 = vpack.c.b16 %v1366, %v1364
        %v1555 = vpack.c.b16 %v1369, %v1367
        %v1556 = vpack.c.b16 %v1370, %v1368
        %v1557 = vpack.c.b16 %v1373, %v1371
        %v1558 = vpack.c.b16 %v1374, %v1372
        %v1559 = vpack.c.b16 %v1377, %v1375
        %v1560 = vpack.c.b16 %v1378, %v1376
        %v1561 = vpack.c.b16 %v1381, %v1379
        %v1562 = vpack.c.b16 %v1382, %v1380
        %v1563 = vpack.c.b16 %v1385, %v1383
        %v1564 = vpack.c.b16 %v1386, %v1384
        %v1565 = vpack.c.b16 %v1389, %v1387
        %v1566 = vpack.c.b16 %v1390, %v1388
        %v1567 = vpack.c.b16 %v1393, %v1391
        %v1568 = vpack.c.b16 %v1394, %v1392
        %v1569 = vpack.c.b16 %v1397, %v1395
        %v1570 = vpack.c.b16 %v1398, %v1396
        %v1571 = vpack.c.b16 %v1401, %v1399
        %v1572 = vpack.c.b16 %v1402, %v1400
        %v1573 = vpack.c.b16 %v1405, %v1403
        %v1574 = vpack.c.b16 %v1406, %v1404
        %v1575 = vpack.c.b16 %v1409, %v1407
        %v1576 = vpack.c.b16 %v1410, %v1408
        %v1577 = vpack.c.b16 %v1413, %v1411
        %v1578 = vpack.c.b16 %v1414, %v1412
        %v1579 = vpack.c.b16 %v1417, %v1415
        %v1580 = vpack.c.b16 %v1418, %v1416
        %v1581 = vpack.c.b16 %v1421, %v1419
        %v1582 = vpack.c.b16 %v1422, %v1420
        %v1583 = vpack.c.b16 %v1425, %v1423
        %v1584 = vpack.c.b16 %v1426, %v1424
        %v1585 = vpack.c.b16 %v1429, %v1427
        %v1586 = vpack.c.b16 %v1430, %v1428
        %v1587 = vpack.c.b16 %v1433, %v1431
        %v1588 = vpack.c.b16 %v1434, %v1432
        %v1589 = vpack.c.b16 %v1437, %v1435
        %v1590 = vpack.c.b16 %v1438, %v1436
        %v1591 = vpack.c.b16 %v1441, %v1439
        %v1592 = vpack.c.b16 %v1442, %v1440
        %v1593 = vpack.c.b16 %v1445, %v1443
        %v1594 = vpack.c.b16 %v1446, %v1444
        %v1595 = vpack.c.b16 %v1449, %v1447
        %v1596 = vpack.c.b16 %v1450, %v1448
        %v1597 = vpack.c.b16 %v1453, %v1451
        %v1598 = vpack.c.b16 %v1454, %v1452
        %v1599 = vpack.c.b16 %v1457, %v1455
        %v1600 = vpack.c.b16 %v1458, %v1456
        %v1601 = vpack.c.b16 %v1461, %v1459
        %v1602 = vpack.c.b16 %v1462, %v1460
        %v1603 = vpack.c.b16 %v1465, %v1463
        %v1604 = vpack.c.b16 %v1466, %v1464
        %v1605 = vpack.c.b16 %v1469, %v1467
        %v1606 = vpack.c.b16 %v1470, %v1468
        %v1607 = vpack.c.b16 %v1473, %v1471
        %v1608 = vpack.c.b16 %v1474, %v1472
        %v1609 = vpack.c.b16 %v1477, %v1475
        %v1610 = vpack.c.b16 %v1478, %v1476
        %v1611 = vpack.c.b16 %v1481, %v1479
        %v1612 = vpack.c.b16 %v1482, %v1480
        %v1613 = vpack.c.b16 %v1485, %v1483
        %v1614 = vpack.c.b16 %v1486, %v1484
        %v1615 = vpack.c.b16 %v1489, %v1487
        %v1616 = vpack.c.b16 %v1490, %v1488
        %v1617 = vpack.c.b16 %v1493, %v1491
        %v1618 = vpack.c.b16 %v1494, %v1492
        %v1619 = vpack.c.b16 %v1497, %v1495
        %v1620 = vpack.c.b16 %v1498, %v1496
        %v1621 = vpack.c.b16 %v1501, %v1499
        %v1622 = vpack.c.b16 %v1502, %v1500
        %v1623 = vpack.c.b16 %v1505, %v1503
        %v1624 = vpack.c.b16 %v1506, %v1504
        %v1625 = vpack.c.b16 %v1509, %v1507
        %v1626 = vpack.c.b16 %v1510, %v1508
        %v1627 = vpack.c.b16 %v1513, %v1511
        %v1628 = vpack.c.b16 %v1514, %v1512
        %v1629 = vpack.c.b16 %v1517, %v1515
        %v1630 = vpack.c.b16 %v1518, %v1516
        %v1631 = vpack.c.b16 %v1521, %v1519
        %v1632 = vpack.c.b16 %v1522, %v1520
        %v1633 = vpack.c.b16 %v1525, %v1523
        %v1634 = vpack.c.b16 %v1526, %v1524
        %v1635 = vpack.c.b16 %v1529, %v1527
        %v1636 = vpack.c.b16 %v1530, %v1528
        %v1637 = vpack.c.b16 %v1533, %v1531
        %v1638 = vpack.c.b16 %v1534, %v1532
        %v1639 = vpack.c.b16 %v1537, %v1535
        %v1640 = vpack.c.b16 %v1538, %v1536
        %v1641 = vpack.c.b16 %v1541, %v1539
        %v1642 = vpack.c.b16 %v1542, %v1540
        %v1643 = vpack.c.b16 %v1545, %v1543
        %v1644 = vpack.c.b16 %v1546, %v1544
        %v1645 = vpack.c.b16 %v1549, %v1547
        %v1646 = vpack.c.b16 %v1550, %v1548
        %1743 = vmatprep.subr.bf16.mxu0 %v1552
        %1744 = vmatpush1.bf16.msra.mxu0 %v1551
        %1745 = vmatprep.subr.bf16.mxu0 %v1554
        %1746 = vmatpush1.bf16.msra.mxu0 %v1553
        %1747 = vmatprep.subr.bf16.mxu0 %v1556
        %1748 = vmatpush1.bf16.msra.mxu0 %v1555
        %1749 = vmatprep.subr.bf16.mxu0 %v1558
        %1750 = vmatpush1.bf16.msra.mxu0 %v1557
        %1751 = vmatprep.subr.bf16.mxu0 %v1560
        %1752 = vmatpush1.bf16.msra.mxu0 %v1559
        %1753 = vmatprep.subr.bf16.mxu0 %v1562
        %1754 = vmatpush1.bf16.msra.mxu0 %v1561
        %1755 = vmatprep.subr.bf16.mxu0 %v1564
        %1756 = vmatpush1.bf16.msra.mxu0 %v1563
        %1757 = vmatprep.subr.bf16.mxu0 %v1566
        %1758 = vmatpush1.bf16.msra.mxu0 %v1565
        %1759 = vmatprep.subr.bf16.mxu0 %v1568
        %1760 = vmatpush1.bf16.msra.mxu0 %v1567
        %1761 = vmatprep.subr.bf16.mxu0 %v1570
        %1762 = vmatpush1.bf16.msra.mxu0 %v1569
        %1763 = vmatprep.subr.bf16.mxu0 %v1572
        %1764 = vmatpush1.bf16.msra.mxu0 %v1571
        %1765 = vmatprep.subr.bf16.mxu0 %v1574
        %1766 = vmatpush1.bf16.msra.mxu0 %v1573
        %1767 = vmatprep.subr.bf16.mxu0 %v1576
        %1768 = vmatpush1.bf16.msra.mxu0 %v1575
        %1769 = vmatprep.subr.bf16.mxu0 %v1578
        %1770 = vmatpush1.bf16.msra.mxu0 %v1577
        %1771 = vmatprep.subr.bf16.mxu0 %v1580
        %1772 = vmatpush1.bf16.msra.mxu0 %v1579
        %1773 = vmatprep.subr.bf16.mxu0 %v1582
        %1774 = vmatpush1.bf16.msra.mxu0 %v1581
        %1775 = vmatprep.mubr.bf16.mxu0 %v928
        %1776 = vmatmul.mubr.bf16.gmra.mrb[0].mxu0 %v927
        %v1777 = vpop.f32.mrb[0].mxu0
        %v1778 = vadd.f32 0.0, %v1777
        %v1779 = vpop.f32.mrb[0].mxu0
        %v1780 = vadd.f32 0.0, %v1779
        %v1781 = vpop.f32.mrb[0].mxu0
        %v1782 = vadd.f32 0.0, %v1781
        %v1783 = vpop.f32.mrb[0].mxu0
        %v1784 = vadd.f32 0.0, %v1783
        %1785 = vmatprep.mubr.bf16.mxu0 %v934
        %1786 = vmatmul.mubr.bf16.gmra.mrb[0].mxu0 %v933
        %v1787 = vpop.f32.mrb[0].mxu0
        %v1788 = vadd.f32 0.0, %v1787
        %v1789 = vpop.f32.mrb[0].mxu0
        %v1790 = vadd.f32 0.0, %v1789
        %v1791 = vpop.f32.mrb[0].mxu0
        %v1792 = vadd.f32 0.0, %v1791
        %v1793 = vpop.f32.mrb[0].mxu0
        %v1794 = vadd.f32 0.0, %v1793
        %1795 = vmatprep.mubr.bf16.mxu0 %v940
        %1796 = vmatmul.mubr.bf16.gmra.mrb[0].mxu0 %v939
        %v1797 = vpop.f32.mrb[0].mxu0
        %v1798 = vadd.f32 0.0, %v1797
        %v1799 = vpop.f32.mrb[0].mxu0
        %v1800 = vadd.f32 0.0, %v1799
        %v1801 = vpop.f32.mrb[0].mxu0
        %v1802 = vadd.f32 0.0, %v1801
        %v1803 = vpop.f32.mrb[0].mxu0
        %v1804 = vadd.f32 0.0, %v1803
        %1805 = vmatprep.mubr.bf16.mxu0 %v946
        %1806 = vmatmul.mubr.bf16.gmra.mrb[0].mxu0 %v945
        %v1807 = vpop.f32.mrb[0].mxu0
        %v1808 = vadd.f32 0.0, %v1807
        %v1809 = vpop.f32.mrb[0].mxu0
        %v1810 = vadd.f32 0.0, %v1809
        %v1811 = vpop.f32.mrb[0].mxu0
        %v1812 = vadd.f32 0.0, %v1811
        %v1813 = vpop.f32.mrb[0].mxu0
        %v1814 = vadd.f32 0.0, %v1813
        %1815 = vmatprep.mubr.bf16.mxu0 %v952
        %1816 = vmatmul.mubr.bf16.gmra.mrb[0].mxu0 %v951
        %v1817 = vpop.f32.mrb[0].mxu0
        %v1818 = vadd.f32 0.0, %v1817
        %v1819 = vpop.f32.mrb[0].mxu0
        %v1820 = vadd.f32 0.0, %v1819
        %v1821 = vpop.f32.mrb[0].mxu0
        %v1822 = vadd.f32 0.0, %v1821
        %v1823 = vpop.f32.mrb[0].mxu0
        %v1824 = vadd.f32 0.0, %v1823
        %1825 = vmatprep.mubr.bf16.mxu0 %v958
        %1826 = vmatmul.mubr.bf16.gmra.mrb[0].mxu0 %v957
        %v1827 = vpop.f32.mrb[0].mxu0
        %v1828 = vadd.f32 0.0, %v1827
        %v1829 = vpop.f32.mrb[0].mxu0
        %v1830 = vadd.f32 0.0, %v1829
        %v1831 = vpop.f32.mrb[0].mxu0
        %v1832 = vadd.f32 0.0, %v1831
        %v1833 = vpop.f32.mrb[0].mxu0
        %v1834 = vadd.f32 0.0, %v1833
        %1835 = vmatprep.mubr.bf16.mxu0 %v964
        %1836 = vmatmul.mubr.bf16.gmra.mrb[0].mxu0 %v963
        %v1837 = vpop.f32.mrb[0].mxu0
        %v1838 = vadd.f32 0.0, %v1837
        %v1839 = vpop.f32.mrb[0].mxu0
        %v1840 = vadd.f32 0.0, %v1839
        %v1841 = vpop.f32.mrb[0].mxu0
        %v1842 = vadd.f32 0.0, %v1841
        %v1843 = vpop.f32.mrb[0].mxu0
        %v1844 = vadd.f32 0.0, %v1843
        %1845 = vmatprep.mubr.bf16.mxu0 %v970
        %1846 = vmatmul.mubr.bf16.gmra.mrb[0].mxu0 %v969
        %v1847 = vpop.f32.mrb[0].mxu0
        %v1848 = vadd.f32 0.0, %v1847
        %v1849 = vpop.f32.mrb[0].mxu0
        %v1850 = vadd.f32 0.0, %v1849
        %v1851 = vpop.f32.mrb[0].mxu0
        %v1852 = vadd.f32 0.0, %v1851
        %v1853 = vpop.f32.mrb[0].mxu0
        %v1854 = vadd.f32 0.0, %v1853
        %1855 = vmatprep.mubr.bf16.mxu0 %v976
        %1856 = vmatmul.mubr.bf16.gmra.mrb[0].mxu0 %v975
        %v1857 = vpop.f32.mrb[0].mxu0
        %v1858 = vadd.f32 0.0, %v1857
        %v1859 = vpop.f32.mrb[0].mxu0
        %v1860 = vadd.f32 0.0, %v1859
        %v1861 = vpop.f32.mrb[0].mxu0
        %v1862 = vadd.f32 0.0, %v1861
        %v1863 = vpop.f32.mrb[0].mxu0
        %v1864 = vadd.f32 0.0, %v1863
        %1865 = vmatprep.mubr.bf16.mxu0 %v982
        %1866 = vmatmul.mubr.bf16.gmra.mrb[0].mxu0 %v981
        %v1867 = vpop.f32.mrb[0].mxu0
        %v1868 = vadd.f32 0.0, %v1867
        %v1869 = vpop.f32.mrb[0].mxu0
        %v1870 = vadd.f32 0.0, %v1869
        %v1871 = vpop.f32.mrb[0].mxu0
        %v1872 = vadd.f32 0.0, %v1871
        %v1873 = vpop.f32.mrb[0].mxu0
        %v1874 = vadd.f32 0.0, %v1873
        %1875 = vmatprep.mubr.bf16.mxu0 %v988
        %1876 = vmatmul.mubr.bf16.gmra.mrb[0].mxu0 %v987
        %v1877 = vpop.f32.mrb[0].mxu0
        %v1878 = vadd.f32 0.0, %v1877
        %v1879 = vpop.f32.mrb[0].mxu0
        %v1880 = vadd.f32 0.0, %v1879
        %v1881 = vpop.f32.mrb[0].mxu0
        %v1882 = vadd.f32 0.0, %v1881
        %v1883 = vpop.f32.mrb[0].mxu0
        %v1884 = vadd.f32 0.0, %v1883
        %1885 = vmatprep.mubr.bf16.mxu0 %v994
        %1886 = vmatmul.mubr.bf16.gmra.mrb[0].mxu0 %v993
        %v1887 = vpop.f32.mrb[0].mxu0
        %v1888 = vadd.f32 0.0, %v1887
        %v1889 = vpop.f32.mrb[0].mxu0
        %v1890 = vadd.f32 0.0, %v1889
        %v1891 = vpop.f32.mrb[0].mxu0
        %v1892 = vadd.f32 0.0, %v1891
        %v1893 = vpop.f32.mrb[0].mxu0
        %v1894 = vadd.f32 0.0, %v1893
        %1895 = vmatprep.mubr.bf16.mxu0 %v1000
        %1896 = vmatmul.mubr.bf16.gmra.mrb[0].mxu0 %v999
        %v1897 = vpop.f32.mrb[0].mxu0
        %v1898 = vadd.f32 0.0, %v1897
        %v1899 = vpop.f32.mrb[0].mxu0
        %v1900 = vadd.f32 0.0, %v1899
        %v1901 = vpop.f32.mrb[0].mxu0
        %v1902 = vadd.f32 0.0, %v1901
        %v1903 = vpop.f32.mrb[0].mxu0
        %v1904 = vadd.f32 0.0, %v1903
        %1905 = vmatprep.mubr.bf16.mxu0 %v1006
        %1906 = vmatmul.mubr.bf16.gmra.mrb[0].mxu0 %v1005
        %v1907 = vpop.f32.mrb[0].mxu0
        %v1908 = vadd.f32 0.0, %v1907
        %v1909 = vpop.f32.mrb[0].mxu0
        %v1910 = vadd.f32 0.0, %v1909
        %v1911 = vpop.f32.mrb[0].mxu0
        %v1912 = vadd.f32 0.0, %v1911
        %v1913 = vpop.f32.mrb[0].mxu0
        %v1914 = vadd.f32 0.0, %v1913
        %1915 = vmatprep.mubr.bf16.mxu0 %v1012
        %1916 = vmatmul.mubr.bf16.gmra.mrb[0].mxu0 %v1011
        %v1917 = vpop.f32.mrb[0].mxu0
        %v1918 = vadd.f32 0.0, %v1917
        %v1919 = vpop.f32.mrb[0].mxu0
        %v1920 = vadd.f32 0.0, %v1919
        %v1921 = vpop.f32.mrb[0].mxu0
        %v1922 = vadd.f32 0.0, %v1921
        %v1923 = vpop.f32.mrb[0].mxu0
        %v1924 = vadd.f32 0.0, %v1923
        %1925 = vmatprep.mubr.bf16.mxu0 %v1018
        %1926 = vmatmul.mubr.bf16.gmra.mrb[0].mxu0 %v1017
        %v1927 = vpop.f32.mrb[0].mxu0
        %v1928 = vadd.f32 0.0, %v1927
        %v1929 = vpop.f32.mrb[0].mxu0
        %v1930 = vadd.f32 0.0, %v1929
        %v1931 = vpop.f32.mrb[0].mxu0
        %v1932 = vadd.f32 0.0, %v1931
        %v1933 = vpop.f32.mrb[0].mxu0
        %v1934 = vadd.f32 0.0, %v1933
        %1935 = vmatprep.mubr.bf16.mxu0 %v1024
        %1936 = vmatmul.mubr.bf16.gmra.mrb[0].mxu0 %v1023
        %v1937 = vpop.f32.mrb[0].mxu0
        %v1938 = vadd.f32 0.0, %v1937
        %v1939 = vpop.f32.mrb[0].mxu0
        %v1940 = vadd.f32 0.0, %v1939
        %v1941 = vpop.f32.mrb[0].mxu0
        %v1942 = vadd.f32 0.0, %v1941
        %v1943 = vpop.f32.mrb[0].mxu0
        %v1944 = vadd.f32 0.0, %v1943
        %1945 = vmatprep.mubr.bf16.mxu0 %v1030
        %1946 = vmatmul.mubr.bf16.gmra.mrb[0].mxu0 %v1029
        %v1947 = vpop.f32.mrb[0].mxu0
        %v1948 = vadd.f32 0.0, %v1947
        %v1949 = vpop.f32.mrb[0].mxu0
        %v1950 = vadd.f32 0.0, %v1949
        %v1951 = vpop.f32.mrb[0].mxu0
        %v1952 = vadd.f32 0.0, %v1951
        %v1953 = vpop.f32.mrb[0].mxu0
        %v1954 = vadd.f32 0.0, %v1953
        %1955 = vmatprep.mubr.bf16.mxu0 %v1036
        %1956 = vmatmul.mubr.bf16.gmra.mrb[0].mxu0 %v1035
        %v1957 = vpop.f32.mrb[0].mxu0
        %v1958 = vadd.f32 0.0, %v1957
        %v1959 = vpop.f32.mrb[0].mxu0
        %v1960 = vadd.f32 0.0, %v1959
        %v1961 = vpop.f32.mrb[0].mxu0
        %v1962 = vadd.f32 0.0, %v1961
        %v1963 = vpop.f32.mrb[0].mxu0
        %v1964 = vadd.f32 0.0, %v1963
        %1965 = vmatprep.mubr.bf16.mxu0 %v1042
        %1966 = vmatmul.mubr.bf16.gmra.mrb[0].mxu0 %v1041
        %v1967 = vpop.f32.mrb[0].mxu0
        %v1968 = vadd.f32 0.0, %v1967
        %v1969 = vpop.f32.mrb[0].mxu0
        %v1970 = vadd.f32 0.0, %v1969
        %v1971 = vpop.f32.mrb[0].mxu0
        %v1972 = vadd.f32 0.0, %v1971
        %v1973 = vpop.f32.mrb[0].mxu0
        %v1974 = vadd.f32 0.0, %v1973
        %1975 = vmatprep.mubr.bf16.mxu0 %v1048
        %1976 = vmatmul.mubr.bf16.gmra.mrb[0].mxu0 %v1047
        %v1977 = vpop.f32.mrb[0].mxu0
        %v1978 = vadd.f32 0.0, %v1977
        %v1979 = vpop.f32.mrb[0].mxu0
        %v1980 = vadd.f32 0.0, %v1979
        %v1981 = vpop.f32.mrb[0].mxu0
        %v1982 = vadd.f32 0.0, %v1981
        %v1983 = vpop.f32.mrb[0].mxu0
        %v1984 = vadd.f32 0.0, %v1983
        %1985 = vmatprep.mubr.bf16.mxu0 %v1054
        %1986 = vmatmul.mubr.bf16.gmra.mrb[0].mxu0 %v1053
        %v1987 = vpop.f32.mrb[0].mxu0
        %v1988 = vadd.f32 0.0, %v1987
        %v1989 = vpop.f32.mrb[0].mxu0
        %v1990 = vadd.f32 0.0, %v1989
        %v1991 = vpop.f32.mrb[0].mxu0
        %v1992 = vadd.f32 0.0, %v1991
        %v1993 = vpop.f32.mrb[0].mxu0
        %v1994 = vadd.f32 0.0, %v1993
        %1995 = vmatprep.mubr.bf16.mxu0 %v1060
        %1996 = vmatmul.mubr.bf16.gmra.mrb[0].mxu0 %v1059
        %v1997 = vpop.f32.mrb[0].mxu0
        %v1998 = vadd.f32 0.0, %v1997
        %v1999 = vpop.f32.mrb[0].mxu0
        %v2000 = vadd.f32 0.0, %v1999
        %v2001 = vpop.f32.mrb[0].mxu0
        %v2002 = vadd.f32 0.0, %v2001
        %v2003 = vpop.f32.mrb[0].mxu0
        %v2004 = vadd.f32 0.0, %v2003
        %2005 = vmatprep.mubr.bf16.mxu0 %v1066
        %2006 = vmatmul.mubr.bf16.gmra.mrb[0].mxu0 %v1065
        %v2007 = vpop.f32.mrb[0].mxu0
        %v2008 = vadd.f32 0.0, %v2007
        %v2009 = vpop.f32.mrb[0].mxu0
        %v2010 = vadd.f32 0.0, %v2009
        %v2011 = vpop.f32.mrb[0].mxu0
        %v2012 = vadd.f32 0.0, %v2011
        %v2013 = vpop.f32.mrb[0].mxu0
        %v2014 = vadd.f32 0.0, %v2013
        %2015 = vmatprep.mubr.bf16.mxu0 %v1072
        %2016 = vmatmul.mubr.bf16.gmra.mrb[0].mxu0 %v1071
        %v2017 = vpop.f32.mrb[0].mxu0
        %v2018 = vadd.f32 0.0, %v2017
        %v2019 = vpop.f32.mrb[0].mxu0
        %v2020 = vadd.f32 0.0, %v2019
        %v2021 = vpop.f32.mrb[0].mxu0
        %v2022 = vadd.f32 0.0, %v2021
        %v2023 = vpop.f32.mrb[0].mxu0
        %v2024 = vadd.f32 0.0, %v2023
        %2025 = vmatprep.mubr.bf16.mxu0 %v1078
        %2026 = vmatmul.mubr.bf16.gmra.mrb[0].mxu0 %v1077
        %v2027 = vpop.f32.mrb[0].mxu0
        %v2028 = vadd.f32 0.0, %v2027
        %v2029 = vpop.f32.mrb[0].mxu0
        %v2030 = vadd.f32 0.0, %v2029
        %v2031 = vpop.f32.mrb[0].mxu0
        %v2032 = vadd.f32 0.0, %v2031
        %v2033 = vpop.f32.mrb[0].mxu0
        %v2034 = vadd.f32 0.0, %v2033
        %2035 = vmatprep.mubr.bf16.mxu0 %v1084
        %2036 = vmatmul.mubr.bf16.gmra.mrb[0].mxu0 %v1083
        %v2037 = vpop.f32.mrb[0].mxu0
        %v2038 = vadd.f32 0.0, %v2037
        %v2039 = vpop.f32.mrb[0].mxu0
        %v2040 = vadd.f32 0.0, %v2039
        %v2041 = vpop.f32.mrb[0].mxu0
        %v2042 = vadd.f32 0.0, %v2041
        %v2043 = vpop.f32.mrb[0].mxu0
        %v2044 = vadd.f32 0.0, %v2043
        %2045 = vmatprep.mubr.bf16.mxu0 %v1090
        %2046 = vmatmul.mubr.bf16.gmra.mrb[0].mxu0 %v1089
        %v2047 = vpop.f32.mrb[0].mxu0
        %v2048 = vadd.f32 0.0, %v2047
        %v2049 = vpop.f32.mrb[0].mxu0
        %v2050 = vadd.f32 0.0, %v2049
        %v2051 = vpop.f32.mrb[0].mxu0
        %v2052 = vadd.f32 0.0, %v2051
        %v2053 = vpop.f32.mrb[0].mxu0
        %v2054 = vadd.f32 0.0, %v2053
        %2055 = vdwg.mxu0
        %2056 = vmatprep.subr.bf16.mxu0 %v1584
        %2057 = vmatpush1.bf16.msra.mxu0 %v1583
        %2058 = vmatprep.subr.bf16.mxu0 %v1586
        %2059 = vmatpush1.bf16.msra.mxu0 %v1585
        %2060 = vmatprep.subr.bf16.mxu0 %v1588
        %2061 = vmatpush1.bf16.msra.mxu0 %v1587
        %2062 = vmatprep.subr.bf16.mxu0 %v1590
        %2063 = vmatpush1.bf16.msra.mxu0 %v1589
        %2064 = vmatprep.subr.bf16.mxu0 %v1592
        %2065 = vmatpush1.bf16.msra.mxu0 %v1591
        %2066 = vmatprep.subr.bf16.mxu0 %v1594
        %2067 = vmatpush1.bf16.msra.mxu0 %v1593
        %2068 = vmatprep.subr.bf16.mxu0 %v1596
        %2069 = vmatpush1.bf16.msra.mxu0 %v1595
        %2070 = vmatprep.subr.bf16.mxu0 %v1598
        %2071 = vmatpush1.bf16.msra.mxu0 %v1597
        %2072 = vmatprep.subr.bf16.mxu0 %v1600
        %2073 = vmatpush1.bf16.msra.mxu0 %v1599
        %2074 = vmatprep.subr.bf16.mxu0 %v1602
        %2075 = vmatpush1.bf16.msra.mxu0 %v1601
        %2076 = vmatprep.subr.bf16.mxu0 %v1604
        %2077 = vmatpush1.bf16.msra.mxu0 %v1603
        %2078 = vmatprep.subr.bf16.mxu0 %v1606
        %2079 = vmatpush1.bf16.msra.mxu0 %v1605
        %2080 = vmatprep.subr.bf16.mxu0 %v1608
        %2081 = vmatpush1.bf16.msra.mxu0 %v1607
        %2082 = vmatprep.subr.bf16.mxu0 %v1610
        %2083 = vmatpush1.bf16.msra.mxu0 %v1609
        %2084 = vmatprep.subr.bf16.mxu0 %v1612
        %2085 = vmatpush1.bf16.msra.mxu0 %v1611
        %2086 = vmatprep.subr.bf16.mxu0 %v1614
        %2087 = vmatpush1.bf16.msra.mxu0 %v1613
        %2088 = vmatprep.mubr.bf16.mxu0 %v930
        %2089 = vmatmul.mubr.bf16.gmra.mrb[0].mxu0 %v929
        %v2090 = vpop.f32.mrb[0].mxu0
        %v2091 = vadd.f32 %v1778, %v2090
        %v2092 = vpop.f32.mrb[0].mxu0
        %v2093 = vadd.f32 %v1780, %v2092
        %v2094 = vpop.f32.mrb[0].mxu0
        %v2095 = vadd.f32 %v1782, %v2094
        %v2096 = vpop.f32.mrb[0].mxu0
        %v2097 = vadd.f32 %v1784, %v2096
        %2098 = vmatprep.mubr.bf16.mxu0 %v936
        %2099 = vmatmul.mubr.bf16.gmra.mrb[0].mxu0 %v935
        %v2100 = vpop.f32.mrb[0].mxu0
        %v2101 = vadd.f32 %v1788, %v2100
        %v2102 = vpop.f32.mrb[0].mxu0
        %v2103 = vadd.f32 %v1790, %v2102
        %v2104 = vpop.f32.mrb[0].mxu0
        %v2105 = vadd.f32 %v1792, %v2104
        %v2106 = vpop.f32.mrb[0].mxu0
        %v2107 = vadd.f32 %v1794, %v2106
        %2108 = vmatprep.mubr.bf16.mxu0 %v942
        %2109 = vmatmul.mubr.bf16.gmra.mrb[0].mxu0 %v941
        %v2110 = vpop.f32.mrb[0].mxu0
        %v2111 = vadd.f32 %v1798, %v2110
        %v2112 = vpop.f32.mrb[0].mxu0
        %v2113 = vadd.f32 %v1800, %v2112
        %v2114 = vpop.f32.mrb[0].mxu0
        %v2115 = vadd.f32 %v1802, %v2114
        %v2116 = vpop.f32.mrb[0].mxu0
        %v2117 = vadd.f32 %v1804, %v2116
        %2118 = vmatprep.mubr.bf16.mxu0 %v948
        %2119 = vmatmul.mubr.bf16.gmra.mrb[0].mxu0 %v947
        %v2120 = vpop.f32.mrb[0].mxu0
        %v2121 = vadd.f32 %v1808, %v2120
        %v2122 = vpop.f32.mrb[0].mxu0
        %v2123 = vadd.f32 %v1810, %v2122
        %v2124 = vpop.f32.mrb[0].mxu0
        %v2125 = vadd.f32 %v1812, %v2124
        %v2126 = vpop.f32.mrb[0].mxu0
        %v2127 = vadd.f32 %v1814, %v2126
        %2128 = vmatprep.mubr.bf16.mxu0 %v954
        %2129 = vmatmul.mubr.bf16.gmra.mrb[0].mxu0 %v953
        %v2130 = vpop.f32.mrb[0].mxu0
        %v2131 = vadd.f32 %v1818, %v2130
        %v2132 = vpop.f32.mrb[0].mxu0
        %v2133 = vadd.f32 %v1820, %v2132
        %v2134 = vpop.f32.mrb[0].mxu0
        %v2135 = vadd.f32 %v1822, %v2134
        %v2136 = vpop.f32.mrb[0].mxu0
        %v2137 = vadd.f32 %v1824, %v2136
        %2138 = vmatprep.mubr.bf16.mxu0 %v960
        %2139 = vmatmul.mubr.bf16.gmra.mrb[0].mxu0 %v959
        %v2140 = vpop.f32.mrb[0].mxu0
        %v2141 = vadd.f32 %v1828, %v2140
        %v2142 = vpop.f32.mrb[0].mxu0
        %v2143 = vadd.f32 %v1830, %v2142
        %v2144 = vpop.f32.mrb[0].mxu0
        %v2145 = vadd.f32 %v1832, %v2144
        %v2146 = vpop.f32.mrb[0].mxu0
        %v2147 = vadd.f32 %v1834, %v2146
        %2148 = vmatprep.mubr.bf16.mxu0 %v966
        %2149 = vmatmul.mubr.bf16.gmra.mrb[0].mxu0 %v965
        %v2150 = vpop.f32.mrb[0].mxu0
        %v2151 = vadd.f32 %v1838, %v2150
        %v2152 = vpop.f32.mrb[0].mxu0
        %v2153 = vadd.f32 %v1840, %v2152
        %v2154 = vpop.f32.mrb[0].mxu0
        %v2155 = vadd.f32 %v1842, %v2154
        %v2156 = vpop.f32.mrb[0].mxu0
        %v2157 = vadd.f32 %v1844, %v2156
        %2158 = vmatprep.mubr.bf16.mxu0 %v972
        %2159 = vmatmul.mubr.bf16.gmra.mrb[0].mxu0 %v971
        %v2160 = vpop.f32.mrb[0].mxu0
        %v2161 = vadd.f32 %v1848, %v2160
        %v2162 = vpop.f32.mrb[0].mxu0
        %v2163 = vadd.f32 %v1850, %v2162
        %v2164 = vpop.f32.mrb[0].mxu0
        %v2165 = vadd.f32 %v1852, %v2164
        %v2166 = vpop.f32.mrb[0].mxu0
        %v2167 = vadd.f32 %v1854, %v2166
        %2168 = vmatprep.mubr.bf16.mxu0 %v978
        %2169 = vmatmul.mubr.bf16.gmra.mrb[0].mxu0 %v977
        %v2170 = vpop.f32.mrb[0].mxu0
        %v2171 = vadd.f32 %v1858, %v2170
        %v2172 = vpop.f32.mrb[0].mxu0
        %v2173 = vadd.f32 %v1860, %v2172
        %v2174 = vpop.f32.mrb[0].mxu0
        %v2175 = vadd.f32 %v1862, %v2174
        %v2176 = vpop.f32.mrb[0].mxu0
        %v2177 = vadd.f32 %v1864, %v2176
        %2178 = vmatprep.mubr.bf16.mxu0 %v984
        %2179 = vmatmul.mubr.bf16.gmra.mrb[0].mxu0 %v983
        %v2180 = vpop.f32.mrb[0].mxu0
        %v2181 = vadd.f32 %v1868, %v2180
        %v2182 = vpop.f32.mrb[0].mxu0
        %v2183 = vadd.f32 %v1870, %v2182
        %v2184 = vpop.f32.mrb[0].mxu0
        %v2185 = vadd.f32 %v1872, %v2184
        %v2186 = vpop.f32.mrb[0].mxu0
        %v2187 = vadd.f32 %v1874, %v2186
        %2188 = vmatprep.mubr.bf16.mxu0 %v990
        %2189 = vmatmul.mubr.bf16.gmra.mrb[0].mxu0 %v989
        %v2190 = vpop.f32.mrb[0].mxu0
        %v2191 = vadd.f32 %v1878, %v2190
        %v2192 = vpop.f32.mrb[0].mxu0
        %v2193 = vadd.f32 %v1880, %v2192
        %v2194 = vpop.f32.mrb[0].mxu0
        %v2195 = vadd.f32 %v1882, %v2194
        %v2196 = vpop.f32.mrb[0].mxu0
        %v2197 = vadd.f32 %v1884, %v2196
        %2198 = vmatprep.mubr.bf16.mxu0 %v996
        %2199 = vmatmul.mubr.bf16.gmra.mrb[0].mxu0 %v995
        %v2200 = vpop.f32.mrb[0].mxu0
        %v2201 = vadd.f32 %v1888, %v2200
        %v2202 = vpop.f32.mrb[0].mxu0
        %v2203 = vadd.f32 %v1890, %v2202
        %v2204 = vpop.f32.mrb[0].mxu0
        %v2205 = vadd.f32 %v1892, %v2204
        %v2206 = vpop.f32.mrb[0].mxu0
        %v2207 = vadd.f32 %v1894, %v2206
        %2208 = vmatprep.mubr.bf16.mxu0 %v1002
        %2209 = vmatmul.mubr.bf16.gmra.mrb[0].mxu0 %v1001
        %v2210 = vpop.f32.mrb[0].mxu0
        %v2211 = vadd.f32 %v1898, %v2210
        %v2212 = vpop.f32.mrb[0].mxu0
        %v2213 = vadd.f32 %v1900, %v2212
        %v2214 = vpop.f32.mrb[0].mxu0
        %v2215 = vadd.f32 %v1902, %v2214
        %v2216 = vpop.f32.mrb[0].mxu0
        %v2217 = vadd.f32 %v1904, %v2216
        %2218 = vmatprep.mubr.bf16.mxu0 %v1008
        %2219 = vmatmul.mubr.bf16.gmra.mrb[0].mxu0 %v1007
        %v2220 = vpop.f32.mrb[0].mxu0
        %v2221 = vadd.f32 %v1908, %v2220
        %v2222 = vpop.f32.mrb[0].mxu0
        %v2223 = vadd.f32 %v1910, %v2222
        %v2224 = vpop.f32.mrb[0].mxu0
        %v2225 = vadd.f32 %v1912, %v2224
        %v2226 = vpop.f32.mrb[0].mxu0
        %v2227 = vadd.f32 %v1914, %v2226
        %2228 = vmatprep.mubr.bf16.mxu0 %v1014
        %2229 = vmatmul.mubr.bf16.gmra.mrb[0].mxu0 %v1013
        %v2230 = vpop.f32.mrb[0].mxu0
        %v2231 = vadd.f32 %v1918, %v2230
        %v2232 = vpop.f32.mrb[0].mxu0
        %v2233 = vadd.f32 %v1920, %v2232
        %v2234 = vpop.f32.mrb[0].mxu0
        %v2235 = vadd.f32 %v1922, %v2234
        %v2236 = vpop.f32.mrb[0].mxu0
        %v2237 = vadd.f32 %v1924, %v2236
        %2238 = vmatprep.mubr.bf16.mxu0 %v1020
        %2239 = vmatmul.mubr.bf16.gmra.mrb[0].mxu0 %v1019
        %v2240 = vpop.f32.mrb[0].mxu0
        %v2241 = vadd.f32 %v1928, %v2240
        %v2242 = vpop.f32.mrb[0].mxu0
        %v2243 = vadd.f32 %v1930, %v2242
        %v2244 = vpop.f32.mrb[0].mxu0
        %v2245 = vadd.f32 %v1932, %v2244
        %v2246 = vpop.f32.mrb[0].mxu0
        %v2247 = vadd.f32 %v1934, %v2246
        %2248 = vmatprep.mubr.bf16.mxu0 %v1026
        %2249 = vmatmul.mubr.bf16.gmra.mrb[0].mxu0 %v1025
        %v2250 = vpop.f32.mrb[0].mxu0
        %v2251 = vadd.f32 %v1938, %v2250
        %v2252 = vpop.f32.mrb[0].mxu0
        %v2253 = vadd.f32 %v1940, %v2252
        %v2254 = vpop.f32.mrb[0].mxu0
        %v2255 = vadd.f32 %v1942, %v2254
        %v2256 = vpop.f32.mrb[0].mxu0
        %v2257 = vadd.f32 %v1944, %v2256
        %2258 = vmatprep.mubr.bf16.mxu0 %v1032
        %2259 = vmatmul.mubr.bf16.gmra.mrb[0].mxu0 %v1031
        %v2260 = vpop.f32.mrb[0].mxu0
        %v2261 = vadd.f32 %v1948, %v2260
        %v2262 = vpop.f32.mrb[0].mxu0
        %v2263 = vadd.f32 %v1950, %v2262
        %v2264 = vpop.f32.mrb[0].mxu0
        %v2265 = vadd.f32 %v1952, %v2264
        %v2266 = vpop.f32.mrb[0].mxu0
        %v2267 = vadd.f32 %v1954, %v2266
        %2268 = vmatprep.mubr.bf16.mxu0 %v1038
        %2269 = vmatmul.mubr.bf16.gmra.mrb[0].mxu0 %v1037
        %v2270 = vpop.f32.mrb[0].mxu0
        %v2271 = vadd.f32 %v1958, %v2270
        %v2272 = vpop.f32.mrb[0].mxu0
        %v2273 = vadd.f32 %v1960, %v2272
        %v2274 = vpop.f32.mrb[0].mxu0
        %v2275 = vadd.f32 %v1962, %v2274
        %v2276 = vpop.f32.mrb[0].mxu0
        %v2277 = vadd.f32 %v1964, %v2276
        %2278 = vmatprep.mubr.bf16.mxu0 %v1044
        %2279 = vmatmul.mubr.bf16.gmra.mrb[0].mxu0 %v1043
        %v2280 = vpop.f32.mrb[0].mxu0
        %v2281 = vadd.f32 %v1968, %v2280
        %v2282 = vpop.f32.mrb[0].mxu0
        %v2283 = vadd.f32 %v1970, %v2282
        %v2284 = vpop.f32.mrb[0].mxu0
        %v2285 = vadd.f32 %v1972, %v2284
        %v2286 = vpop.f32.mrb[0].mxu0
        %v2287 = vadd.f32 %v1974, %v2286
        %2288 = vmatprep.mubr.bf16.mxu0 %v1050
        %2289 = vmatmul.mubr.bf16.gmra.mrb[0].mxu0 %v1049
        %v2290 = vpop.f32.mrb[0].mxu0
        %v2291 = vadd.f32 %v1978, %v2290
        %v2292 = vpop.f32.mrb[0].mxu0
        %v2293 = vadd.f32 %v1980, %v2292
        %v2294 = vpop.f32.mrb[0].mxu0
        %v2295 = vadd.f32 %v1982, %v2294
        %v2296 = vpop.f32.mrb[0].mxu0
        %v2297 = vadd.f32 %v1984, %v2296
        %2298 = vmatprep.mubr.bf16.mxu0 %v1056
        %2299 = vmatmul.mubr.bf16.gmra.mrb[0].mxu0 %v1055
        %v2300 = vpop.f32.mrb[0].mxu0
        %v2301 = vadd.f32 %v1988, %v2300
        %v2302 = vpop.f32.mrb[0].mxu0
        %v2303 = vadd.f32 %v1990, %v2302
        %v2304 = vpop.f32.mrb[0].mxu0
        %v2305 = vadd.f32 %v1992, %v2304
        %v2306 = vpop.f32.mrb[0].mxu0
        %v2307 = vadd.f32 %v1994, %v2306
        %2308 = vmatprep.mubr.bf16.mxu0 %v1062
        %2309 = vmatmul.mubr.bf16.gmra.mrb[0].mxu0 %v1061
        %v2310 = vpop.f32.mrb[0].mxu0
        %v2311 = vadd.f32 %v1998, %v2310
        %v2312 = vpop.f32.mrb[0].mxu0
        %v2313 = vadd.f32 %v2000, %v2312
        %v2314 = vpop.f32.mrb[0].mxu0
        %v2315 = vadd.f32 %v2002, %v2314
        %v2316 = vpop.f32.mrb[0].mxu0
        %v2317 = vadd.f32 %v2004, %v2316
        %2318 = vmatprep.mubr.bf16.mxu0 %v1068
        %2319 = vmatmul.mubr.bf16.gmra.mrb[0].mxu0 %v1067
        %v2320 = vpop.f32.mrb[0].mxu0
        %v2321 = vadd.f32 %v2008, %v2320
        %v2322 = vpop.f32.mrb[0].mxu0
        %v2323 = vadd.f32 %v2010, %v2322
        %v2324 = vpop.f32.mrb[0].mxu0
        %v2325 = vadd.f32 %v2012, %v2324
        %v2326 = vpop.f32.mrb[0].mxu0
        %v2327 = vadd.f32 %v2014, %v2326
        %2328 = vmatprep.mubr.bf16.mxu0 %v1074
        %2329 = vmatmul.mubr.bf16.gmra.mrb[0].mxu0 %v1073
        %v2330 = vpop.f32.mrb[0].mxu0
        %v2331 = vadd.f32 %v2018, %v2330
        %v2332 = vpop.f32.mrb[0].mxu0
        %v2333 = vadd.f32 %v2020, %v2332
        %v2334 = vpop.f32.mrb[0].mxu0
        %v2335 = vadd.f32 %v2022, %v2334
        %v2336 = vpop.f32.mrb[0].mxu0
        %v2337 = vadd.f32 %v2024, %v2336
        %2338 = vmatprep.mubr.bf16.mxu0 %v1080
        %2339 = vmatmul.mubr.bf16.gmra.mrb[0].mxu0 %v1079
        %v2340 = vpop.f32.mrb[0].mxu0
        %v2341 = vadd.f32 %v2028, %v2340
        %v2342 = vpop.f32.mrb[0].mxu0
        %v2343 = vadd.f32 %v2030, %v2342
        %v2344 = vpop.f32.mrb[0].mxu0
        %v2345 = vadd.f32 %v2032, %v2344
        %v2346 = vpop.f32.mrb[0].mxu0
        %v2347 = vadd.f32 %v2034, %v2346
        %2348 = vmatprep.mubr.bf16.mxu0 %v1086
        %2349 = vmatmul.mubr.bf16.gmra.mrb[0].mxu0 %v1085
        %v2350 = vpop.f32.mrb[0].mxu0
        %v2351 = vadd.f32 %v2038, %v2350
        %v2352 = vpop.f32.mrb[0].mxu0
        %v2353 = vadd.f32 %v2040, %v2352
        %v2354 = vpop.f32.mrb[0].mxu0
        %v2355 = vadd.f32 %v2042, %v2354
        %v2356 = vpop.f32.mrb[0].mxu0
        %v2357 = vadd.f32 %v2044, %v2356
        %2358 = vmatprep.mubr.bf16.mxu0 %v1092
        %2359 = vmatmul.mubr.bf16.gmra.mrb[0].mxu0 %v1091
        %v2360 = vpop.f32.mrb[0].mxu0
        %v2361 = vadd.f32 %v2048, %v2360
        %v2362 = vpop.f32.mrb[0].mxu0
        %v2363 = vadd.f32 %v2050, %v2362
        %v2364 = vpop.f32.mrb[0].mxu0
        %v2365 = vadd.f32 %v2052, %v2364
        %v2366 = vpop.f32.mrb[0].mxu0
        %v2367 = vadd.f32 %v2054, %v2366
        %2368 = vdwg.mxu0
        %2369 = vmatprep.subr.bf16.mxu0 %v1616
        %2370 = vmatpush1.bf16.msra.mxu0 %v1615
        %2371 = vmatprep.subr.bf16.mxu0 %v1618
        %2372 = vmatpush1.bf16.msra.mxu0 %v1617
        %2373 = vmatprep.subr.bf16.mxu0 %v1620
        %2374 = vmatpush1.bf16.msra.mxu0 %v1619
        %2375 = vmatprep.subr.bf16.mxu0 %v1622
        %2376 = vmatpush1.bf16.msra.mxu0 %v1621
        %2377 = vmatprep.subr.bf16.mxu0 %v1624
        %2378 = vmatpush1.bf16.msra.mxu0 %v1623
        %2379 = vmatprep.subr.bf16.mxu0 %v1626
        %2380 = vmatpush1.bf16.msra.mxu0 %v1625
        %2381 = vmatprep.subr.bf16.mxu0 %v1628
        %2382 = vmatpush1.bf16.msra.mxu0 %v1627
        %2383 = vmatprep.subr.bf16.mxu0 %v1630
        %2384 = vmatpush1.bf16.msra.mxu0 %v1629
        %2385 = vmatprep.subr.bf16.mxu0 %v1632
        %2386 = vmatpush1.bf16.msra.mxu0 %v1631
        %2387 = vmatprep.subr.bf16.mxu0 %v1634
        %2388 = vmatpush1.bf16.msra.mxu0 %v1633
        %2389 = vmatprep.subr.bf16.mxu0 %v1636
        %2390 = vmatpush1.bf16.msra.mxu0 %v1635
        %2391 = vmatprep.subr.bf16.mxu0 %v1638
        %2392 = vmatpush1.bf16.msra.mxu0 %v1637
        %2393 = vmatprep.subr.bf16.mxu0 %v1640
        %2394 = vmatpush1.bf16.msra.mxu0 %v1639
        %2395 = vmatprep.subr.bf16.mxu0 %v1642
        %2396 = vmatpush1.bf16.msra.mxu0 %v1641
        %2397 = vmatprep.subr.bf16.mxu0 %v1644
        %2398 = vmatpush1.bf16.msra.mxu0 %v1643
        %2399 = vmatprep.subr.bf16.mxu0 %v1646
        %2400 = vmatpush1.bf16.msra.mxu0 %v1645
        %2401 = vmatprep.mubr.bf16.mxu0 %v932
        %2402 = vmatmul.mubr.bf16.gmra.mrb[0].mxu0 %v931
        %v2403 = vpop.f32.mrb[0].mxu0
        %v2404 = vadd.f32 %v2091, %v2403
        %v2405 = vpop.f32.mrb[0].mxu0
        %v2406 = vadd.f32 %v2093, %v2405
        %v2407 = vpop.f32.mrb[0].mxu0
        %v2408 = vadd.f32 %v2095, %v2407
        %v2409 = vpop.f32.mrb[0].mxu0
        %v2410 = vadd.f32 %v2097, %v2409
        %2411 = vmatprep.mubr.bf16.mxu0 %v938
        %2412 = vmatmul.mubr.bf16.gmra.mrb[0].mxu0 %v937
        %v2413 = vpop.f32.mrb[0].mxu0
        %v2414 = vadd.f32 %v2101, %v2413
        %v2415 = vpop.f32.mrb[0].mxu0
        %v2416 = vadd.f32 %v2103, %v2415
        %v2417 = vpop.f32.mrb[0].mxu0
        %v2418 = vadd.f32 %v2105, %v2417
        %v2419 = vpop.f32.mrb[0].mxu0
        %v2420 = vadd.f32 %v2107, %v2419
        %2421 = vmatprep.mubr.bf16.mxu0 %v944
        %2422 = vmatmul.mubr.bf16.gmra.mrb[0].mxu0 %v943
        %v2423 = vpop.f32.mrb[0].mxu0
        %v2424 = vadd.f32 %v2111, %v2423
        %v2425 = vpop.f32.mrb[0].mxu0
        %v2426 = vadd.f32 %v2113, %v2425
        %v2427 = vpop.f32.mrb[0].mxu0
        %v2428 = vadd.f32 %v2115, %v2427
        %v2429 = vpop.f32.mrb[0].mxu0
        %v2430 = vadd.f32 %v2117, %v2429
        %2431 = vmatprep.mubr.bf16.mxu0 %v950
        %2432 = vmatmul.mubr.bf16.gmra.mrb[0].mxu0 %v949
        %v2433 = vpop.f32.mrb[0].mxu0
        %v2434 = vadd.f32 %v2121, %v2433
        %v2435 = vpop.f32.mrb[0].mxu0
        %v2436 = vadd.f32 %v2123, %v2435
        %v2437 = vpop.f32.mrb[0].mxu0
        %v2438 = vadd.f32 %v2125, %v2437
        %v2439 = vpop.f32.mrb[0].mxu0
        %v2440 = vadd.f32 %v2127, %v2439
        %2441 = vmatprep.mubr.bf16.mxu0 %v956
        %2442 = vmatmul.mubr.bf16.gmra.mrb[0].mxu0 %v955
        %v2443 = vpop.f32.mrb[0].mxu0
        %v2444 = vadd.f32 %v2131, %v2443
        %v2445 = vpop.f32.mrb[0].mxu0
        %v2446 = vadd.f32 %v2133, %v2445
        %v2447 = vpop.f32.mrb[0].mxu0
        %v2448 = vadd.f32 %v2135, %v2447
        %v2449 = vpop.f32.mrb[0].mxu0
        %v2450 = vadd.f32 %v2137, %v2449
        %2451 = vmatprep.mubr.bf16.mxu0 %v962
        %2452 = vmatmul.mubr.bf16.gmra.mrb[0].mxu0 %v961
        %v2453 = vpop.f32.mrb[0].mxu0
        %v2454 = vadd.f32 %v2141, %v2453
        %v2455 = vpop.f32.mrb[0].mxu0
        %v2456 = vadd.f32 %v2143, %v2455
        %v2457 = vpop.f32.mrb[0].mxu0
        %v2458 = vadd.f32 %v2145, %v2457
        %v2459 = vpop.f32.mrb[0].mxu0
        %v2460 = vadd.f32 %v2147, %v2459
        %2461 = vmatprep.mubr.bf16.mxu0 %v968
        %2462 = vmatmul.mubr.bf16.gmra.mrb[0].mxu0 %v967
        %v2463 = vpop.f32.mrb[0].mxu0
        %v2464 = vadd.f32 %v2151, %v2463
        %v2465 = vpop.f32.mrb[0].mxu0
        %v2466 = vadd.f32 %v2153, %v2465
        %v2467 = vpop.f32.mrb[0].mxu0
        %v2468 = vadd.f32 %v2155, %v2467
        %v2469 = vpop.f32.mrb[0].mxu0
        %v2470 = vadd.f32 %v2157, %v2469
        %2471 = vmatprep.mubr.bf16.mxu0 %v974
        %2472 = vmatmul.mubr.bf16.gmra.mrb[0].mxu0 %v973
        %v2473 = vpop.f32.mrb[0].mxu0
        %v2474 = vadd.f32 %v2161, %v2473
        %v2475 = vpop.f32.mrb[0].mxu0
        %v2476 = vadd.f32 %v2163, %v2475
        %v2477 = vpop.f32.mrb[0].mxu0
        %v2478 = vadd.f32 %v2165, %v2477
        %v2479 = vpop.f32.mrb[0].mxu0
        %v2480 = vadd.f32 %v2167, %v2479
        %2481 = vmatprep.mubr.bf16.mxu0 %v980
        %2482 = vmatmul.mubr.bf16.gmra.mrb[0].mxu0 %v979
        %v2483 = vpop.f32.mrb[0].mxu0
        %v2484 = vadd.f32 %v2171, %v2483
        %v2485 = vpop.f32.mrb[0].mxu0
        %v2486 = vadd.f32 %v2173, %v2485
        %v2487 = vpop.f32.mrb[0].mxu0
        %v2488 = vadd.f32 %v2175, %v2487
        %v2489 = vpop.f32.mrb[0].mxu0
        %v2490 = vadd.f32 %v2177, %v2489
        %2491 = vmatprep.mubr.bf16.mxu0 %v986
        %2492 = vmatmul.mubr.bf16.gmra.mrb[0].mxu0 %v985
        %v2493 = vpop.f32.mrb[0].mxu0
        %v2494 = vadd.f32 %v2181, %v2493
        %v2495 = vpop.f32.mrb[0].mxu0
        %v2496 = vadd.f32 %v2183, %v2495
        %v2497 = vpop.f32.mrb[0].mxu0
        %v2498 = vadd.f32 %v2185, %v2497
        %v2499 = vpop.f32.mrb[0].mxu0
        %v2500 = vadd.f32 %v2187, %v2499
        %2501 = vmatprep.mubr.bf16.mxu0 %v992
        %2502 = vmatmul.mubr.bf16.gmra.mrb[0].mxu0 %v991
        %v2503 = vpop.f32.mrb[0].mxu0
        %v2504 = vadd.f32 %v2191, %v2503
        %v2505 = vpop.f32.mrb[0].mxu0
        %v2506 = vadd.f32 %v2193, %v2505
        %v2507 = vpop.f32.mrb[0].mxu0
        %v2508 = vadd.f32 %v2195, %v2507
        %v2509 = vpop.f32.mrb[0].mxu0
        %v2510 = vadd.f32 %v2197, %v2509
        %2511 = vmatprep.mubr.bf16.mxu0 %v998
        %2512 = vmatmul.mubr.bf16.gmra.mrb[0].mxu0 %v997
        %v2513 = vpop.f32.mrb[0].mxu0
        %v2514 = vadd.f32 %v2201, %v2513
        %v2515 = vpop.f32.mrb[0].mxu0
        %v2516 = vadd.f32 %v2203, %v2515
        %v2517 = vpop.f32.mrb[0].mxu0
        %v2518 = vadd.f32 %v2205, %v2517
        %v2519 = vpop.f32.mrb[0].mxu0
        %v2520 = vadd.f32 %v2207, %v2519
        %2521 = vmatprep.mubr.bf16.mxu0 %v1004
        %2522 = vmatmul.mubr.bf16.gmra.mrb[0].mxu0 %v1003
        %v2523 = vpop.f32.mrb[0].mxu0
        %v2524 = vadd.f32 %v2211, %v2523
        %v2525 = vpop.f32.mrb[0].mxu0
        %v2526 = vadd.f32 %v2213, %v2525
        %v2527 = vpop.f32.mrb[0].mxu0
        %v2528 = vadd.f32 %v2215, %v2527
        %v2529 = vpop.f32.mrb[0].mxu0
        %v2530 = vadd.f32 %v2217, %v2529
        %2531 = vmatprep.mubr.bf16.mxu0 %v1010
        %2532 = vmatmul.mubr.bf16.gmra.mrb[0].mxu0 %v1009
        %v2533 = vpop.f32.mrb[0].mxu0
        %v2534 = vadd.f32 %v2221, %v2533
        %v2535 = vpop.f32.mrb[0].mxu0
        %v2536 = vadd.f32 %v2223, %v2535
        %v2537 = vpop.f32.mrb[0].mxu0
        %v2538 = vadd.f32 %v2225, %v2537
        %v2539 = vpop.f32.mrb[0].mxu0
        %v2540 = vadd.f32 %v2227, %v2539
        %2541 = vmatprep.mubr.bf16.mxu0 %v1016
        %2542 = vmatmul.mubr.bf16.gmra.mrb[0].mxu0 %v1015
        %v2543 = vpop.f32.mrb[0].mxu0
        %v2544 = vadd.f32 %v2231, %v2543
        %v2545 = vpop.f32.mrb[0].mxu0
        %v2546 = vadd.f32 %v2233, %v2545
        %v2547 = vpop.f32.mrb[0].mxu0
        %v2548 = vadd.f32 %v2235, %v2547
        %v2549 = vpop.f32.mrb[0].mxu0
        %v2550 = vadd.f32 %v2237, %v2549
        %2551 = vmatprep.mubr.bf16.mxu0 %v1022
        %2552 = vmatmul.mubr.bf16.gmra.mrb[0].mxu0 %v1021
        %v2553 = vpop.f32.mrb[0].mxu0
        %v2554 = vadd.f32 %v2241, %v2553
        %v2555 = vpop.f32.mrb[0].mxu0
        %v2556 = vadd.f32 %v2243, %v2555
        %v2557 = vpop.f32.mrb[0].mxu0
        %v2558 = vadd.f32 %v2245, %v2557
        %v2559 = vpop.f32.mrb[0].mxu0
        %v2560 = vadd.f32 %v2247, %v2559
        %2561 = vmatprep.mubr.bf16.mxu0 %v1028
        %2562 = vmatmul.mubr.bf16.gmra.mrb[0].mxu0 %v1027
        %v2563 = vpop.f32.mrb[0].mxu0
        %v2564 = vadd.f32 %v2251, %v2563
        %v2565 = vpop.f32.mrb[0].mxu0
        %v2566 = vadd.f32 %v2253, %v2565
        %v2567 = vpop.f32.mrb[0].mxu0
        %v2568 = vadd.f32 %v2255, %v2567
        %v2569 = vpop.f32.mrb[0].mxu0
        %v2570 = vadd.f32 %v2257, %v2569
        %2571 = vmatprep.mubr.bf16.mxu0 %v1034
        %2572 = vmatmul.mubr.bf16.gmra.mrb[0].mxu0 %v1033
        %v2573 = vpop.f32.mrb[0].mxu0
        %v2574 = vadd.f32 %v2261, %v2573
        %v2575 = vpop.f32.mrb[0].mxu0
        %v2576 = vadd.f32 %v2263, %v2575
        %v2577 = vpop.f32.mrb[0].mxu0
        %v2578 = vadd.f32 %v2265, %v2577
        %v2579 = vpop.f32.mrb[0].mxu0
        %v2580 = vadd.f32 %v2267, %v2579
        %2581 = vmatprep.mubr.bf16.mxu0 %v1040
        %2582 = vmatmul.mubr.bf16.gmra.mrb[0].mxu0 %v1039
        %v2583 = vpop.f32.mrb[0].mxu0
        %v2584 = vadd.f32 %v2271, %v2583
        %v2585 = vpop.f32.mrb[0].mxu0
        %v2586 = vadd.f32 %v2273, %v2585
        %v2587 = vpop.f32.mrb[0].mxu0
        %v2588 = vadd.f32 %v2275, %v2587
        %v2589 = vpop.f32.mrb[0].mxu0
        %v2590 = vadd.f32 %v2277, %v2589
        %2591 = vmatprep.mubr.bf16.mxu0 %v1046
        %2592 = vmatmul.mubr.bf16.gmra.mrb[0].mxu0 %v1045
        %v2593 = vpop.f32.mrb[0].mxu0
        %v2594 = vadd.f32 %v2281, %v2593
        %v2595 = vpop.f32.mrb[0].mxu0
        %v2596 = vadd.f32 %v2283, %v2595
        %v2597 = vpop.f32.mrb[0].mxu0
        %v2598 = vadd.f32 %v2285, %v2597
        %v2599 = vpop.f32.mrb[0].mxu0
        %v2600 = vadd.f32 %v2287, %v2599
        %2601 = vmatprep.mubr.bf16.mxu0 %v1052
        %2602 = vmatmul.mubr.bf16.gmra.mrb[0].mxu0 %v1051
        %v2603 = vpop.f32.mrb[0].mxu0
        %v2604 = vadd.f32 %v2291, %v2603
        %v2605 = vpop.f32.mrb[0].mxu0
        %v2606 = vadd.f32 %v2293, %v2605
        %v2607 = vpop.f32.mrb[0].mxu0
        %v2608 = vadd.f32 %v2295, %v2607
        %v2609 = vpop.f32.mrb[0].mxu0
        %v2610 = vadd.f32 %v2297, %v2609
        %2611 = vmatprep.mubr.bf16.mxu0 %v1058
        %2612 = vmatmul.mubr.bf16.gmra.mrb[0].mxu0 %v1057
        %v2613 = vpop.f32.mrb[0].mxu0
        %v2614 = vadd.f32 %v2301, %v2613
        %v2615 = vpop.f32.mrb[0].mxu0
        %v2616 = vadd.f32 %v2303, %v2615
        %v2617 = vpop.f32.mrb[0].mxu0
        %v2618 = vadd.f32 %v2305, %v2617
        %v2619 = vpop.f32.mrb[0].mxu0
        %v2620 = vadd.f32 %v2307, %v2619
        %2621 = vmatprep.mubr.bf16.mxu0 %v1064
        %2622 = vmatmul.mubr.bf16.gmra.mrb[0].mxu0 %v1063
        %v2623 = vpop.f32.mrb[0].mxu0
        %v2624 = vadd.f32 %v2311, %v2623
        %v2625 = vpop.f32.mrb[0].mxu0
        %v2626 = vadd.f32 %v2313, %v2625
        %v2627 = vpop.f32.mrb[0].mxu0
        %v2628 = vadd.f32 %v2315, %v2627
        %v2629 = vpop.f32.mrb[0].mxu0
        %v2630 = vadd.f32 %v2317, %v2629
        %2631 = vmatprep.mubr.bf16.mxu0 %v1070
        %2632 = vmatmul.mubr.bf16.gmra.mrb[0].mxu0 %v1069
        %v2633 = vpop.f32.mrb[0].mxu0
        %v2634 = vadd.f32 %v2321, %v2633
        %v2635 = vpop.f32.mrb[0].mxu0
        %v2636 = vadd.f32 %v2323, %v2635
        %v2637 = vpop.f32.mrb[0].mxu0
        %v2638 = vadd.f32 %v2325, %v2637
        %v2639 = vpop.f32.mrb[0].mxu0
        %v2640 = vadd.f32 %v2327, %v2639
        %2641 = vmatprep.mubr.bf16.mxu0 %v1076
        %2642 = vmatmul.mubr.bf16.gmra.mrb[0].mxu0 %v1075
        %v2643 = vpop.f32.mrb[0].mxu0
        %v2644 = vadd.f32 %v2331, %v2643
        %v2645 = vpop.f32.mrb[0].mxu0
        %v2646 = vadd.f32 %v2333, %v2645
        %v2647 = vpop.f32.mrb[0].mxu0
        %v2648 = vadd.f32 %v2335, %v2647
        %v2649 = vpop.f32.mrb[0].mxu0
        %v2650 = vadd.f32 %v2337, %v2649
        %2651 = vmatprep.mubr.bf16.mxu0 %v1082
        %2652 = vmatmul.mubr.bf16.gmra.mrb[0].mxu0 %v1081
        %v2653 = vpop.f32.mrb[0].mxu0
        %v2654 = vadd.f32 %v2341, %v2653
        %v2655 = vpop.f32.mrb[0].mxu0
        %v2656 = vadd.f32 %v2343, %v2655
        %v2657 = vpop.f32.mrb[0].mxu0
        %v2658 = vadd.f32 %v2345, %v2657
        %v2659 = vpop.f32.mrb[0].mxu0
        %v2660 = vadd.f32 %v2347, %v2659
        %2661 = vmatprep.mubr.bf16.mxu0 %v1088
        %2662 = vmatmul.mubr.bf16.gmra.mrb[0].mxu0 %v1087
        %v2663 = vpop.f32.mrb[0].mxu0
        %v2664 = vadd.f32 %v2351, %v2663
        %v2665 = vpop.f32.mrb[0].mxu0
        %v2666 = vadd.f32 %v2353, %v2665
        %v2667 = vpop.f32.mrb[0].mxu0
        %v2668 = vadd.f32 %v2355, %v2667
        %v2669 = vpop.f32.mrb[0].mxu0
        %v2670 = vadd.f32 %v2357, %v2669
        %2671 = vmatprep.mubr.bf16.mxu0 %v1094
        %2672 = vmatmul.mubr.bf16.gmra.mrb[0].mxu0 %v1093
        %v2673 = vpop.f32.mrb[0].mxu0
        %v2674 = vadd.f32 %v2361, %v2673
        %v2675 = vpop.f32.mrb[0].mxu0
        %v2676 = vadd.f32 %v2363, %v2675
        %v2677 = vpop.f32.mrb[0].mxu0
        %v2678 = vadd.f32 %v2365, %v2677
        %v2679 = vpop.f32.mrb[0].mxu0
        %v2680 = vadd.f32 %v2367, %v2679
        %2681 = vdwg.mxu0
        %2682 = vst [vmem:[%s151] sm:$0xff] %v2404
        %2683 = vst [vmem:[%s151 + $0x8] sm:$0xff] %v2406
        %2684 = vst [vmem:[%s151 + $0x10] sm:$0xff] %v2408
        %2685 = vst [vmem:[%s151 + $0x18] sm:$0xff] %v2410
        %2686 = vst [vmem:[%s151 + $0x20] sm:$0xff] %v2414
        %2687 = vst [vmem:[%s151 + $0x28] sm:$0xff] %v2416
        %2688 = vst [vmem:[%s151 + $0x30] sm:$0xff] %v2418
        %2689 = vst [vmem:[%s151 + $0x38] sm:$0xff] %v2420
        %2690 = vst [vmem:[%s151 + $0x40] sm:$0xff] %v2424
        %2691 = vst [vmem:[%s151 + $0x48] sm:$0xff] %v2426
        %2692 = vst [vmem:[%s151 + $0x50] sm:$0xff] %v2428
        %2693 = vst [vmem:[%s151 + $0x58] sm:$0xff] %v2430
        %2694 = vst [vmem:[%s151 + $0x60] sm:$0xff] %v2434
        %2695 = vst [vmem:[%s151 + $0x68] sm:$0xff] %v2436
        %2696 = vst [vmem:[%s151 + $0x70] sm:$0xff] %v2438
        %2697 = vst [vmem:[%s151 + $0x78] sm:$0xff] %v2440
        %2698 = vst [vmem:[%s151 + $0x80] sm:$0xff] %v2444
        %2699 = vst [vmem:[%s151 + $0x88] sm:$0xff] %v2446
        %2700 = vst [vmem:[%s151 + $0x90] sm:$0xff] %v2448
        %2701 = vst [vmem:[%s151 + $0x98] sm:$0xff] %v2450
        %2702 = vst [vmem:[%s151 + $0xa0] sm:$0xff] %v2454
        %2703 = vst [vmem:[%s151 + $0xa8] sm:$0xff] %v2456
        %2704 = vst [vmem:[%s151 + $0xb0] sm:$0xff] %v2458
        %2705 = vst [vmem:[%s151 + $0xb8] sm:$0xff] %v2460
        %2706 = vst [vmem:[%s151 + $0xc0] sm:$0xff] %v2464
        %2707 = vst [vmem:[%s151 + $0xc8] sm:$0xff] %v2466
        %2708 = vst [vmem:[%s151 + $0xd0] sm:$0xff] %v2468
        %2709 = vst [vmem:[%s151 + $0xd8] sm:$0xff] %v2470
        %2710 = vst [vmem:[%s151 + $0xe0] sm:$0xff] %v2474
        %2711 = vst [vmem:[%s151 + $0xe8] sm:$0xff] %v2476
        %2712 = vst [vmem:[%s151 + $0xf0] sm:$0xff] %v2478
        %2713 = vst [vmem:[%s151 + $0xf8] sm:$0xff] %v2480
        %2714 = vst [vmem:[%s151 + $0x100] sm:$0xff] %v2484
        %2715 = vst [vmem:[%s151 + $0x108] sm:$0xff] %v2486
        %2716 = vst [vmem:[%s151 + $0x110] sm:$0xff] %v2488
        %2717 = vst [vmem:[%s151 + $0x118] sm:$0xff] %v2490
        %2718 = vst [vmem:[%s151 + $0x120] sm:$0xff] %v2494
        %2719 = vst [vmem:[%s151 + $0x128] sm:$0xff] %v2496
        %2720 = vst [vmem:[%s151 + $0x130] sm:$0xff] %v2498
        %2721 = vst [vmem:[%s151 + $0x138] sm:$0xff] %v2500
        %2722 = vst [vmem:[%s151 + $0x140] sm:$0xff] %v2504
        %2723 = vst [vmem:[%s151 + $0x148] sm:$0xff] %v2506
        %2724 = vst [vmem:[%s151 + $0x150] sm:$0xff] %v2508
        %2725 = vst [vmem:[%s151 + $0x158] sm:$0xff] %v2510
        %2726 = vst [vmem:[%s151 + $0x160] sm:$0xff] %v2514
        %2727 = vst [vmem:[%s151 + $0x168] sm:$0xff] %v2516
        %2728 = vst [vmem:[%s151 + $0x170] sm:$0xff] %v2518
        %2729 = vst [vmem:[%s151 + $0x178] sm:$0xff] %v2520
        %2730 = vst [vmem:[%s151 + $0x180] sm:$0xff] %v2524
        %2731 = vst [vmem:[%s151 + $0x188] sm:$0xff] %v2526
        %2732 = vst [vmem:[%s151 + $0x190] sm:$0xff] %v2528
        %2733 = vst [vmem:[%s151 + $0x198] sm:$0xff] %v2530
        %2734 = vst [vmem:[%s151 + $0x1a0] sm:$0xff] %v2534
        %2735 = vst [vmem:[%s151 + $0x1a8] sm:$0xff] %v2536
        %2736 = vst [vmem:[%s151 + $0x1b0] sm:$0xff] %v2538
        %2737 = vst [vmem:[%s151 + $0x1b8] sm:$0xff] %v2540
        %2738 = vst [vmem:[%s151 + $0x1c0] sm:$0xff] %v2544
        %2739 = vst [vmem:[%s151 + $0x1c8] sm:$0xff] %v2546
        %2740 = vst [vmem:[%s151 + $0x1d0] sm:$0xff] %v2548
        %2741 = vst [vmem:[%s151 + $0x1d8] sm:$0xff] %v2550
        %2742 = vst [vmem:[%s151 + $0x1e0] sm:$0xff] %v2554
        %2743 = vst [vmem:[%s151 + $0x1e8] sm:$0xff] %v2556
        %2744 = vst [vmem:[%s151 + $0x1f0] sm:$0xff] %v2558
        %2745 = vst [vmem:[%s151 + $0x1f8] sm:$0xff] %v2560
        %2746 = vst [vmem:[%s151 + $0x200] sm:$0xff] %v2564
        %2747 = vst [vmem:[%s151 + $0x208] sm:$0xff] %v2566
        %2748 = vst [vmem:[%s151 + $0x210] sm:$0xff] %v2568
        %2749 = vst [vmem:[%s151 + $0x218] sm:$0xff] %v2570
        %2750 = vst [vmem:[%s151 + $0x220] sm:$0xff] %v2574
        %2751 = vst [vmem:[%s151 + $0x228] sm:$0xff] %v2576
        %2752 = vst [vmem:[%s151 + $0x230] sm:$0xff] %v2578
        %2753 = vst [vmem:[%s151 + $0x238] sm:$0xff] %v2580
        %2754 = vst [vmem:[%s151 + $0x240] sm:$0xff] %v2584
        %2755 = vst [vmem:[%s151 + $0x248] sm:$0xff] %v2586
        %2756 = vst [vmem:[%s151 + $0x250] sm:$0xff] %v2588
        %2757 = vst [vmem:[%s151 + $0x258] sm:$0xff] %v2590
        %2758 = vst [vmem:[%s151 + $0x260] sm:$0xff] %v2594
        %2759 = vst [vmem:[%s151 + $0x268] sm:$0xff] %v2596
        %2760 = vst [vmem:[%s151 + $0x270] sm:$0xff] %v2598
        %2761 = vst [vmem:[%s151 + $0x278] sm:$0xff] %v2600
        %2762 = vst [vmem:[%s151 + $0x280] sm:$0xff] %v2604
        %2763 = vst [vmem:[%s151 + $0x288] sm:$0xff] %v2606
        %2764 = vst [vmem:[%s151 + $0x290] sm:$0xff] %v2608
        %2765 = vst [vmem:[%s151 + $0x298] sm:$0xff] %v2610
        %2766 = vst [vmem:[%s151 + $0x2a0] sm:$0xff] %v2614
        %2767 = vst [vmem:[%s151 + $0x2a8] sm:$0xff] %v2616
        %2768 = vst [vmem:[%s151 + $0x2b0] sm:$0xff] %v2618
        %2769 = vst [vmem:[%s151 + $0x2b8] sm:$0xff] %v2620
        %2770 = vst [vmem:[%s151 + $0x2c0] sm:$0xff] %v2624
        %2771 = vst [vmem:[%s151 + $0x2c8] sm:$0xff] %v2626
        %2772 = vst [vmem:[%s151 + $0x2d0] sm:$0xff] %v2628
        %2773 = vst [vmem:[%s151 + $0x2d8] sm:$0xff] %v2630
        %2774 = vst [vmem:[%s151 + $0x2e0] sm:$0xff] %v2634
        %2775 = vst [vmem:[%s151 + $0x2e8] sm:$0xff] %v2636
        %2776 = vst [vmem:[%s151 + $0x2f0] sm:$0xff] %v2638
        %2777 = vst [vmem:[%s151 + $0x2f8] sm:$0xff] %v2640
        %2778 = vst [vmem:[%s151 + $0x300] sm:$0xff] %v2644
        %2779 = vst [vmem:[%s151 + $0x308] sm:$0xff] %v2646
        %2780 = vst [vmem:[%s151 + $0x310] sm:$0xff] %v2648
        %2781 = vst [vmem:[%s151 + $0x318] sm:$0xff] %v2650
        %2782 = vst [vmem:[%s151 + $0x320] sm:$0xff] %v2654
        %2783 = vst [vmem:[%s151 + $0x328] sm:$0xff] %v2656
        %2784 = vst [vmem:[%s151 + $0x330] sm:$0xff] %v2658
        %2785 = vst [vmem:[%s151 + $0x338] sm:$0xff] %v2660
        %2786 = vst [vmem:[%s151 + $0x340] sm:$0xff] %v2664
        %2787 = vst [vmem:[%s151 + $0x348] sm:$0xff] %v2666
        %2788 = vst [vmem:[%s151 + $0x350] sm:$0xff] %v2668
        %2789 = vst [vmem:[%s151 + $0x358] sm:$0xff] %v2670
        %2790 = vst [vmem:[%s151 + $0x360] sm:$0xff] %v2674
        %2791 = vst [vmem:[%s151 + $0x368] sm:$0xff] %v2676
        %2792 = vst [vmem:[%s151 + $0x370] sm:$0xff] %v2678
        %2793 = vst [vmem:[%s151 + $0x378] sm:$0xff] %v2680
        %s2794 = sadd.s32 %s153, 64
        %s2795 = sshra.s32 %s2794, 3
        %s2796 = sand.u32 %s2794, 7
        %s2797 = smul.u32 %s2795, 6
        %s2798 = smul.addr %s2797, 4
        %s2799 = scalar_lea.vmem [#allocation2], %s2798
        %v2800 = vld [vmem:[%s2799] sm:$0xff]
        %v2801 = vld [vmem:[%s2799 + $0x8] sm:$0xff]
        %v2802 = vld [vmem:[%s2799 + $0x10] sm:$0xff]
        %v2803 = vld [vmem:[%s2799 + $0x18] sm:$0xff]
        %v2804 = vld [vmem:[%s2799 + $0x20] sm:$0xff]
        %v2805 = vld [vmem:[%s2799 + $0x28] sm:$0xff]
        %v2806 = vld [vmem:[%s2799 + $0x30] sm:$0xff]
        %v2807 = vld [vmem:[%s2799 + $0x38] sm:$0xff]
        %v2808 = vld [vmem:[%s2799 + $0x40] sm:$0xff]
        %v2809 = vld [vmem:[%s2799 + $0x48] sm:$0xff]
        %v2810 = vld [vmem:[%s2799 + $0x50] sm:$0xff]
        %v2811 = vld [vmem:[%s2799 + $0x58] sm:$0xff]
        %v2812 = vld [vmem:[%s2799 + $0x60] sm:$0xff]
        %v2813 = vld [vmem:[%s2799 + $0x68] sm:$0xff]
        %v2814 = vld [vmem:[%s2799 + $0x70] sm:$0xff]
        %v2815 = vld [vmem:[%s2799 + $0x78] sm:$0xff]
        %v2816 = vld [vmem:[%s2799 + $0x80] sm:$0xff]
        %v2817 = vld [vmem:[%s2799 + $0x88] sm:$0xff]
        %v2818 = vld [vmem:[%s2799 + $0x90] sm:$0xff]
        %v2819 = vld [vmem:[%s2799 + $0x98] sm:$0xff]
        %v2820 = vld [vmem:[%s2799 + $0xa0] sm:$0xff]
        %v2821 = vld [vmem:[%s2799 + $0xa8] sm:$0xff]
        %v2822 = vld [vmem:[%s2799 + $0xb0] sm:$0xff]
        %v2823 = vld [vmem:[%s2799 + $0xb8] sm:$0xff]
        %v2824 = vld [vmem:[%s2799 + $0xc0] sm:$0xff]
        %v2825 = vld [vmem:[%s2799 + $0xc8] sm:$0xff]
        %v2826 = vld [vmem:[%s2799 + $0xd0] sm:$0xff]
        %v2827 = vld [vmem:[%s2799 + $0xd8] sm:$0xff]
        %v2828 = vld [vmem:[%s2799 + $0xe0] sm:$0xff]
        %v2829 = vld [vmem:[%s2799 + $0xe8] sm:$0xff]
        %v2830 = vld [vmem:[%s2799 + $0xf0] sm:$0xff]
        %v2831 = vld [vmem:[%s2799 + $0xf8] sm:$0xff]
        %v2832 = vld [vmem:[%s2799 + $0x100] sm:$0xff]
        %v2833 = vld [vmem:[%s2799 + $0x108] sm:$0xff]
        %v2834 = vld [vmem:[%s2799 + $0x110] sm:$0xff]
        %v2835 = vld [vmem:[%s2799 + $0x118] sm:$0xff]
        %v2836 = vld [vmem:[%s2799 + $0x120] sm:$0xff]
        %v2837 = vld [vmem:[%s2799 + $0x128] sm:$0xff]
        %v2838 = vld [vmem:[%s2799 + $0x130] sm:$0xff]
        %v2839 = vld [vmem:[%s2799 + $0x138] sm:$0xff]
        %v2840 = vld [vmem:[%s2799 + $0x140] sm:$0xff]
        %v2841 = vld [vmem:[%s2799 + $0x148] sm:$0xff]
        %v2842 = vld [vmem:[%s2799 + $0x150] sm:$0xff]
        %v2843 = vld [vmem:[%s2799 + $0x158] sm:$0xff]
        %v2844 = vld [vmem:[%s2799 + $0x160] sm:$0xff]
        %v2845 = vld [vmem:[%s2799 + $0x168] sm:$0xff]
        %v2846 = vld [vmem:[%s2799 + $0x170] sm:$0xff]
        %v2847 = vld [vmem:[%s2799 + $0x178] sm:$0xff]
        %v2848 = vld [vmem:[%s2799 + $0x180] sm:$0xff]
        %v2849 = vld [vmem:[%s2799 + $0x188] sm:$0xff]
        %v2850 = vld [vmem:[%s2799 + $0x190] sm:$0xff]
        %v2851 = vld [vmem:[%s2799 + $0x198] sm:$0xff]
        %v2852 = vld [vmem:[%s2799 + $0x1a0] sm:$0xff]
        %v2853 = vld [vmem:[%s2799 + $0x1a8] sm:$0xff]
        %v2854 = vld [vmem:[%s2799 + $0x1b0] sm:$0xff]
        %v2855 = vld [vmem:[%s2799 + $0x1b8] sm:$0xff]
        %v2856 = vld [vmem:[%s2799 + $0x1c0] sm:$0xff]
        %v2857 = vld [vmem:[%s2799 + $0x1c8] sm:$0xff]
        %v2858 = vld [vmem:[%s2799 + $0x1d0] sm:$0xff]
        %v2859 = vld [vmem:[%s2799 + $0x1d8] sm:$0xff]
        %v2860 = vld [vmem:[%s2799 + $0x1e0] sm:$0xff]
        %v2861 = vld [vmem:[%s2799 + $0x1e8] sm:$0xff]
        %v2862 = vld [vmem:[%s2799 + $0x1f0] sm:$0xff]
        %v2863 = vld [vmem:[%s2799 + $0x1f8] sm:$0xff]
        %v2864 = vld [vmem:[%s2799 + $0x200] sm:$0xff]
        %v2865 = vld [vmem:[%s2799 + $0x208] sm:$0xff]
        %v2866 = vld [vmem:[%s2799 + $0x210] sm:$0xff]
        %v2867 = vld [vmem:[%s2799 + $0x218] sm:$0xff]
        %v2868 = vld [vmem:[%s2799 + $0x220] sm:$0xff]
        %v2869 = vld [vmem:[%s2799 + $0x228] sm:$0xff]
        %v2870 = vld [vmem:[%s2799 + $0x230] sm:$0xff]
        %v2871 = vld [vmem:[%s2799 + $0x238] sm:$0xff]
        %v2872 = vld [vmem:[%s2799 + $0x240] sm:$0xff]
        %v2873 = vld [vmem:[%s2799 + $0x248] sm:$0xff]
        %v2874 = vld [vmem:[%s2799 + $0x250] sm:$0xff]
        %v2875 = vld [vmem:[%s2799 + $0x258] sm:$0xff]
        %v2876 = vld [vmem:[%s2799 + $0x260] sm:$0xff]
        %v2877 = vld [vmem:[%s2799 + $0x268] sm:$0xff]
        %v2878 = vld [vmem:[%s2799 + $0x270] sm:$0xff]
        %v2879 = vld [vmem:[%s2799 + $0x278] sm:$0xff]
        %v2880 = vld [vmem:[%s2799 + $0x280] sm:$0xff]
        %v2881 = vld [vmem:[%s2799 + $0x288] sm:$0xff]
        %v2882 = vld [vmem:[%s2799 + $0x290] sm:$0xff]
        %v2883 = vld [vmem:[%s2799 + $0x298] sm:$0xff]
        %v2884 = vld [vmem:[%s2799 + $0x2a0] sm:$0xff]
        %v2885 = vld [vmem:[%s2799 + $0x2a8] sm:$0xff]
        %v2886 = vld [vmem:[%s2799 + $0x2b0] sm:$0xff]
        %v2887 = vld [vmem:[%s2799 + $0x2b8] sm:$0xff]
        %v2888 = vld [vmem:[%s2799 + $0x2c0] sm:$0xff]
        %v2889 = vld [vmem:[%s2799 + $0x2c8] sm:$0xff]
        %v2890 = vld [vmem:[%s2799 + $0x2d0] sm:$0xff]
        %v2891 = vld [vmem:[%s2799 + $0x2d8] sm:$0xff]
        %v2892 = vld [vmem:[%s2799 + $0x2e0] sm:$0xff]
        %v2893 = vld [vmem:[%s2799 + $0x2e8] sm:$0xff]
        %v2894 = vld [vmem:[%s2799 + $0x2f0] sm:$0xff]
        %v2895 = vld [vmem:[%s2799 + $0x2f8] sm:$0xff]
        %v2896 = vld [vmem:[%s2799 + $0x300] sm:$0xff]
        %v2897 = vld [vmem:[%s2799 + $0x308] sm:$0xff]
        %v2898 = vld [vmem:[%s2799 + $0x310] sm:$0xff]
        %v2899 = vld [vmem:[%s2799 + $0x318] sm:$0xff]
        %v2900 = vld [vmem:[%s2799 + $0x320] sm:$0xff]
        %v2901 = vld [vmem:[%s2799 + $0x328] sm:$0xff]
        %v2902 = vld [vmem:[%s2799 + $0x330] sm:$0xff]
        %v2903 = vld [vmem:[%s2799 + $0x338] sm:$0xff]
        %v2904 = vld [vmem:[%s2799 + $0x340] sm:$0xff]
        %v2905 = vld [vmem:[%s2799 + $0x348] sm:$0xff]
        %v2906 = vld [vmem:[%s2799 + $0x350] sm:$0xff]
        %v2907 = vld [vmem:[%s2799 + $0x358] sm:$0xff]
        %v2908 = vld [vmem:[%s2799 + $0x360] sm:$0xff]
        %v2909 = vld [vmem:[%s2799 + $0x368] sm:$0xff]
        %v2910 = vld [vmem:[%s2799 + $0x370] sm:$0xff]
        %v2911 = vld [vmem:[%s2799 + $0x378] sm:$0xff]
        %v2912 = vld [vmem:[%s2799 + $0x380] sm:$0xff]
        %v2913 = vld [vmem:[%s2799 + $0x388] sm:$0xff]
        %v2914 = vld [vmem:[%s2799 + $0x390] sm:$0xff]
        %v2915 = vld [vmem:[%s2799 + $0x398] sm:$0xff]
        %v2916 = vld [vmem:[%s2799 + $0x3a0] sm:$0xff]
        %v2917 = vld [vmem:[%s2799 + $0x3a8] sm:$0xff]
        %v2918 = vld [vmem:[%s2799 + $0x3b0] sm:$0xff]
        %v2919 = vld [vmem:[%s2799 + $0x3b8] sm:$0xff]
        %v2920 = vld [vmem:[%s2799 + $0x3c0] sm:$0xff]
        %v2921 = vld [vmem:[%s2799 + $0x3c8] sm:$0xff]
        %v2922 = vld [vmem:[%s2799 + $0x3d0] sm:$0xff]
        %v2923 = vld [vmem:[%s2799 + $0x3d8] sm:$0xff]
        %v2924 = vld [vmem:[%s2799 + $0x3e0] sm:$0xff]
        %v2925 = vld [vmem:[%s2799 + $0x3e8] sm:$0xff]
        %v2926 = vld [vmem:[%s2799 + $0x3f0] sm:$0xff]
        %v2927 = vld [vmem:[%s2799 + $0x3f8] sm:$0xff]
        %v2928 = vld [vmem:[%s2799 + $0x400] sm:$0xff]
        %v2929 = vld [vmem:[%s2799 + $0x408] sm:$0xff]
        %v2930 = vld [vmem:[%s2799 + $0x410] sm:$0xff]
        %v2931 = vld [vmem:[%s2799 + $0x418] sm:$0xff]
        %v2932 = vld [vmem:[%s2799 + $0x420] sm:$0xff]
        %v2933 = vld [vmem:[%s2799 + $0x428] sm:$0xff]
        %v2934 = vld [vmem:[%s2799 + $0x430] sm:$0xff]
        %v2935 = vld [vmem:[%s2799 + $0x438] sm:$0xff]
        %v2936 = vld [vmem:[%s2799 + $0x440] sm:$0xff]
        %v2937 = vld [vmem:[%s2799 + $0x448] sm:$0xff]
        %v2938 = vld [vmem:[%s2799 + $0x450] sm:$0xff]
        %v2939 = vld [vmem:[%s2799 + $0x458] sm:$0xff]
        %v2940 = vld [vmem:[%s2799 + $0x460] sm:$0xff]
        %v2941 = vld [vmem:[%s2799 + $0x468] sm:$0xff]
        %v2942 = vld [vmem:[%s2799 + $0x470] sm:$0xff]
        %v2943 = vld [vmem:[%s2799 + $0x478] sm:$0xff]
        %v2944 = vld [vmem:[%s2799 + $0x480] sm:$0xff]
        %v2945 = vld [vmem:[%s2799 + $0x488] sm:$0xff]
        %v2946 = vld [vmem:[%s2799 + $0x490] sm:$0xff]
        %v2947 = vld [vmem:[%s2799 + $0x498] sm:$0xff]
        %v2948 = vld [vmem:[%s2799 + $0x4a0] sm:$0xff]
        %v2949 = vld [vmem:[%s2799 + $0x4a8] sm:$0xff]
        %v2950 = vld [vmem:[%s2799 + $0x4b0] sm:$0xff]
        %v2951 = vld [vmem:[%s2799 + $0x4b8] sm:$0xff]
        %v2952 = vld [vmem:[%s2799 + $0x4c0] sm:$0xff]
        %v2953 = vld [vmem:[%s2799 + $0x4c8] sm:$0xff]
        %v2954 = vld [vmem:[%s2799 + $0x4d0] sm:$0xff]
        %v2955 = vld [vmem:[%s2799 + $0x4d8] sm:$0xff]
        %v2956 = vld [vmem:[%s2799 + $0x4e0] sm:$0xff]
        %v2957 = vld [vmem:[%s2799 + $0x4e8] sm:$0xff]
        %v2958 = vld [vmem:[%s2799 + $0x4f0] sm:$0xff]
        %v2959 = vld [vmem:[%s2799 + $0x4f8] sm:$0xff]
        %v2960 = vld [vmem:[%s2799 + $0x500] sm:$0xff]
        %v2961 = vld [vmem:[%s2799 + $0x508] sm:$0xff]
        %v2962 = vld [vmem:[%s2799 + $0x510] sm:$0xff]
        %v2963 = vld [vmem:[%s2799 + $0x518] sm:$0xff]
        %v2964 = vld [vmem:[%s2799 + $0x520] sm:$0xff]
        %v2965 = vld [vmem:[%s2799 + $0x528] sm:$0xff]
        %v2966 = vld [vmem:[%s2799 + $0x530] sm:$0xff]
        %v2967 = vld [vmem:[%s2799 + $0x538] sm:$0xff]
        %s2968 = scalar_lea.vmem [#allocation5], 768
        %v2969 = vld [vmem:[%s2968] sm:$0xff]
        %v2970 = vld [vmem:[%s2968 + $0x8] sm:$0xff]
        %v2971 = vld [vmem:[%s2968 + $0x10] sm:$0xff]
        %v2972 = vld [vmem:[%s2968 + $0x18] sm:$0xff]
        %v2973 = vld [vmem:[%s2968 + $0x20] sm:$0xff]
        %v2974 = vld [vmem:[%s2968 + $0x28] sm:$0xff]
        %v2975 = vld [vmem:[%s2968 + $0x30] sm:$0xff]
        %v2976 = vld [vmem:[%s2968 + $0x38] sm:$0xff]
        %v2977 = vld [vmem:[%s2968 + $0x40] sm:$0xff]
        %v2978 = vld [vmem:[%s2968 + $0x48] sm:$0xff]
        %v2979 = vld [vmem:[%s2968 + $0x50] sm:$0xff]
        %v2980 = vld [vmem:[%s2968 + $0x58] sm:$0xff]
        %v2981 = vld [vmem:[%s2968 + $0x60] sm:$0xff]
        %v2982 = vld [vmem:[%s2968 + $0x68] sm:$0xff]
        %v2983 = vld [vmem:[%s2968 + $0x70] sm:$0xff]
        %v2984 = vld [vmem:[%s2968 + $0x78] sm:$0xff]
        %v2985 = vld [vmem:[%s2968 + $0x80] sm:$0xff]
        %v2986 = vld [vmem:[%s2968 + $0x88] sm:$0xff]
        %v2987 = vld [vmem:[%s2968 + $0x90] sm:$0xff]
        %v2988 = vld [vmem:[%s2968 + $0x98] sm:$0xff]
        %v2989 = vld [vmem:[%s2968 + $0xa0] sm:$0xff]
        %v2990 = vld [vmem:[%s2968 + $0xa8] sm:$0xff]
        %v2991 = vld [vmem:[%s2968 + $0xb0] sm:$0xff]
        %v2992 = vld [vmem:[%s2968 + $0xb8] sm:$0xff]
        %v2993 = vld [vmem:[%s2968 + $0xc0] sm:$0xff]
        %v2994 = vld [vmem:[%s2968 + $0xc8] sm:$0xff]
        %v2995 = vld [vmem:[%s2968 + $0xd0] sm:$0xff]
        %v2996 = vld [vmem:[%s2968 + $0xd8] sm:$0xff]
        %v2997 = vld [vmem:[%s2968 + $0xe0] sm:$0xff]
        %v2998 = vld [vmem:[%s2968 + $0xe8] sm:$0xff]
        %v2999 = vld [vmem:[%s2968 + $0xf0] sm:$0xff]
        %v3000 = vld [vmem:[%s2968 + $0xf8] sm:$0xff]
        %v3001 = vld [vmem:[%s2968 + $0x100] sm:$0xff]
        %v3002 = vld [vmem:[%s2968 + $0x108] sm:$0xff]
        %v3003 = vld [vmem:[%s2968 + $0x110] sm:$0xff]
        %v3004 = vld [vmem:[%s2968 + $0x118] sm:$0xff]
        %v3005 = vld [vmem:[%s2968 + $0x120] sm:$0xff]
        %v3006 = vld [vmem:[%s2968 + $0x128] sm:$0xff]
        %v3007 = vld [vmem:[%s2968 + $0x130] sm:$0xff]
        %v3008 = vld [vmem:[%s2968 + $0x138] sm:$0xff]
        %v3009 = vld [vmem:[%s2968 + $0x140] sm:$0xff]
        %v3010 = vld [vmem:[%s2968 + $0x148] sm:$0xff]
        %v3011 = vld [vmem:[%s2968 + $0x150] sm:$0xff]
        %v3012 = vld [vmem:[%s2968 + $0x158] sm:$0xff]
        %v3013 = vld [vmem:[%s2968 + $0x160] sm:$0xff]
        %v3014 = vld [vmem:[%s2968 + $0x168] sm:$0xff]
        %v3015 = vld [vmem:[%s2968 + $0x170] sm:$0xff]
        %v3016 = vld [vmem:[%s2968 + $0x178] sm:$0xff]
        %v3017 = vld [vmem:[%s2968 + $0x180] sm:$0xff]
        %v3018 = vld [vmem:[%s2968 + $0x188] sm:$0xff]
        %v3019 = vld [vmem:[%s2968 + $0x190] sm:$0xff]
        %v3020 = vld [vmem:[%s2968 + $0x198] sm:$0xff]
        %v3021 = vld [vmem:[%s2968 + $0x1a0] sm:$0xff]
        %v3022 = vld [vmem:[%s2968 + $0x1a8] sm:$0xff]
        %v3023 = vld [vmem:[%s2968 + $0x1b0] sm:$0xff]
        %v3024 = vld [vmem:[%s2968 + $0x1b8] sm:$0xff]
        %v3025 = vld [vmem:[%s2968 + $0x1c0] sm:$0xff]
        %v3026 = vld [vmem:[%s2968 + $0x1c8] sm:$0xff]
        %v3027 = vld [vmem:[%s2968 + $0x1d0] sm:$0xff]
        %v3028 = vld [vmem:[%s2968 + $0x1d8] sm:$0xff]
        %v3029 = vld [vmem:[%s2968 + $0x1e0] sm:$0xff]
        %v3030 = vld [vmem:[%s2968 + $0x1e8] sm:$0xff]
        %v3031 = vld [vmem:[%s2968 + $0x1f0] sm:$0xff]
        %v3032 = vld [vmem:[%s2968 + $0x1f8] sm:$0xff]
        %v3033 = vld [vmem:[%s2968 + $0x200] sm:$0xff]
        %v3034 = vld [vmem:[%s2968 + $0x208] sm:$0xff]
        %v3035 = vld [vmem:[%s2968 + $0x210] sm:$0xff]
        %v3036 = vld [vmem:[%s2968 + $0x218] sm:$0xff]
        %v3037 = vld [vmem:[%s2968 + $0x220] sm:$0xff]
        %v3038 = vld [vmem:[%s2968 + $0x228] sm:$0xff]
        %v3039 = vld [vmem:[%s2968 + $0x230] sm:$0xff]
        %v3040 = vld [vmem:[%s2968 + $0x238] sm:$0xff]
        %v3041 = vld [vmem:[%s2968 + $0x240] sm:$0xff]
        %v3042 = vld [vmem:[%s2968 + $0x248] sm:$0xff]
        %v3043 = vld [vmem:[%s2968 + $0x250] sm:$0xff]
        %v3044 = vld [vmem:[%s2968 + $0x258] sm:$0xff]
        %v3045 = vld [vmem:[%s2968 + $0x260] sm:$0xff]
        %v3046 = vld [vmem:[%s2968 + $0x268] sm:$0xff]
        %v3047 = vld [vmem:[%s2968 + $0x270] sm:$0xff]
        %v3048 = vld [vmem:[%s2968 + $0x278] sm:$0xff]
        %v3049 = vld [vmem:[%s2968 + $0x280] sm:$0xff]
        %v3050 = vld [vmem:[%s2968 + $0x288] sm:$0xff]
        %v3051 = vld [vmem:[%s2968 + $0x290] sm:$0xff]
        %v3052 = vld [vmem:[%s2968 + $0x298] sm:$0xff]
        %v3053 = vld [vmem:[%s2968 + $0x2a0] sm:$0xff]
        %v3054 = vld [vmem:[%s2968 + $0x2a8] sm:$0xff]
        %v3055 = vld [vmem:[%s2968 + $0x2b0] sm:$0xff]
        %v3056 = vld [vmem:[%s2968 + $0x2b8] sm:$0xff]
        %v3057 = vld [vmem:[%s2968 + $0x2c0] sm:$0xff]
        %v3058 = vld [vmem:[%s2968 + $0x2c8] sm:$0xff]
        %v3059 = vld [vmem:[%s2968 + $0x2d0] sm:$0xff]
        %v3060 = vld [vmem:[%s2968 + $0x2d8] sm:$0xff]
        %v3061 = vld [vmem:[%s2968 + $0x2e0] sm:$0xff]
        %v3062 = vld [vmem:[%s2968 + $0x2e8] sm:$0xff]
        %v3063 = vld [vmem:[%s2968 + $0x2f0] sm:$0xff]
        %v3064 = vld [vmem:[%s2968 + $0x2f8] sm:$0xff]
        %v3233 = vunpack.c.l.b16 %v2800
        %v3234 = vunpack.c.h.b16 %v2800
        %v3235 = vunpack.c.l.b16 %v2801
        %v3236 = vunpack.c.h.b16 %v2801
        %v3237 = vunpack.c.l.b16 %v2802
        %v3238 = vunpack.c.h.b16 %v2802
        %v3239 = vunpack.c.l.b16 %v2803
        %v3240 = vunpack.c.h.b16 %v2803
        %v3241 = vunpack.c.l.b16 %v2804
        %v3242 = vunpack.c.h.b16 %v2804
        %v3243 = vunpack.c.l.b16 %v2805
        %v3244 = vunpack.c.h.b16 %v2805
        %v3245 = vunpack.c.l.b16 %v2806
        %v3246 = vunpack.c.h.b16 %v2806
        %v3247 = vunpack.c.l.b16 %v2807
        %v3248 = vunpack.c.h.b16 %v2807
        %v3249 = vunpack.c.l.b16 %v2808
        %v3250 = vunpack.c.h.b16 %v2808
        %v3251 = vunpack.c.l.b16 %v2809
        %v3252 = vunpack.c.h.b16 %v2809
        %v3253 = vunpack.c.l.b16 %v2810
        %v3254 = vunpack.c.h.b16 %v2810
        %v3255 = vunpack.c.l.b16 %v2811
        %v3256 = vunpack.c.h.b16 %v2811
        %v3257 = vunpack.c.l.b16 %v2812
        %v3258 = vunpack.c.h.b16 %v2812
        %v3259 = vunpack.c.l.b16 %v2813
        %v3260 = vunpack.c.h.b16 %v2813
        %v3261 = vunpack.c.l.b16 %v2814
        %v3262 = vunpack.c.h.b16 %v2814
        %v3263 = vunpack.c.l.b16 %v2815
        %v3264 = vunpack.c.h.b16 %v2815
        %v3265 = vunpack.c.l.b16 %v2816
        %v3266 = vunpack.c.h.b16 %v2816
        %v3267 = vunpack.c.l.b16 %v2817
        %v3268 = vunpack.c.h.b16 %v2817
        %v3269 = vunpack.c.l.b16 %v2818
        %v3270 = vunpack.c.h.b16 %v2818
        %v3271 = vunpack.c.l.b16 %v2819
        %v3272 = vunpack.c.h.b16 %v2819
        %v3273 = vunpack.c.l.b16 %v2820
        %v3274 = vunpack.c.h.b16 %v2820
        %v3275 = vunpack.c.l.b16 %v2821
        %v3276 = vunpack.c.h.b16 %v2821
        %v3277 = vunpack.c.l.b16 %v2822
        %v3278 = vunpack.c.h.b16 %v2822
        %v3279 = vunpack.c.l.b16 %v2823
        %v3280 = vunpack.c.h.b16 %v2823
        %v3281 = vunpack.c.l.b16 %v2824
        %v3282 = vunpack.c.h.b16 %v2824
        %v3283 = vunpack.c.l.b16 %v2825
        %v3284 = vunpack.c.h.b16 %v2825
        %v3285 = vunpack.c.l.b16 %v2826
        %v3286 = vunpack.c.h.b16 %v2826
        %v3287 = vunpack.c.l.b16 %v2827
        %v3288 = vunpack.c.h.b16 %v2827
        %v3289 = vunpack.c.l.b16 %v2828
        %v3290 = vunpack.c.h.b16 %v2828
        %v3291 = vunpack.c.l.b16 %v2829
        %v3292 = vunpack.c.h.b16 %v2829
        %v3293 = vunpack.c.l.b16 %v2830
        %v3294 = vunpack.c.h.b16 %v2830
        %v3295 = vunpack.c.l.b16 %v2831
        %v3296 = vunpack.c.h.b16 %v2831
        %v3297 = vunpack.c.l.b16 %v2832
        %v3298 = vunpack.c.h.b16 %v2832
        %v3299 = vunpack.c.l.b16 %v2833
        %v3300 = vunpack.c.h.b16 %v2833
        %v3301 = vunpack.c.l.b16 %v2834
        %v3302 = vunpack.c.h.b16 %v2834
        %v3303 = vunpack.c.l.b16 %v2835
        %v3304 = vunpack.c.h.b16 %v2835
        %v3305 = vunpack.c.l.b16 %v2836
        %v3306 = vunpack.c.h.b16 %v2836
        %v3307 = vunpack.c.l.b16 %v2837
        %v3308 = vunpack.c.h.b16 %v2837
        %v3309 = vunpack.c.l.b16 %v2838
        %v3310 = vunpack.c.h.b16 %v2838
        %v3311 = vunpack.c.l.b16 %v2839
        %v3312 = vunpack.c.h.b16 %v2839
        %v3313 = vunpack.c.l.b16 %v2840
        %v3314 = vunpack.c.h.b16 %v2840
        %v3315 = vunpack.c.l.b16 %v2841
        %v3316 = vunpack.c.h.b16 %v2841
        %v3317 = vunpack.c.l.b16 %v2842
        %v3318 = vunpack.c.h.b16 %v2842
        %v3319 = vunpack.c.l.b16 %v2843
        %v3320 = vunpack.c.h.b16 %v2843
        %v3321 = vunpack.c.l.b16 %v2844
        %v3322 = vunpack.c.h.b16 %v2844
        %v3323 = vunpack.c.l.b16 %v2845
        %v3324 = vunpack.c.h.b16 %v2845
        %v3325 = vunpack.c.l.b16 %v2846
        %v3326 = vunpack.c.h.b16 %v2846
        %v3327 = vunpack.c.l.b16 %v2847
        %v3328 = vunpack.c.h.b16 %v2847
        %v3329 = vunpack.c.l.b16 %v2848
        %v3330 = vunpack.c.h.b16 %v2848
        %v3331 = vunpack.c.l.b16 %v2849
        %v3332 = vunpack.c.h.b16 %v2849
        %v3333 = vunpack.c.l.b16 %v2850
        %v3334 = vunpack.c.h.b16 %v2850
        %v3335 = vunpack.c.l.b16 %v2851
        %v3336 = vunpack.c.h.b16 %v2851
        %v3337 = vunpack.c.l.b16 %v2852
        %v3338 = vunpack.c.h.b16 %v2852
        %v3339 = vunpack.c.l.b16 %v2853
        %v3340 = vunpack.c.h.b16 %v2853
        %v3341 = vunpack.c.l.b16 %v2854
        %v3342 = vunpack.c.h.b16 %v2854
        %v3343 = vunpack.c.l.b16 %v2855
        %v3344 = vunpack.c.h.b16 %v2855
        %v3345 = vunpack.c.l.b16 %v2856
        %v3346 = vunpack.c.h.b16 %v2856
        %v3347 = vunpack.c.l.b16 %v2857
        %v3348 = vunpack.c.h.b16 %v2857
        %v3349 = vunpack.c.l.b16 %v2858
        %v3350 = vunpack.c.h.b16 %v2858
        %v3351 = vunpack.c.l.b16 %v2859
        %v3352 = vunpack.c.h.b16 %v2859
        %v3353 = vunpack.c.l.b16 %v2860
        %v3354 = vunpack.c.h.b16 %v2860
        %v3355 = vunpack.c.l.b16 %v2861
        %v3356 = vunpack.c.h.b16 %v2861
        %v3357 = vunpack.c.l.b16 %v2862
        %v3358 = vunpack.c.h.b16 %v2862
        %v3359 = vunpack.c.l.b16 %v2863
        %v3360 = vunpack.c.h.b16 %v2863
        %v3361 = vunpack.c.l.b16 %v2864
        %v3362 = vunpack.c.h.b16 %v2864
        %v3363 = vunpack.c.l.b16 %v2865
        %v3364 = vunpack.c.h.b16 %v2865
        %v3365 = vunpack.c.l.b16 %v2866
        %v3366 = vunpack.c.h.b16 %v2866
        %v3367 = vunpack.c.l.b16 %v2867
        %v3368 = vunpack.c.h.b16 %v2867
        %v3369 = vunpack.c.l.b16 %v2868
        %v3370 = vunpack.c.h.b16 %v2868
        %v3371 = vunpack.c.l.b16 %v2869
        %v3372 = vunpack.c.h.b16 %v2869
        %v3373 = vunpack.c.l.b16 %v2870
        %v3374 = vunpack.c.h.b16 %v2870
        %v3375 = vunpack.c.l.b16 %v2871
        %v3376 = vunpack.c.h.b16 %v2871
        %v3377 = vunpack.c.l.b16 %v2872
        %v3378 = vunpack.c.h.b16 %v2872
        %v3379 = vunpack.c.l.b16 %v2873
        %v3380 = vunpack.c.h.b16 %v2873
        %v3381 = vunpack.c.l.b16 %v2874
        %v3382 = vunpack.c.h.b16 %v2874
        %v3383 = vunpack.c.l.b16 %v2875
        %v3384 = vunpack.c.h.b16 %v2875
        %v3385 = vunpack.c.l.b16 %v2876
        %v3386 = vunpack.c.h.b16 %v2876
        %v3387 = vunpack.c.l.b16 %v2877
        %v3388 = vunpack.c.h.b16 %v2877
        %v3389 = vunpack.c.l.b16 %v2878
        %v3390 = vunpack.c.h.b16 %v2878
        %v3391 = vunpack.c.l.b16 %v2879
        %v3392 = vunpack.c.h.b16 %v2879
        %v3393 = vunpack.c.l.b16 %v2880
        %v3394 = vunpack.c.h.b16 %v2880
        %v3395 = vunpack.c.l.b16 %v2881
        %v3396 = vunpack.c.h.b16 %v2881
        %v3397 = vunpack.c.l.b16 %v2882
        %v3398 = vunpack.c.h.b16 %v2882
        %v3399 = vunpack.c.l.b16 %v2883
        %v3400 = vunpack.c.h.b16 %v2883
        %v3401 = vunpack.c.l.b16 %v2884
        %v3402 = vunpack.c.h.b16 %v2884
        %v3403 = vunpack.c.l.b16 %v2885
        %v3404 = vunpack.c.h.b16 %v2885
        %v3405 = vunpack.c.l.b16 %v2886
        %v3406 = vunpack.c.h.b16 %v2886
        %v3407 = vunpack.c.l.b16 %v2887
        %v3408 = vunpack.c.h.b16 %v2887
        %v3409 = vunpack.c.l.b16 %v2888
        %v3410 = vunpack.c.h.b16 %v2888
        %v3411 = vunpack.c.l.b16 %v2889
        %v3412 = vunpack.c.h.b16 %v2889
        %v3413 = vunpack.c.l.b16 %v2890
        %v3414 = vunpack.c.h.b16 %v2890
        %v3415 = vunpack.c.l.b16 %v2891
        %v3416 = vunpack.c.h.b16 %v2891
        %v3417 = vunpack.c.l.b16 %v2892
        %v3418 = vunpack.c.h.b16 %v2892
        %v3419 = vunpack.c.l.b16 %v2893
        %v3420 = vunpack.c.h.b16 %v2893
        %v3421 = vunpack.c.l.b16 %v2894
        %v3422 = vunpack.c.h.b16 %v2894
        %v3423 = vunpack.c.l.b16 %v2895
        %v3424 = vunpack.c.h.b16 %v2895
        %v3425 = vunpack.c.l.b16 %v2896
        %v3426 = vunpack.c.h.b16 %v2896
        %v3427 = vunpack.c.l.b16 %v2897
        %v3428 = vunpack.c.h.b16 %v2897
        %v3429 = vunpack.c.l.b16 %v2898
        %v3430 = vunpack.c.h.b16 %v2898
        %v3431 = vunpack.c.l.b16 %v2899
        %v3432 = vunpack.c.h.b16 %v2899
        %v3433 = vunpack.c.l.b16 %v2900
        %v3434 = vunpack.c.h.b16 %v2900
        %v3435 = vunpack.c.l.b16 %v2901
        %v3436 = vunpack.c.h.b16 %v2901
        %v3437 = vunpack.c.l.b16 %v2902
        %v3438 = vunpack.c.h.b16 %v2902
        %v3439 = vunpack.c.l.b16 %v2903
        %v3440 = vunpack.c.h.b16 %v2903
        %v3441 = vunpack.c.l.b16 %v2904
        %v3442 = vunpack.c.h.b16 %v2904
        %v3443 = vunpack.c.l.b16 %v2905
        %v3444 = vunpack.c.h.b16 %v2905
        %v3445 = vunpack.c.l.b16 %v2906
        %v3446 = vunpack.c.h.b16 %v2906
        %v3447 = vunpack.c.l.b16 %v2907
        %v3448 = vunpack.c.h.b16 %v2907
        %v3449 = vunpack.c.l.b16 %v2908
        %v3450 = vunpack.c.h.b16 %v2908
        %v3451 = vunpack.c.l.b16 %v2909
        %v3452 = vunpack.c.h.b16 %v2909
        %v3453 = vunpack.c.l.b16 %v2910
        %v3454 = vunpack.c.h.b16 %v2910
        %v3455 = vunpack.c.l.b16 %v2911
        %v3456 = vunpack.c.h.b16 %v2911
        %v3457 = vunpack.c.l.b16 %v2912
        %v3458 = vunpack.c.h.b16 %v2912
        %v3459 = vunpack.c.l.b16 %v2913
        %v3460 = vunpack.c.h.b16 %v2913
        %v3461 = vunpack.c.l.b16 %v2914
        %v3462 = vunpack.c.h.b16 %v2914
        %v3463 = vunpack.c.l.b16 %v2915
        %v3464 = vunpack.c.h.b16 %v2915
        %v3465 = vunpack.c.l.b16 %v2916
        %v3466 = vunpack.c.h.b16 %v2916
        %v3467 = vunpack.c.l.b16 %v2917
        %v3468 = vunpack.c.h.b16 %v2917
        %v3469 = vunpack.c.l.b16 %v2918
        %v3470 = vunpack.c.h.b16 %v2918
        %v3471 = vunpack.c.l.b16 %v2919
        %v3472 = vunpack.c.h.b16 %v2919
        %v3473 = vunpack.c.l.b16 %v2920
        %v3474 = vunpack.c.h.b16 %v2920
        %v3475 = vunpack.c.l.b16 %v2921
        %v3476 = vunpack.c.h.b16 %v2921
        %v3477 = vunpack.c.l.b16 %v2922
        %v3478 = vunpack.c.h.b16 %v2922
        %v3479 = vunpack.c.l.b16 %v2923
        %v3480 = vunpack.c.h.b16 %v2923
        %v3481 = vunpack.c.l.b16 %v2924
        %v3482 = vunpack.c.h.b16 %v2924
        %v3483 = vunpack.c.l.b16 %v2925
        %v3484 = vunpack.c.h.b16 %v2925
        %v3485 = vunpack.c.l.b16 %v2926
        %v3486 = vunpack.c.h.b16 %v2926
        %v3487 = vunpack.c.l.b16 %v2927
        %v3488 = vunpack.c.h.b16 %v2927
        %v3489 = vunpack.c.l.b16 %v2928
        %v3490 = vunpack.c.h.b16 %v2928
        %v3491 = vunpack.c.l.b16 %v2929
        %v3492 = vunpack.c.h.b16 %v2929
        %v3493 = vunpack.c.l.b16 %v2930
        %v3494 = vunpack.c.h.b16 %v2930
        %v3495 = vunpack.c.l.b16 %v2931
        %v3496 = vunpack.c.h.b16 %v2931
        %v3497 = vunpack.c.l.b16 %v2932
        %v3498 = vunpack.c.h.b16 %v2932
        %v3499 = vunpack.c.l.b16 %v2933
        %v3500 = vunpack.c.h.b16 %v2933
        %v3501 = vunpack.c.l.b16 %v2934
        %v3502 = vunpack.c.h.b16 %v2934
        %v3503 = vunpack.c.l.b16 %v2935
        %v3504 = vunpack.c.h.b16 %v2935
        %v3505 = vunpack.c.l.b16 %v2936
        %v3506 = vunpack.c.h.b16 %v2936
        %v3507 = vunpack.c.l.b16 %v2937
        %v3508 = vunpack.c.h.b16 %v2937
        %v3509 = vunpack.c.l.b16 %v2938
        %v3510 = vunpack.c.h.b16 %v2938
        %v3511 = vunpack.c.l.b16 %v2939
        %v3512 = vunpack.c.h.b16 %v2939
        %v3513 = vunpack.c.l.b16 %v2940
        %v3514 = vunpack.c.h.b16 %v2940
        %v3515 = vunpack.c.l.b16 %v2941
        %v3516 = vunpack.c.h.b16 %v2941
        %v3517 = vunpack.c.l.b16 %v2942
        %v3518 = vunpack.c.h.b16 %v2942
        %v3519 = vunpack.c.l.b16 %v2943
        %v3520 = vunpack.c.h.b16 %v2943
        %v3521 = vunpack.c.l.b16 %v2944
        %v3522 = vunpack.c.h.b16 %v2944
        %v3523 = vunpack.c.l.b16 %v2945
        %v3524 = vunpack.c.h.b16 %v2945
        %v3525 = vunpack.c.l.b16 %v2946
        %v3526 = vunpack.c.h.b16 %v2946
        %v3527 = vunpack.c.l.b16 %v2947
        %v3528 = vunpack.c.h.b16 %v2947
        %v3529 = vunpack.c.l.b16 %v2948
        %v3530 = vunpack.c.h.b16 %v2948
        %v3531 = vunpack.c.l.b16 %v2949
        %v3532 = vunpack.c.h.b16 %v2949
        %v3533 = vunpack.c.l.b16 %v2950
        %v3534 = vunpack.c.h.b16 %v2950
        %v3535 = vunpack.c.l.b16 %v2951
        %v3536 = vunpack.c.h.b16 %v2951
        %v3537 = vunpack.c.l.b16 %v2952
        %v3538 = vunpack.c.h.b16 %v2952
        %v3539 = vunpack.c.l.b16 %v2953
        %v3540 = vunpack.c.h.b16 %v2953
        %v3541 = vunpack.c.l.b16 %v2954
        %v3542 = vunpack.c.h.b16 %v2954
        %v3543 = vunpack.c.l.b16 %v2955
        %v3544 = vunpack.c.h.b16 %v2955
        %v3545 = vunpack.c.l.b16 %v2956
        %v3546 = vunpack.c.h.b16 %v2956
        %v3547 = vunpack.c.l.b16 %v2957
        %v3548 = vunpack.c.h.b16 %v2957
        %v3549 = vunpack.c.l.b16 %v2958
        %v3550 = vunpack.c.h.b16 %v2958
        %v3551 = vunpack.c.l.b16 %v2959
        %v3552 = vunpack.c.h.b16 %v2959
        %v3553 = vunpack.c.l.b16 %v2960
        %v3554 = vunpack.c.h.b16 %v2960
        %v3555 = vunpack.c.l.b16 %v2961
        %v3556 = vunpack.c.h.b16 %v2961
        %v3557 = vunpack.c.l.b16 %v2962
        %v3558 = vunpack.c.h.b16 %v2962
        %v3559 = vunpack.c.l.b16 %v2963
        %v3560 = vunpack.c.h.b16 %v2963
        %v3561 = vunpack.c.l.b16 %v2964
        %v3562 = vunpack.c.h.b16 %v2964
        %v3563 = vunpack.c.l.b16 %v2965
        %v3564 = vunpack.c.h.b16 %v2965
        %v3565 = vunpack.c.l.b16 %v2966
        %v3566 = vunpack.c.h.b16 %v2966
        %v3567 = vunpack.c.l.b16 %v2967
        %v3568 = vunpack.c.h.b16 %v2967
        %v3569 = vpack.c.b16 %v3239, %v3233
        %v3570 = vpack.c.b16 %v3240, %v3234
        %v3571 = vpack.c.b16 %v3241, %v3235
        %v3572 = vpack.c.b16 %v3242, %v3236
        %v3573 = vpack.c.b16 %v3243, %v3237
        %v3574 = vpack.c.b16 %v3244, %v3238
        %v3575 = vpack.c.b16 %v3251, %v3245
        %v3576 = vpack.c.b16 %v3252, %v3246
        %v3577 = vpack.c.b16 %v3253, %v3247
        %v3578 = vpack.c.b16 %v3254, %v3248
        %v3579 = vpack.c.b16 %v3255, %v3249
        %v3580 = vpack.c.b16 %v3256, %v3250
        %v3581 = vpack.c.b16 %v3263, %v3257
        %v3582 = vpack.c.b16 %v3264, %v3258
        %v3583 = vpack.c.b16 %v3265, %v3259
        %v3584 = vpack.c.b16 %v3266, %v3260
        %v3585 = vpack.c.b16 %v3267, %v3261
        %v3586 = vpack.c.b16 %v3268, %v3262
        %v3587 = vpack.c.b16 %v3275, %v3269
        %v3588 = vpack.c.b16 %v3276, %v3270
        %v3589 = vpack.c.b16 %v3277, %v3271
        %v3590 = vpack.c.b16 %v3278, %v3272
        %v3591 = vpack.c.b16 %v3279, %v3273
        %v3592 = vpack.c.b16 %v3280, %v3274
        %v3593 = vpack.c.b16 %v3287, %v3281
        %v3594 = vpack.c.b16 %v3288, %v3282
        %v3595 = vpack.c.b16 %v3289, %v3283
        %v3596 = vpack.c.b16 %v3290, %v3284
        %v3597 = vpack.c.b16 %v3291, %v3285
        %v3598 = vpack.c.b16 %v3292, %v3286
        %v3599 = vpack.c.b16 %v3299, %v3293
        %v3600 = vpack.c.b16 %v3300, %v3294
        %v3601 = vpack.c.b16 %v3301, %v3295
        %v3602 = vpack.c.b16 %v3302, %v3296
        %v3603 = vpack.c.b16 %v3303, %v3297
        %v3604 = vpack.c.b16 %v3304, %v3298
        %v3605 = vpack.c.b16 %v3311, %v3305
        %v3606 = vpack.c.b16 %v3312, %v3306
        %v3607 = vpack.c.b16 %v3313, %v3307
        %v3608 = vpack.c.b16 %v3314, %v3308
        %v3609 = vpack.c.b16 %v3315, %v3309
        %v3610 = vpack.c.b16 %v3316, %v3310
        %v3611 = vpack.c.b16 %v3323, %v3317
        %v3612 = vpack.c.b16 %v3324, %v3318
        %v3613 = vpack.c.b16 %v3325, %v3319
        %v3614 = vpack.c.b16 %v3326, %v3320
        %v3615 = vpack.c.b16 %v3327, %v3321
        %v3616 = vpack.c.b16 %v3328, %v3322
        %v3617 = vpack.c.b16 %v3335, %v3329
        %v3618 = vpack.c.b16 %v3336, %v3330
        %v3619 = vpack.c.b16 %v3337, %v3331
        %v3620 = vpack.c.b16 %v3338, %v3332
        %v3621 = vpack.c.b16 %v3339, %v3333
        %v3622 = vpack.c.b16 %v3340, %v3334
        %v3623 = vpack.c.b16 %v3347, %v3341
        %v3624 = vpack.c.b16 %v3348, %v3342
        %v3625 = vpack.c.b16 %v3349, %v3343
        %v3626 = vpack.c.b16 %v3350, %v3344
        %v3627 = vpack.c.b16 %v3351, %v3345
        %v3628 = vpack.c.b16 %v3352, %v3346
        %v3629 = vpack.c.b16 %v3359, %v3353
        %v3630 = vpack.c.b16 %v3360, %v3354
        %v3631 = vpack.c.b16 %v3361, %v3355
        %v3632 = vpack.c.b16 %v3362, %v3356
        %v3633 = vpack.c.b16 %v3363, %v3357
        %v3634 = vpack.c.b16 %v3364, %v3358
        %v3635 = vpack.c.b16 %v3371, %v3365
        %v3636 = vpack.c.b16 %v3372, %v3366
        %v3637 = vpack.c.b16 %v3373, %v3367
        %v3638 = vpack.c.b16 %v3374, %v3368
        %v3639 = vpack.c.b16 %v3375, %v3369
        %v3640 = vpack.c.b16 %v3376, %v3370
        %v3641 = vpack.c.b16 %v3383, %v3377
        %v3642 = vpack.c.b16 %v3384, %v3378
        %v3643 = vpack.c.b16 %v3385, %v3379
        %v3644 = vpack.c.b16 %v3386, %v3380
        %v3645 = vpack.c.b16 %v3387, %v3381
        %v3646 = vpack.c.b16 %v3388, %v3382
        %v3647 = vpack.c.b16 %v3395, %v3389
        %v3648 = vpack.c.b16 %v3396, %v3390
        %v3649 = vpack.c.b16 %v3397, %v3391
        %v3650 = vpack.c.b16 %v3398, %v3392
        %v3651 = vpack.c.b16 %v3399, %v3393
        %v3652 = vpack.c.b16 %v3400, %v3394
        %v3653 = vpack.c.b16 %v3407, %v3401
        %v3654 = vpack.c.b16 %v3408, %v3402
        %v3655 = vpack.c.b16 %v3409, %v3403
        %v3656 = vpack.c.b16 %v3410, %v3404
        %v3657 = vpack.c.b16 %v3411, %v3405
        %v3658 = vpack.c.b16 %v3412, %v3406
        %v3659 = vpack.c.b16 %v3419, %v3413
        %v3660 = vpack.c.b16 %v3420, %v3414
        %v3661 = vpack.c.b16 %v3421, %v3415
        %v3662 = vpack.c.b16 %v3422, %v3416
        %v3663 = vpack.c.b16 %v3423, %v3417
        %v3664 = vpack.c.b16 %v3424, %v3418
        %v3665 = vpack.c.b16 %v3431, %v3425
        %v3666 = vpack.c.b16 %v3432, %v3426
        %v3667 = vpack.c.b16 %v3433, %v3427
        %v3668 = vpack.c.b16 %v3434, %v3428
        %v3669 = vpack.c.b16 %v3435, %v3429
        %v3670 = vpack.c.b16 %v3436, %v3430
        %v3671 = vpack.c.b16 %v3443, %v3437
        %v3672 = vpack.c.b16 %v3444, %v3438
        %v3673 = vpack.c.b16 %v3445, %v3439
        %v3674 = vpack.c.b16 %v3446, %v3440
        %v3675 = vpack.c.b16 %v3447, %v3441
        %v3676 = vpack.c.b16 %v3448, %v3442
        %v3677 = vpack.c.b16 %v3455, %v3449
        %v3678 = vpack.c.b16 %v3456, %v3450
        %v3679 = vpack.c.b16 %v3457, %v3451
        %v3680 = vpack.c.b16 %v3458, %v3452
        %v3681 = vpack.c.b16 %v3459, %v3453
        %v3682 = vpack.c.b16 %v3460, %v3454
        %v3683 = vpack.c.b16 %v3467, %v3461
        %v3684 = vpack.c.b16 %v3468, %v3462
        %v3685 = vpack.c.b16 %v3469, %v3463
        %v3686 = vpack.c.b16 %v3470, %v3464
        %v3687 = vpack.c.b16 %v3471, %v3465
        %v3688 = vpack.c.b16 %v3472, %v3466
        %v3689 = vpack.c.b16 %v3479, %v3473
        %v3690 = vpack.c.b16 %v3480, %v3474
        %v3691 = vpack.c.b16 %v3481, %v3475
        %v3692 = vpack.c.b16 %v3482, %v3476
        %v3693 = vpack.c.b16 %v3483, %v3477
        %v3694 = vpack.c.b16 %v3484, %v3478
        %v3695 = vpack.c.b16 %v3491, %v3485
        %v3696 = vpack.c.b16 %v3492, %v3486
        %v3697 = vpack.c.b16 %v3493, %v3487
        %v3698 = vpack.c.b16 %v3494, %v3488
        %v3699 = vpack.c.b16 %v3495, %v3489
        %v3700 = vpack.c.b16 %v3496, %v3490
        %v3701 = vpack.c.b16 %v3503, %v3497
        %v3702 = vpack.c.b16 %v3504, %v3498
        %v3703 = vpack.c.b16 %v3505, %v3499
        %v3704 = vpack.c.b16 %v3506, %v3500
        %v3705 = vpack.c.b16 %v3507, %v3501
        %v3706 = vpack.c.b16 %v3508, %v3502
        %v3707 = vpack.c.b16 %v3515, %v3509
        %v3708 = vpack.c.b16 %v3516, %v3510
        %v3709 = vpack.c.b16 %v3517, %v3511
        %v3710 = vpack.c.b16 %v3518, %v3512
        %v3711 = vpack.c.b16 %v3519, %v3513
        %v3712 = vpack.c.b16 %v3520, %v3514
        %v3713 = vpack.c.b16 %v3527, %v3521
        %v3714 = vpack.c.b16 %v3528, %v3522
        %v3715 = vpack.c.b16 %v3529, %v3523
        %v3716 = vpack.c.b16 %v3530, %v3524
        %v3717 = vpack.c.b16 %v3531, %v3525
        %v3718 = vpack.c.b16 %v3532, %v3526
        %v3719 = vpack.c.b16 %v3539, %v3533
        %v3720 = vpack.c.b16 %v3540, %v3534
        %v3721 = vpack.c.b16 %v3541, %v3535
        %v3722 = vpack.c.b16 %v3542, %v3536
        %v3723 = vpack.c.b16 %v3543, %v3537
        %v3724 = vpack.c.b16 %v3544, %v3538
        %v3725 = vpack.c.b16 %v3551, %v3545
        %v3726 = vpack.c.b16 %v3552, %v3546
        %v3727 = vpack.c.b16 %v3553, %v3547
        %v3728 = vpack.c.b16 %v3554, %v3548
        %v3729 = vpack.c.b16 %v3555, %v3549
        %v3730 = vpack.c.b16 %v3556, %v3550
        %v3731 = vpack.c.b16 %v3563, %v3557
        %v3732 = vpack.c.b16 %v3564, %v3558
        %v3733 = vpack.c.b16 %v3565, %v3559
        %v3734 = vpack.c.b16 %v3566, %v3560
        %v3735 = vpack.c.b16 %v3567, %v3561
        %v3736 = vpack.c.b16 %v3568, %v3562
        %v4001 = vunpack.c.l.b16 %v2969
        %v4002 = vunpack.c.h.b16 %v2969
        %v4003 = vunpack.c.l.b16 %v2970
        %v4004 = vunpack.c.h.b16 %v2970
        %v4005 = vunpack.c.l.b16 %v2971
        %v4006 = vunpack.c.h.b16 %v2971
        %v4007 = vunpack.c.l.b16 %v2972
        %v4008 = vunpack.c.h.b16 %v2972
        %v4009 = vunpack.c.l.b16 %v2973
        %v4010 = vunpack.c.h.b16 %v2973
        %v4011 = vunpack.c.l.b16 %v2974
        %v4012 = vunpack.c.h.b16 %v2974
        %v4013 = vunpack.c.l.b16 %v2975
        %v4014 = vunpack.c.h.b16 %v2975
        %v4015 = vunpack.c.l.b16 %v2976
        %v4016 = vunpack.c.h.b16 %v2976
        %v4017 = vunpack.c.l.b16 %v2977
        %v4018 = vunpack.c.h.b16 %v2977
        %v4019 = vunpack.c.l.b16 %v2978
        %v4020 = vunpack.c.h.b16 %v2978
        %v4021 = vunpack.c.l.b16 %v2979
        %v4022 = vunpack.c.h.b16 %v2979
        %v4023 = vunpack.c.l.b16 %v2980
        %v4024 = vunpack.c.h.b16 %v2980
        %v4025 = vunpack.c.l.b16 %v2981
        %v4026 = vunpack.c.h.b16 %v2981
        %v4027 = vunpack.c.l.b16 %v2982
        %v4028 = vunpack.c.h.b16 %v2982
        %v4029 = vunpack.c.l.b16 %v2983
        %v4030 = vunpack.c.h.b16 %v2983
        %v4031 = vunpack.c.l.b16 %v2984
        %v4032 = vunpack.c.h.b16 %v2984
        %v4033 = vunpack.c.l.b16 %v2985
        %v4034 = vunpack.c.h.b16 %v2985
        %v4035 = vunpack.c.l.b16 %v2986
        %v4036 = vunpack.c.h.b16 %v2986
        %v4037 = vunpack.c.l.b16 %v2987
        %v4038 = vunpack.c.h.b16 %v2987
        %v4039 = vunpack.c.l.b16 %v2988
        %v4040 = vunpack.c.h.b16 %v2988
        %v4041 = vunpack.c.l.b16 %v2989
        %v4042 = vunpack.c.h.b16 %v2989
        %v4043 = vunpack.c.l.b16 %v2990
        %v4044 = vunpack.c.h.b16 %v2990
        %v4045 = vunpack.c.l.b16 %v2991
        %v4046 = vunpack.c.h.b16 %v2991
        %v4047 = vunpack.c.l.b16 %v2992
        %v4048 = vunpack.c.h.b16 %v2992
        %v4049 = vunpack.c.l.b16 %v2993
        %v4050 = vunpack.c.h.b16 %v2993
        %v4051 = vunpack.c.l.b16 %v2994
        %v4052 = vunpack.c.h.b16 %v2994
        %v4053 = vunpack.c.l.b16 %v2995
        %v4054 = vunpack.c.h.b16 %v2995
        %v4055 = vunpack.c.l.b16 %v2996
        %v4056 = vunpack.c.h.b16 %v2996
        %v4057 = vunpack.c.l.b16 %v2997
        %v4058 = vunpack.c.h.b16 %v2997
        %v4059 = vunpack.c.l.b16 %v2998
        %v4060 = vunpack.c.h.b16 %v2998
        %v4061 = vunpack.c.l.b16 %v2999
        %v4062 = vunpack.c.h.b16 %v2999
        %v4063 = vunpack.c.l.b16 %v3000
        %v4064 = vunpack.c.h.b16 %v3000
        %v4065 = vunpack.c.l.b16 %v3001
        %v4066 = vunpack.c.h.b16 %v3001
        %v4067 = vunpack.c.l.b16 %v3002
        %v4068 = vunpack.c.h.b16 %v3002
        %v4069 = vunpack.c.l.b16 %v3003
        %v4070 = vunpack.c.h.b16 %v3003
        %v4071 = vunpack.c.l.b16 %v3004
        %v4072 = vunpack.c.h.b16 %v3004
        %v4073 = vunpack.c.l.b16 %v3005
        %v4074 = vunpack.c.h.b16 %v3005
        %v4075 = vunpack.c.l.b16 %v3006
        %v4076 = vunpack.c.h.b16 %v3006
        %v4077 = vunpack.c.l.b16 %v3007
        %v4078 = vunpack.c.h.b16 %v3007
        %v4079 = vunpack.c.l.b16 %v3008
        %v4080 = vunpack.c.h.b16 %v3008
        %v4081 = vunpack.c.l.b16 %v3009
        %v4082 = vunpack.c.h.b16 %v3009
        %v4083 = vunpack.c.l.b16 %v3010
        %v4084 = vunpack.c.h.b16 %v3010
        %v4085 = vunpack.c.l.b16 %v3011
        %v4086 = vunpack.c.h.b16 %v3011
        %v4087 = vunpack.c.l.b16 %v3012
        %v4088 = vunpack.c.h.b16 %v3012
        %v4089 = vunpack.c.l.b16 %v3013
        %v4090 = vunpack.c.h.b16 %v3013
        %v4091 = vunpack.c.l.b16 %v3014
        %v4092 = vunpack.c.h.b16 %v3014
        %v4093 = vunpack.c.l.b16 %v3015
        %v4094 = vunpack.c.h.b16 %v3015
        %v4095 = vunpack.c.l.b16 %v3016
        %v4096 = vunpack.c.h.b16 %v3016
        %v4097 = vunpack.c.l.b16 %v3017
        %v4098 = vunpack.c.h.b16 %v3017
        %v4099 = vunpack.c.l.b16 %v3018
        %v4100 = vunpack.c.h.b16 %v3018
        %v4101 = vunpack.c.l.b16 %v3019
        %v4102 = vunpack.c.h.b16 %v3019
        %v4103 = vunpack.c.l.b16 %v3020
        %v4104 = vunpack.c.h.b16 %v3020
        %v4105 = vunpack.c.l.b16 %v3021
        %v4106 = vunpack.c.h.b16 %v3021
        %v4107 = vunpack.c.l.b16 %v3022
        %v4108 = vunpack.c.h.b16 %v3022
        %v4109 = vunpack.c.l.b16 %v3023
        %v4110 = vunpack.c.h.b16 %v3023
        %v4111 = vunpack.c.l.b16 %v3024
        %v4112 = vunpack.c.h.b16 %v3024
        %v4113 = vunpack.c.l.b16 %v3025
        %v4114 = vunpack.c.h.b16 %v3025
        %v4115 = vunpack.c.l.b16 %v3026
        %v4116 = vunpack.c.h.b16 %v3026
        %v4117 = vunpack.c.l.b16 %v3027
        %v4118 = vunpack.c.h.b16 %v3027
        %v4119 = vunpack.c.l.b16 %v3028
        %v4120 = vunpack.c.h.b16 %v3028
        %v4121 = vunpack.c.l.b16 %v3029
        %v4122 = vunpack.c.h.b16 %v3029
        %v4123 = vunpack.c.l.b16 %v3030
        %v4124 = vunpack.c.h.b16 %v3030
        %v4125 = vunpack.c.l.b16 %v3031
        %v4126 = vunpack.c.h.b16 %v3031
        %v4127 = vunpack.c.l.b16 %v3032
        %v4128 = vunpack.c.h.b16 %v3032
        %v4129 = vunpack.c.l.b16 %v3033
        %v4130 = vunpack.c.h.b16 %v3033
        %v4131 = vunpack.c.l.b16 %v3034
        %v4132 = vunpack.c.h.b16 %v3034
        %v4133 = vunpack.c.l.b16 %v3035
        %v4134 = vunpack.c.h.b16 %v3035
        %v4135 = vunpack.c.l.b16 %v3036
        %v4136 = vunpack.c.h.b16 %v3036
        %v4137 = vunpack.c.l.b16 %v3037
        %v4138 = vunpack.c.h.b16 %v3037
        %v4139 = vunpack.c.l.b16 %v3038
        %v4140 = vunpack.c.h.b16 %v3038
        %v4141 = vunpack.c.l.b16 %v3039
        %v4142 = vunpack.c.h.b16 %v3039
        %v4143 = vunpack.c.l.b16 %v3040
        %v4144 = vunpack.c.h.b16 %v3040
        %v4145 = vunpack.c.l.b16 %v3041
        %v4146 = vunpack.c.h.b16 %v3041
        %v4147 = vunpack.c.l.b16 %v3042
        %v4148 = vunpack.c.h.b16 %v3042
        %v4149 = vunpack.c.l.b16 %v3043
        %v4150 = vunpack.c.h.b16 %v3043
        %v4151 = vunpack.c.l.b16 %v3044
        %v4152 = vunpack.c.h.b16 %v3044
        %v4153 = vunpack.c.l.b16 %v3045
        %v4154 = vunpack.c.h.b16 %v3045
        %v4155 = vunpack.c.l.b16 %v3046
        %v4156 = vunpack.c.h.b16 %v3046
        %v4157 = vunpack.c.l.b16 %v3047
        %v4158 = vunpack.c.h.b16 %v3047
        %v4159 = vunpack.c.l.b16 %v3048
        %v4160 = vunpack.c.h.b16 %v3048
        %v4161 = vunpack.c.l.b16 %v3049
        %v4162 = vunpack.c.h.b16 %v3049
        %v4163 = vunpack.c.l.b16 %v3050
        %v4164 = vunpack.c.h.b16 %v3050
        %v4165 = vunpack.c.l.b16 %v3051
        %v4166 = vunpack.c.h.b16 %v3051
        %v4167 = vunpack.c.l.b16 %v3052
        %v4168 = vunpack.c.h.b16 %v3052
        %v4169 = vunpack.c.l.b16 %v3053
        %v4170 = vunpack.c.h.b16 %v3053
        %v4171 = vunpack.c.l.b16 %v3054
        %v4172 = vunpack.c.h.b16 %v3054
        %v4173 = vunpack.c.l.b16 %v3055
        %v4174 = vunpack.c.h.b16 %v3055
        %v4175 = vunpack.c.l.b16 %v3056
        %v4176 = vunpack.c.h.b16 %v3056
        %v4177 = vunpack.c.l.b16 %v3057
        %v4178 = vunpack.c.h.b16 %v3057
        %v4179 = vunpack.c.l.b16 %v3058
        %v4180 = vunpack.c.h.b16 %v3058
        %v4181 = vunpack.c.l.b16 %v3059
        %v4182 = vunpack.c.h.b16 %v3059
        %v4183 = vunpack.c.l.b16 %v3060
        %v4184 = vunpack.c.h.b16 %v3060
        %v4185 = vunpack.c.l.b16 %v3061
        %v4186 = vunpack.c.h.b16 %v3061
        %v4187 = vunpack.c.l.b16 %v3062
        %v4188 = vunpack.c.h.b16 %v3062
        %v4189 = vunpack.c.l.b16 %v3063
        %v4190 = vunpack.c.h.b16 %v3063
        %v4191 = vunpack.c.l.b16 %v3064
        %v4192 = vunpack.c.h.b16 %v3064
        %v4193 = vpack.c.b16 %v4003, %v4001
        %v4194 = vpack.c.b16 %v4004, %v4002
        %v4195 = vpack.c.b16 %v4007, %v4005
        %v4196 = vpack.c.b16 %v4008, %v4006
        %v4197 = vpack.c.b16 %v4011, %v4009
        %v4198 = vpack.c.b16 %v4012, %v4010
        %v4199 = vpack.c.b16 %v4015, %v4013
        %v4200 = vpack.c.b16 %v4016, %v4014
        %v4201 = vpack.c.b16 %v4019, %v4017
        %v4202 = vpack.c.b16 %v4020, %v4018
        %v4203 = vpack.c.b16 %v4023, %v4021
        %v4204 = vpack.c.b16 %v4024, %v4022
        %v4205 = vpack.c.b16 %v4027, %v4025
        %v4206 = vpack.c.b16 %v4028, %v4026
        %v4207 = vpack.c.b16 %v4031, %v4029
        %v4208 = vpack.c.b16 %v4032, %v4030
        %v4209 = vpack.c.b16 %v4035, %v4033
        %v4210 = vpack.c.b16 %v4036, %v4034
        %v4211 = vpack.c.b16 %v4039, %v4037
        %v4212 = vpack.c.b16 %v4040, %v4038
        %v4213 = vpack.c.b16 %v4043, %v4041
        %v4214 = vpack.c.b16 %v4044, %v4042
        %v4215 = vpack.c.b16 %v4047, %v4045
        %v4216 = vpack.c.b16 %v4048, %v4046
        %v4217 = vpack.c.b16 %v4051, %v4049
        %v4218 = vpack.c.b16 %v4052, %v4050
        %v4219 = vpack.c.b16 %v4055, %v4053
        %v4220 = vpack.c.b16 %v4056, %v4054
        %v4221 = vpack.c.b16 %v4059, %v4057
        %v4222 = vpack.c.b16 %v4060, %v4058
        %v4223 = vpack.c.b16 %v4063, %v4061
        %v4224 = vpack.c.b16 %v4064, %v4062
        %v4225 = vpack.c.b16 %v4067, %v4065
        %v4226 = vpack.c.b16 %v4068, %v4066
        %v4227 = vpack.c.b16 %v4071, %v4069
        %v4228 = vpack.c.b16 %v4072, %v4070
        %v4229 = vpack.c.b16 %v4075, %v4073
        %v4230 = vpack.c.b16 %v4076, %v4074
        %v4231 = vpack.c.b16 %v4079, %v4077
        %v4232 = vpack.c.b16 %v4080, %v4078
        %v4233 = vpack.c.b16 %v4083, %v4081
        %v4234 = vpack.c.b16 %v4084, %v4082
        %v4235 = vpack.c.b16 %v4087, %v4085
        %v4236 = vpack.c.b16 %v4088, %v4086
        %v4237 = vpack.c.b16 %v4091, %v4089
        %v4238 = vpack.c.b16 %v4092, %v4090
        %v4239 = vpack.c.b16 %v4095, %v4093
        %v4240 = vpack.c.b16 %v4096, %v4094
        %v4241 = vpack.c.b16 %v4099, %v4097
        %v4242 = vpack.c.b16 %v4100, %v4098
        %v4243 = vpack.c.b16 %v4103, %v4101
        %v4244 = vpack.c.b16 %v4104, %v4102
        %v4245 = vpack.c.b16 %v4107, %v4105
        %v4246 = vpack.c.b16 %v4108, %v4106
        %v4247 = vpack.c.b16 %v4111, %v4109
        %v4248 = vpack.c.b16 %v4112, %v4110
        %v4249 = vpack.c.b16 %v4115, %v4113
        %v4250 = vpack.c.b16 %v4116, %v4114
        %v4251 = vpack.c.b16 %v4119, %v4117
        %v4252 = vpack.c.b16 %v4120, %v4118
        %v4253 = vpack.c.b16 %v4123, %v4121
        %v4254 = vpack.c.b16 %v4124, %v4122
        %v4255 = vpack.c.b16 %v4127, %v4125
        %v4256 = vpack.c.b16 %v4128, %v4126
        %v4257 = vpack.c.b16 %v4131, %v4129
        %v4258 = vpack.c.b16 %v4132, %v4130
        %v4259 = vpack.c.b16 %v4135, %v4133
        %v4260 = vpack.c.b16 %v4136, %v4134
        %v4261 = vpack.c.b16 %v4139, %v4137
        %v4262 = vpack.c.b16 %v4140, %v4138
        %v4263 = vpack.c.b16 %v4143, %v4141
        %v4264 = vpack.c.b16 %v4144, %v4142
        %v4265 = vpack.c.b16 %v4147, %v4145
        %v4266 = vpack.c.b16 %v4148, %v4146
        %v4267 = vpack.c.b16 %v4151, %v4149
        %v4268 = vpack.c.b16 %v4152, %v4150
        %v4269 = vpack.c.b16 %v4155, %v4153
        %v4270 = vpack.c.b16 %v4156, %v4154
        %v4271 = vpack.c.b16 %v4159, %v4157
        %v4272 = vpack.c.b16 %v4160, %v4158
        %v4273 = vpack.c.b16 %v4163, %v4161
        %v4274 = vpack.c.b16 %v4164, %v4162
        %v4275 = vpack.c.b16 %v4167, %v4165
        %v4276 = vpack.c.b16 %v4168, %v4166
        %v4277 = vpack.c.b16 %v4171, %v4169
        %v4278 = vpack.c.b16 %v4172, %v4170
        %v4279 = vpack.c.b16 %v4175, %v4173
        %v4280 = vpack.c.b16 %v4176, %v4174
        %v4281 = vpack.c.b16 %v4179, %v4177
        %v4282 = vpack.c.b16 %v4180, %v4178
        %v4283 = vpack.c.b16 %v4183, %v4181
        %v4284 = vpack.c.b16 %v4184, %v4182
        %v4285 = vpack.c.b16 %v4187, %v4185
        %v4286 = vpack.c.b16 %v4188, %v4186
        %v4287 = vpack.c.b16 %v4191, %v4189
        %v4288 = vpack.c.b16 %v4192, %v4190
        %4385 = vmatprep.subr.bf16.mxu0 %v4194
        %4386 = vmatpush1.bf16.msra.mxu0 %v4193
        %4387 = vmatprep.subr.bf16.mxu0 %v4196
        %4388 = vmatpush1.bf16.msra.mxu0 %v4195
        %4389 = vmatprep.subr.bf16.mxu0 %v4198
        %4390 = vmatpush1.bf16.msra.mxu0 %v4197
        %4391 = vmatprep.subr.bf16.mxu0 %v4200
        %4392 = vmatpush1.bf16.msra.mxu0 %v4199
        %4393 = vmatprep.subr.bf16.mxu0 %v4202
        %4394 = vmatpush1.bf16.msra.mxu0 %v4201
        %4395 = vmatprep.subr.bf16.mxu0 %v4204
        %4396 = vmatpush1.bf16.msra.mxu0 %v4203
        %4397 = vmatprep.subr.bf16.mxu0 %v4206
        %4398 = vmatpush1.bf16.msra.mxu0 %v4205
        %4399 = vmatprep.subr.bf16.mxu0 %v4208
        %4400 = vmatpush1.bf16.msra.mxu0 %v4207
        %4401 = vmatprep.subr.bf16.mxu0 %v4210
        %4402 = vmatpush1.bf16.msra.mxu0 %v4209
        %4403 = vmatprep.subr.bf16.mxu0 %v4212
        %4404 = vmatpush1.bf16.msra.mxu0 %v4211
        %4405 = vmatprep.subr.bf16.mxu0 %v4214
        %4406 = vmatpush1.bf16.msra.mxu0 %v4213
        %4407 = vmatprep.subr.bf16.mxu0 %v4216
        %4408 = vmatpush1.bf16.msra.mxu0 %v4215
        %4409 = vmatprep.subr.bf16.mxu0 %v4218
        %4410 = vmatpush1.bf16.msra.mxu0 %v4217
        %4411 = vmatprep.subr.bf16.mxu0 %v4220
        %4412 = vmatpush1.bf16.msra.mxu0 %v4219
        %4413 = vmatprep.subr.bf16.mxu0 %v4222
        %4414 = vmatpush1.bf16.msra.mxu0 %v4221
        %4415 = vmatprep.subr.bf16.mxu0 %v4224
        %4416 = vmatpush1.bf16.msra.mxu0 %v4223
        %4417 = vmatprep.mubr.bf16.mxu0 %v3570
        %4418 = vmatmul.mubr.bf16.gmra.mrb[0].mxu0 %v3569
        %v4419 = vpop.f32.mrb[0].mxu0
        %v4420 = vadd.f32 0.0, %v4419
        %v4421 = vpop.f32.mrb[0].mxu0
        %v4422 = vadd.f32 0.0, %v4421
        %v4423 = vpop.f32.mrb[0].mxu0
        %v4424 = vadd.f32 0.0, %v4423
        %v4425 = vpop.f32.mrb[0].mxu0
        %v4426 = vadd.f32 0.0, %v4425
        %4427 = vmatprep.mubr.bf16.mxu0 %v3576
        %4428 = vmatmul.mubr.bf16.gmra.mrb[0].mxu0 %v3575
        %v4429 = vpop.f32.mrb[0].mxu0
        %v4430 = vadd.f32 0.0, %v4429
        %v4431 = vpop.f32.mrb[0].mxu0
        %v4432 = vadd.f32 0.0, %v4431
        %v4433 = vpop.f32.mrb[0].mxu0
        %v4434 = vadd.f32 0.0, %v4433
        %v4435 = vpop.f32.mrb[0].mxu0
        %v4436 = vadd.f32 0.0, %v4435
        %4437 = vmatprep.mubr.bf16.mxu0 %v3582
        %4438 = vmatmul.mubr.bf16.gmra.mrb[0].mxu0 %v3581
        %v4439 = vpop.f32.mrb[0].mxu0
        %v4440 = vadd.f32 0.0, %v4439
        %v4441 = vpop.f32.mrb[0].mxu0
        %v4442 = vadd.f32 0.0, %v4441
        %v4443 = vpop.f32.mrb[0].mxu0
        %v4444 = vadd.f32 0.0, %v4443
        %v4445 = vpop.f32.mrb[0].mxu0
        %v4446 = vadd.f32 0.0, %v4445
        %4447 = vmatprep.mubr.bf16.mxu0 %v3588
        %4448 = vmatmul.mubr.bf16.gmra.mrb[0].mxu0 %v3587
        %v4449 = vpop.f32.mrb[0].mxu0
        %v4450 = vadd.f32 0.0, %v4449
        %v4451 = vpop.f32.mrb[0].mxu0
        %v4452 = vadd.f32 0.0, %v4451
        %v4453 = vpop.f32.mrb[0].mxu0
        %v4454 = vadd.f32 0.0, %v4453
        %v4455 = vpop.f32.mrb[0].mxu0
        %v4456 = vadd.f32 0.0, %v4455
        %4457 = vmatprep.mubr.bf16.mxu0 %v3594
        %4458 = vmatmul.mubr.bf16.gmra.mrb[0].mxu0 %v3593
        %v4459 = vpop.f32.mrb[0].mxu0
        %v4460 = vadd.f32 0.0, %v4459
        %v4461 = vpop.f32.mrb[0].mxu0
        %v4462 = vadd.f32 0.0, %v4461
        %v4463 = vpop.f32.mrb[0].mxu0
        %v4464 = vadd.f32 0.0, %v4463
        %v4465 = vpop.f32.mrb[0].mxu0
        %v4466 = vadd.f32 0.0, %v4465
        %4467 = vmatprep.mubr.bf16.mxu0 %v3600
        %4468 = vmatmul.mubr.bf16.gmra.mrb[0].mxu0 %v3599
        %v4469 = vpop.f32.mrb[0].mxu0
        %v4470 = vadd.f32 0.0, %v4469
        %v4471 = vpop.f32.mrb[0].mxu0
        %v4472 = vadd.f32 0.0, %v4471
        %v4473 = vpop.f32.mrb[0].mxu0
        %v4474 = vadd.f32 0.0, %v4473
        %v4475 = vpop.f32.mrb[0].mxu0
        %v4476 = vadd.f32 0.0, %v4475
        %4477 = vmatprep.mubr.bf16.mxu0 %v3606
        %4478 = vmatmul.mubr.bf16.gmra.mrb[0].mxu0 %v3605
        %v4479 = vpop.f32.mrb[0].mxu0
        %v4480 = vadd.f32 0.0, %v4479
        %v4481 = vpop.f32.mrb[0].mxu0
        %v4482 = vadd.f32 0.0, %v4481
        %v4483 = vpop.f32.mrb[0].mxu0
        %v4484 = vadd.f32 0.0, %v4483
        %v4485 = vpop.f32.mrb[0].mxu0
        %v4486 = vadd.f32 0.0, %v4485
        %4487 = vmatprep.mubr.bf16.mxu0 %v3612
        %4488 = vmatmul.mubr.bf16.gmra.mrb[0].mxu0 %v3611
        %v4489 = vpop.f32.mrb[0].mxu0
        %v4490 = vadd.f32 0.0, %v4489
        %v4491 = vpop.f32.mrb[0].mxu0
        %v4492 = vadd.f32 0.0, %v4491
        %v4493 = vpop.f32.mrb[0].mxu0
        %v4494 = vadd.f32 0.0, %v4493
        %v4495 = vpop.f32.mrb[0].mxu0
        %v4496 = vadd.f32 0.0, %v4495
        %4497 = vmatprep.mubr.bf16.mxu0 %v3618
        %4498 = vmatmul.mubr.bf16.gmra.mrb[0].mxu0 %v3617
        %v4499 = vpop.f32.mrb[0].mxu0
        %v4500 = vadd.f32 0.0, %v4499
        %v4501 = vpop.f32.mrb[0].mxu0
        %v4502 = vadd.f32 0.0, %v4501
        %v4503 = vpop.f32.mrb[0].mxu0
        %v4504 = vadd.f32 0.0, %v4503
        %v4505 = vpop.f32.mrb[0].mxu0
        %v4506 = vadd.f32 0.0, %v4505
        %4507 = vmatprep.mubr.bf16.mxu0 %v3624
        %4508 = vmatmul.mubr.bf16.gmra.mrb[0].mxu0 %v3623
        %v4509 = vpop.f32.mrb[0].mxu0
        %v4510 = vadd.f32 0.0, %v4509
        %v4511 = vpop.f32.mrb[0].mxu0
        %v4512 = vadd.f32 0.0, %v4511
        %v4513 = vpop.f32.mrb[0].mxu0
        %v4514 = vadd.f32 0.0, %v4513
        %v4515 = vpop.f32.mrb[0].mxu0
        %v4516 = vadd.f32 0.0, %v4515
        %4517 = vmatprep.mubr.bf16.mxu0 %v3630
        %4518 = vmatmul.mubr.bf16.gmra.mrb[0].mxu0 %v3629
        %v4519 = vpop.f32.mrb[0].mxu0
        %v4520 = vadd.f32 0.0, %v4519
        %v4521 = vpop.f32.mrb[0].mxu0
        %v4522 = vadd.f32 0.0, %v4521
        %v4523 = vpop.f32.mrb[0].mxu0
        %v4524 = vadd.f32 0.0, %v4523
        %v4525 = vpop.f32.mrb[0].mxu0
        %v4526 = vadd.f32 0.0, %v4525
        %4527 = vmatprep.mubr.bf16.mxu0 %v3636
        %4528 = vmatmul.mubr.bf16.gmra.mrb[0].mxu0 %v3635
        %v4529 = vpop.f32.mrb[0].mxu0
        %v4530 = vadd.f32 0.0, %v4529
        %v4531 = vpop.f32.mrb[0].mxu0
        %v4532 = vadd.f32 0.0, %v4531
        %v4533 = vpop.f32.mrb[0].mxu0
        %v4534 = vadd.f32 0.0, %v4533
        %v4535 = vpop.f32.mrb[0].mxu0
        %v4536 = vadd.f32 0.0, %v4535
        %4537 = vmatprep.mubr.bf16.mxu0 %v3642
        %4538 = vmatmul.mubr.bf16.gmra.mrb[0].mxu0 %v3641
        %v4539 = vpop.f32.mrb[0].mxu0
        %v4540 = vadd.f32 0.0, %v4539
        %v4541 = vpop.f32.mrb[0].mxu0
        %v4542 = vadd.f32 0.0, %v4541
        %v4543 = vpop.f32.mrb[0].mxu0
        %v4544 = vadd.f32 0.0, %v4543
        %v4545 = vpop.f32.mrb[0].mxu0
        %v4546 = vadd.f32 0.0, %v4545
        %4547 = vmatprep.mubr.bf16.mxu0 %v3648
        %4548 = vmatmul.mubr.bf16.gmra.mrb[0].mxu0 %v3647
        %v4549 = vpop.f32.mrb[0].mxu0
        %v4550 = vadd.f32 0.0, %v4549
        %v4551 = vpop.f32.mrb[0].mxu0
        %v4552 = vadd.f32 0.0, %v4551
        %v4553 = vpop.f32.mrb[0].mxu0
        %v4554 = vadd.f32 0.0, %v4553
        %v4555 = vpop.f32.mrb[0].mxu0
        %v4556 = vadd.f32 0.0, %v4555
        %4557 = vmatprep.mubr.bf16.mxu0 %v3654
        %4558 = vmatmul.mubr.bf16.gmra.mrb[0].mxu0 %v3653
        %v4559 = vpop.f32.mrb[0].mxu0
        %v4560 = vadd.f32 0.0, %v4559
        %v4561 = vpop.f32.mrb[0].mxu0
        %v4562 = vadd.f32 0.0, %v4561
        %v4563 = vpop.f32.mrb[0].mxu0
        %v4564 = vadd.f32 0.0, %v4563
        %v4565 = vpop.f32.mrb[0].mxu0
        %v4566 = vadd.f32 0.0, %v4565
        %4567 = vmatprep.mubr.bf16.mxu0 %v3660
        %4568 = vmatmul.mubr.bf16.gmra.mrb[0].mxu0 %v3659
        %v4569 = vpop.f32.mrb[0].mxu0
        %v4570 = vadd.f32 0.0, %v4569
        %v4571 = vpop.f32.mrb[0].mxu0
        %v4572 = vadd.f32 0.0, %v4571
        %v4573 = vpop.f32.mrb[0].mxu0
        %v4574 = vadd.f32 0.0, %v4573
        %v4575 = vpop.f32.mrb[0].mxu0
        %v4576 = vadd.f32 0.0, %v4575
        %4577 = vmatprep.mubr.bf16.mxu0 %v3666
        %4578 = vmatmul.mubr.bf16.gmra.mrb[0].mxu0 %v3665
        %v4579 = vpop.f32.mrb[0].mxu0
        %v4580 = vadd.f32 0.0, %v4579
        %v4581 = vpop.f32.mrb[0].mxu0
        %v4582 = vadd.f32 0.0, %v4581
        %v4583 = vpop.f32.mrb[0].mxu0
        %v4584 = vadd.f32 0.0, %v4583
        %v4585 = vpop.f32.mrb[0].mxu0
        %v4586 = vadd.f32 0.0, %v4585
        %4587 = vmatprep.mubr.bf16.mxu0 %v3672
        %4588 = vmatmul.mubr.bf16.gmra.mrb[0].mxu0 %v3671
        %v4589 = vpop.f32.mrb[0].mxu0
        %v4590 = vadd.f32 0.0, %v4589
        %v4591 = vpop.f32.mrb[0].mxu0
        %v4592 = vadd.f32 0.0, %v4591
        %v4593 = vpop.f32.mrb[0].mxu0
        %v4594 = vadd.f32 0.0, %v4593
        %v4595 = vpop.f32.mrb[0].mxu0
        %v4596 = vadd.f32 0.0, %v4595
        %4597 = vmatprep.mubr.bf16.mxu0 %v3678
        %4598 = vmatmul.mubr.bf16.gmra.mrb[0].mxu0 %v3677
        %v4599 = vpop.f32.mrb[0].mxu0
        %v4600 = vadd.f32 0.0, %v4599
        %v4601 = vpop.f32.mrb[0].mxu0
        %v4602 = vadd.f32 0.0, %v4601
        %v4603 = vpop.f32.mrb[0].mxu0
        %v4604 = vadd.f32 0.0, %v4603
        %v4605 = vpop.f32.mrb[0].mxu0
        %v4606 = vadd.f32 0.0, %v4605
        %4607 = vmatprep.mubr.bf16.mxu0 %v3684
        %4608 = vmatmul.mubr.bf16.gmra.mrb[0].mxu0 %v3683
        %v4609 = vpop.f32.mrb[0].mxu0
        %v4610 = vadd.f32 0.0, %v4609
        %v4611 = vpop.f32.mrb[0].mxu0
        %v4612 = vadd.f32 0.0, %v4611
        %v4613 = vpop.f32.mrb[0].mxu0
        %v4614 = vadd.f32 0.0, %v4613
        %v4615 = vpop.f32.mrb[0].mxu0
        %v4616 = vadd.f32 0.0, %v4615
        %4617 = vmatprep.mubr.bf16.mxu0 %v3690
        %4618 = vmatmul.mubr.bf16.gmra.mrb[0].mxu0 %v3689
        %v4619 = vpop.f32.mrb[0].mxu0
        %v4620 = vadd.f32 0.0, %v4619
        %v4621 = vpop.f32.mrb[0].mxu0
        %v4622 = vadd.f32 0.0, %v4621
        %v4623 = vpop.f32.mrb[0].mxu0
        %v4624 = vadd.f32 0.0, %v4623
        %v4625 = vpop.f32.mrb[0].mxu0
        %v4626 = vadd.f32 0.0, %v4625
        %4627 = vmatprep.mubr.bf16.mxu0 %v3696
        %4628 = vmatmul.mubr.bf16.gmra.mrb[0].mxu0 %v3695
        %v4629 = vpop.f32.mrb[0].mxu0
        %v4630 = vadd.f32 0.0, %v4629
        %v4631 = vpop.f32.mrb[0].mxu0
        %v4632 = vadd.f32 0.0, %v4631
        %v4633 = vpop.f32.mrb[0].mxu0
        %v4634 = vadd.f32 0.0, %v4633
        %v4635 = vpop.f32.mrb[0].mxu0
        %v4636 = vadd.f32 0.0, %v4635
        %4637 = vmatprep.mubr.bf16.mxu0 %v3702
        %4638 = vmatmul.mubr.bf16.gmra.mrb[0].mxu0 %v3701
        %v4639 = vpop.f32.mrb[0].mxu0
        %v4640 = vadd.f32 0.0, %v4639
        %v4641 = vpop.f32.mrb[0].mxu0
        %v4642 = vadd.f32 0.0, %v4641
        %v4643 = vpop.f32.mrb[0].mxu0
        %v4644 = vadd.f32 0.0, %v4643
        %v4645 = vpop.f32.mrb[0].mxu0
        %v4646 = vadd.f32 0.0, %v4645
        %4647 = vmatprep.mubr.bf16.mxu0 %v3708
        %4648 = vmatmul.mubr.bf16.gmra.mrb[0].mxu0 %v3707
        %v4649 = vpop.f32.mrb[0].mxu0
        %v4650 = vadd.f32 0.0, %v4649
        %v4651 = vpop.f32.mrb[0].mxu0
        %v4652 = vadd.f32 0.0, %v4651
        %v4653 = vpop.f32.mrb[0].mxu0
        %v4654 = vadd.f32 0.0, %v4653
        %v4655 = vpop.f32.mrb[0].mxu0
        %v4656 = vadd.f32 0.0, %v4655
        %4657 = vmatprep.mubr.bf16.mxu0 %v3714
        %4658 = vmatmul.mubr.bf16.gmra.mrb[0].mxu0 %v3713
        %v4659 = vpop.f32.mrb[0].mxu0
        %v4660 = vadd.f32 0.0, %v4659
        %v4661 = vpop.f32.mrb[0].mxu0
        %v4662 = vadd.f32 0.0, %v4661
        %v4663 = vpop.f32.mrb[0].mxu0
        %v4664 = vadd.f32 0.0, %v4663
        %v4665 = vpop.f32.mrb[0].mxu0
        %v4666 = vadd.f32 0.0, %v4665
        %4667 = vmatprep.mubr.bf16.mxu0 %v3720
        %4668 = vmatmul.mubr.bf16.gmra.mrb[0].mxu0 %v3719
        %v4669 = vpop.f32.mrb[0].mxu0
        %v4670 = vadd.f32 0.0, %v4669
        %v4671 = vpop.f32.mrb[0].mxu0
        %v4672 = vadd.f32 0.0, %v4671
        %v4673 = vpop.f32.mrb[0].mxu0
        %v4674 = vadd.f32 0.0, %v4673
        %v4675 = vpop.f32.mrb[0].mxu0
        %v4676 = vadd.f32 0.0, %v4675
        %4677 = vmatprep.mubr.bf16.mxu0 %v3726
        %4678 = vmatmul.mubr.bf16.gmra.mrb[0].mxu0 %v3725
        %v4679 = vpop.f32.mrb[0].mxu0
        %v4680 = vadd.f32 0.0, %v4679
        %v4681 = vpop.f32.mrb[0].mxu0
        %v4682 = vadd.f32 0.0, %v4681
        %v4683 = vpop.f32.mrb[0].mxu0
        %v4684 = vadd.f32 0.0, %v4683
        %v4685 = vpop.f32.mrb[0].mxu0
        %v4686 = vadd.f32 0.0, %v4685
        %4687 = vmatprep.mubr.bf16.mxu0 %v3732
        %4688 = vmatmul.mubr.bf16.gmra.mrb[0].mxu0 %v3731
        %v4689 = vpop.f32.mrb[0].mxu0
        %v4690 = vadd.f32 0.0, %v4689
        %v4691 = vpop.f32.mrb[0].mxu0
        %v4692 = vadd.f32 0.0, %v4691
        %v4693 = vpop.f32.mrb[0].mxu0
        %v4694 = vadd.f32 0.0, %v4693
        %v4695 = vpop.f32.mrb[0].mxu0
        %v4696 = vadd.f32 0.0, %v4695
        %4697 = vdwg.mxu0
        %4698 = vmatprep.subr.bf16.mxu0 %v4226
        %4699 = vmatpush1.bf16.msra.mxu0 %v4225
        %4700 = vmatprep.subr.bf16.mxu0 %v4228
        %4701 = vmatpush1.bf16.msra.mxu0 %v4227
        %4702 = vmatprep.subr.bf16.mxu0 %v4230
        %4703 = vmatpush1.bf16.msra.mxu0 %v4229
        %4704 = vmatprep.subr.bf16.mxu0 %v4232
        %4705 = vmatpush1.bf16.msra.mxu0 %v4231
        %4706 = vmatprep.subr.bf16.mxu0 %v4234
        %4707 = vmatpush1.bf16.msra.mxu0 %v4233
        %4708 = vmatprep.subr.bf16.mxu0 %v4236
        %4709 = vmatpush1.bf16.msra.mxu0 %v4235
        %4710 = vmatprep.subr.bf16.mxu0 %v4238
        %4711 = vmatpush1.bf16.msra.mxu0 %v4237
        %4712 = vmatprep.subr.bf16.mxu0 %v4240
        %4713 = vmatpush1.bf16.msra.mxu0 %v4239
        %4714 = vmatprep.subr.bf16.mxu0 %v4242
        %4715 = vmatpush1.bf16.msra.mxu0 %v4241
        %4716 = vmatprep.subr.bf16.mxu0 %v4244
        %4717 = vmatpush1.bf16.msra.mxu0 %v4243
        %4718 = vmatprep.subr.bf16.mxu0 %v4246
        %4719 = vmatpush1.bf16.msra.mxu0 %v4245
        %4720 = vmatprep.subr.bf16.mxu0 %v4248
        %4721 = vmatpush1.bf16.msra.mxu0 %v4247
        %4722 = vmatprep.subr.bf16.mxu0 %v4250
        %4723 = vmatpush1.bf16.msra.mxu0 %v4249
        %4724 = vmatprep.subr.bf16.mxu0 %v4252
        %4725 = vmatpush1.bf16.msra.mxu0 %v4251
        %4726 = vmatprep.subr.bf16.mxu0 %v4254
        %4727 = vmatpush1.bf16.msra.mxu0 %v4253
        %4728 = vmatprep.subr.bf16.mxu0 %v4256
        %4729 = vmatpush1.bf16.msra.mxu0 %v4255
        %4730 = vmatprep.mubr.bf16.mxu0 %v3572
        %4731 = vmatmul.mubr.bf16.gmra.mrb[0].mxu0 %v3571
        %v4732 = vpop.f32.mrb[0].mxu0
        %v4733 = vadd.f32 %v4420, %v4732
        %v4734 = vpop.f32.mrb[0].mxu0
        %v4735 = vadd.f32 %v4422, %v4734
        %v4736 = vpop.f32.mrb[0].mxu0
        %v4737 = vadd.f32 %v4424, %v4736
        %v4738 = vpop.f32.mrb[0].mxu0
        %v4739 = vadd.f32 %v4426, %v4738
        %4740 = vmatprep.mubr.bf16.mxu0 %v3578
        %4741 = vmatmul.mubr.bf16.gmra.mrb[0].mxu0 %v3577
        %v4742 = vpop.f32.mrb[0].mxu0
        %v4743 = vadd.f32 %v4430, %v4742
        %v4744 = vpop.f32.mrb[0].mxu0
        %v4745 = vadd.f32 %v4432, %v4744
        %v4746 = vpop.f32.mrb[0].mxu0
        %v4747 = vadd.f32 %v4434, %v4746
        %v4748 = vpop.f32.mrb[0].mxu0
        %v4749 = vadd.f32 %v4436, %v4748
        %4750 = vmatprep.mubr.bf16.mxu0 %v3584
        %4751 = vmatmul.mubr.bf16.gmra.mrb[0].mxu0 %v3583
        %v4752 = vpop.f32.mrb[0].mxu0
        %v4753 = vadd.f32 %v4440, %v4752
        %v4754 = vpop.f32.mrb[0].mxu0
        %v4755 = vadd.f32 %v4442, %v4754
        %v4756 = vpop.f32.mrb[0].mxu0
        %v4757 = vadd.f32 %v4444, %v4756
        %v4758 = vpop.f32.mrb[0].mxu0
        %v4759 = vadd.f32 %v4446, %v4758
        %4760 = vmatprep.mubr.bf16.mxu0 %v3590
        %4761 = vmatmul.mubr.bf16.gmra.mrb[0].mxu0 %v3589
        %v4762 = vpop.f32.mrb[0].mxu0
        %v4763 = vadd.f32 %v4450, %v4762
        %v4764 = vpop.f32.mrb[0].mxu0
        %v4765 = vadd.f32 %v4452, %v4764
        %v4766 = vpop.f32.mrb[0].mxu0
        %v4767 = vadd.f32 %v4454, %v4766
        %v4768 = vpop.f32.mrb[0].mxu0
        %v4769 = vadd.f32 %v4456, %v4768
        %4770 = vmatprep.mubr.bf16.mxu0 %v3596
        %4771 = vmatmul.mubr.bf16.gmra.mrb[0].mxu0 %v3595
        %v4772 = vpop.f32.mrb[0].mxu0
        %v4773 = vadd.f32 %v4460, %v4772
        %v4774 = vpop.f32.mrb[0].mxu0
        %v4775 = vadd.f32 %v4462, %v4774
        %v4776 = vpop.f32.mrb[0].mxu0
        %v4777 = vadd.f32 %v4464, %v4776
        %v4778 = vpop.f32.mrb[0].mxu0
        %v4779 = vadd.f32 %v4466, %v4778
        %4780 = vmatprep.mubr.bf16.mxu0 %v3602
        %4781 = vmatmul.mubr.bf16.gmra.mrb[0].mxu0 %v3601
        %v4782 = vpop.f32.mrb[0].mxu0
        %v4783 = vadd.f32 %v4470, %v4782
        %v4784 = vpop.f32.mrb[0].mxu0
        %v4785 = vadd.f32 %v4472, %v4784
        %v4786 = vpop.f32.mrb[0].mxu0
        %v4787 = vadd.f32 %v4474, %v4786
        %v4788 = vpop.f32.mrb[0].mxu0
        %v4789 = vadd.f32 %v4476, %v4788
        %4790 = vmatprep.mubr.bf16.mxu0 %v3608
        %4791 = vmatmul.mubr.bf16.gmra.mrb[0].mxu0 %v3607
        %v4792 = vpop.f32.mrb[0].mxu0
        %v4793 = vadd.f32 %v4480, %v4792
        %v4794 = vpop.f32.mrb[0].mxu0
        %v4795 = vadd.f32 %v4482, %v4794
        %v4796 = vpop.f32.mrb[0].mxu0
        %v4797 = vadd.f32 %v4484, %v4796
        %v4798 = vpop.f32.mrb[0].mxu0
        %v4799 = vadd.f32 %v4486, %v4798
        %4800 = vmatprep.mubr.bf16.mxu0 %v3614
        %4801 = vmatmul.mubr.bf16.gmra.mrb[0].mxu0 %v3613
        %v4802 = vpop.f32.mrb[0].mxu0
        %v4803 = vadd.f32 %v4490, %v4802
        %v4804 = vpop.f32.mrb[0].mxu0
        %v4805 = vadd.f32 %v4492, %v4804
        %v4806 = vpop.f32.mrb[0].mxu0
        %v4807 = vadd.f32 %v4494, %v4806
        %v4808 = vpop.f32.mrb[0].mxu0
        %v4809 = vadd.f32 %v4496, %v4808
        %4810 = vmatprep.mubr.bf16.mxu0 %v3620
        %4811 = vmatmul.mubr.bf16.gmra.mrb[0].mxu0 %v3619
        %v4812 = vpop.f32.mrb[0].mxu0
        %v4813 = vadd.f32 %v4500, %v4812
        %v4814 = vpop.f32.mrb[0].mxu0
        %v4815 = vadd.f32 %v4502, %v4814
        %v4816 = vpop.f32.mrb[0].mxu0
        %v4817 = vadd.f32 %v4504, %v4816
        %v4818 = vpop.f32.mrb[0].mxu0
        %v4819 = vadd.f32 %v4506, %v4818
        %4820 = vmatprep.mubr.bf16.mxu0 %v3626
        %4821 = vmatmul.mubr.bf16.gmra.mrb[0].mxu0 %v3625
        %v4822 = vpop.f32.mrb[0].mxu0
        %v4823 = vadd.f32 %v4510, %v4822
        %v4824 = vpop.f32.mrb[0].mxu0
        %v4825 = vadd.f32 %v4512, %v4824
        %v4826 = vpop.f32.mrb[0].mxu0
        %v4827 = vadd.f32 %v4514, %v4826
        %v4828 = vpop.f32.mrb[0].mxu0
        %v4829 = vadd.f32 %v4516, %v4828
        %4830 = vmatprep.mubr.bf16.mxu0 %v3632
        %4831 = vmatmul.mubr.bf16.gmra.mrb[0].mxu0 %v3631
        %v4832 = vpop.f32.mrb[0].mxu0
        %v4833 = vadd.f32 %v4520, %v4832
        %v4834 = vpop.f32.mrb[0].mxu0
        %v4835 = vadd.f32 %v4522, %v4834
        %v4836 = vpop.f32.mrb[0].mxu0
        %v4837 = vadd.f32 %v4524, %v4836
        %v4838 = vpop.f32.mrb[0].mxu0
        %v4839 = vadd.f32 %v4526, %v4838
        %4840 = vmatprep.mubr.bf16.mxu0 %v3638
        %4841 = vmatmul.mubr.bf16.gmra.mrb[0].mxu0 %v3637
        %v4842 = vpop.f32.mrb[0].mxu0
        %v4843 = vadd.f32 %v4530, %v4842
        %v4844 = vpop.f32.mrb[0].mxu0
        %v4845 = vadd.f32 %v4532, %v4844
        %v4846 = vpop.f32.mrb[0].mxu0
        %v4847 = vadd.f32 %v4534, %v4846
        %v4848 = vpop.f32.mrb[0].mxu0
        %v4849 = vadd.f32 %v4536, %v4848
        %4850 = vmatprep.mubr.bf16.mxu0 %v3644
        %4851 = vmatmul.mubr.bf16.gmra.mrb[0].mxu0 %v3643
        %v4852 = vpop.f32.mrb[0].mxu0
        %v4853 = vadd.f32 %v4540, %v4852
        %v4854 = vpop.f32.mrb[0].mxu0
        %v4855 = vadd.f32 %v4542, %v4854
        %v4856 = vpop.f32.mrb[0].mxu0
        %v4857 = vadd.f32 %v4544, %v4856
        %v4858 = vpop.f32.mrb[0].mxu0
        %v4859 = vadd.f32 %v4546, %v4858
        %4860 = vmatprep.mubr.bf16.mxu0 %v3650
        %4861 = vmatmul.mubr.bf16.gmra.mrb[0].mxu0 %v3649
        %v4862 = vpop.f32.mrb[0].mxu0
        %v4863 = vadd.f32 %v4550, %v4862
        %v4864 = vpop.f32.mrb[0].mxu0
        %v4865 = vadd.f32 %v4552, %v4864
        %v4866 = vpop.f32.mrb[0].mxu0
        %v4867 = vadd.f32 %v4554, %v4866
        %v4868 = vpop.f32.mrb[0].mxu0
        %v4869 = vadd.f32 %v4556, %v4868
        %4870 = vmatprep.mubr.bf16.mxu0 %v3656
        %4871 = vmatmul.mubr.bf16.gmra.mrb[0].mxu0 %v3655
        %v4872 = vpop.f32.mrb[0].mxu0
        %v4873 = vadd.f32 %v4560, %v4872
        %v4874 = vpop.f32.mrb[0].mxu0
        %v4875 = vadd.f32 %v4562, %v4874
        %v4876 = vpop.f32.mrb[0].mxu0
        %v4877 = vadd.f32 %v4564, %v4876
        %v4878 = vpop.f32.mrb[0].mxu0
        %v4879 = vadd.f32 %v4566, %v4878
        %4880 = vmatprep.mubr.bf16.mxu0 %v3662
        %4881 = vmatmul.mubr.bf16.gmra.mrb[0].mxu0 %v3661
        %v4882 = vpop.f32.mrb[0].mxu0
        %v4883 = vadd.f32 %v4570, %v4882
        %v4884 = vpop.f32.mrb[0].mxu0
        %v4885 = vadd.f32 %v4572, %v4884
        %v4886 = vpop.f32.mrb[0].mxu0
        %v4887 = vadd.f32 %v4574, %v4886
        %v4888 = vpop.f32.mrb[0].mxu0
        %v4889 = vadd.f32 %v4576, %v4888
        %4890 = vmatprep.mubr.bf16.mxu0 %v3668
        %4891 = vmatmul.mubr.bf16.gmra.mrb[0].mxu0 %v3667
        %v4892 = vpop.f32.mrb[0].mxu0
        %v4893 = vadd.f32 %v4580, %v4892
        %v4894 = vpop.f32.mrb[0].mxu0
        %v4895 = vadd.f32 %v4582, %v4894
        %v4896 = vpop.f32.mrb[0].mxu0
        %v4897 = vadd.f32 %v4584, %v4896
        %v4898 = vpop.f32.mrb[0].mxu0
        %v4899 = vadd.f32 %v4586, %v4898
        %4900 = vmatprep.mubr.bf16.mxu0 %v3674
        %4901 = vmatmul.mubr.bf16.gmra.mrb[0].mxu0 %v3673
        %v4902 = vpop.f32.mrb[0].mxu0
        %v4903 = vadd.f32 %v4590, %v4902
        %v4904 = vpop.f32.mrb[0].mxu0
        %v4905 = vadd.f32 %v4592, %v4904
        %v4906 = vpop.f32.mrb[0].mxu0
        %v4907 = vadd.f32 %v4594, %v4906
        %v4908 = vpop.f32.mrb[0].mxu0
        %v4909 = vadd.f32 %v4596, %v4908
        %4910 = vmatprep.mubr.bf16.mxu0 %v3680
        %4911 = vmatmul.mubr.bf16.gmra.mrb[0].mxu0 %v3679
        %v4912 = vpop.f32.mrb[0].mxu0
        %v4913 = vadd.f32 %v4600, %v4912
        %v4914 = vpop.f32.mrb[0].mxu0
        %v4915 = vadd.f32 %v4602, %v4914
        %v4916 = vpop.f32.mrb[0].mxu0
        %v4917 = vadd.f32 %v4604, %v4916
        %v4918 = vpop.f32.mrb[0].mxu0
        %v4919 = vadd.f32 %v4606, %v4918
        %4920 = vmatprep.mubr.bf16.mxu0 %v3686
        %4921 = vmatmul.mubr.bf16.gmra.mrb[0].mxu0 %v3685
        %v4922 = vpop.f32.mrb[0].mxu0
        %v4923 = vadd.f32 %v4610, %v4922
        %v4924 = vpop.f32.mrb[0].mxu0
        %v4925 = vadd.f32 %v4612, %v4924
        %v4926 = vpop.f32.mrb[0].mxu0
        %v4927 = vadd.f32 %v4614, %v4926
        %v4928 = vpop.f32.mrb[0].mxu0
        %v4929 = vadd.f32 %v4616, %v4928
        %4930 = vmatprep.mubr.bf16.mxu0 %v3692
        %4931 = vmatmul.mubr.bf16.gmra.mrb[0].mxu0 %v3691
        %v4932 = vpop.f32.mrb[0].mxu0
        %v4933 = vadd.f32 %v4620, %v4932
        %v4934 = vpop.f32.mrb[0].mxu0
        %v4935 = vadd.f32 %v4622, %v4934
        %v4936 = vpop.f32.mrb[0].mxu0
        %v4937 = vadd.f32 %v4624, %v4936
        %v4938 = vpop.f32.mrb[0].mxu0
        %v4939 = vadd.f32 %v4626, %v4938
        %4940 = vmatprep.mubr.bf16.mxu0 %v3698
        %4941 = vmatmul.mubr.bf16.gmra.mrb[0].mxu0 %v3697
        %v4942 = vpop.f32.mrb[0].mxu0
        %v4943 = vadd.f32 %v4630, %v4942
        %v4944 = vpop.f32.mrb[0].mxu0
        %v4945 = vadd.f32 %v4632, %v4944
        %v4946 = vpop.f32.mrb[0].mxu0
        %v4947 = vadd.f32 %v4634, %v4946
        %v4948 = vpop.f32.mrb[0].mxu0
        %v4949 = vadd.f32 %v4636, %v4948
        %4950 = vmatprep.mubr.bf16.mxu0 %v3704
        %4951 = vmatmul.mubr.bf16.gmra.mrb[0].mxu0 %v3703
        %v4952 = vpop.f32.mrb[0].mxu0
        %v4953 = vadd.f32 %v4640, %v4952
        %v4954 = vpop.f32.mrb[0].mxu0
        %v4955 = vadd.f32 %v4642, %v4954
        %v4956 = vpop.f32.mrb[0].mxu0
        %v4957 = vadd.f32 %v4644, %v4956
        %v4958 = vpop.f32.mrb[0].mxu0
        %v4959 = vadd.f32 %v4646, %v4958
        %4960 = vmatprep.mubr.bf16.mxu0 %v3710
        %4961 = vmatmul.mubr.bf16.gmra.mrb[0].mxu0 %v3709
        %v4962 = vpop.f32.mrb[0].mxu0
        %v4963 = vadd.f32 %v4650, %v4962
        %v4964 = vpop.f32.mrb[0].mxu0
        %v4965 = vadd.f32 %v4652, %v4964
        %v4966 = vpop.f32.mrb[0].mxu0
        %v4967 = vadd.f32 %v4654, %v4966
        %v4968 = vpop.f32.mrb[0].mxu0
        %v4969 = vadd.f32 %v4656, %v4968
        %4970 = vmatprep.mubr.bf16.mxu0 %v3716
        %4971 = vmatmul.mubr.bf16.gmra.mrb[0].mxu0 %v3715
        %v4972 = vpop.f32.mrb[0].mxu0
        %v4973 = vadd.f32 %v4660, %v4972
        %v4974 = vpop.f32.mrb[0].mxu0
        %v4975 = vadd.f32 %v4662, %v4974
        %v4976 = vpop.f32.mrb[0].mxu0
        %v4977 = vadd.f32 %v4664, %v4976
        %v4978 = vpop.f32.mrb[0].mxu0
        %v4979 = vadd.f32 %v4666, %v4978
        %4980 = vmatprep.mubr.bf16.mxu0 %v3722
        %4981 = vmatmul.mubr.bf16.gmra.mrb[0].mxu0 %v3721
        %v4982 = vpop.f32.mrb[0].mxu0
        %v4983 = vadd.f32 %v4670, %v4982
        %v4984 = vpop.f32.mrb[0].mxu0
        %v4985 = vadd.f32 %v4672, %v4984
        %v4986 = vpop.f32.mrb[0].mxu0
        %v4987 = vadd.f32 %v4674, %v4986
        %v4988 = vpop.f32.mrb[0].mxu0
        %v4989 = vadd.f32 %v4676, %v4988
        %4990 = vmatprep.mubr.bf16.mxu0 %v3728
        %4991 = vmatmul.mubr.bf16.gmra.mrb[0].mxu0 %v3727
        %v4992 = vpop.f32.mrb[0].mxu0
        %v4993 = vadd.f32 %v4680, %v4992
        %v4994 = vpop.f32.mrb[0].mxu0
        %v4995 = vadd.f32 %v4682, %v4994
        %v4996 = vpop.f32.mrb[0].mxu0
        %v4997 = vadd.f32 %v4684, %v4996
        %v4998 = vpop.f32.mrb[0].mxu0
        %v4999 = vadd.f32 %v4686, %v4998
        %5000 = vmatprep.mubr.bf16.mxu0 %v3734
        %5001 = vmatmul.mubr.bf16.gmra.mrb[0].mxu0 %v3733
        %v5002 = vpop.f32.mrb[0].mxu0
        %v5003 = vadd.f32 %v4690, %v5002
        %v5004 = vpop.f32.mrb[0].mxu0
        %v5005 = vadd.f32 %v4692, %v5004
        %v5006 = vpop.f32.mrb[0].mxu0
        %v5007 = vadd.f32 %v4694, %v5006
        %v5008 = vpop.f32.mrb[0].mxu0
        %v5009 = vadd.f32 %v4696, %v5008
        %5010 = vdwg.mxu0
        %5011 = vmatprep.subr.bf16.mxu0 %v4258
        %5012 = vmatpush1.bf16.msra.mxu0 %v4257
        %5013 = vmatprep.subr.bf16.mxu0 %v4260
        %5014 = vmatpush1.bf16.msra.mxu0 %v4259
        %5015 = vmatprep.subr.bf16.mxu0 %v4262
        %5016 = vmatpush1.bf16.msra.mxu0 %v4261
        %5017 = vmatprep.subr.bf16.mxu0 %v4264
        %5018 = vmatpush1.bf16.msra.mxu0 %v4263
        %5019 = vmatprep.subr.bf16.mxu0 %v4266
        %5020 = vmatpush1.bf16.msra.mxu0 %v4265
        %5021 = vmatprep.subr.bf16.mxu0 %v4268
        %5022 = vmatpush1.bf16.msra.mxu0 %v4267
        %5023 = vmatprep.subr.bf16.mxu0 %v4270
        %5024 = vmatpush1.bf16.msra.mxu0 %v4269
        %5025 = vmatprep.subr.bf16.mxu0 %v4272
        %5026 = vmatpush1.bf16.msra.mxu0 %v4271
        %5027 = vmatprep.subr.bf16.mxu0 %v4274
        %5028 = vmatpush1.bf16.msra.mxu0 %v4273
        %5029 = vmatprep.subr.bf16.mxu0 %v4276
        %5030 = vmatpush1.bf16.msra.mxu0 %v4275
        %5031 = vmatprep.subr.bf16.mxu0 %v4278
        %5032 = vmatpush1.bf16.msra.mxu0 %v4277
        %5033 = vmatprep.subr.bf16.mxu0 %v4280
        %5034 = vmatpush1.bf16.msra.mxu0 %v4279
        %5035 = vmatprep.subr.bf16.mxu0 %v4282
        %5036 = vmatpush1.bf16.msra.mxu0 %v4281
        %5037 = vmatprep.subr.bf16.mxu0 %v4284
        %5038 = vmatpush1.bf16.msra.mxu0 %v4283
        %5039 = vmatprep.subr.bf16.mxu0 %v4286
        %5040 = vmatpush1.bf16.msra.mxu0 %v4285
        %5041 = vmatprep.subr.bf16.mxu0 %v4288
        %5042 = vmatpush1.bf16.msra.mxu0 %v4287
        %5043 = vmatprep.mubr.bf16.mxu0 %v3574
        %5044 = vmatmul.mubr.bf16.gmra.mrb[0].mxu0 %v3573
        %v5045 = vpop.f32.mrb[0].mxu0
        %v5046 = vadd.f32 %v4733, %v5045
        %v5047 = vpop.f32.mrb[0].mxu0
        %v5048 = vadd.f32 %v4735, %v5047
        %v5049 = vpop.f32.mrb[0].mxu0
        %v5050 = vadd.f32 %v4737, %v5049
        %v5051 = vpop.f32.mrb[0].mxu0
        %v5052 = vadd.f32 %v4739, %v5051
        %5053 = vmatprep.mubr.bf16.mxu0 %v3580
        %5054 = vmatmul.mubr.bf16.gmra.mrb[0].mxu0 %v3579
        %v5055 = vpop.f32.mrb[0].mxu0
        %v5056 = vadd.f32 %v4743, %v5055
        %v5057 = vpop.f32.mrb[0].mxu0
        %v5058 = vadd.f32 %v4745, %v5057
        %v5059 = vpop.f32.mrb[0].mxu0
        %v5060 = vadd.f32 %v4747, %v5059
        %v5061 = vpop.f32.mrb[0].mxu0
        %v5062 = vadd.f32 %v4749, %v5061
        %5063 = vmatprep.mubr.bf16.mxu0 %v3586
        %5064 = vmatmul.mubr.bf16.gmra.mrb[0].mxu0 %v3585
        %v5065 = vpop.f32.mrb[0].mxu0
        %v5066 = vadd.f32 %v4753, %v5065
        %v5067 = vpop.f32.mrb[0].mxu0
        %v5068 = vadd.f32 %v4755, %v5067
        %v5069 = vpop.f32.mrb[0].mxu0
        %v5070 = vadd.f32 %v4757, %v5069
        %v5071 = vpop.f32.mrb[0].mxu0
        %v5072 = vadd.f32 %v4759, %v5071
        %5073 = vmatprep.mubr.bf16.mxu0 %v3592
        %5074 = vmatmul.mubr.bf16.gmra.mrb[0].mxu0 %v3591
        %v5075 = vpop.f32.mrb[0].mxu0
        %v5076 = vadd.f32 %v4763, %v5075
        %v5077 = vpop.f32.mrb[0].mxu0
        %v5078 = vadd.f32 %v4765, %v5077
        %v5079 = vpop.f32.mrb[0].mxu0
        %v5080 = vadd.f32 %v4767, %v5079
        %v5081 = vpop.f32.mrb[0].mxu0
        %v5082 = vadd.f32 %v4769, %v5081
        %5083 = vmatprep.mubr.bf16.mxu0 %v3598
        %5084 = vmatmul.mubr.bf16.gmra.mrb[0].mxu0 %v3597
        %v5085 = vpop.f32.mrb[0].mxu0
        %v5086 = vadd.f32 %v4773, %v5085
        %v5087 = vpop.f32.mrb[0].mxu0
        %v5088 = vadd.f32 %v4775, %v5087
        %v5089 = vpop.f32.mrb[0].mxu0
        %v5090 = vadd.f32 %v4777, %v5089
        %v5091 = vpop.f32.mrb[0].mxu0
        %v5092 = vadd.f32 %v4779, %v5091
        %5093 = vmatprep.mubr.bf16.mxu0 %v3604
        %5094 = vmatmul.mubr.bf16.gmra.mrb[0].mxu0 %v3603
        %v5095 = vpop.f32.mrb[0].mxu0
        %v5096 = vadd.f32 %v4783, %v5095
        %v5097 = vpop.f32.mrb[0].mxu0
        %v5098 = vadd.f32 %v4785, %v5097
        %v5099 = vpop.f32.mrb[0].mxu0
        %v5100 = vadd.f32 %v4787, %v5099
        %v5101 = vpop.f32.mrb[0].mxu0
        %v5102 = vadd.f32 %v4789, %v5101
        %5103 = vmatprep.mubr.bf16.mxu0 %v3610
        %5104 = vmatmul.mubr.bf16.gmra.mrb[0].mxu0 %v3609
        %v5105 = vpop.f32.mrb[0].mxu0
        %v5106 = vadd.f32 %v4793, %v5105
        %v5107 = vpop.f32.mrb[0].mxu0
        %v5108 = vadd.f32 %v4795, %v5107
        %v5109 = vpop.f32.mrb[0].mxu0
        %v5110 = vadd.f32 %v4797, %v5109
        %v5111 = vpop.f32.mrb[0].mxu0
        %v5112 = vadd.f32 %v4799, %v5111
        %5113 = vmatprep.mubr.bf16.mxu0 %v3616
        %5114 = vmatmul.mubr.bf16.gmra.mrb[0].mxu0 %v3615
        %v5115 = vpop.f32.mrb[0].mxu0
        %v5116 = vadd.f32 %v4803, %v5115
        %v5117 = vpop.f32.mrb[0].mxu0
        %v5118 = vadd.f32 %v4805, %v5117
        %v5119 = vpop.f32.mrb[0].mxu0
        %v5120 = vadd.f32 %v4807, %v5119
        %v5121 = vpop.f32.mrb[0].mxu0
        %v5122 = vadd.f32 %v4809, %v5121
        %5123 = vmatprep.mubr.bf16.mxu0 %v3622
        %5124 = vmatmul.mubr.bf16.gmra.mrb[0].mxu0 %v3621
        %v5125 = vpop.f32.mrb[0].mxu0
        %v5126 = vadd.f32 %v4813, %v5125
        %v5127 = vpop.f32.mrb[0].mxu0
        %v5128 = vadd.f32 %v4815, %v5127
        %v5129 = vpop.f32.mrb[0].mxu0
        %v5130 = vadd.f32 %v4817, %v5129
        %v5131 = vpop.f32.mrb[0].mxu0
        %v5132 = vadd.f32 %v4819, %v5131
        %5133 = vmatprep.mubr.bf16.mxu0 %v3628
        %5134 = vmatmul.mubr.bf16.gmra.mrb[0].mxu0 %v3627
        %v5135 = vpop.f32.mrb[0].mxu0
        %v5136 = vadd.f32 %v4823, %v5135
        %v5137 = vpop.f32.mrb[0].mxu0
        %v5138 = vadd.f32 %v4825, %v5137
        %v5139 = vpop.f32.mrb[0].mxu0
        %v5140 = vadd.f32 %v4827, %v5139
        %v5141 = vpop.f32.mrb[0].mxu0
        %v5142 = vadd.f32 %v4829, %v5141
        %5143 = vmatprep.mubr.bf16.mxu0 %v3634
        %5144 = vmatmul.mubr.bf16.gmra.mrb[0].mxu0 %v3633
        %v5145 = vpop.f32.mrb[0].mxu0
        %v5146 = vadd.f32 %v4833, %v5145
        %v5147 = vpop.f32.mrb[0].mxu0
        %v5148 = vadd.f32 %v4835, %v5147
        %v5149 = vpop.f32.mrb[0].mxu0
        %v5150 = vadd.f32 %v4837, %v5149
        %v5151 = vpop.f32.mrb[0].mxu0
        %v5152 = vadd.f32 %v4839, %v5151
        %5153 = vmatprep.mubr.bf16.mxu0 %v3640
        %5154 = vmatmul.mubr.bf16.gmra.mrb[0].mxu0 %v3639
        %v5155 = vpop.f32.mrb[0].mxu0
        %v5156 = vadd.f32 %v4843, %v5155
        %v5157 = vpop.f32.mrb[0].mxu0
        %v5158 = vadd.f32 %v4845, %v5157
        %v5159 = vpop.f32.mrb[0].mxu0
        %v5160 = vadd.f32 %v4847, %v5159
        %v5161 = vpop.f32.mrb[0].mxu0
        %v5162 = vadd.f32 %v4849, %v5161
        %5163 = vmatprep.mubr.bf16.mxu0 %v3646
        %5164 = vmatmul.mubr.bf16.gmra.mrb[0].mxu0 %v3645
        %v5165 = vpop.f32.mrb[0].mxu0
        %v5166 = vadd.f32 %v4853, %v5165
        %v5167 = vpop.f32.mrb[0].mxu0
        %v5168 = vadd.f32 %v4855, %v5167
        %v5169 = vpop.f32.mrb[0].mxu0
        %v5170 = vadd.f32 %v4857, %v5169
        %v5171 = vpop.f32.mrb[0].mxu0
        %v5172 = vadd.f32 %v4859, %v5171
        %5173 = vmatprep.mubr.bf16.mxu0 %v3652
        %5174 = vmatmul.mubr.bf16.gmra.mrb[0].mxu0 %v3651
        %v5175 = vpop.f32.mrb[0].mxu0
        %v5176 = vadd.f32 %v4863, %v5175
        %v5177 = vpop.f32.mrb[0].mxu0
        %v5178 = vadd.f32 %v4865, %v5177
        %v5179 = vpop.f32.mrb[0].mxu0
        %v5180 = vadd.f32 %v4867, %v5179
        %v5181 = vpop.f32.mrb[0].mxu0
        %v5182 = vadd.f32 %v4869, %v5181
        %5183 = vmatprep.mubr.bf16.mxu0 %v3658
        %5184 = vmatmul.mubr.bf16.gmra.mrb[0].mxu0 %v3657
        %v5185 = vpop.f32.mrb[0].mxu0
        %v5186 = vadd.f32 %v4873, %v5185
        %v5187 = vpop.f32.mrb[0].mxu0
        %v5188 = vadd.f32 %v4875, %v5187
        %v5189 = vpop.f32.mrb[0].mxu0
        %v5190 = vadd.f32 %v4877, %v5189
        %v5191 = vpop.f32.mrb[0].mxu0
        %v5192 = vadd.f32 %v4879, %v5191
        %5193 = vmatprep.mubr.bf16.mxu0 %v3664
        %5194 = vmatmul.mubr.bf16.gmra.mrb[0].mxu0 %v3663
        %v5195 = vpop.f32.mrb[0].mxu0
        %v5196 = vadd.f32 %v4883, %v5195
        %v5197 = vpop.f32.mrb[0].mxu0
        %v5198 = vadd.f32 %v4885, %v5197
        %v5199 = vpop.f32.mrb[0].mxu0
        %v5200 = vadd.f32 %v4887, %v5199
        %v5201 = vpop.f32.mrb[0].mxu0
        %v5202 = vadd.f32 %v4889, %v5201
        %5203 = vmatprep.mubr.bf16.mxu0 %v3670
        %5204 = vmatmul.mubr.bf16.gmra.mrb[0].mxu0 %v3669
        %v5205 = vpop.f32.mrb[0].mxu0
        %v5206 = vadd.f32 %v4893, %v5205
        %v5207 = vpop.f32.mrb[0].mxu0
        %v5208 = vadd.f32 %v4895, %v5207
        %v5209 = vpop.f32.mrb[0].mxu0
        %v5210 = vadd.f32 %v4897, %v5209
        %v5211 = vpop.f32.mrb[0].mxu0
        %v5212 = vadd.f32 %v4899, %v5211
        %5213 = vmatprep.mubr.bf16.mxu0 %v3676
        %5214 = vmatmul.mubr.bf16.gmra.mrb[0].mxu0 %v3675
        %v5215 = vpop.f32.mrb[0].mxu0
        %v5216 = vadd.f32 %v4903, %v5215
        %v5217 = vpop.f32.mrb[0].mxu0
        %v5218 = vadd.f32 %v4905, %v5217
        %v5219 = vpop.f32.mrb[0].mxu0
        %v5220 = vadd.f32 %v4907, %v5219
        %v5221 = vpop.f32.mrb[0].mxu0
        %v5222 = vadd.f32 %v4909, %v5221
        %5223 = vmatprep.mubr.bf16.mxu0 %v3682
        %5224 = vmatmul.mubr.bf16.gmra.mrb[0].mxu0 %v3681
        %v5225 = vpop.f32.mrb[0].mxu0
        %v5226 = vadd.f32 %v4913, %v5225
        %v5227 = vpop.f32.mrb[0].mxu0
        %v5228 = vadd.f32 %v4915, %v5227
        %v5229 = vpop.f32.mrb[0].mxu0
        %v5230 = vadd.f32 %v4917, %v5229
        %v5231 = vpop.f32.mrb[0].mxu0
        %v5232 = vadd.f32 %v4919, %v5231
        %5233 = vmatprep.mubr.bf16.mxu0 %v3688
        %5234 = vmatmul.mubr.bf16.gmra.mrb[0].mxu0 %v3687
        %v5235 = vpop.f32.mrb[0].mxu0
        %v5236 = vadd.f32 %v4923, %v5235
        %v5237 = vpop.f32.mrb[0].mxu0
        %v5238 = vadd.f32 %v4925, %v5237
        %v5239 = vpop.f32.mrb[0].mxu0
        %v5240 = vadd.f32 %v4927, %v5239
        %v5241 = vpop.f32.mrb[0].mxu0
        %v5242 = vadd.f32 %v4929, %v5241
        %5243 = vmatprep.mubr.bf16.mxu0 %v3694
        %5244 = vmatmul.mubr.bf16.gmra.mrb[0].mxu0 %v3693
        %v5245 = vpop.f32.mrb[0].mxu0
        %v5246 = vadd.f32 %v4933, %v5245
        %v5247 = vpop.f32.mrb[0].mxu0
        %v5248 = vadd.f32 %v4935, %v5247
        %v5249 = vpop.f32.mrb[0].mxu0
        %v5250 = vadd.f32 %v4937, %v5249
        %v5251 = vpop.f32.mrb[0].mxu0
        %v5252 = vadd.f32 %v4939, %v5251
        %5253 = vmatprep.mubr.bf16.mxu0 %v3700
        %5254 = vmatmul.mubr.bf16.gmra.mrb[0].mxu0 %v3699
        %v5255 = vpop.f32.mrb[0].mxu0
        %v5256 = vadd.f32 %v4943, %v5255
        %v5257 = vpop.f32.mrb[0].mxu0
        %v5258 = vadd.f32 %v4945, %v5257
        %v5259 = vpop.f32.mrb[0].mxu0
        %v5260 = vadd.f32 %v4947, %v5259
        %v5261 = vpop.f32.mrb[0].mxu0
        %v5262 = vadd.f32 %v4949, %v5261
        %5263 = vmatprep.mubr.bf16.mxu0 %v3706
        %5264 = vmatmul.mubr.bf16.gmra.mrb[0].mxu0 %v3705
        %v5265 = vpop.f32.mrb[0].mxu0
        %v5266 = vadd.f32 %v4953, %v5265
        %v5267 = vpop.f32.mrb[0].mxu0
        %v5268 = vadd.f32 %v4955, %v5267
        %v5269 = vpop.f32.mrb[0].mxu0
        %v5270 = vadd.f32 %v4957, %v5269
        %v5271 = vpop.f32.mrb[0].mxu0
        %v5272 = vadd.f32 %v4959, %v5271
        %5273 = vmatprep.mubr.bf16.mxu0 %v3712
        %5274 = vmatmul.mubr.bf16.gmra.mrb[0].mxu0 %v3711
        %v5275 = vpop.f32.mrb[0].mxu0
        %v5276 = vadd.f32 %v4963, %v5275
        %v5277 = vpop.f32.mrb[0].mxu0
        %v5278 = vadd.f32 %v4965, %v5277
        %v5279 = vpop.f32.mrb[0].mxu0
        %v5280 = vadd.f32 %v4967, %v5279
        %v5281 = vpop.f32.mrb[0].mxu0
        %v5282 = vadd.f32 %v4969, %v5281
        %5283 = vmatprep.mubr.bf16.mxu0 %v3718
        %5284 = vmatmul.mubr.bf16.gmra.mrb[0].mxu0 %v3717
        %v5285 = vpop.f32.mrb[0].mxu0
        %v5286 = vadd.f32 %v4973, %v5285
        %v5287 = vpop.f32.mrb[0].mxu0
        %v5288 = vadd.f32 %v4975, %v5287
        %v5289 = vpop.f32.mrb[0].mxu0
        %v5290 = vadd.f32 %v4977, %v5289
        %v5291 = vpop.f32.mrb[0].mxu0
        %v5292 = vadd.f32 %v4979, %v5291
        %5293 = vmatprep.mubr.bf16.mxu0 %v3724
        %5294 = vmatmul.mubr.bf16.gmra.mrb[0].mxu0 %v3723
        %v5295 = vpop.f32.mrb[0].mxu0
        %v5296 = vadd.f32 %v4983, %v5295
        %v5297 = vpop.f32.mrb[0].mxu0
        %v5298 = vadd.f32 %v4985, %v5297
        %v5299 = vpop.f32.mrb[0].mxu0
        %v5300 = vadd.f32 %v4987, %v5299
        %v5301 = vpop.f32.mrb[0].mxu0
        %v5302 = vadd.f32 %v4989, %v5301
        %5303 = vmatprep.mubr.bf16.mxu0 %v3730
        %5304 = vmatmul.mubr.bf16.gmra.mrb[0].mxu0 %v3729
        %v5305 = vpop.f32.mrb[0].mxu0
        %v5306 = vadd.f32 %v4993, %v5305
        %v5307 = vpop.f32.mrb[0].mxu0
        %v5308 = vadd.f32 %v4995, %v5307
        %v5309 = vpop.f32.mrb[0].mxu0
        %v5310 = vadd.f32 %v4997, %v5309
        %v5311 = vpop.f32.mrb[0].mxu0
        %v5312 = vadd.f32 %v4999, %v5311
        %5313 = vmatprep.mubr.bf16.mxu0 %v3736
        %5314 = vmatmul.mubr.bf16.gmra.mrb[0].mxu0 %v3735
        %v5315 = vpop.f32.mrb[0].mxu0
        %v5316 = vadd.f32 %v5003, %v5315
        %v5317 = vpop.f32.mrb[0].mxu0
        %v5318 = vadd.f32 %v5005, %v5317
        %v5319 = vpop.f32.mrb[0].mxu0
        %v5320 = vadd.f32 %v5007, %v5319
        %v5321 = vpop.f32.mrb[0].mxu0
        %v5322 = vadd.f32 %v5009, %v5321
        %5323 = vdwg.mxu0
        %v5324 = vld [vmem:[%s151] sm:$0xff]
        %v5325 = vld [vmem:[%s151 + $0x8] sm:$0xff]
        %v5326 = vld [vmem:[%s151 + $0x10] sm:$0xff]
        %v5327 = vld [vmem:[%s151 + $0x18] sm:$0xff]
        %v5328 = vld [vmem:[%s151 + $0x20] sm:$0xff]
        %v5329 = vld [vmem:[%s151 + $0x28] sm:$0xff]
        %v5330 = vld [vmem:[%s151 + $0x30] sm:$0xff]
        %v5331 = vld [vmem:[%s151 + $0x38] sm:$0xff]
        %v5332 = vld [vmem:[%s151 + $0x40] sm:$0xff]
        %v5333 = vld [vmem:[%s151 + $0x48] sm:$0xff]
        %v5334 = vld [vmem:[%s151 + $0x50] sm:$0xff]
        %v5335 = vld [vmem:[%s151 + $0x58] sm:$0xff]
        %v5336 = vld [vmem:[%s151 + $0x60] sm:$0xff]
        %v5337 = vld [vmem:[%s151 + $0x68] sm:$0xff]
        %v5338 = vld [vmem:[%s151 + $0x70] sm:$0xff]
        %v5339 = vld [vmem:[%s151 + $0x78] sm:$0xff]
        %v5340 = vld [vmem:[%s151 + $0x80] sm:$0xff]
        %v5341 = vld [vmem:[%s151 + $0x88] sm:$0xff]
        %v5342 = vld [vmem:[%s151 + $0x90] sm:$0xff]
        %v5343 = vld [vmem:[%s151 + $0x98] sm:$0xff]
        %v5344 = vld [vmem:[%s151 + $0xa0] sm:$0xff]
        %v5345 = vld [vmem:[%s151 + $0xa8] sm:$0xff]
        %v5346 = vld [vmem:[%s151 + $0xb0] sm:$0xff]
        %v5347 = vld [vmem:[%s151 + $0xb8] sm:$0xff]
        %v5348 = vld [vmem:[%s151 + $0xc0] sm:$0xff]
        %v5349 = vld [vmem:[%s151 + $0xc8] sm:$0xff]
        %v5350 = vld [vmem:[%s151 + $0xd0] sm:$0xff]
        %v5351 = vld [vmem:[%s151 + $0xd8] sm:$0xff]
        %v5352 = vld [vmem:[%s151 + $0xe0] sm:$0xff]
        %v5353 = vld [vmem:[%s151 + $0xe8] sm:$0xff]
        %v5354 = vld [vmem:[%s151 + $0xf0] sm:$0xff]
        %v5355 = vld [vmem:[%s151 + $0xf8] sm:$0xff]
        %v5356 = vld [vmem:[%s151 + $0x100] sm:$0xff]
        %v5357 = vld [vmem:[%s151 + $0x108] sm:$0xff]
        %v5358 = vld [vmem:[%s151 + $0x110] sm:$0xff]
        %v5359 = vld [vmem:[%s151 + $0x118] sm:$0xff]
        %v5360 = vld [vmem:[%s151 + $0x120] sm:$0xff]
        %v5361 = vld [vmem:[%s151 + $0x128] sm:$0xff]
        %v5362 = vld [vmem:[%s151 + $0x130] sm:$0xff]
        %v5363 = vld [vmem:[%s151 + $0x138] sm:$0xff]
        %v5364 = vld [vmem:[%s151 + $0x140] sm:$0xff]
        %v5365 = vld [vmem:[%s151 + $0x148] sm:$0xff]
        %v5366 = vld [vmem:[%s151 + $0x150] sm:$0xff]
        %v5367 = vld [vmem:[%s151 + $0x158] sm:$0xff]
        %v5368 = vld [vmem:[%s151 + $0x160] sm:$0xff]
        %v5369 = vld [vmem:[%s151 + $0x168] sm:$0xff]
        %v5370 = vld [vmem:[%s151 + $0x170] sm:$0xff]
        %v5371 = vld [vmem:[%s151 + $0x178] sm:$0xff]
        %v5372 = vld [vmem:[%s151 + $0x180] sm:$0xff]
        %v5373 = vld [vmem:[%s151 + $0x188] sm:$0xff]
        %v5374 = vld [vmem:[%s151 + $0x190] sm:$0xff]
        %v5375 = vld [vmem:[%s151 + $0x198] sm:$0xff]
        %v5376 = vld [vmem:[%s151 + $0x1a0] sm:$0xff]
        %v5377 = vld [vmem:[%s151 + $0x1a8] sm:$0xff]
        %v5378 = vld [vmem:[%s151 + $0x1b0] sm:$0xff]
        %v5379 = vld [vmem:[%s151 + $0x1b8] sm:$0xff]
        %v5380 = vld [vmem:[%s151 + $0x1c0] sm:$0xff]
        %v5381 = vld [vmem:[%s151 + $0x1c8] sm:$0xff]
        %v5382 = vld [vmem:[%s151 + $0x1d0] sm:$0xff]
        %v5383 = vld [vmem:[%s151 + $0x1d8] sm:$0xff]
        %v5384 = vld [vmem:[%s151 + $0x1e0] sm:$0xff]
        %v5385 = vld [vmem:[%s151 + $0x1e8] sm:$0xff]
        %v5386 = vld [vmem:[%s151 + $0x1f0] sm:$0xff]
        %v5387 = vld [vmem:[%s151 + $0x1f8] sm:$0xff]
        %v5388 = vld [vmem:[%s151 + $0x200] sm:$0xff]
        %v5389 = vld [vmem:[%s151 + $0x208] sm:$0xff]
        %v5390 = vld [vmem:[%s151 + $0x210] sm:$0xff]
        %v5391 = vld [vmem:[%s151 + $0x218] sm:$0xff]
        %v5392 = vld [vmem:[%s151 + $0x220] sm:$0xff]
        %v5393 = vld [vmem:[%s151 + $0x228] sm:$0xff]
        %v5394 = vld [vmem:[%s151 + $0x230] sm:$0xff]
        %v5395 = vld [vmem:[%s151 + $0x238] sm:$0xff]
        %v5396 = vld [vmem:[%s151 + $0x240] sm:$0xff]
        %v5397 = vld [vmem:[%s151 + $0x248] sm:$0xff]
        %v5398 = vld [vmem:[%s151 + $0x250] sm:$0xff]
        %v5399 = vld [vmem:[%s151 + $0x258] sm:$0xff]
        %v5400 = vld [vmem:[%s151 + $0x260] sm:$0xff]
        %v5401 = vld [vmem:[%s151 + $0x268] sm:$0xff]
        %v5402 = vld [vmem:[%s151 + $0x270] sm:$0xff]
        %v5403 = vld [vmem:[%s151 + $0x278] sm:$0xff]
        %v5404 = vld [vmem:[%s151 + $0x280] sm:$0xff]
        %v5405 = vld [vmem:[%s151 + $0x288] sm:$0xff]
        %v5406 = vld [vmem:[%s151 + $0x290] sm:$0xff]
        %v5407 = vld [vmem:[%s151 + $0x298] sm:$0xff]
        %v5408 = vld [vmem:[%s151 + $0x2a0] sm:$0xff]
        %v5409 = vld [vmem:[%s151 + $0x2a8] sm:$0xff]
        %v5410 = vld [vmem:[%s151 + $0x2b0] sm:$0xff]
        %v5411 = vld [vmem:[%s151 + $0x2b8] sm:$0xff]
        %v5412 = vld [vmem:[%s151 + $0x2c0] sm:$0xff]
        %v5413 = vld [vmem:[%s151 + $0x2c8] sm:$0xff]
        %v5414 = vld [vmem:[%s151 + $0x2d0] sm:$0xff]
        %v5415 = vld [vmem:[%s151 + $0x2d8] sm:$0xff]
        %v5416 = vld [vmem:[%s151 + $0x2e0] sm:$0xff]
        %v5417 = vld [vmem:[%s151 + $0x2e8] sm:$0xff]
        %v5418 = vld [vmem:[%s151 + $0x2f0] sm:$0xff]
        %v5419 = vld [vmem:[%s151 + $0x2f8] sm:$0xff]
        %v5420 = vld [vmem:[%s151 + $0x300] sm:$0xff]
        %v5421 = vld [vmem:[%s151 + $0x308] sm:$0xff]
        %v5422 = vld [vmem:[%s151 + $0x310] sm:$0xff]
        %v5423 = vld [vmem:[%s151 + $0x318] sm:$0xff]
        %v5424 = vld [vmem:[%s151 + $0x320] sm:$0xff]
        %v5425 = vld [vmem:[%s151 + $0x328] sm:$0xff]
        %v5426 = vld [vmem:[%s151 + $0x330] sm:$0xff]
        %v5427 = vld [vmem:[%s151 + $0x338] sm:$0xff]
        %v5428 = vld [vmem:[%s151 + $0x340] sm:$0xff]
        %v5429 = vld [vmem:[%s151 + $0x348] sm:$0xff]
        %v5430 = vld [vmem:[%s151 + $0x350] sm:$0xff]
        %v5431 = vld [vmem:[%s151 + $0x358] sm:$0xff]
        %v5432 = vld [vmem:[%s151 + $0x360] sm:$0xff]
        %v5433 = vld [vmem:[%s151 + $0x368] sm:$0xff]
        %v5434 = vld [vmem:[%s151 + $0x370] sm:$0xff]
        %v5435 = vld [vmem:[%s151 + $0x378] sm:$0xff]
        %v5436 = vadd.f32 %v5324, %v5046
        %v5437 = vadd.f32 %v5325, %v5048
        %v5438 = vadd.f32 %v5326, %v5050
        %v5439 = vadd.f32 %v5327, %v5052
        %v5440 = vadd.f32 %v5328, %v5056
        %v5441 = vadd.f32 %v5329, %v5058
        %v5442 = vadd.f32 %v5330, %v5060
        %v5443 = vadd.f32 %v5331, %v5062
        %v5444 = vadd.f32 %v5332, %v5066
        %v5445 = vadd.f32 %v5333, %v5068
        %v5446 = vadd.f32 %v5334, %v5070
        %v5447 = vadd.f32 %v5335, %v5072
        %v5448 = vadd.f32 %v5336, %v5076
        %v5449 = vadd.f32 %v5337, %v5078
        %v5450 = vadd.f32 %v5338, %v5080
        %v5451 = vadd.f32 %v5339, %v5082
        %v5452 = vadd.f32 %v5340, %v5086
        %v5453 = vadd.f32 %v5341, %v5088
        %v5454 = vadd.f32 %v5342, %v5090
        %v5455 = vadd.f32 %v5343, %v5092
        %v5456 = vadd.f32 %v5344, %v5096
        %v5457 = vadd.f32 %v5345, %v5098
        %v5458 = vadd.f32 %v5346, %v5100
        %v5459 = vadd.f32 %v5347, %v5102
        %v5460 = vadd.f32 %v5348, %v5106
        %v5461 = vadd.f32 %v5349, %v5108
        %v5462 = vadd.f32 %v5350, %v5110
        %v5463 = vadd.f32 %v5351, %v5112
        %v5464 = vadd.f32 %v5352, %v5116
        %v5465 = vadd.f32 %v5353, %v5118
        %v5466 = vadd.f32 %v5354, %v5120
        %v5467 = vadd.f32 %v5355, %v5122
        %v5468 = vadd.f32 %v5356, %v5126
        %v5469 = vadd.f32 %v5357, %v5128
        %v5470 = vadd.f32 %v5358, %v5130
        %v5471 = vadd.f32 %v5359, %v5132
        %v5472 = vadd.f32 %v5360, %v5136
        %v5473 = vadd.f32 %v5361, %v5138
        %v5474 = vadd.f32 %v5362, %v5140
        %v5475 = vadd.f32 %v5363, %v5142
        %v5476 = vadd.f32 %v5364, %v5146
        %v5477 = vadd.f32 %v5365, %v5148
        %v5478 = vadd.f32 %v5366, %v5150
        %v5479 = vadd.f32 %v5367, %v5152
        %v5480 = vadd.f32 %v5368, %v5156
        %v5481 = vadd.f32 %v5369, %v5158
        %v5482 = vadd.f32 %v5370, %v5160
        %v5483 = vadd.f32 %v5371, %v5162
        %v5484 = vadd.f32 %v5372, %v5166
        %v5485 = vadd.f32 %v5373, %v5168
        %v5486 = vadd.f32 %v5374, %v5170
        %v5487 = vadd.f32 %v5375, %v5172
        %v5488 = vadd.f32 %v5376, %v5176
        %v5489 = vadd.f32 %v5377, %v5178
        %v5490 = vadd.f32 %v5378, %v5180
        %v5491 = vadd.f32 %v5379, %v5182
        %v5492 = vadd.f32 %v5380, %v5186
        %v5493 = vadd.f32 %v5381, %v5188
        %v5494 = vadd.f32 %v5382, %v5190
        %v5495 = vadd.f32 %v5383, %v5192
        %v5496 = vadd.f32 %v5384, %v5196
        %v5497 = vadd.f32 %v5385, %v5198
        %v5498 = vadd.f32 %v5386, %v5200
        %v5499 = vadd.f32 %v5387, %v5202
        %v5500 = vadd.f32 %v5388, %v5206
        %v5501 = vadd.f32 %v5389, %v5208
        %v5502 = vadd.f32 %v5390, %v5210
        %v5503 = vadd.f32 %v5391, %v5212
        %v5504 = vadd.f32 %v5392, %v5216
        %v5505 = vadd.f32 %v5393, %v5218
        %v5506 = vadd.f32 %v5394, %v5220
        %v5507 = vadd.f32 %v5395, %v5222
        %v5508 = vadd.f32 %v5396, %v5226
        %v5509 = vadd.f32 %v5397, %v5228
        %v5510 = vadd.f32 %v5398, %v5230
        %v5511 = vadd.f32 %v5399, %v5232
        %v5512 = vadd.f32 %v5400, %v5236
        %v5513 = vadd.f32 %v5401, %v5238
        %v5514 = vadd.f32 %v5402, %v5240
        %v5515 = vadd.f32 %v5403, %v5242
        %v5516 = vadd.f32 %v5404, %v5246
        %v5517 = vadd.f32 %v5405, %v5248
        %v5518 = vadd.f32 %v5406, %v5250
        %v5519 = vadd.f32 %v5407, %v5252
        %v5520 = vadd.f32 %v5408, %v5256
        %v5521 = vadd.f32 %v5409, %v5258
        %v5522 = vadd.f32 %v5410, %v5260
        %v5523 = vadd.f32 %v5411, %v5262
        %v5524 = vadd.f32 %v5412, %v5266
        %v5525 = vadd.f32 %v5413, %v5268
        %v5526 = vadd.f32 %v5414, %v5270
        %v5527 = vadd.f32 %v5415, %v5272
        %v5528 = vadd.f32 %v5416, %v5276
        %v5529 = vadd.f32 %v5417, %v5278
        %v5530 = vadd.f32 %v5418, %v5280
        %v5531 = vadd.f32 %v5419, %v5282
        %v5532 = vadd.f32 %v5420, %v5286
        %v5533 = vadd.f32 %v5421, %v5288
        %v5534 = vadd.f32 %v5422, %v5290
        %v5535 = vadd.f32 %v5423, %v5292
        %v5536 = vadd.f32 %v5424, %v5296
        %v5537 = vadd.f32 %v5425, %v5298
        %v5538 = vadd.f32 %v5426, %v5300
        %v5539 = vadd.f32 %v5427, %v5302
        %v5540 = vadd.f32 %v5428, %v5306
        %v5541 = vadd.f32 %v5429, %v5308
        %v5542 = vadd.f32 %v5430, %v5310
        %v5543 = vadd.f32 %v5431, %v5312
        %v5544 = vadd.f32 %v5432, %v5316
        %v5545 = vadd.f32 %v5433, %v5318
        %v5546 = vadd.f32 %v5434, %v5320
        %v5547 = vadd.f32 %v5435, %v5322
        %5548 = vst [vmem:[%s151] sm:$0xff] %v5436
        %5549 = vst [vmem:[%s151 + $0x8] sm:$0xff] %v5437
        %5550 = vst [vmem:[%s151 + $0x10] sm:$0xff] %v5438
        %5551 = vst [vmem:[%s151 + $0x18] sm:$0xff] %v5439
        %5552 = vst [vmem:[%s151 + $0x20] sm:$0xff] %v5440
        %5553 = vst [vmem:[%s151 + $0x28] sm:$0xff] %v5441
        %5554 = vst [vmem:[%s151 + $0x30] sm:$0xff] %v5442
        %5555 = vst [vmem:[%s151 + $0x38] sm:$0xff] %v5443
        %5556 = vst [vmem:[%s151 + $0x40] sm:$0xff] %v5444
        %5557 = vst [vmem:[%s151 + $0x48] sm:$0xff] %v5445
        %5558 = vst [vmem:[%s151 + $0x50] sm:$0xff] %v5446
        %5559 = vst [vmem:[%s151 + $0x58] sm:$0xff] %v5447
        %5560 = vst [vmem:[%s151 + $0x60] sm:$0xff] %v5448
        %5561 = vst [vmem:[%s151 + $0x68] sm:$0xff] %v5449
        %5562 = vst [vmem:[%s151 + $0x70] sm:$0xff] %v5450
        %5563 = vst [vmem:[%s151 + $0x78] sm:$0xff] %v5451
        %5564 = vst [vmem:[%s151 + $0x80] sm:$0xff] %v5452
        %5565 = vst [vmem:[%s151 + $0x88] sm:$0xff] %v5453
        %5566 = vst [vmem:[%s151 + $0x90] sm:$0xff] %v5454
        %5567 = vst [vmem:[%s151 + $0x98] sm:$0xff] %v5455
        %5568 = vst [vmem:[%s151 + $0xa0] sm:$0xff] %v5456
        %5569 = vst [vmem:[%s151 + $0xa8] sm:$0xff] %v5457
        %5570 = vst [vmem:[%s151 + $0xb0] sm:$0xff] %v5458
        %5571 = vst [vmem:[%s151 + $0xb8] sm:$0xff] %v5459
        %5572 = vst [vmem:[%s151 + $0xc0] sm:$0xff] %v5460
        %5573 = vst [vmem:[%s151 + $0xc8] sm:$0xff] %v5461
        %5574 = vst [vmem:[%s151 + $0xd0] sm:$0xff] %v5462
        %5575 = vst [vmem:[%s151 + $0xd8] sm:$0xff] %v5463
        %5576 = vst [vmem:[%s151 + $0xe0] sm:$0xff] %v5464
        %5577 = vst [vmem:[%s151 + $0xe8] sm:$0xff] %v5465
        %5578 = vst [vmem:[%s151 + $0xf0] sm:$0xff] %v5466
        %5579 = vst [vmem:[%s151 + $0xf8] sm:$0xff] %v5467
        %5580 = vst [vmem:[%s151 + $0x100] sm:$0xff] %v5468
        %5581 = vst [vmem:[%s151 + $0x108] sm:$0xff] %v5469
        %5582 = vst [vmem:[%s151 + $0x110] sm:$0xff] %v5470
        %5583 = vst [vmem:[%s151 + $0x118] sm:$0xff] %v5471
        %5584 = vst [vmem:[%s151 + $0x120] sm:$0xff] %v5472
        %5585 = vst [vmem:[%s151 + $0x128] sm:$0xff] %v5473
        %5586 = vst [vmem:[%s151 + $0x130] sm:$0xff] %v5474
        %5587 = vst [vmem:[%s151 + $0x138] sm:$0xff] %v5475
        %5588 = vst [vmem:[%s151 + $0x140] sm:$0xff] %v5476
        %5589 = vst [vmem:[%s151 + $0x148] sm:$0xff] %v5477
        %5590 = vst [vmem:[%s151 + $0x150] sm:$0xff] %v5478
        %5591 = vst [vmem:[%s151 + $0x158] sm:$0xff] %v5479
        %5592 = vst [vmem:[%s151 + $0x160] sm:$0xff] %v5480
        %5593 = vst [vmem:[%s151 + $0x168] sm:$0xff] %v5481
        %5594 = vst [vmem:[%s151 + $0x170] sm:$0xff] %v5482
        %5595 = vst [vmem:[%s151 + $0x178] sm:$0xff] %v5483
        %5596 = vst [vmem:[%s151 + $0x180] sm:$0xff] %v5484
        %5597 = vst [vmem:[%s151 + $0x188] sm:$0xff] %v5485
        %5598 = vst [vmem:[%s151 + $0x190] sm:$0xff] %v5486
        %5599 = vst [vmem:[%s151 + $0x198] sm:$0xff] %v5487
        %5600 = vst [vmem:[%s151 + $0x1a0] sm:$0xff] %v5488
        %5601 = vst [vmem:[%s151 + $0x1a8] sm:$0xff] %v5489
        %5602 = vst [vmem:[%s151 + $0x1b0] sm:$0xff] %v5490
        %5603 = vst [vmem:[%s151 + $0x1b8] sm:$0xff] %v5491
        %5604 = vst [vmem:[%s151 + $0x1c0] sm:$0xff] %v5492
        %5605 = vst [vmem:[%s151 + $0x1c8] sm:$0xff] %v5493
        %5606 = vst [vmem:[%s151 + $0x1d0] sm:$0xff] %v5494
        %5607 = vst [vmem:[%s151 + $0x1d8] sm:$0xff] %v5495
        %5608 = vst [vmem:[%s151 + $0x1e0] sm:$0xff] %v5496
        %5609 = vst [vmem:[%s151 + $0x1e8] sm:$0xff] %v5497
        %5610 = vst [vmem:[%s151 + $0x1f0] sm:$0xff] %v5498
        %5611 = vst [vmem:[%s151 + $0x1f8] sm:$0xff] %v5499
        %5612 = vst [vmem:[%s151 + $0x200] sm:$0xff] %v5500
        %5613 = vst [vmem:[%s151 + $0x208] sm:$0xff] %v5501
        %5614 = vst [vmem:[%s151 + $0x210] sm:$0xff] %v5502
        %5615 = vst [vmem:[%s151 + $0x218] sm:$0xff] %v5503
        %5616 = vst [vmem:[%s151 + $0x220] sm:$0xff] %v5504
        %5617 = vst [vmem:[%s151 + $0x228] sm:$0xff] %v5505
        %5618 = vst [vmem:[%s151 + $0x230] sm:$0xff] %v5506
        %5619 = vst [vmem:[%s151 + $0x238] sm:$0xff] %v5507
        %5620 = vst [vmem:[%s151 + $0x240] sm:$0xff] %v5508
        %5621 = vst [vmem:[%s151 + $0x248] sm:$0xff] %v5509
        %5622 = vst [vmem:[%s151 + $0x250] sm:$0xff] %v5510
        %5623 = vst [vmem:[%s151 + $0x258] sm:$0xff] %v5511
        %5624 = vst [vmem:[%s151 + $0x260] sm:$0xff] %v5512
        %5625 = vst [vmem:[%s151 + $0x268] sm:$0xff] %v5513
        %5626 = vst [vmem:[%s151 + $0x270] sm:$0xff] %v5514
        %5627 = vst [vmem:[%s151 + $0x278] sm:$0xff] %v5515
        %5628 = vst [vmem:[%s151 + $0x280] sm:$0xff] %v5516
        %5629 = vst [vmem:[%s151 + $0x288] sm:$0xff] %v5517
        %5630 = vst [vmem:[%s151 + $0x290] sm:$0xff] %v5518
        %5631 = vst [vmem:[%s151 + $0x298] sm:$0xff] %v5519
        %5632 = vst [vmem:[%s151 + $0x2a0] sm:$0xff] %v5520
        %5633 = vst [vmem:[%s151 + $0x2a8] sm:$0xff] %v5521
        %5634 = vst [vmem:[%s151 + $0x2b0] sm:$0xff] %v5522
        %5635 = vst [vmem:[%s151 + $0x2b8] sm:$0xff] %v5523
        %5636 = vst [vmem:[%s151 + $0x2c0] sm:$0xff] %v5524
        %5637 = vst [vmem:[%s151 + $0x2c8] sm:$0xff] %v5525
        %5638 = vst [vmem:[%s151 + $0x2d0] sm:$0xff] %v5526
        %5639 = vst [vmem:[%s151 + $0x2d8] sm:$0xff] %v5527
        %5640 = vst [vmem:[%s151 + $0x2e0] sm:$0xff] %v5528
        %5641 = vst [vmem:[%s151 + $0x2e8] sm:$0xff] %v5529
        %5642 = vst [vmem:[%s151 + $0x2f0] sm:$0xff] %v5530
        %5643 = vst [vmem:[%s151 + $0x2f8] sm:$0xff] %v5531
        %5644 = vst [vmem:[%s151 + $0x300] sm:$0xff] %v5532
        %5645 = vst [vmem:[%s151 + $0x308] sm:$0xff] %v5533
        %5646 = vst [vmem:[%s151 + $0x310] sm:$0xff] %v5534
        %5647 = vst [vmem:[%s151 + $0x318] sm:$0xff] %v5535
        %5648 = vst [vmem:[%s151 + $0x320] sm:$0xff] %v5536
        %5649 = vst [vmem:[%s151 + $0x328] sm:$0xff] %v5537
        %5650 = vst [vmem:[%s151 + $0x330] sm:$0xff] %v5538
        %5651 = vst [vmem:[%s151 + $0x338] sm:$0xff] %v5539
        %5652 = vst [vmem:[%s151 + $0x340] sm:$0xff] %v5540
        %5653 = vst [vmem:[%s151 + $0x348] sm:$0xff] %v5541
        %5654 = vst [vmem:[%s151 + $0x350] sm:$0xff] %v5542
        %5655 = vst [vmem:[%s151 + $0x358] sm:$0xff] %v5543
        %5656 = vst [vmem:[%s151 + $0x360] sm:$0xff] %v5544
        %5657 = vst [vmem:[%s151 + $0x368] sm:$0xff] %v5545
        %5658 = vst [vmem:[%s151 + $0x370] sm:$0xff] %v5546
        %5659 = vst [vmem:[%s151 + $0x378] sm:$0xff] %v5547
        %s5660 = sadd.s32 %s153, 128
        %s5661 = sshra.s32 %s5660, 3
        %s5662 = sand.u32 %s5660, 7
        %s5663 = smul.u32 %s5661, 6
        %s5664 = smul.addr %s5663, 4
        %s5665 = scalar_lea.vmem [#allocation2], %s5664
        %v5666 = vld [vmem:[%s5665] sm:$0xff]
        %v5667 = vld [vmem:[%s5665 + $0x8] sm:$0xff]
        %v5668 = vld [vmem:[%s5665 + $0x10] sm:$0xff]
        %v5669 = vld [vmem:[%s5665 + $0x18] sm:$0xff]
        %v5670 = vld [vmem:[%s5665 + $0x20] sm:$0xff]
        %v5671 = vld [vmem:[%s5665 + $0x28] sm:$0xff]
        %v5672 = vld [vmem:[%s5665 + $0x30] sm:$0xff]
        %v5673 = vld [vmem:[%s5665 + $0x38] sm:$0xff]
        %v5674 = vld [vmem:[%s5665 + $0x40] sm:$0xff]
        %v5675 = vld [vmem:[%s5665 + $0x48] sm:$0xff]
        %v5676 = vld [vmem:[%s5665 + $0x50] sm:$0xff]
        %v5677 = vld [vmem:[%s5665 + $0x58] sm:$0xff]
        %v5678 = vld [vmem:[%s5665 + $0x60] sm:$0xff]
        %v5679 = vld [vmem:[%s5665 + $0x68] sm:$0xff]
        %v5680 = vld [vmem:[%s5665 + $0x70] sm:$0xff]
        %v5681 = vld [vmem:[%s5665 + $0x78] sm:$0xff]
        %v5682 = vld [vmem:[%s5665 + $0x80] sm:$0xff]
        %v5683 = vld [vmem:[%s5665 + $0x88] sm:$0xff]
        %v5684 = vld [vmem:[%s5665 + $0x90] sm:$0xff]
        %v5685 = vld [vmem:[%s5665 + $0x98] sm:$0xff]
        %v5686 = vld [vmem:[%s5665 + $0xa0] sm:$0xff]
        %v5687 = vld [vmem:[%s5665 + $0xa8] sm:$0xff]
        %v5688 = vld [vmem:[%s5665 + $0xb0] sm:$0xff]
        %v5689 = vld [vmem:[%s5665 + $0xb8] sm:$0xff]
        %v5690 = vld [vmem:[%s5665 + $0xc0] sm:$0xff]
        %v5691 = vld [vmem:[%s5665 + $0xc8] sm:$0xff]
        %v5692 = vld [vmem:[%s5665 + $0xd0] sm:$0xff]
        %v5693 = vld [vmem:[%s5665 + $0xd8] sm:$0xff]
        %v5694 = vld [vmem:[%s5665 + $0xe0] sm:$0xff]
        %v5695 = vld [vmem:[%s5665 + $0xe8] sm:$0xff]
        %v5696 = vld [vmem:[%s5665 + $0xf0] sm:$0xff]
        %v5697 = vld [vmem:[%s5665 + $0xf8] sm:$0xff]
        %v5698 = vld [vmem:[%s5665 + $0x100] sm:$0xff]
        %v5699 = vld [vmem:[%s5665 + $0x108] sm:$0xff]
        %v5700 = vld [vmem:[%s5665 + $0x110] sm:$0xff]
        %v5701 = vld [vmem:[%s5665 + $0x118] sm:$0xff]
        %v5702 = vld [vmem:[%s5665 + $0x120] sm:$0xff]
        %v5703 = vld [vmem:[%s5665 + $0x128] sm:$0xff]
        %v5704 = vld [vmem:[%s5665 + $0x130] sm:$0xff]
        %v5705 = vld [vmem:[%s5665 + $0x138] sm:$0xff]
        %v5706 = vld [vmem:[%s5665 + $0x140] sm:$0xff]
        %v5707 = vld [vmem:[%s5665 + $0x148] sm:$0xff]
        %v5708 = vld [vmem:[%s5665 + $0x150] sm:$0xff]
        %v5709 = vld [vmem:[%s5665 + $0x158] sm:$0xff]
        %v5710 = vld [vmem:[%s5665 + $0x160] sm:$0xff]
        %v5711 = vld [vmem:[%s5665 + $0x168] sm:$0xff]
        %v5712 = vld [vmem:[%s5665 + $0x170] sm:$0xff]
        %v5713 = vld [vmem:[%s5665 + $0x178] sm:$0xff]
        %v5714 = vld [vmem:[%s5665 + $0x180] sm:$0xff]
        %v5715 = vld [vmem:[%s5665 + $0x188] sm:$0xff]
        %v5716 = vld [vmem:[%s5665 + $0x190] sm:$0xff]
        %v5717 = vld [vmem:[%s5665 + $0x198] sm:$0xff]
        %v5718 = vld [vmem:[%s5665 + $0x1a0] sm:$0xff]
        %v5719 = vld [vmem:[%s5665 + $0x1a8] sm:$0xff]
        %v5720 = vld [vmem:[%s5665 + $0x1b0] sm:$0xff]
        %v5721 = vld [vmem:[%s5665 + $0x1b8] sm:$0xff]
        %v5722 = vld [vmem:[%s5665 + $0x1c0] sm:$0xff]
        %v5723 = vld [vmem:[%s5665 + $0x1c8] sm:$0xff]
        %v5724 = vld [vmem:[%s5665 + $0x1d0] sm:$0xff]
        %v5725 = vld [vmem:[%s5665 + $0x1d8] sm:$0xff]
        %v5726 = vld [vmem:[%s5665 + $0x1e0] sm:$0xff]
        %v5727 = vld [vmem:[%s5665 + $0x1e8] sm:$0xff]
        %v5728 = vld [vmem:[%s5665 + $0x1f0] sm:$0xff]
        %v5729 = vld [vmem:[%s5665 + $0x1f8] sm:$0xff]
        %v5730 = vld [vmem:[%s5665 + $0x200] sm:$0xff]
        %v5731 = vld [vmem:[%s5665 + $0x208] sm:$0xff]
        %v5732 = vld [vmem:[%s5665 + $0x210] sm:$0xff]
        %v5733 = vld [vmem:[%s5665 + $0x218] sm:$0xff]
        %v5734 = vld [vmem:[%s5665 + $0x220] sm:$0xff]
        %v5735 = vld [vmem:[%s5665 + $0x228] sm:$0xff]
        %v5736 = vld [vmem:[%s5665 + $0x230] sm:$0xff]
        %v5737 = vld [vmem:[%s5665 + $0x238] sm:$0xff]
        %v5738 = vld [vmem:[%s5665 + $0x240] sm:$0xff]
        %v5739 = vld [vmem:[%s5665 + $0x248] sm:$0xff]
        %v5740 = vld [vmem:[%s5665 + $0x250] sm:$0xff]
        %v5741 = vld [vmem:[%s5665 + $0x258] sm:$0xff]
        %v5742 = vld [vmem:[%s5665 + $0x260] sm:$0xff]
        %v5743 = vld [vmem:[%s5665 + $0x268] sm:$0xff]
        %v5744 = vld [vmem:[%s5665 + $0x270] sm:$0xff]
        %v5745 = vld [vmem:[%s5665 + $0x278] sm:$0xff]
        %v5746 = vld [vmem:[%s5665 + $0x280] sm:$0xff]
        %v5747 = vld [vmem:[%s5665 + $0x288] sm:$0xff]
        %v5748 = vld [vmem:[%s5665 + $0x290] sm:$0xff]
        %v5749 = vld [vmem:[%s5665 + $0x298] sm:$0xff]
        %v5750 = vld [vmem:[%s5665 + $0x2a0] sm:$0xff]
        %v5751 = vld [vmem:[%s5665 + $0x2a8] sm:$0xff]
        %v5752 = vld [vmem:[%s5665 + $0x2b0] sm:$0xff]
        %v5753 = vld [vmem:[%s5665 + $0x2b8] sm:$0xff]
        %v5754 = vld [vmem:[%s5665 + $0x2c0] sm:$0xff]
        %v5755 = vld [vmem:[%s5665 + $0x2c8] sm:$0xff]
        %v5756 = vld [vmem:[%s5665 + $0x2d0] sm:$0xff]
        %v5757 = vld [vmem:[%s5665 + $0x2d8] sm:$0xff]
        %v5758 = vld [vmem:[%s5665 + $0x2e0] sm:$0xff]
        %v5759 = vld [vmem:[%s5665 + $0x2e8] sm:$0xff]
        %v5760 = vld [vmem:[%s5665 + $0x2f0] sm:$0xff]
        %v5761 = vld [vmem:[%s5665 + $0x2f8] sm:$0xff]
        %v5762 = vld [vmem:[%s5665 + $0x300] sm:$0xff]
        %v5763 = vld [vmem:[%s5665 + $0x308] sm:$0xff]
        %v5764 = vld [vmem:[%s5665 + $0x310] sm:$0xff]
        %v5765 = vld [vmem:[%s5665 + $0x318] sm:$0xff]
        %v5766 = vld [vmem:[%s5665 + $0x320] sm:$0xff]
        %v5767 = vld [vmem:[%s5665 + $0x328] sm:$0xff]
        %v5768 = vld [vmem:[%s5665 + $0x330] sm:$0xff]
        %v5769 = vld [vmem:[%s5665 + $0x338] sm:$0xff]
        %v5770 = vld [vmem:[%s5665 + $0x340] sm:$0xff]
        %v5771 = vld [vmem:[%s5665 + $0x348] sm:$0xff]
        %v5772 = vld [vmem:[%s5665 + $0x350] sm:$0xff]
        %v5773 = vld [vmem:[%s5665 + $0x358] sm:$0xff]
        %v5774 = vld [vmem:[%s5665 + $0x360] sm:$0xff]
        %v5775 = vld [vmem:[%s5665 + $0x368] sm:$0xff]
        %v5776 = vld [vmem:[%s5665 + $0x370] sm:$0xff]
        %v5777 = vld [vmem:[%s5665 + $0x378] sm:$0xff]
        %v5778 = vld [vmem:[%s5665 + $0x380] sm:$0xff]
        %v5779 = vld [vmem:[%s5665 + $0x388] sm:$0xff]
        %v5780 = vld [vmem:[%s5665 + $0x390] sm:$0xff]
        %v5781 = vld [vmem:[%s5665 + $0x398] sm:$0xff]
        %v5782 = vld [vmem:[%s5665 + $0x3a0] sm:$0xff]
        %v5783 = vld [vmem:[%s5665 + $0x3a8] sm:$0xff]
        %v5784 = vld [vmem:[%s5665 + $0x3b0] sm:$0xff]
        %v5785 = vld [vmem:[%s5665 + $0x3b8] sm:$0xff]
        %v5786 = vld [vmem:[%s5665 + $0x3c0] sm:$0xff]
        %v5787 = vld [vmem:[%s5665 + $0x3c8] sm:$0xff]
        %v5788 = vld [vmem:[%s5665 + $0x3d0] sm:$0xff]
        %v5789 = vld [vmem:[%s5665 + $0x3d8] sm:$0xff]
        %v5790 = vld [vmem:[%s5665 + $0x3e0] sm:$0xff]
        %v5791 = vld [vmem:[%s5665 + $0x3e8] sm:$0xff]
        %v5792 = vld [vmem:[%s5665 + $0x3f0] sm:$0xff]
        %v5793 = vld [vmem:[%s5665 + $0x3f8] sm:$0xff]
        %v5794 = vld [vmem:[%s5665 + $0x400] sm:$0xff]
        %v5795 = vld [vmem:[%s5665 + $0x408] sm:$0xff]
        %v5796 = vld [vmem:[%s5665 + $0x410] sm:$0xff]
        %v5797 = vld [vmem:[%s5665 + $0x418] sm:$0xff]
        %v5798 = vld [vmem:[%s5665 + $0x420] sm:$0xff]
        %v5799 = vld [vmem:[%s5665 + $0x428] sm:$0xff]
        %v5800 = vld [vmem:[%s5665 + $0x430] sm:$0xff]
        %v5801 = vld [vmem:[%s5665 + $0x438] sm:$0xff]
        %v5802 = vld [vmem:[%s5665 + $0x440] sm:$0xff]
        %v5803 = vld [vmem:[%s5665 + $0x448] sm:$0xff]
        %v5804 = vld [vmem:[%s5665 + $0x450] sm:$0xff]
        %v5805 = vld [vmem:[%s5665 + $0x458] sm:$0xff]
        %v5806 = vld [vmem:[%s5665 + $0x460] sm:$0xff]
        %v5807 = vld [vmem:[%s5665 + $0x468] sm:$0xff]
        %v5808 = vld [vmem:[%s5665 + $0x470] sm:$0xff]
        %v5809 = vld [vmem:[%s5665 + $0x478] sm:$0xff]
        %v5810 = vld [vmem:[%s5665 + $0x480] sm:$0xff]
        %v5811 = vld [vmem:[%s5665 + $0x488] sm:$0xff]
        %v5812 = vld [vmem:[%s5665 + $0x490] sm:$0xff]
        %v5813 = vld [vmem:[%s5665 + $0x498] sm:$0xff]
        %v5814 = vld [vmem:[%s5665 + $0x4a0] sm:$0xff]
        %v5815 = vld [vmem:[%s5665 + $0x4a8] sm:$0xff]
        %v5816 = vld [vmem:[%s5665 + $0x4b0] sm:$0xff]
        %v5817 = vld [vmem:[%s5665 + $0x4b8] sm:$0xff]
        %v5818 = vld [vmem:[%s5665 + $0x4c0] sm:$0xff]
        %v5819 = vld [vmem:[%s5665 + $0x4c8] sm:$0xff]
        %v5820 = vld [vmem:[%s5665 + $0x4d0] sm:$0xff]
        %v5821 = vld [vmem:[%s5665 + $0x4d8] sm:$0xff]
        %v5822 = vld [vmem:[%s5665 + $0x4e0] sm:$0xff]
        %v5823 = vld [vmem:[%s5665 + $0x4e8] sm:$0xff]
        %v5824 = vld [vmem:[%s5665 + $0x4f0] sm:$0xff]
        %v5825 = vld [vmem:[%s5665 + $0x4f8] sm:$0xff]
        %v5826 = vld [vmem:[%s5665 + $0x500] sm:$0xff]
        %v5827 = vld [vmem:[%s5665 + $0x508] sm:$0xff]
        %v5828 = vld [vmem:[%s5665 + $0x510] sm:$0xff]
        %v5829 = vld [vmem:[%s5665 + $0x518] sm:$0xff]
        %v5830 = vld [vmem:[%s5665 + $0x520] sm:$0xff]
        %v5831 = vld [vmem:[%s5665 + $0x528] sm:$0xff]
        %v5832 = vld [vmem:[%s5665 + $0x530] sm:$0xff]
        %v5833 = vld [vmem:[%s5665 + $0x538] sm:$0xff]
        %s5834 = scalar_lea.vmem [#allocation5], 1536
        %v5835 = vld [vmem:[%s5834] sm:$0xff]
        %v5836 = vld [vmem:[%s5834 + $0x8] sm:$0xff]
        %v5837 = vld [vmem:[%s5834 + $0x10] sm:$0xff]
        %v5838 = vld [vmem:[%s5834 + $0x18] sm:$0xff]
        %v5839 = vld [vmem:[%s5834 + $0x20] sm:$0xff]
        %v5840 = vld [vmem:[%s5834 + $0x28] sm:$0xff]
        %v5841 = vld [vmem:[%s5834 + $0x30] sm:$0xff]
        %v5842 = vld [vmem:[%s5834 + $0x38] sm:$0xff]
        %v5843 = vld [vmem:[%s5834 + $0x40] sm:$0xff]
        %v5844 = vld [vmem:[%s5834 + $0x48] sm:$0xff]
        %v5845 = vld [vmem:[%s5834 + $0x50] sm:$0xff]
        %v5846 = vld [vmem:[%s5834 + $0x58] sm:$0xff]
        %v5847 = vld [vmem:[%s5834 + $0x60] sm:$0xff]
        %v5848 = vld [vmem:[%s5834 + $0x68] sm:$0xff]
        %v5849 = vld [vmem:[%s5834 + $0x70] sm:$0xff]
        %v5850 = vld [vmem:[%s5834 + $0x78] sm:$0xff]
        %v5851 = vld [vmem:[%s5834 + $0x80] sm:$0xff]
        %v5852 = vld [vmem:[%s5834 + $0x88] sm:$0xff]
        %v5853 = vld [vmem:[%s5834 + $0x90] sm:$0xff]
        %v5854 = vld [vmem:[%s5834 + $0x98] sm:$0xff]
        %v5855 = vld [vmem:[%s5834 + $0xa0] sm:$0xff]
        %v5856 = vld [vmem:[%s5834 + $0xa8] sm:$0xff]
        %v5857 = vld [vmem:[%s5834 + $0xb0] sm:$0xff]
        %v5858 = vld [vmem:[%s5834 + $0xb8] sm:$0xff]
        %v5859 = vld [vmem:[%s5834 + $0xc0] sm:$0xff]
        %v5860 = vld [vmem:[%s5834 + $0xc8] sm:$0xff]
        %v5861 = vld [vmem:[%s5834 + $0xd0] sm:$0xff]
        %v5862 = vld [vmem:[%s5834 + $0xd8] sm:$0xff]
        %v5863 = vld [vmem:[%s5834 + $0xe0] sm:$0xff]
        %v5864 = vld [vmem:[%s5834 + $0xe8] sm:$0xff]
        %v5865 = vld [vmem:[%s5834 + $0xf0] sm:$0xff]
        %v5866 = vld [vmem:[%s5834 + $0xf8] sm:$0xff]
        %v5867 = vld [vmem:[%s5834 + $0x100] sm:$0xff]
        %v5868 = vld [vmem:[%s5834 + $0x108] sm:$0xff]
        %v5869 = vld [vmem:[%s5834 + $0x110] sm:$0xff]
        %v5870 = vld [vmem:[%s5834 + $0x118] sm:$0xff]
        %v5871 = vld [vmem:[%s5834 + $0x120] sm:$0xff]
        %v5872 = vld [vmem:[%s5834 + $0x128] sm:$0xff]
        %v5873 = vld [vmem:[%s5834 + $0x130] sm:$0xff]
        %v5874 = vld [vmem:[%s5834 + $0x138] sm:$0xff]
        %v5875 = vld [vmem:[%s5834 + $0x140] sm:$0xff]
        %v5876 = vld [vmem:[%s5834 + $0x148] sm:$0xff]
        %v5877 = vld [vmem:[%s5834 + $0x150] sm:$0xff]
        %v5878 = vld [vmem:[%s5834 + $0x158] sm:$0xff]
        %v5879 = vld [vmem:[%s5834 + $0x160] sm:$0xff]
        %v5880 = vld [vmem:[%s5834 + $0x168] sm:$0xff]
        %v5881 = vld [vmem:[%s5834 + $0x170] sm:$0xff]
        %v5882 = vld [vmem:[%s5834 + $0x178] sm:$0xff]
        %v5883 = vld [vmem:[%s5834 + $0x180] sm:$0xff]
        %v5884 = vld [vmem:[%s5834 + $0x188] sm:$0xff]
        %v5885 = vld [vmem:[%s5834 + $0x190] sm:$0xff]
        %v5886 = vld [vmem:[%s5834 + $0x198] sm:$0xff]
        %v5887 = vld [vmem:[%s5834 + $0x1a0] sm:$0xff]
        %v5888 = vld [vmem:[%s5834 + $0x1a8] sm:$0xff]
        %v5889 = vld [vmem:[%s5834 + $0x1b0] sm:$0xff]
        %v5890 = vld [vmem:[%s5834 + $0x1b8] sm:$0xff]
        %v5891 = vld [vmem:[%s5834 + $0x1c0] sm:$0xff]
        %v5892 = vld [vmem:[%s5834 + $0x1c8] sm:$0xff]
        %v5893 = vld [vmem:[%s5834 + $0x1d0] sm:$0xff]
        %v5894 = vld [vmem:[%s5834 + $0x1d8] sm:$0xff]
        %v5895 = vld [vmem:[%s5834 + $0x1e0] sm:$0xff]
        %v5896 = vld [vmem:[%s5834 + $0x1e8] sm:$0xff]
        %v5897 = vld [vmem:[%s5834 + $0x1f0] sm:$0xff]
        %v5898 = vld [vmem:[%s5834 + $0x1f8] sm:$0xff]
        %v5899 = vld [vmem:[%s5834 + $0x200] sm:$0xff]
        %v5900 = vld [vmem:[%s5834 + $0x208] sm:$0xff]
        %v5901 = vld [vmem:[%s5834 + $0x210] sm:$0xff]
        %v5902 = vld [vmem:[%s5834 + $0x218] sm:$0xff]
        %v5903 = vld [vmem:[%s5834 + $0x220] sm:$0xff]
        %v5904 = vld [vmem:[%s5834 + $0x228] sm:$0xff]
        %v5905 = vld [vmem:[%s5834 + $0x230] sm:$0xff]
        %v5906 = vld [vmem:[%s5834 + $0x238] sm:$0xff]
        %v5907 = vld [vmem:[%s5834 + $0x240] sm:$0xff]
        %v5908 = vld [vmem:[%s5834 + $0x248] sm:$0xff]
        %v5909 = vld [vmem:[%s5834 + $0x250] sm:$0xff]
        %v5910 = vld [vmem:[%s5834 + $0x258] sm:$0xff]
        %v5911 = vld [vmem:[%s5834 + $0x260] sm:$0xff]
        %v5912 = vld [vmem:[%s5834 + $0x268] sm:$0xff]
        %v5913 = vld [vmem:[%s5834 + $0x270] sm:$0xff]
        %v5914 = vld [vmem:[%s5834 + $0x278] sm:$0xff]
        %v5915 = vld [vmem:[%s5834 + $0x280] sm:$0xff]
        %v5916 = vld [vmem:[%s5834 + $0x288] sm:$0xff]
        %v5917 = vld [vmem:[%s5834 + $0x290] sm:$0xff]
        %v5918 = vld [vmem:[%s5834 + $0x298] sm:$0xff]
        %v5919 = vld [vmem:[%s5834 + $0x2a0] sm:$0xff]
        %v5920 = vld [vmem:[%s5834 + $0x2a8] sm:$0xff]
        %v5921 = vld [vmem:[%s5834 + $0x2b0] sm:$0xff]
        %v5922 = vld [vmem:[%s5834 + $0x2b8] sm:$0xff]
        %v5923 = vld [vmem:[%s5834 + $0x2c0] sm:$0xff]
        %v5924 = vld [vmem:[%s5834 + $0x2c8] sm:$0xff]
        %v5925 = vld [vmem:[%s5834 + $0x2d0] sm:$0xff]
        %v5926 = vld [vmem:[%s5834 + $0x2d8] sm:$0xff]
        %v5927 = vld [vmem:[%s5834 + $0x2e0] sm:$0xff]
        %v5928 = vld [vmem:[%s5834 + $0x2e8] sm:$0xff]
        %v5929 = vld [vmem:[%s5834 + $0x2f0] sm:$0xff]
        %v5930 = vld [vmem:[%s5834 + $0x2f8] sm:$0xff]
        %v6099 = vunpack.c.l.b16 %v5666
        %v6100 = vunpack.c.h.b16 %v5666
        %v6101 = vunpack.c.l.b16 %v5667
        %v6102 = vunpack.c.h.b16 %v5667
        %v6103 = vunpack.c.l.b16 %v5668
        %v6104 = vunpack.c.h.b16 %v5668
        %v6105 = vunpack.c.l.b16 %v5669
        %v6106 = vunpack.c.h.b16 %v5669
        %v6107 = vunpack.c.l.b16 %v5670
        %v6108 = vunpack.c.h.b16 %v5670
        %v6109 = vunpack.c.l.b16 %v5671
        %v6110 = vunpack.c.h.b16 %v5671
        %v6111 = vunpack.c.l.b16 %v5672
        %v6112 = vunpack.c.h.b16 %v5672
        %v6113 = vunpack.c.l.b16 %v5673
        %v6114 = vunpack.c.h.b16 %v5673
        %v6115 = vunpack.c.l.b16 %v5674
        %v6116 = vunpack.c.h.b16 %v5674
        %v6117 = vunpack.c.l.b16 %v5675
        %v6118 = vunpack.c.h.b16 %v5675
        %v6119 = vunpack.c.l.b16 %v5676
        %v6120 = vunpack.c.h.b16 %v5676
        %v6121 = vunpack.c.l.b16 %v5677
        %v6122 = vunpack.c.h.b16 %v5677
        %v6123 = vunpack.c.l.b16 %v5678
        %v6124 = vunpack.c.h.b16 %v5678
        %v6125 = vunpack.c.l.b16 %v5679
        %v6126 = vunpack.c.h.b16 %v5679
        %v6127 = vunpack.c.l.b16 %v5680
        %v6128 = vunpack.c.h.b16 %v5680
        %v6129 = vunpack.c.l.b16 %v5681
        %v6130 = vunpack.c.h.b16 %v5681
        %v6131 = vunpack.c.l.b16 %v5682
        %v6132 = vunpack.c.h.b16 %v5682
        %v6133 = vunpack.c.l.b16 %v5683
        %v6134 = vunpack.c.h.b16 %v5683
        %v6135 = vunpack.c.l.b16 %v5684
        %v6136 = vunpack.c.h.b16 %v5684
        %v6137 = vunpack.c.l.b16 %v5685
        %v6138 = vunpack.c.h.b16 %v5685
        %v6139 = vunpack.c.l.b16 %v5686
        %v6140 = vunpack.c.h.b16 %v5686
        %v6141 = vunpack.c.l.b16 %v5687
        %v6142 = vunpack.c.h.b16 %v5687
        %v6143 = vunpack.c.l.b16 %v5688
        %v6144 = vunpack.c.h.b16 %v5688
        %v6145 = vunpack.c.l.b16 %v5689
        %v6146 = vunpack.c.h.b16 %v5689
        %v6147 = vunpack.c.l.b16 %v5690
        %v6148 = vunpack.c.h.b16 %v5690
        %v6149 = vunpack.c.l.b16 %v5691
        %v6150 = vunpack.c.h.b16 %v5691
        %v6151 = vunpack.c.l.b16 %v5692
        %v6152 = vunpack.c.h.b16 %v5692
        %v6153 = vunpack.c.l.b16 %v5693
        %v6154 = vunpack.c.h.b16 %v5693
        %v6155 = vunpack.c.l.b16 %v5694
        %v6156 = vunpack.c.h.b16 %v5694
        %v6157 = vunpack.c.l.b16 %v5695
        %v6158 = vunpack.c.h.b16 %v5695
        %v6159 = vunpack.c.l.b16 %v5696
        %v6160 = vunpack.c.h.b16 %v5696
        %v6161 = vunpack.c.l.b16 %v5697
        %v6162 = vunpack.c.h.b16 %v5697
        %v6163 = vunpack.c.l.b16 %v5698
        %v6164 = vunpack.c.h.b16 %v5698
        %v6165 = vunpack.c.l.b16 %v5699
        %v6166 = vunpack.c.h.b16 %v5699
        %v6167 = vunpack.c.l.b16 %v5700
        %v6168 = vunpack.c.h.b16 %v5700
        %v6169 = vunpack.c.l.b16 %v5701
        %v6170 = vunpack.c.h.b16 %v5701
        %v6171 = vunpack.c.l.b16 %v5702
        %v6172 = vunpack.c.h.b16 %v5702
        %v6173 = vunpack.c.l.b16 %v5703
        %v6174 = vunpack.c.h.b16 %v5703
        %v6175 = vunpack.c.l.b16 %v5704
        %v6176 = vunpack.c.h.b16 %v5704
        %v6177 = vunpack.c.l.b16 %v5705
        %v6178 = vunpack.c.h.b16 %v5705
        %v6179 = vunpack.c.l.b16 %v5706
        %v6180 = vunpack.c.h.b16 %v5706
        %v6181 = vunpack.c.l.b16 %v5707
        %v6182 = vunpack.c.h.b16 %v5707
        %v6183 = vunpack.c.l.b16 %v5708
        %v6184 = vunpack.c.h.b16 %v5708
        %v6185 = vunpack.c.l.b16 %v5709
        %v6186 = vunpack.c.h.b16 %v5709
        %v6187 = vunpack.c.l.b16 %v5710
        %v6188 = vunpack.c.h.b16 %v5710
        %v6189 = vunpack.c.l.b16 %v5711
        %v6190 = vunpack.c.h.b16 %v5711
        %v6191 = vunpack.c.l.b16 %v5712
        %v6192 = vunpack.c.h.b16 %v5712
        %v6193 = vunpack.c.l.b16 %v5713
        %v6194 = vunpack.c.h.b16 %v5713
        %v6195 = vunpack.c.l.b16 %v5714
        %v6196 = vunpack.c.h.b16 %v5714
        %v6197 = vunpack.c.l.b16 %v5715
        %v6198 = vunpack.c.h.b16 %v5715
        %v6199 = vunpack.c.l.b16 %v5716
        %v6200 = vunpack.c.h.b16 %v5716
        %v6201 = vunpack.c.l.b16 %v5717
        %v6202 = vunpack.c.h.b16 %v5717
        %v6203 = vunpack.c.l.b16 %v5718
        %v6204 = vunpack.c.h.b16 %v5718
        %v6205 = vunpack.c.l.b16 %v5719
        %v6206 = vunpack.c.h.b16 %v5719
        %v6207 = vunpack.c.l.b16 %v5720
        %v6208 = vunpack.c.h.b16 %v5720
        %v6209 = vunpack.c.l.b16 %v5721
        %v6210 = vunpack.c.h.b16 %v5721
        %v6211 = vunpack.c.l.b16 %v5722
        %v6212 = vunpack.c.h.b16 %v5722
        %v6213 = vunpack.c.l.b16 %v5723
        %v6214 = vunpack.c.h.b16 %v5723
        %v6215 = vunpack.c.l.b16 %v5724
        %v6216 = vunpack.c.h.b16 %v5724
        %v6217 = vunpack.c.l.b16 %v5725
        %v6218 = vunpack.c.h.b16 %v5725
        %v6219 = vunpack.c.l.b16 %v5726
        %v6220 = vunpack.c.h.b16 %v5726
        %v6221 = vunpack.c.l.b16 %v5727
        %v6222 = vunpack.c.h.b16 %v5727
        %v6223 = vunpack.c.l.b16 %v5728
        %v6224 = vunpack.c.h.b16 %v5728
        %v6225 = vunpack.c.l.b16 %v5729
        %v6226 = vunpack.c.h.b16 %v5729
        %v6227 = vunpack.c.l.b16 %v5730
        %v6228 = vunpack.c.h.b16 %v5730
        %v6229 = vunpack.c.l.b16 %v5731
        %v6230 = vunpack.c.h.b16 %v5731
        %v6231 = vunpack.c.l.b16 %v5732
        %v6232 = vunpack.c.h.b16 %v5732
        %v6233 = vunpack.c.l.b16 %v5733
        %v6234 = vunpack.c.h.b16 %v5733
        %v6235 = vunpack.c.l.b16 %v5734
        %v6236 = vunpack.c.h.b16 %v5734
        %v6237 = vunpack.c.l.b16 %v5735
        %v6238 = vunpack.c.h.b16 %v5735
        %v6239 = vunpack.c.l.b16 %v5736
        %v6240 = vunpack.c.h.b16 %v5736
        %v6241 = vunpack.c.l.b16 %v5737
        %v6242 = vunpack.c.h.b16 %v5737
        %v6243 = vunpack.c.l.b16 %v5738
        %v6244 = vunpack.c.h.b16 %v5738
        %v6245 = vunpack.c.l.b16 %v5739
        %v6246 = vunpack.c.h.b16 %v5739
        %v6247 = vunpack.c.l.b16 %v5740
        %v6248 = vunpack.c.h.b16 %v5740
        %v6249 = vunpack.c.l.b16 %v5741
        %v6250 = vunpack.c.h.b16 %v5741
        %v6251 = vunpack.c.l.b16 %v5742
        %v6252 = vunpack.c.h.b16 %v5742
        %v6253 = vunpack.c.l.b16 %v5743
        %v6254 = vunpack.c.h.b16 %v5743
        %v6255 = vunpack.c.l.b16 %v5744
        %v6256 = vunpack.c.h.b16 %v5744
        %v6257 = vunpack.c.l.b16 %v5745
        %v6258 = vunpack.c.h.b16 %v5745
        %v6259 = vunpack.c.l.b16 %v5746
        %v6260 = vunpack.c.h.b16 %v5746
        %v6261 = vunpack.c.l.b16 %v5747
        %v6262 = vunpack.c.h.b16 %v5747
        %v6263 = vunpack.c.l.b16 %v5748
        %v6264 = vunpack.c.h.b16 %v5748
        %v6265 = vunpack.c.l.b16 %v5749
        %v6266 = vunpack.c.h.b16 %v5749
        %v6267 = vunpack.c.l.b16 %v5750
        %v6268 = vunpack.c.h.b16 %v5750
        %v6269 = vunpack.c.l.b16 %v5751
        %v6270 = vunpack.c.h.b16 %v5751
        %v6271 = vunpack.c.l.b16 %v5752
        %v6272 = vunpack.c.h.b16 %v5752
        %v6273 = vunpack.c.l.b16 %v5753
        %v6274 = vunpack.c.h.b16 %v5753
        %v6275 = vunpack.c.l.b16 %v5754
        %v6276 = vunpack.c.h.b16 %v5754
        %v6277 = vunpack.c.l.b16 %v5755
        %v6278 = vunpack.c.h.b16 %v5755
        %v6279 = vunpack.c.l.b16 %v5756
        %v6280 = vunpack.c.h.b16 %v5756
        %v6281 = vunpack.c.l.b16 %v5757
        %v6282 = vunpack.c.h.b16 %v5757
        %v6283 = vunpack.c.l.b16 %v5758
        %v6284 = vunpack.c.h.b16 %v5758
        %v6285 = vunpack.c.l.b16 %v5759
        %v6286 = vunpack.c.h.b16 %v5759
        %v6287 = vunpack.c.l.b16 %v5760
        %v6288 = vunpack.c.h.b16 %v5760
        %v6289 = vunpack.c.l.b16 %v5761
        %v6290 = vunpack.c.h.b16 %v5761
        %v6291 = vunpack.c.l.b16 %v5762
        %v6292 = vunpack.c.h.b16 %v5762
        %v6293 = vunpack.c.l.b16 %v5763
        %v6294 = vunpack.c.h.b16 %v5763
        %v6295 = vunpack.c.l.b16 %v5764
        %v6296 = vunpack.c.h.b16 %v5764
        %v6297 = vunpack.c.l.b16 %v5765
        %v6298 = vunpack.c.h.b16 %v5765
        %v6299 = vunpack.c.l.b16 %v5766
        %v6300 = vunpack.c.h.b16 %v5766
        %v6301 = vunpack.c.l.b16 %v5767
        %v6302 = vunpack.c.h.b16 %v5767
        %v6303 = vunpack.c.l.b16 %v5768
        %v6304 = vunpack.c.h.b16 %v5768
        %v6305 = vunpack.c.l.b16 %v5769
        %v6306 = vunpack.c.h.b16 %v5769
        %v6307 = vunpack.c.l.b16 %v5770
        %v6308 = vunpack.c.h.b16 %v5770
        %v6309 = vunpack.c.l.b16 %v5771
        %v6310 = vunpack.c.h.b16 %v5771
        %v6311 = vunpack.c.l.b16 %v5772
        %v6312 = vunpack.c.h.b16 %v5772
        %v6313 = vunpack.c.l.b16 %v5773
        %v6314 = vunpack.c.h.b16 %v5773
        %v6315 = vunpack.c.l.b16 %v5774
        %v6316 = vunpack.c.h.b16 %v5774
        %v6317 = vunpack.c.l.b16 %v5775
        %v6318 = vunpack.c.h.b16 %v5775
        %v6319 = vunpack.c.l.b16 %v5776
        %v6320 = vunpack.c.h.b16 %v5776
        %v6321 = vunpack.c.l.b16 %v5777
        %v6322 = vunpack.c.h.b16 %v5777
        %v6323 = vunpack.c.l.b16 %v5778
        %v6324 = vunpack.c.h.b16 %v5778
        %v6325 = vunpack.c.l.b16 %v5779
        %v6326 = vunpack.c.h.b16 %v5779
        %v6327 = vunpack.c.l.b16 %v5780
        %v6328 = vunpack.c.h.b16 %v5780
        %v6329 = vunpack.c.l.b16 %v5781
        %v6330 = vunpack.c.h.b16 %v5781
        %v6331 = vunpack.c.l.b16 %v5782
        %v6332 = vunpack.c.h.b16 %v5782
        %v6333 = vunpack.c.l.b16 %v5783
        %v6334 = vunpack.c.h.b16 %v5783
        %v6335 = vunpack.c.l.b16 %v5784
        %v6336 = vunpack.c.h.b16 %v5784
        %v6337 = vunpack.c.l.b16 %v5785
        %v6338 = vunpack.c.h.b16 %v5785
        %v6339 = vunpack.c.l.b16 %v5786
        %v6340 = vunpack.c.h.b16 %v5786
        %v6341 = vunpack.c.l.b16 %v5787
        %v6342 = vunpack.c.h.b16 %v5787
        %v6343 = vunpack.c.l.b16 %v5788
        %v6344 = vunpack.c.h.b16 %v5788
        %v6345 = vunpack.c.l.b16 %v5789
        %v6346 = vunpack.c.h.b16 %v5789
        %v6347 = vunpack.c.l.b16 %v5790
        %v6348 = vunpack.c.h.b16 %v5790
        %v6349 = vunpack.c.l.b16 %v5791
        %v6350 = vunpack.c.h.b16 %v5791
        %v6351 = vunpack.c.l.b16 %v5792
        %v6352 = vunpack.c.h.b16 %v5792
        %v6353 = vunpack.c.l.b16 %v5793
        %v6354 = vunpack.c.h.b16 %v5793
        %v6355 = vunpack.c.l.b16 %v5794
        %v6356 = vunpack.c.h.b16 %v5794
        %v6357 = vunpack.c.l.b16 %v5795
        %v6358 = vunpack.c.h.b16 %v5795
        %v6359 = vunpack.c.l.b16 %v5796
        %v6360 = vunpack.c.h.b16 %v5796
        %v6361 = vunpack.c.l.b16 %v5797
        %v6362 = vunpack.c.h.b16 %v5797
        %v6363 = vunpack.c.l.b16 %v5798
        %v6364 = vunpack.c.h.b16 %v5798
        %v6365 = vunpack.c.l.b16 %v5799
        %v6366 = vunpack.c.h.b16 %v5799
        %v6367 = vunpack.c.l.b16 %v5800
        %v6368 = vunpack.c.h.b16 %v5800
        %v6369 = vunpack.c.l.b16 %v5801
        %v6370 = vunpack.c.h.b16 %v5801
        %v6371 = vunpack.c.l.b16 %v5802
        %v6372 = vunpack.c.h.b16 %v5802
        %v6373 = vunpack.c.l.b16 %v5803
        %v6374 = vunpack.c.h.b16 %v5803
        %v6375 = vunpack.c.l.b16 %v5804
        %v6376 = vunpack.c.h.b16 %v5804
        %v6377 = vunpack.c.l.b16 %v5805
        %v6378 = vunpack.c.h.b16 %v5805
        %v6379 = vunpack.c.l.b16 %v5806
        %v6380 = vunpack.c.h.b16 %v5806
        %v6381 = vunpack.c.l.b16 %v5807
        %v6382 = vunpack.c.h.b16 %v5807
        %v6383 = vunpack.c.l.b16 %v5808
        %v6384 = vunpack.c.h.b16 %v5808
        %v6385 = vunpack.c.l.b16 %v5809
        %v6386 = vunpack.c.h.b16 %v5809
        %v6387 = vunpack.c.l.b16 %v5810
        %v6388 = vunpack.c.h.b16 %v5810
        %v6389 = vunpack.c.l.b16 %v5811
        %v6390 = vunpack.c.h.b16 %v5811
        %v6391 = vunpack.c.l.b16 %v5812
        %v6392 = vunpack.c.h.b16 %v5812
        %v6393 = vunpack.c.l.b16 %v5813
        %v6394 = vunpack.c.h.b16 %v5813
        %v6395 = vunpack.c.l.b16 %v5814
        %v6396 = vunpack.c.h.b16 %v5814
        %v6397 = vunpack.c.l.b16 %v5815
        %v6398 = vunpack.c.h.b16 %v5815
        %v6399 = vunpack.c.l.b16 %v5816
        %v6400 = vunpack.c.h.b16 %v5816
        %v6401 = vunpack.c.l.b16 %v5817
        %v6402 = vunpack.c.h.b16 %v5817
        %v6403 = vunpack.c.l.b16 %v5818
        %v6404 = vunpack.c.h.b16 %v5818
        %v6405 = vunpack.c.l.b16 %v5819
        %v6406 = vunpack.c.h.b16 %v5819
        %v6407 = vunpack.c.l.b16 %v5820
        %v6408 = vunpack.c.h.b16 %v5820
        %v6409 = vunpack.c.l.b16 %v5821
        %v6410 = vunpack.c.h.b16 %v5821
        %v6411 = vunpack.c.l.b16 %v5822
        %v6412 = vunpack.c.h.b16 %v5822
        %v6413 = vunpack.c.l.b16 %v5823
        %v6414 = vunpack.c.h.b16 %v5823
        %v6415 = vunpack.c.l.b16 %v5824
        %v6416 = vunpack.c.h.b16 %v5824
        %v6417 = vunpack.c.l.b16 %v5825
        %v6418 = vunpack.c.h.b16 %v5825
        %v6419 = vunpack.c.l.b16 %v5826
        %v6420 = vunpack.c.h.b16 %v5826
        %v6421 = vunpack.c.l.b16 %v5827
        %v6422 = vunpack.c.h.b16 %v5827
        %v6423 = vunpack.c.l.b16 %v5828
        %v6424 = vunpack.c.h.b16 %v5828
        %v6425 = vunpack.c.l.b16 %v5829
        %v6426 = vunpack.c.h.b16 %v5829
        %v6427 = vunpack.c.l.b16 %v5830
        %v6428 = vunpack.c.h.b16 %v5830
        %v6429 = vunpack.c.l.b16 %v5831
        %v6430 = vunpack.c.h.b16 %v5831
        %v6431 = vunpack.c.l.b16 %v5832
        %v6432 = vunpack.c.h.b16 %v5832
        %v6433 = vunpack.c.l.b16 %v5833
        %v6434 = vunpack.c.h.b16 %v5833
        %v6435 = vpack.c.b16 %v6105, %v6099
        %v6436 = vpack.c.b16 %v6106, %v6100
        %v6437 = vpack.c.b16 %v6107, %v6101
        %v6438 = vpack.c.b16 %v6108, %v6102
        %v6439 = vpack.c.b16 %v6109, %v6103
        %v6440 = vpack.c.b16 %v6110, %v6104
        %v6441 = vpack.c.b16 %v6117, %v6111
        %v6442 = vpack.c.b16 %v6118, %v6112
        %v6443 = vpack.c.b16 %v6119, %v6113
        %v6444 = vpack.c.b16 %v6120, %v6114
        %v6445 = vpack.c.b16 %v6121, %v6115
        %v6446 = vpack.c.b16 %v6122, %v6116
        %v6447 = vpack.c.b16 %v6129, %v6123
        %v6448 = vpack.c.b16 %v6130, %v6124
        %v6449 = vpack.c.b16 %v6131, %v6125
        %v6450 = vpack.c.b16 %v6132, %v6126
        %v6451 = vpack.c.b16 %v6133, %v6127
        %v6452 = vpack.c.b16 %v6134, %v6128
        %v6453 = vpack.c.b16 %v6141, %v6135
        %v6454 = vpack.c.b16 %v6142, %v6136
        %v6455 = vpack.c.b16 %v6143, %v6137
        %v6456 = vpack.c.b16 %v6144, %v6138
        %v6457 = vpack.c.b16 %v6145, %v6139
        %v6458 = vpack.c.b16 %v6146, %v6140
        %v6459 = vpack.c.b16 %v6153, %v6147
        %v6460 = vpack.c.b16 %v6154, %v6148
        %v6461 = vpack.c.b16 %v6155, %v6149
        %v6462 = vpack.c.b16 %v6156, %v6150
        %v6463 = vpack.c.b16 %v6157, %v6151
        %v6464 = vpack.c.b16 %v6158, %v6152
        %v6465 = vpack.c.b16 %v6165, %v6159
        %v6466 = vpack.c.b16 %v6166, %v6160
        %v6467 = vpack.c.b16 %v6167, %v6161
        %v6468 = vpack.c.b16 %v6168, %v6162
        %v6469 = vpack.c.b16 %v6169, %v6163
        %v6470 = vpack.c.b16 %v6170, %v6164
        %v6471 = vpack.c.b16 %v6177, %v6171
        %v6472 = vpack.c.b16 %v6178, %v6172
        %v6473 = vpack.c.b16 %v6179, %v6173
        %v6474 = vpack.c.b16 %v6180, %v6174
        %v6475 = vpack.c.b16 %v6181, %v6175
        %v6476 = vpack.c.b16 %v6182, %v6176
        %v6477 = vpack.c.b16 %v6189, %v6183
        %v6478 = vpack.c.b16 %v6190, %v6184
        %v6479 = vpack.c.b16 %v6191, %v6185
        %v6480 = vpack.c.b16 %v6192, %v6186
        %v6481 = vpack.c.b16 %v6193, %v6187
        %v6482 = vpack.c.b16 %v6194, %v6188
        %v6483 = vpack.c.b16 %v6201, %v6195
        %v6484 = vpack.c.b16 %v6202, %v6196
        %v6485 = vpack.c.b16 %v6203, %v6197
        %v6486 = vpack.c.b16 %v6204, %v6198
        %v6487 = vpack.c.b16 %v6205, %v6199
        %v6488 = vpack.c.b16 %v6206, %v6200
        %v6489 = vpack.c.b16 %v6213, %v6207
        %v6490 = vpack.c.b16 %v6214, %v6208
        %v6491 = vpack.c.b16 %v6215, %v6209
        %v6492 = vpack.c.b16 %v6216, %v6210
        %v6493 = vpack.c.b16 %v6217, %v6211
        %v6494 = vpack.c.b16 %v6218, %v6212
        %v6495 = vpack.c.b16 %v6225, %v6219
        %v6496 = vpack.c.b16 %v6226, %v6220
        %v6497 = vpack.c.b16 %v6227, %v6221
        %v6498 = vpack.c.b16 %v6228, %v6222
        %v6499 = vpack.c.b16 %v6229, %v6223
        %v6500 = vpack.c.b16 %v6230, %v6224
        %v6501 = vpack.c.b16 %v6237, %v6231
        %v6502 = vpack.c.b16 %v6238, %v6232
        %v6503 = vpack.c.b16 %v6239, %v6233
        %v6504 = vpack.c.b16 %v6240, %v6234
        %v6505 = vpack.c.b16 %v6241, %v6235
        %v6506 = vpack.c.b16 %v6242, %v6236
        %v6507 = vpack.c.b16 %v6249, %v6243
        %v6508 = vpack.c.b16 %v6250, %v6244
        %v6509 = vpack.c.b16 %v6251, %v6245
        %v6510 = vpack.c.b16 %v6252, %v6246
        %v6511 = vpack.c.b16 %v6253, %v6247
        %v6512 = vpack.c.b16 %v6254, %v6248
        %v6513 = vpack.c.b16 %v6261, %v6255
        %v6514 = vpack.c.b16 %v6262, %v6256
        %v6515 = vpack.c.b16 %v6263, %v6257
        %v6516 = vpack.c.b16 %v6264, %v6258
        %v6517 = vpack.c.b16 %v6265, %v6259
        %v6518 = vpack.c.b16 %v6266, %v6260
        %v6519 = vpack.c.b16 %v6273, %v6267
        %v6520 = vpack.c.b16 %v6274, %v6268
        %v6521 = vpack.c.b16 %v6275, %v6269
        %v6522 = vpack.c.b16 %v6276, %v6270
        %v6523 = vpack.c.b16 %v6277, %v6271
        %v6524 = vpack.c.b16 %v6278, %v6272
        %v6525 = vpack.c.b16 %v6285, %v6279
        %v6526 = vpack.c.b16 %v6286, %v6280
        %v6527 = vpack.c.b16 %v6287, %v6281
        %v6528 = vpack.c.b16 %v6288, %v6282
        %v6529 = vpack.c.b16 %v6289, %v6283
        %v6530 = vpack.c.b16 %v6290, %v6284
        %v6531 = vpack.c.b16 %v6297, %v6291
        %v6532 = vpack.c.b16 %v6298, %v6292
        %v6533 = vpack.c.b16 %v6299, %v6293
        %v6534 = vpack.c.b16 %v6300, %v6294
        %v6535 = vpack.c.b16 %v6301, %v6295
        %v6536 = vpack.c.b16 %v6302, %v6296
        %v6537 = vpack.c.b16 %v6309, %v6303
        %v6538 = vpack.c.b16 %v6310, %v6304
        %v6539 = vpack.c.b16 %v6311, %v6305
        %v6540 = vpack.c.b16 %v6312, %v6306
        %v6541 = vpack.c.b16 %v6313, %v6307
        %v6542 = vpack.c.b16 %v6314, %v6308
        %v6543 = vpack.c.b16 %v6321, %v6315
        %v6544 = vpack.c.b16 %v6322, %v6316
        %v6545 = vpack.c.b16 %v6323, %v6317
        %v6546 = vpack.c.b16 %v6324, %v6318
        %v6547 = vpack.c.b16 %v6325, %v6319
        %v6548 = vpack.c.b16 %v6326, %v6320
        %v6549 = vpack.c.b16 %v6333, %v6327
        %v6550 = vpack.c.b16 %v6334, %v6328
        %v6551 = vpack.c.b16 %v6335, %v6329
        %v6552 = vpack.c.b16 %v6336, %v6330
        %v6553 = vpack.c.b16 %v6337, %v6331
        %v6554 = vpack.c.b16 %v6338, %v6332
        %v6555 = vpack.c.b16 %v6345, %v6339
        %v6556 = vpack.c.b16 %v6346, %v6340
        %v6557 = vpack.c.b16 %v6347, %v6341
        %v6558 = vpack.c.b16 %v6348, %v6342
        %v6559 = vpack.c.b16 %v6349, %v6343
        %v6560 = vpack.c.b16 %v6350, %v6344
        %v6561 = vpack.c.b16 %v6357, %v6351
        %v6562 = vpack.c.b16 %v6358, %v6352
        %v6563 = vpack.c.b16 %v6359, %v6353
        %v6564 = vpack.c.b16 %v6360, %v6354
        %v6565 = vpack.c.b16 %v6361, %v6355
        %v6566 = vpack.c.b16 %v6362, %v6356
        %v6567 = vpack.c.b16 %v6369, %v6363
        %v6568 = vpack.c.b16 %v6370, %v6364
        %v6569 = vpack.c.b16 %v6371, %v6365
        %v6570 = vpack.c.b16 %v6372, %v6366
        %v6571 = vpack.c.b16 %v6373, %v6367
        %v6572 = vpack.c.b16 %v6374, %v6368
        %v6573 = vpack.c.b16 %v6381, %v6375
        %v6574 = vpack.c.b16 %v6382, %v6376
        %v6575 = vpack.c.b16 %v6383, %v6377
        %v6576 = vpack.c.b16 %v6384, %v6378
        %v6577 = vpack.c.b16 %v6385, %v6379
        %v6578 = vpack.c.b16 %v6386, %v6380
        %v6579 = vpack.c.b16 %v6393, %v6387
        %v6580 = vpack.c.b16 %v6394, %v6388
        %v6581 = vpack.c.b16 %v6395, %v6389
        %v6582 = vpack.c.b16 %v6396, %v6390
        %v6583 = vpack.c.b16 %v6397, %v6391
        %v6584 = vpack.c.b16 %v6398, %v6392
        %v6585 = vpack.c.b16 %v6405, %v6399
        %v6586 = vpack.c.b16 %v6406, %v6400
        %v6587 = vpack.c.b16 %v6407, %v6401
        %v6588 = vpack.c.b16 %v6408, %v6402
        %v6589 = vpack.c.b16 %v6409, %v6403
        %v6590 = vpack.c.b16 %v6410, %v6404
        %v6591 = vpack.c.b16 %v6417, %v6411
        %v6592 = vpack.c.b16 %v6418, %v6412
        %v6593 = vpack.c.b16 %v6419, %v6413
        %v6594 = vpack.c.b16 %v6420, %v6414
        %v6595 = vpack.c.b16 %v6421, %v6415
        %v6596 = vpack.c.b16 %v6422, %v6416
        %v6597 = vpack.c.b16 %v6429, %v6423
        %v6598 = vpack.c.b16 %v6430, %v6424
        %v6599 = vpack.c.b16 %v6431, %v6425
        %v6600 = vpack.c.b16 %v6432, %v6426
        %v6601 = vpack.c.b16 %v6433, %v6427
        %v6602 = vpack.c.b16 %v6434, %v6428
        %v6867 = vunpack.c.l.b16 %v5835
        %v6868 = vunpack.c.h.b16 %v5835
        %v6869 = vunpack.c.l.b16 %v5836
        %v6870 = vunpack.c.h.b16 %v5836
        %v6871 = vunpack.c.l.b16 %v5837
        %v6872 = vunpack.c.h.b16 %v5837
        %v6873 = vunpack.c.l.b16 %v5838
        %v6874 = vunpack.c.h.b16 %v5838
        %v6875 = vunpack.c.l.b16 %v5839
        %v6876 = vunpack.c.h.b16 %v5839
        %v6877 = vunpack.c.l.b16 %v5840
        %v6878 = vunpack.c.h.b16 %v5840
        %v6879 = vunpack.c.l.b16 %v5841
        %v6880 = vunpack.c.h.b16 %v5841
        %v6881 = vunpack.c.l.b16 %v5842
        %v6882 = vunpack.c.h.b16 %v5842
        %v6883 = vunpack.c.l.b16 %v5843
        %v6884 = vunpack.c.h.b16 %v5843
        %v6885 = vunpack.c.l.b16 %v5844
        %v6886 = vunpack.c.h.b16 %v5844
        %v6887 = vunpack.c.l.b16 %v5845
        %v6888 = vunpack.c.h.b16 %v5845
        %v6889 = vunpack.c.l.b16 %v5846
        %v6890 = vunpack.c.h.b16 %v5846
        %v6891 = vunpack.c.l.b16 %v5847
        %v6892 = vunpack.c.h.b16 %v5847
        %v6893 = vunpack.c.l.b16 %v5848
        %v6894 = vunpack.c.h.b16 %v5848
        %v6895 = vunpack.c.l.b16 %v5849
        %v6896 = vunpack.c.h.b16 %v5849
        %v6897 = vunpack.c.l.b16 %v5850
        %v6898 = vunpack.c.h.b16 %v5850
        %v6899 = vunpack.c.l.b16 %v5851
        %v6900 = vunpack.c.h.b16 %v5851
        %v6901 = vunpack.c.l.b16 %v5852
        %v6902 = vunpack.c.h.b16 %v5852
        %v6903 = vunpack.c.l.b16 %v5853
        %v6904 = vunpack.c.h.b16 %v5853
        %v6905 = vunpack.c.l.b16 %v5854
        %v6906 = vunpack.c.h.b16 %v5854
        %v6907 = vunpack.c.l.b16 %v5855
        %v6908 = vunpack.c.h.b16 %v5855
        %v6909 = vunpack.c.l.b16 %v5856
        %v6910 = vunpack.c.h.b16 %v5856
        %v6911 = vunpack.c.l.b16 %v5857
        %v6912 = vunpack.c.h.b16 %v5857
        %v6913 = vunpack.c.l.b16 %v5858
        %v6914 = vunpack.c.h.b16 %v5858
        %v6915 = vunpack.c.l.b16 %v5859
        %v6916 = vunpack.c.h.b16 %v5859
        %v6917 = vunpack.c.l.b16 %v5860
        %v6918 = vunpack.c.h.b16 %v5860
        %v6919 = vunpack.c.l.b16 %v5861
        %v6920 = vunpack.c.h.b16 %v5861
        %v6921 = vunpack.c.l.b16 %v5862
        %v6922 = vunpack.c.h.b16 %v5862
        %v6923 = vunpack.c.l.b16 %v5863
        %v6924 = vunpack.c.h.b16 %v5863
        %v6925 = vunpack.c.l.b16 %v5864
        %v6926 = vunpack.c.h.b16 %v5864
        %v6927 = vunpack.c.l.b16 %v5865
        %v6928 = vunpack.c.h.b16 %v5865
        %v6929 = vunpack.c.l.b16 %v5866
        %v6930 = vunpack.c.h.b16 %v5866
        %v6931 = vunpack.c.l.b16 %v5867
        %v6932 = vunpack.c.h.b16 %v5867
        %v6933 = vunpack.c.l.b16 %v5868
        %v6934 = vunpack.c.h.b16 %v5868
        %v6935 = vunpack.c.l.b16 %v5869
        %v6936 = vunpack.c.h.b16 %v5869
        %v6937 = vunpack.c.l.b16 %v5870
        %v6938 = vunpack.c.h.b16 %v5870
        %v6939 = vunpack.c.l.b16 %v5871
        %v6940 = vunpack.c.h.b16 %v5871
        %v6941 = vunpack.c.l.b16 %v5872
        %v6942 = vunpack.c.h.b16 %v5872
        %v6943 = vunpack.c.l.b16 %v5873
        %v6944 = vunpack.c.h.b16 %v5873
        %v6945 = vunpack.c.l.b16 %v5874
        %v6946 = vunpack.c.h.b16 %v5874
        %v6947 = vunpack.c.l.b16 %v5875
        %v6948 = vunpack.c.h.b16 %v5875
        %v6949 = vunpack.c.l.b16 %v5876
        %v6950 = vunpack.c.h.b16 %v5876
        %v6951 = vunpack.c.l.b16 %v5877
        %v6952 = vunpack.c.h.b16 %v5877
        %v6953 = vunpack.c.l.b16 %v5878
        %v6954 = vunpack.c.h.b16 %v5878
        %v6955 = vunpack.c.l.b16 %v5879
        %v6956 = vunpack.c.h.b16 %v5879
        %v6957 = vunpack.c.l.b16 %v5880
        %v6958 = vunpack.c.h.b16 %v5880
        %v6959 = vunpack.c.l.b16 %v5881
        %v6960 = vunpack.c.h.b16 %v5881
        %v6961 = vunpack.c.l.b16 %v5882
        %v6962 = vunpack.c.h.b16 %v5882
        %v6963 = vunpack.c.l.b16 %v5883
        %v6964 = vunpack.c.h.b16 %v5883
        %v6965 = vunpack.c.l.b16 %v5884
        %v6966 = vunpack.c.h.b16 %v5884
        %v6967 = vunpack.c.l.b16 %v5885
        %v6968 = vunpack.c.h.b16 %v5885
        %v6969 = vunpack.c.l.b16 %v5886
        %v6970 = vunpack.c.h.b16 %v5886
        %v6971 = vunpack.c.l.b16 %v5887
        %v6972 = vunpack.c.h.b16 %v5887
        %v6973 = vunpack.c.l.b16 %v5888
        %v6974 = vunpack.c.h.b16 %v5888
        %v6975 = vunpack.c.l.b16 %v5889
        %v6976 = vunpack.c.h.b16 %v5889
        %v6977 = vunpack.c.l.b16 %v5890
        %v6978 = vunpack.c.h.b16 %v5890
        %v6979 = vunpack.c.l.b16 %v5891
        %v6980 = vunpack.c.h.b16 %v5891
        %v6981 = vunpack.c.l.b16 %v5892
        %v6982 = vunpack.c.h.b16 %v5892
        %v6983 = vunpack.c.l.b16 %v5893
        %v6984 = vunpack.c.h.b16 %v5893
        %v6985 = vunpack.c.l.b16 %v5894
        %v6986 = vunpack.c.h.b16 %v5894
        %v6987 = vunpack.c.l.b16 %v5895
        %v6988 = vunpack.c.h.b16 %v5895
        %v6989 = vunpack.c.l.b16 %v5896
        %v6990 = vunpack.c.h.b16 %v5896
        %v6991 = vunpack.c.l.b16 %v5897
        %v6992 = vunpack.c.h.b16 %v5897
        %v6993 = vunpack.c.l.b16 %v5898
        %v6994 = vunpack.c.h.b16 %v5898
        %v6995 = vunpack.c.l.b16 %v5899
        %v6996 = vunpack.c.h.b16 %v5899
        %v6997 = vunpack.c.l.b16 %v5900
        %v6998 = vunpack.c.h.b16 %v5900
        %v6999 = vunpack.c.l.b16 %v5901
        %v7000 = vunpack.c.h.b16 %v5901
        %v7001 = vunpack.c.l.b16 %v5902
        %v7002 = vunpack.c.h.b16 %v5902
        %v7003 = vunpack.c.l.b16 %v5903
        %v7004 = vunpack.c.h.b16 %v5903
        %v7005 = vunpack.c.l.b16 %v5904
        %v7006 = vunpack.c.h.b16 %v5904
        %v7007 = vunpack.c.l.b16 %v5905
        %v7008 = vunpack.c.h.b16 %v5905
        %v7009 = vunpack.c.l.b16 %v5906
        %v7010 = vunpack.c.h.b16 %v5906
        %v7011 = vunpack.c.l.b16 %v5907
        %v7012 = vunpack.c.h.b16 %v5907
        %v7013 = vunpack.c.l.b16 %v5908
        %v7014 = vunpack.c.h.b16 %v5908
        %v7015 = vunpack.c.l.b16 %v5909
        %v7016 = vunpack.c.h.b16 %v5909
        %v7017 = vunpack.c.l.b16 %v5910
        %v7018 = vunpack.c.h.b16 %v5910
        %v7019 = vunpack.c.l.b16 %v5911
        %v7020 = vunpack.c.h.b16 %v5911
        %v7021 = vunpack.c.l.b16 %v5912
        %v7022 = vunpack.c.h.b16 %v5912
        %v7023 = vunpack.c.l.b16 %v5913
        %v7024 = vunpack.c.h.b16 %v5913
        %v7025 = vunpack.c.l.b16 %v5914
        %v7026 = vunpack.c.h.b16 %v5914
        %v7027 = vunpack.c.l.b16 %v5915
        %v7028 = vunpack.c.h.b16 %v5915
        %v7029 = vunpack.c.l.b16 %v5916
        %v7030 = vunpack.c.h.b16 %v5916
        %v7031 = vunpack.c.l.b16 %v5917
        %v7032 = vunpack.c.h.b16 %v5917
        %v7033 = vunpack.c.l.b16 %v5918
        %v7034 = vunpack.c.h.b16 %v5918
        %v7035 = vunpack.c.l.b16 %v5919
        %v7036 = vunpack.c.h.b16 %v5919
        %v7037 = vunpack.c.l.b16 %v5920
        %v7038 = vunpack.c.h.b16 %v5920
        %v7039 = vunpack.c.l.b16 %v5921
        %v7040 = vunpack.c.h.b16 %v5921
        %v7041 = vunpack.c.l.b16 %v5922
        %v7042 = vunpack.c.h.b16 %v5922
        %v7043 = vunpack.c.l.b16 %v5923
        %v7044 = vunpack.c.h.b16 %v5923
        %v7045 = vunpack.c.l.b16 %v5924
        %v7046 = vunpack.c.h.b16 %v5924
        %v7047 = vunpack.c.l.b16 %v5925
        %v7048 = vunpack.c.h.b16 %v5925
        %v7049 = vunpack.c.l.b16 %v5926
        %v7050 = vunpack.c.h.b16 %v5926
        %v7051 = vunpack.c.l.b16 %v5927
        %v7052 = vunpack.c.h.b16 %v5927
        %v7053 = vunpack.c.l.b16 %v5928
        %v7054 = vunpack.c.h.b16 %v5928
        %v7055 = vunpack.c.l.b16 %v5929
        %v7056 = vunpack.c.h.b16 %v5929
        %v7057 = vunpack.c.l.b16 %v5930
        %v7058 = vunpack.c.h.b16 %v5930
        %v7059 = vpack.c.b16 %v6869, %v6867
        %v7060 = vpack.c.b16 %v6870, %v6868
        %v7061 = vpack.c.b16 %v6873, %v6871
        %v7062 = vpack.c.b16 %v6874, %v6872
        %v7063 = vpack.c.b16 %v6877, %v6875
        %v7064 = vpack.c.b16 %v6878, %v6876
        %v7065 = vpack.c.b16 %v6881, %v6879
        %v7066 = vpack.c.b16 %v6882, %v6880
        %v7067 = vpack.c.b16 %v6885, %v6883
        %v7068 = vpack.c.b16 %v6886, %v6884
        %v7069 = vpack.c.b16 %v6889, %v6887
        %v7070 = vpack.c.b16 %v6890, %v6888
        %v7071 = vpack.c.b16 %v6893, %v6891
        %v7072 = vpack.c.b16 %v6894, %v6892
        %v7073 = vpack.c.b16 %v6897, %v6895
        %v7074 = vpack.c.b16 %v6898, %v6896
        %v7075 = vpack.c.b16 %v6901, %v6899
        %v7076 = vpack.c.b16 %v6902, %v6900
        %v7077 = vpack.c.b16 %v6905, %v6903
        %v7078 = vpack.c.b16 %v6906, %v6904
        %v7079 = vpack.c.b16 %v6909, %v6907
        %v7080 = vpack.c.b16 %v6910, %v6908
        %v7081 = vpack.c.b16 %v6913, %v6911
        %v7082 = vpack.c.b16 %v6914, %v6912
        %v7083 = vpack.c.b16 %v6917, %v6915
        %v7084 = vpack.c.b16 %v6918, %v6916
        %v7085 = vpack.c.b16 %v6921, %v6919
        %v7086 = vpack.c.b16 %v6922, %v6920
        %v7087 = vpack.c.b16 %v6925, %v6923
        %v7088 = vpack.c.b16 %v6926, %v6924
        %v7089 = vpack.c.b16 %v6929, %v6927
        %v7090 = vpack.c.b16 %v6930, %v6928
        %v7091 = vpack.c.b16 %v6933, %v6931
        %v7092 = vpack.c.b16 %v6934, %v6932
        %v7093 = vpack.c.b16 %v6937, %v6935
        %v7094 = vpack.c.b16 %v6938, %v6936
        %v7095 = vpack.c.b16 %v6941, %v6939
        %v7096 = vpack.c.b16 %v6942, %v6940
        %v7097 = vpack.c.b16 %v6945, %v6943
        %v7098 = vpack.c.b16 %v6946, %v6944
        %v7099 = vpack.c.b16 %v6949, %v6947
        %v7100 = vpack.c.b16 %v6950, %v6948
        %v7101 = vpack.c.b16 %v6953, %v6951
        %v7102 = vpack.c.b16 %v6954, %v6952
        %v7103 = vpack.c.b16 %v6957, %v6955
        %v7104 = vpack.c.b16 %v6958, %v6956
        %v7105 = vpack.c.b16 %v6961, %v6959
        %v7106 = vpack.c.b16 %v6962, %v6960
        %v7107 = vpack.c.b16 %v6965, %v6963
        %v7108 = vpack.c.b16 %v6966, %v6964
        %v7109 = vpack.c.b16 %v6969, %v6967
        %v7110 = vpack.c.b16 %v6970, %v6968
        %v7111 = vpack.c.b16 %v6973, %v6971
        %v7112 = vpack.c.b16 %v6974, %v6972
        %v7113 = vpack.c.b16 %v6977, %v6975
        %v7114 = vpack.c.b16 %v6978, %v6976
        %v7115 = vpack.c.b16 %v6981, %v6979
        %v7116 = vpack.c.b16 %v6982, %v6980
        %v7117 = vpack.c.b16 %v6985, %v6983
        %v7118 = vpack.c.b16 %v6986, %v6984
        %v7119 = vpack.c.b16 %v6989, %v6987
        %v7120 = vpack.c.b16 %v6990, %v6988
        %v7121 = vpack.c.b16 %v6993, %v6991
        %v7122 = vpack.c.b16 %v6994, %v6992
        %v7123 = vpack.c.b16 %v6997, %v6995
        %v7124 = vpack.c.b16 %v6998, %v6996
        %v7125 = vpack.c.b16 %v7001, %v6999
        %v7126 = vpack.c.b16 %v7002, %v7000
        %v7127 = vpack.c.b16 %v7005, %v7003
        %v7128 = vpack.c.b16 %v7006, %v7004
        %v7129 = vpack.c.b16 %v7009, %v7007
        %v7130 = vpack.c.b16 %v7010, %v7008
        %v7131 = vpack.c.b16 %v7013, %v7011
        %v7132 = vpack.c.b16 %v7014, %v7012
        %v7133 = vpack.c.b16 %v7017, %v7015
        %v7134 = vpack.c.b16 %v7018, %v7016
        %v7135 = vpack.c.b16 %v7021, %v7019
        %v7136 = vpack.c.b16 %v7022, %v7020
        %v7137 = vpack.c.b16 %v7025, %v7023
        %v7138 = vpack.c.b16 %v7026, %v7024
        %v7139 = vpack.c.b16 %v7029, %v7027
        %v7140 = vpack.c.b16 %v7030, %v7028
        %v7141 = vpack.c.b16 %v7033, %v7031
        %v7142 = vpack.c.b16 %v7034, %v7032
        %v7143 = vpack.c.b16 %v7037, %v7035
        %v7144 = vpack.c.b16 %v7038, %v7036
        %v7145 = vpack.c.b16 %v7041, %v7039
        %v7146 = vpack.c.b16 %v7042, %v7040
        %v7147 = vpack.c.b16 %v7045, %v7043
        %v7148 = vpack.c.b16 %v7046, %v7044
        %v7149 = vpack.c.b16 %v7049, %v7047
        %v7150 = vpack.c.b16 %v7050, %v7048
        %v7151 = vpack.c.b16 %v7053, %v7051
        %v7152 = vpack.c.b16 %v7054, %v7052
        %v7153 = vpack.c.b16 %v7057, %v7055
        %v7154 = vpack.c.b16 %v7058, %v7056
        %7251 = vmatprep.subr.bf16.mxu0 %v7060
        %7252 = vmatpush1.bf16.msra.mxu0 %v7059
        %7253 = vmatprep.subr.bf16.mxu0 %v7062
        %7254 = vmatpush1.bf16.msra.mxu0 %v7061
        %7255 = vmatprep.subr.bf16.mxu0 %v7064
        %7256 = vmatpush1.bf16.msra.mxu0 %v7063
        %7257 = vmatprep.subr.bf16.mxu0 %v7066
        %7258 = vmatpush1.bf16.msra.mxu0 %v7065
        %7259 = vmatprep.subr.bf16.mxu0 %v7068
        %7260 = vmatpush1.bf16.msra.mxu0 %v7067
        %7261 = vmatprep.subr.bf16.mxu0 %v7070
        %7262 = vmatpush1.bf16.msra.mxu0 %v7069
        %7263 = vmatprep.subr.bf16.mxu0 %v7072
        %7264 = vmatpush1.bf16.msra.mxu0 %v7071
        %7265 = vmatprep.subr.bf16.mxu0 %v7074
        %7266 = vmatpush1.bf16.msra.mxu0 %v7073
        %7267 = vmatprep.subr.bf16.mxu0 %v7076
        %7268 = vmatpush1.bf16.msra.mxu0 %v7075
        %7269 = vmatprep.subr.bf16.mxu0 %v7078
        %7270 = vmatpush1.bf16.msra.mxu0 %v7077
        %7271 = vmatprep.subr.bf16.mxu0 %v7080
        %7272 = vmatpush1.bf16.msra.mxu0 %v7079
        %7273 = vmatprep.subr.bf16.mxu0 %v7082
        %7274 = vmatpush1.bf16.msra.mxu0 %v7081
        %7275 = vmatprep.subr.bf16.mxu0 %v7084
        %7276 = vmatpush1.bf16.msra.mxu0 %v7083
        %7277 = vmatprep.subr.bf16.mxu0 %v7086
        %7278 = vmatpush1.bf16.msra.mxu0 %v7085
        %7279 = vmatprep.subr.bf16.mxu0 %v7088
        %7280 = vmatpush1.bf16.msra.mxu0 %v7087
        %7281 = vmatprep.subr.bf16.mxu0 %v7090
        %7282 = vmatpush1.bf16.msra.mxu0 %v7089
        %7283 = vmatprep.mubr.bf16.mxu0 %v6436
        %7284 = vmatmul.mubr.bf16.gmra.mrb[0].mxu0 %v6435
        %v7285 = vpop.f32.mrb[0].mxu0
        %v7286 = vadd.f32 0.0, %v7285
        %v7287 = vpop.f32.mrb[0].mxu0
        %v7288 = vadd.f32 0.0, %v7287
        %v7289 = vpop.f32.mrb[0].mxu0
        %v7290 = vadd.f32 0.0, %v7289
        %v7291 = vpop.f32.mrb[0].mxu0
        %v7292 = vadd.f32 0.0, %v7291
        %7293 = vmatprep.mubr.bf16.mxu0 %v6442
        %7294 = vmatmul.mubr.bf16.gmra.mrb[0].mxu0 %v6441
        %v7295 = vpop.f32.mrb[0].mxu0
        %v7296 = vadd.f32 0.0, %v7295
        %v7297 = vpop.f32.mrb[0].mxu0
        %v7298 = vadd.f32 0.0, %v7297
        %v7299 = vpop.f32.mrb[0].mxu0
        %v7300 = vadd.f32 0.0, %v7299
        %v7301 = vpop.f32.mrb[0].mxu0
        %v7302 = vadd.f32 0.0, %v7301
        %7303 = vmatprep.mubr.bf16.mxu0 %v6448
        %7304 = vmatmul.mubr.bf16.gmra.mrb[0].mxu0 %v6447
        %v7305 = vpop.f32.mrb[0].mxu0
        %v7306 = vadd.f32 0.0, %v7305
        %v7307 = vpop.f32.mrb[0].mxu0
        %v7308 = vadd.f32 0.0, %v7307
        %v7309 = vpop.f32.mrb[0].mxu0
        %v7310 = vadd.f32 0.0, %v7309
        %v7311 = vpop.f32.mrb[0].mxu0
        %v7312 = vadd.f32 0.0, %v7311
        %7313 = vmatprep.mubr.bf16.mxu0 %v6454
        %7314 = vmatmul.mubr.bf16.gmra.mrb[0].mxu0 %v6453
        %v7315 = vpop.f32.mrb[0].mxu0
        %v7316 = vadd.f32 0.0, %v7315
        %v7317 = vpop.f32.mrb[0].mxu0
        %v7318 = vadd.f32 0.0, %v7317
        %v7319 = vpop.f32.mrb[0].mxu0
        %v7320 = vadd.f32 0.0, %v7319
        %v7321 = vpop.f32.mrb[0].mxu0
        %v7322 = vadd.f32 0.0, %v7321
        %7323 = vmatprep.mubr.bf16.mxu0 %v6460
        %7324 = vmatmul.mubr.bf16.gmra.mrb[0].mxu0 %v6459
        %v7325 = vpop.f32.mrb[0].mxu0
        %v7326 = vadd.f32 0.0, %v7325
        %v7327 = vpop.f32.mrb[0].mxu0
        %v7328 = vadd.f32 0.0, %v7327
        %v7329 = vpop.f32.mrb[0].mxu0
        %v7330 = vadd.f32 0.0, %v7329
        %v7331 = vpop.f32.mrb[0].mxu0
        %v7332 = vadd.f32 0.0, %v7331
        %7333 = vmatprep.mubr.bf16.mxu0 %v6466
        %7334 = vmatmul.mubr.bf16.gmra.mrb[0].mxu0 %v6465
        %v7335 = vpop.f32.mrb[0].mxu0
        %v7336 = vadd.f32 0.0, %v7335
        %v7337 = vpop.f32.mrb[0].mxu0
        %v7338 = vadd.f32 0.0, %v7337
        %v7339 = vpop.f32.mrb[0].mxu0
        %v7340 = vadd.f32 0.0, %v7339
        %v7341 = vpop.f32.mrb[0].mxu0
        %v7342 = vadd.f32 0.0, %v7341
        %7343 = vmatprep.mubr.bf16.mxu0 %v6472
        %7344 = vmatmul.mubr.bf16.gmra.mrb[0].mxu0 %v6471
        %v7345 = vpop.f32.mrb[0].mxu0
        %v7346 = vadd.f32 0.0, %v7345
        %v7347 = vpop.f32.mrb[0].mxu0
        %v7348 = vadd.f32 0.0, %v7347
        %v7349 = vpop.f32.mrb[0].mxu0
        %v7350 = vadd.f32 0.0, %v7349
        %v7351 = vpop.f32.mrb[0].mxu0
        %v7352 = vadd.f32 0.0, %v7351
        %7353 = vmatprep.mubr.bf16.mxu0 %v6478
        %7354 = vmatmul.mubr.bf16.gmra.mrb[0].mxu0 %v6477
        %v7355 = vpop.f32.mrb[0].mxu0
        %v7356 = vadd.f32 0.0, %v7355
        %v7357 = vpop.f32.mrb[0].mxu0
        %v7358 = vadd.f32 0.0, %v7357
        %v7359 = vpop.f32.mrb[0].mxu0
        %v7360 = vadd.f32 0.0, %v7359
        %v7361 = vpop.f32.mrb[0].mxu0
        %v7362 = vadd.f32 0.0, %v7361
        %7363 = vmatprep.mubr.bf16.mxu0 %v6484
        %7364 = vmatmul.mubr.bf16.gmra.mrb[0].mxu0 %v6483
        %v7365 = vpop.f32.mrb[0].mxu0
        %v7366 = vadd.f32 0.0, %v7365
        %v7367 = vpop.f32.mrb[0].mxu0
        %v7368 = vadd.f32 0.0, %v7367
        %v7369 = vpop.f32.mrb[0].mxu0
        %v7370 = vadd.f32 0.0, %v7369
        %v7371 = vpop.f32.mrb[0].mxu0
        %v7372 = vadd.f32 0.0, %v7371
        %7373 = vmatprep.mubr.bf16.mxu0 %v6490
        %7374 = vmatmul.mubr.bf16.gmra.mrb[0].mxu0 %v6489
        %v7375 = vpop.f32.mrb[0].mxu0
        %v7376 = vadd.f32 0.0, %v7375
        %v7377 = vpop.f32.mrb[0].mxu0
        %v7378 = vadd.f32 0.0, %v7377
        %v7379 = vpop.f32.mrb[0].mxu0
        %v7380 = vadd.f32 0.0, %v7379
        %v7381 = vpop.f32.mrb[0].mxu0
        %v7382 = vadd.f32 0.0, %v7381
        %7383 = vmatprep.mubr.bf16.mxu0 %v6496
        %7384 = vmatmul.mubr.bf16.gmra.mrb[0].mxu0 %v6495
        %v7385 = vpop.f32.mrb[0].mxu0
        %v7386 = vadd.f32 0.0, %v7385
        %v7387 = vpop.f32.mrb[0].mxu0
        %v7388 = vadd.f32 0.0, %v7387
        %v7389 = vpop.f32.mrb[0].mxu0
        %v7390 = vadd.f32 0.0, %v7389
        %v7391 = vpop.f32.mrb[0].mxu0
        %v7392 = vadd.f32 0.0, %v7391
        %7393 = vmatprep.mubr.bf16.mxu0 %v6502
        %7394 = vmatmul.mubr.bf16.gmra.mrb[0].mxu0 %v6501
        %v7395 = vpop.f32.mrb[0].mxu0
        %v7396 = vadd.f32 0.0, %v7395
        %v7397 = vpop.f32.mrb[0].mxu0
        %v7398 = vadd.f32 0.0, %v7397
        %v7399 = vpop.f32.mrb[0].mxu0
        %v7400 = vadd.f32 0.0, %v7399
        %v7401 = vpop.f32.mrb[0].mxu0
        %v7402 = vadd.f32 0.0, %v7401
        %7403 = vmatprep.mubr.bf16.mxu0 %v6508
        %7404 = vmatmul.mubr.bf16.gmra.mrb[0].mxu0 %v6507
        %v7405 = vpop.f32.mrb[0].mxu0
        %v7406 = vadd.f32 0.0, %v7405
        %v7407 = vpop.f32.mrb[0].mxu0
        %v7408 = vadd.f32 0.0, %v7407
        %v7409 = vpop.f32.mrb[0].mxu0
        %v7410 = vadd.f32 0.0, %v7409
        %v7411 = vpop.f32.mrb[0].mxu0
        %v7412 = vadd.f32 0.0, %v7411
        %7413 = vmatprep.mubr.bf16.mxu0 %v6514
        %7414 = vmatmul.mubr.bf16.gmra.mrb[0].mxu0 %v6513
        %v7415 = vpop.f32.mrb[0].mxu0
        %v7416 = vadd.f32 0.0, %v7415
        %v7417 = vpop.f32.mrb[0].mxu0
        %v7418 = vadd.f32 0.0, %v7417
        %v7419 = vpop.f32.mrb[0].mxu0
        %v7420 = vadd.f32 0.0, %v7419
        %v7421 = vpop.f32.mrb[0].mxu0
        %v7422 = vadd.f32 0.0, %v7421
        %7423 = vmatprep.mubr.bf16.mxu0 %v6520
        %7424 = vmatmul.mubr.bf16.gmra.mrb[0].mxu0 %v6519
        %v7425 = vpop.f32.mrb[0].mxu0
        %v7426 = vadd.f32 0.0, %v7425
        %v7427 = vpop.f32.mrb[0].mxu0
        %v7428 = vadd.f32 0.0, %v7427
        %v7429 = vpop.f32.mrb[0].mxu0
        %v7430 = vadd.f32 0.0, %v7429
        %v7431 = vpop.f32.mrb[0].mxu0
        %v7432 = vadd.f32 0.0, %v7431
        %7433 = vmatprep.mubr.bf16.mxu0 %v6526
        %7434 = vmatmul.mubr.bf16.gmra.mrb[0].mxu0 %v6525
        %v7435 = vpop.f32.mrb[0].mxu0
        %v7436 = vadd.f32 0.0, %v7435
        %v7437 = vpop.f32.mrb[0].mxu0
        %v7438 = vadd.f32 0.0, %v7437
        %v7439 = vpop.f32.mrb[0].mxu0
        %v7440 = vadd.f32 0.0, %v7439
        %v7441 = vpop.f32.mrb[0].mxu0
        %v7442 = vadd.f32 0.0, %v7441
        %7443 = vmatprep.mubr.bf16.mxu0 %v6532
        %7444 = vmatmul.mubr.bf16.gmra.mrb[0].mxu0 %v6531
        %v7445 = vpop.f32.mrb[0].mxu0
        %v7446 = vadd.f32 0.0, %v7445
        %v7447 = vpop.f32.mrb[0].mxu0
        %v7448 = vadd.f32 0.0, %v7447
        %v7449 = vpop.f32.mrb[0].mxu0
        %v7450 = vadd.f32 0.0, %v7449
        %v7451 = vpop.f32.mrb[0].mxu0
        %v7452 = vadd.f32 0.0, %v7451
        %7453 = vmatprep.mubr.bf16.mxu0 %v6538
        %7454 = vmatmul.mubr.bf16.gmra.mrb[0].mxu0 %v6537
        %v7455 = vpop.f32.mrb[0].mxu0
        %v7456 = vadd.f32 0.0, %v7455
        %v7457 = vpop.f32.mrb[0].mxu0
        %v7458 = vadd.f32 0.0, %v7457
        %v7459 = vpop.f32.mrb[0].mxu0
        %v7460 = vadd.f32 0.0, %v7459
        %v7461 = vpop.f32.mrb[0].mxu0
        %v7462 = vadd.f32 0.0, %v7461
        %7463 = vmatprep.mubr.bf16.mxu0 %v6544
        %7464 = vmatmul.mubr.bf16.gmra.mrb[0].mxu0 %v6543
        %v7465 = vpop.f32.mrb[0].mxu0
        %v7466 = vadd.f32 0.0, %v7465
        %v7467 = vpop.f32.mrb[0].mxu0
        %v7468 = vadd.f32 0.0, %v7467
        %v7469 = vpop.f32.mrb[0].mxu0
        %v7470 = vadd.f32 0.0, %v7469
        %v7471 = vpop.f32.mrb[0].mxu0
        %v7472 = vadd.f32 0.0, %v7471
        %7473 = vmatprep.mubr.bf16.mxu0 %v6550
        %7474 = vmatmul.mubr.bf16.gmra.mrb[0].mxu0 %v6549
        %v7475 = vpop.f32.mrb[0].mxu0
        %v7476 = vadd.f32 0.0, %v7475
        %v7477 = vpop.f32.mrb[0].mxu0
        %v7478 = vadd.f32 0.0, %v7477
        %v7479 = vpop.f32.mrb[0].mxu0
        %v7480 = vadd.f32 0.0, %v7479
        %v7481 = vpop.f32.mrb[0].mxu0
        %v7482 = vadd.f32 0.0, %v7481
        %7483 = vmatprep.mubr.bf16.mxu0 %v6556
        %7484 = vmatmul.mubr.bf16.gmra.mrb[0].mxu0 %v6555
        %v7485 = vpop.f32.mrb[0].mxu0
        %v7486 = vadd.f32 0.0, %v7485
        %v7487 = vpop.f32.mrb[0].mxu0
        %v7488 = vadd.f32 0.0, %v7487
        %v7489 = vpop.f32.mrb[0].mxu0
        %v7490 = vadd.f32 0.0, %v7489
        %v7491 = vpop.f32.mrb[0].mxu0
        %v7492 = vadd.f32 0.0, %v7491
        %7493 = vmatprep.mubr.bf16.mxu0 %v6562
        %7494 = vmatmul.mubr.bf16.gmra.mrb[0].mxu0 %v6561
        %v7495 = vpop.f32.mrb[0].mxu0
        %v7496 = vadd.f32 0.0, %v7495
        %v7497 = vpop.f32.mrb[0].mxu0
        %v7498 = vadd.f32 0.0, %v7497
        %v7499 = vpop.f32.mrb[0].mxu0
        %v7500 = vadd.f32 0.0, %v7499
        %v7501 = vpop.f32.mrb[0].mxu0
        %v7502 = vadd.f32 0.0, %v7501
        %7503 = vmatprep.mubr.bf16.mxu0 %v6568
        %7504 = vmatmul.mubr.bf16.gmra.mrb[0].mxu0 %v6567
        %v7505 = vpop.f32.mrb[0].mxu0
        %v7506 = vadd.f32 0.0, %v7505
        %v7507 = vpop.f32.mrb[0].mxu0
        %v7508 = vadd.f32 0.0, %v7507
        %v7509 = vpop.f32.mrb[0].mxu0
        %v7510 = vadd.f32 0.0, %v7509
        %v7511 = vpop.f32.mrb[0].mxu0
        %v7512 = vadd.f32 0.0, %v7511
        %7513 = vmatprep.mubr.bf16.mxu0 %v6574
        %7514 = vmatmul.mubr.bf16.gmra.mrb[0].mxu0 %v6573
        %v7515 = vpop.f32.mrb[0].mxu0
        %v7516 = vadd.f32 0.0, %v7515
        %v7517 = vpop.f32.mrb[0].mxu0
        %v7518 = vadd.f32 0.0, %v7517
        %v7519 = vpop.f32.mrb[0].mxu0
        %v7520 = vadd.f32 0.0, %v7519
        %v7521 = vpop.f32.mrb[0].mxu0
        %v7522 = vadd.f32 0.0, %v7521
        %7523 = vmatprep.mubr.bf16.mxu0 %v6580
        %7524 = vmatmul.mubr.bf16.gmra.mrb[0].mxu0 %v6579
        %v7525 = vpop.f32.mrb[0].mxu0
        %v7526 = vadd.f32 0.0, %v7525
        %v7527 = vpop.f32.mrb[0].mxu0
        %v7528 = vadd.f32 0.0, %v7527
        %v7529 = vpop.f32.mrb[0].mxu0
        %v7530 = vadd.f32 0.0, %v7529
        %v7531 = vpop.f32.mrb[0].mxu0
        %v7532 = vadd.f32 0.0, %v7531
        %7533 = vmatprep.mubr.bf16.mxu0 %v6586
        %7534 = vmatmul.mubr.bf16.gmra.mrb[0].mxu0 %v6585
        %v7535 = vpop.f32.mrb[0].mxu0
        %v7536 = vadd.f32 0.0, %v7535
        %v7537 = vpop.f32.mrb[0].mxu0
        %v7538 = vadd.f32 0.0, %v7537
        %v7539 = vpop.f32.mrb[0].mxu0
        %v7540 = vadd.f32 0.0, %v7539
        %v7541 = vpop.f32.mrb[0].mxu0
        %v7542 = vadd.f32 0.0, %v7541
        %7543 = vmatprep.mubr.bf16.mxu0 %v6592
        %7544 = vmatmul.mubr.bf16.gmra.mrb[0].mxu0 %v6591
        %v7545 = vpop.f32.mrb[0].mxu0
        %v7546 = vadd.f32 0.0, %v7545
        %v7547 = vpop.f32.mrb[0].mxu0
        %v7548 = vadd.f32 0.0, %v7547
        %v7549 = vpop.f32.mrb[0].mxu0
        %v7550 = vadd.f32 0.0, %v7549
        %v7551 = vpop.f32.mrb[0].mxu0
        %v7552 = vadd.f32 0.0, %v7551
        %7553 = vmatprep.mubr.bf16.mxu0 %v6598
        %7554 = vmatmul.mubr.bf16.gmra.mrb[0].mxu0 %v6597
        %v7555 = vpop.f32.mrb[0].mxu0
        %v7556 = vadd.f32 0.0, %v7555
        %v7557 = vpop.f32.mrb[0].mxu0
        %v7558 = vadd.f32 0.0, %v7557
        %v7559 = vpop.f32.mrb[0].mxu0
        %v7560 = vadd.f32 0.0, %v7559
        %v7561 = vpop.f32.mrb[0].mxu0
        %v7562 = vadd.f32 0.0, %v7561
        %7563 = vdwg.mxu0
        %7564 = vmatprep.subr.bf16.mxu0 %v7092
        %7565 = vmatpush1.bf16.msra.mxu0 %v7091
        %7566 = vmatprep.subr.bf16.mxu0 %v7094
        %7567 = vmatpush1.bf16.msra.mxu0 %v7093
        %7568 = vmatprep.subr.bf16.mxu0 %v7096
        %7569 = vmatpush1.bf16.msra.mxu0 %v7095
        %7570 = vmatprep.subr.bf16.mxu0 %v7098
        %7571 = vmatpush1.bf16.msra.mxu0 %v7097
        %7572 = vmatprep.subr.bf16.mxu0 %v7100
        %7573 = vmatpush1.bf16.msra.mxu0 %v7099
        %7574 = vmatprep.subr.bf16.mxu0 %v7102
        %7575 = vmatpush1.bf16.msra.mxu0 %v7101
        %7576 = vmatprep.subr.bf16.mxu0 %v7104
        %7577 = vmatpush1.bf16.msra.mxu0 %v7103
        %7578 = vmatprep.subr.bf16.mxu0 %v7106
        %7579 = vmatpush1.bf16.msra.mxu0 %v7105
        %7580 = vmatprep.subr.bf16.mxu0 %v7108
        %7581 = vmatpush1.bf16.msra.mxu0 %v7107
        %7582 = vmatprep.subr.bf16.mxu0 %v7110
        %7583 = vmatpush1.bf16.msra.mxu0 %v7109
        %7584 = vmatprep.subr.bf16.mxu0 %v7112
        %7585 = vmatpush1.bf16.msra.mxu0 %v7111
        %7586 = vmatprep.subr.bf16.mxu0 %v7114
        %7587 = vmatpush1.bf16.msra.mxu0 %v7113
        %7588 = vmatprep.subr.bf16.mxu0 %v7116
        %7589 = vmatpush1.bf16.msra.mxu0 %v7115
        %7590 = vmatprep.subr.bf16.mxu0 %v7118
        %7591 = vmatpush1.bf16.msra.mxu0 %v7117
        %7592 = vmatprep.subr.bf16.mxu0 %v7120
        %7593 = vmatpush1.bf16.msra.mxu0 %v7119
        %7594 = vmatprep.subr.bf16.mxu0 %v7122
        %7595 = vmatpush1.bf16.msra.mxu0 %v7121
        %7596 = vmatprep.mubr.bf16.mxu0 %v6438
        %7597 = vmatmul.mubr.bf16.gmra.mrb[0].mxu0 %v6437
        %v7598 = vpop.f32.mrb[0].mxu0
        %v7599 = vadd.f32 %v7286, %v7598
        %v7600 = vpop.f32.mrb[0].mxu0
        %v7601 = vadd.f32 %v7288, %v7600
        %v7602 = vpop.f32.mrb[0].mxu0
        %v7603 = vadd.f32 %v7290, %v7602
        %v7604 = vpop.f32.mrb[0].mxu0
        %v7605 = vadd.f32 %v7292, %v7604
        %7606 = vmatprep.mubr.bf16.mxu0 %v6444
        %7607 = vmatmul.mubr.bf16.gmra.mrb[0].mxu0 %v6443
        %v7608 = vpop.f32.mrb[0].mxu0
        %v7609 = vadd.f32 %v7296, %v7608
        %v7610 = vpop.f32.mrb[0].mxu0
        %v7611 = vadd.f32 %v7298, %v7610
        %v7612 = vpop.f32.mrb[0].mxu0
        %v7613 = vadd.f32 %v7300, %v7612
        %v7614 = vpop.f32.mrb[0].mxu0
        %v7615 = vadd.f32 %v7302, %v7614
        %7616 = vmatprep.mubr.bf16.mxu0 %v6450
        %7617 = vmatmul.mubr.bf16.gmra.mrb[0].mxu0 %v6449
        %v7618 = vpop.f32.mrb[0].mxu0
        %v7619 = vadd.f32 %v7306, %v7618
        %v7620 = vpop.f32.mrb[0].mxu0
        %v7621 = vadd.f32 %v7308, %v7620
        %v7622 = vpop.f32.mrb[0].mxu0
        %v7623 = vadd.f32 %v7310, %v7622
        %v7624 = vpop.f32.mrb[0].mxu0
        %v7625 = vadd.f32 %v7312, %v7624
        %7626 = vmatprep.mubr.bf16.mxu0 %v6456
        %7627 = vmatmul.mubr.bf16.gmra.mrb[0].mxu0 %v6455
        %v7628 = vpop.f32.mrb[0].mxu0
        %v7629 = vadd.f32 %v7316, %v7628
        %v7630 = vpop.f32.mrb[0].mxu0
        %v7631 = vadd.f32 %v7318, %v7630
        %v7632 = vpop.f32.mrb[0].mxu0
        %v7633 = vadd.f32 %v7320, %v7632
        %v7634 = vpop.f32.mrb[0].mxu0
        %v7635 = vadd.f32 %v7322, %v7634
        %7636 = vmatprep.mubr.bf16.mxu0 %v6462
        %7637 = vmatmul.mubr.bf16.gmra.mrb[0].mxu0 %v6461
        %v7638 = vpop.f32.mrb[0].mxu0
        %v7639 = vadd.f32 %v7326, %v7638
        %v7640 = vpop.f32.mrb[0].mxu0
        %v7641 = vadd.f32 %v7328, %v7640
        %v7642 = vpop.f32.mrb[0].mxu0
        %v7643 = vadd.f32 %v7330, %v7642
        %v7644 = vpop.f32.mrb[0].mxu0
        %v7645 = vadd.f32 %v7332, %v7644
        %7646 = vmatprep.mubr.bf16.mxu0 %v6468
        %7647 = vmatmul.mubr.bf16.gmra.mrb[0].mxu0 %v6467
        %v7648 = vpop.f32.mrb[0].mxu0
        %v7649 = vadd.f32 %v7336, %v7648
        %v7650 = vpop.f32.mrb[0].mxu0
        %v7651 = vadd.f32 %v7338, %v7650
        %v7652 = vpop.f32.mrb[0].mxu0
        %v7653 = vadd.f32 %v7340, %v7652
        %v7654 = vpop.f32.mrb[0].mxu0
        %v7655 = vadd.f32 %v7342, %v7654
        %7656 = vmatprep.mubr.bf16.mxu0 %v6474
        %7657 = vmatmul.mubr.bf16.gmra.mrb[0].mxu0 %v6473
        %v7658 = vpop.f32.mrb[0].mxu0
        %v7659 = vadd.f32 %v7346, %v7658
        %v7660 = vpop.f32.mrb[0].mxu0
        %v7661 = vadd.f32 %v7348, %v7660
        %v7662 = vpop.f32.mrb[0].mxu0
        %v7663 = vadd.f32 %v7350, %v7662
        %v7664 = vpop.f32.mrb[0].mxu0
        %v7665 = vadd.f32 %v7352, %v7664
        %7666 = vmatprep.mubr.bf16.mxu0 %v6480
        %7667 = vmatmul.mubr.bf16.gmra.mrb[0].mxu0 %v6479
        %v7668 = vpop.f32.mrb[0].mxu0
        %v7669 = vadd.f32 %v7356, %v7668
        %v7670 = vpop.f32.mrb[0].mxu0
        %v7671 = vadd.f32 %v7358, %v7670
        %v7672 = vpop.f32.mrb[0].mxu0
        %v7673 = vadd.f32 %v7360, %v7672
        %v7674 = vpop.f32.mrb[0].mxu0
        %v7675 = vadd.f32 %v7362, %v7674
        %7676 = vmatprep.mubr.bf16.mxu0 %v6486
        %7677 = vmatmul.mubr.bf16.gmra.mrb[0].mxu0 %v6485
        %v7678 = vpop.f32.mrb[0].mxu0
        %v7679 = vadd.f32 %v7366, %v7678
        %v7680 = vpop.f32.mrb[0].mxu0
        %v7681 = vadd.f32 %v7368, %v7680
        %v7682 = vpop.f32.mrb[0].mxu0
        %v7683 = vadd.f32 %v7370, %v7682
        %v7684 = vpop.f32.mrb[0].mxu0
        %v7685 = vadd.f32 %v7372, %v7684
        %7686 = vmatprep.mubr.bf16.mxu0 %v6492
        %7687 = vmatmul.mubr.bf16.gmra.mrb[0].mxu0 %v6491
        %v7688 = vpop.f32.mrb[0].mxu0
        %v7689 = vadd.f32 %v7376, %v7688
        %v7690 = vpop.f32.mrb[0].mxu0
        %v7691 = vadd.f32 %v7378, %v7690
        %v7692 = vpop.f32.mrb[0].mxu0
        %v7693 = vadd.f32 %v7380, %v7692
        %v7694 = vpop.f32.mrb[0].mxu0
        %v7695 = vadd.f32 %v7382, %v7694
        %7696 = vmatprep.mubr.bf16.mxu0 %v6498
        %7697 = vmatmul.mubr.bf16.gmra.mrb[0].mxu0 %v6497
        %v7698 = vpop.f32.mrb[0].mxu0
        %v7699 = vadd.f32 %v7386, %v7698
        %v7700 = vpop.f32.mrb[0].mxu0
        %v7701 = vadd.f32 %v7388, %v7700
        %v7702 = vpop.f32.mrb[0].mxu0
        %v7703 = vadd.f32 %v7390, %v7702
        %v7704 = vpop.f32.mrb[0].mxu0
        %v7705 = vadd.f32 %v7392, %v7704
        %7706 = vmatprep.mubr.bf16.mxu0 %v6504
        %7707 = vmatmul.mubr.bf16.gmra.mrb[0].mxu0 %v6503
        %v7708 = vpop.f32.mrb[0].mxu0
        %v7709 = vadd.f32 %v7396, %v7708
        %v7710 = vpop.f32.mrb[0].mxu0
        %v7711 = vadd.f32 %v7398, %v7710
        %v7712 = vpop.f32.mrb[0].mxu0
        %v7713 = vadd.f32 %v7400, %v7712
        %v7714 = vpop.f32.mrb[0].mxu0
        %v7715 = vadd.f32 %v7402, %v7714
        %7716 = vmatprep.mubr.bf16.mxu0 %v6510
        %7717 = vmatmul.mubr.bf16.gmra.mrb[0].mxu0 %v6509
        %v7718 = vpop.f32.mrb[0].mxu0
        %v7719 = vadd.f32 %v7406, %v7718
        %v7720 = vpop.f32.mrb[0].mxu0
        %v7721 = vadd.f32 %v7408, %v7720
        %v7722 = vpop.f32.mrb[0].mxu0
        %v7723 = vadd.f32 %v7410, %v7722
        %v7724 = vpop.f32.mrb[0].mxu0
        %v7725 = vadd.f32 %v7412, %v7724
        %7726 = vmatprep.mubr.bf16.mxu0 %v6516
        %7727 = vmatmul.mubr.bf16.gmra.mrb[0].mxu0 %v6515
        %v7728 = vpop.f32.mrb[0].mxu0
        %v7729 = vadd.f32 %v7416, %v7728
        %v7730 = vpop.f32.mrb[0].mxu0
        %v7731 = vadd.f32 %v7418, %v7730
        %v7732 = vpop.f32.mrb[0].mxu0
        %v7733 = vadd.f32 %v7420, %v7732
        %v7734 = vpop.f32.mrb[0].mxu0
        %v7735 = vadd.f32 %v7422, %v7734
        %7736 = vmatprep.mubr.bf16.mxu0 %v6522
        %7737 = vmatmul.mubr.bf16.gmra.mrb[0].mxu0 %v6521
        %v7738 = vpop.f32.mrb[0].mxu0
        %v7739 = vadd.f32 %v7426, %v7738
        %v7740 = vpop.f32.mrb[0].mxu0
        %v7741 = vadd.f32 %v7428, %v7740
        %v7742 = vpop.f32.mrb[0].mxu0
        %v7743 = vadd.f32 %v7430, %v7742
        %v7744 = vpop.f32.mrb[0].mxu0
        %v7745 = vadd.f32 %v7432, %v7744
        %7746 = vmatprep.mubr.bf16.mxu0 %v6528
        %7747 = vmatmul.mubr.bf16.gmra.mrb[0].mxu0 %v6527
        %v7748 = vpop.f32.mrb[0].mxu0
        %v7749 = vadd.f32 %v7436, %v7748
        %v7750 = vpop.f32.mrb[0].mxu0
        %v7751 = vadd.f32 %v7438, %v7750
        %v7752 = vpop.f32.mrb[0].mxu0
        %v7753 = vadd.f32 %v7440, %v7752
        %v7754 = vpop.f32.mrb[0].mxu0
        %v7755 = vadd.f32 %v7442, %v7754
        %7756 = vmatprep.mubr.bf16.mxu0 %v6534
        %7757 = vmatmul.mubr.bf16.gmra.mrb[0].mxu0 %v6533
        %v7758 = vpop.f32.mrb[0].mxu0
        %v7759 = vadd.f32 %v7446, %v7758
        %v7760 = vpop.f32.mrb[0].mxu0
        %v7761 = vadd.f32 %v7448, %v7760
        %v7762 = vpop.f32.mrb[0].mxu0
        %v7763 = vadd.f32 %v7450, %v7762
        %v7764 = vpop.f32.mrb[0].mxu0
        %v7765 = vadd.f32 %v7452, %v7764
        %7766 = vmatprep.mubr.bf16.mxu0 %v6540
        %7767 = vmatmul.mubr.bf16.gmra.mrb[0].mxu0 %v6539
        %v7768 = vpop.f32.mrb[0].mxu0
        %v7769 = vadd.f32 %v7456, %v7768
        %v7770 = vpop.f32.mrb[0].mxu0
        %v7771 = vadd.f32 %v7458, %v7770
        %v7772 = vpop.f32.mrb[0].mxu0
        %v7773 = vadd.f32 %v7460, %v7772
        %v7774 = vpop.f32.mrb[0].mxu0
        %v7775 = vadd.f32 %v7462, %v7774
        %7776 = vmatprep.mubr.bf16.mxu0 %v6546
        %7777 = vmatmul.mubr.bf16.gmra.mrb[0].mxu0 %v6545
        %v7778 = vpop.f32.mrb[0].mxu0
        %v7779 = vadd.f32 %v7466, %v7778
        %v7780 = vpop.f32.mrb[0].mxu0
        %v7781 = vadd.f32 %v7468, %v7780
        %v7782 = vpop.f32.mrb[0].mxu0
        %v7783 = vadd.f32 %v7470, %v7782
        %v7784 = vpop.f32.mrb[0].mxu0
        %v7785 = vadd.f32 %v7472, %v7784
        %7786 = vmatprep.mubr.bf16.mxu0 %v6552
        %7787 = vmatmul.mubr.bf16.gmra.mrb[0].mxu0 %v6551
        %v7788 = vpop.f32.mrb[0].mxu0
        %v7789 = vadd.f32 %v7476, %v7788
        %v7790 = vpop.f32.mrb[0].mxu0
        %v7791 = vadd.f32 %v7478, %v7790
        %v7792 = vpop.f32.mrb[0].mxu0
        %v7793 = vadd.f32 %v7480, %v7792
        %v7794 = vpop.f32.mrb[0].mxu0
        %v7795 = vadd.f32 %v7482, %v7794
        %7796 = vmatprep.mubr.bf16.mxu0 %v6558
        %7797 = vmatmul.mubr.bf16.gmra.mrb[0].mxu0 %v6557
        %v7798 = vpop.f32.mrb[0].mxu0
        %v7799 = vadd.f32 %v7486, %v7798
        %v7800 = vpop.f32.mrb[0].mxu0
        %v7801 = vadd.f32 %v7488, %v7800
        %v7802 = vpop.f32.mrb[0].mxu0
        %v7803 = vadd.f32 %v7490, %v7802
        %v7804 = vpop.f32.mrb[0].mxu0
        %v7805 = vadd.f32 %v7492, %v7804
        %7806 = vmatprep.mubr.bf16.mxu0 %v6564
        %7807 = vmatmul.mubr.bf16.gmra.mrb[0].mxu0 %v6563
        %v7808 = vpop.f32.mrb[0].mxu0
        %v7809 = vadd.f32 %v7496, %v7808
        %v7810 = vpop.f32.mrb[0].mxu0
        %v7811 = vadd.f32 %v7498, %v7810
        %v7812 = vpop.f32.mrb[0].mxu0
        %v7813 = vadd.f32 %v7500, %v7812
        %v7814 = vpop.f32.mrb[0].mxu0
        %v7815 = vadd.f32 %v7502, %v7814
        %7816 = vmatprep.mubr.bf16.mxu0 %v6570
        %7817 = vmatmul.mubr.bf16.gmra.mrb[0].mxu0 %v6569
        %v7818 = vpop.f32.mrb[0].mxu0
        %v7819 = vadd.f32 %v7506, %v7818
        %v7820 = vpop.f32.mrb[0].mxu0
        %v7821 = vadd.f32 %v7508, %v7820
        %v7822 = vpop.f32.mrb[0].mxu0
        %v7823 = vadd.f32 %v7510, %v7822
        %v7824 = vpop.f32.mrb[0].mxu0
        %v7825 = vadd.f32 %v7512, %v7824
        %7826 = vmatprep.mubr.bf16.mxu0 %v6576
        %7827 = vmatmul.mubr.bf16.gmra.mrb[0].mxu0 %v6575
        %v7828 = vpop.f32.mrb[0].mxu0
        %v7829 = vadd.f32 %v7516, %v7828
        %v7830 = vpop.f32.mrb[0].mxu0
        %v7831 = vadd.f32 %v7518, %v7830
        %v7832 = vpop.f32.mrb[0].mxu0
        %v7833 = vadd.f32 %v7520, %v7832
        %v7834 = vpop.f32.mrb[0].mxu0
        %v7835 = vadd.f32 %v7522, %v7834
        %7836 = vmatprep.mubr.bf16.mxu0 %v6582
        %7837 = vmatmul.mubr.bf16.gmra.mrb[0].mxu0 %v6581
        %v7838 = vpop.f32.mrb[0].mxu0
        %v7839 = vadd.f32 %v7526, %v7838
        %v7840 = vpop.f32.mrb[0].mxu0
        %v7841 = vadd.f32 %v7528, %v7840
        %v7842 = vpop.f32.mrb[0].mxu0
        %v7843 = vadd.f32 %v7530, %v7842
        %v7844 = vpop.f32.mrb[0].mxu0
        %v7845 = vadd.f32 %v7532, %v7844
        %7846 = vmatprep.mubr.bf16.mxu0 %v6588
        %7847 = vmatmul.mubr.bf16.gmra.mrb[0].mxu0 %v6587
        %v7848 = vpop.f32.mrb[0].mxu0
        %v7849 = vadd.f32 %v7536, %v7848
        %v7850 = vpop.f32.mrb[0].mxu0
        %v7851 = vadd.f32 %v7538, %v7850
        %v7852 = vpop.f32.mrb[0].mxu0
        %v7853 = vadd.f32 %v7540, %v7852
        %v7854 = vpop.f32.mrb[0].mxu0
        %v7855 = vadd.f32 %v7542, %v7854
        %7856 = vmatprep.mubr.bf16.mxu0 %v6594
        %7857 = vmatmul.mubr.bf16.gmra.mrb[0].mxu0 %v6593
        %v7858 = vpop.f32.mrb[0].mxu0
        %v7859 = vadd.f32 %v7546, %v7858
        %v7860 = vpop.f32.mrb[0].mxu0
        %v7861 = vadd.f32 %v7548, %v7860
        %v7862 = vpop.f32.mrb[0].mxu0
        %v7863 = vadd.f32 %v7550, %v7862
        %v7864 = vpop.f32.mrb[0].mxu0
        %v7865 = vadd.f32 %v7552, %v7864
        %7866 = vmatprep.mubr.bf16.mxu0 %v6600
        %7867 = vmatmul.mubr.bf16.gmra.mrb[0].mxu0 %v6599
        %v7868 = vpop.f32.mrb[0].mxu0
        %v7869 = vadd.f32 %v7556, %v7868
        %v7870 = vpop.f32.mrb[0].mxu0
        %v7871 = vadd.f32 %v7558, %v7870
        %v7872 = vpop.f32.mrb[0].mxu0
        %v7873 = vadd.f32 %v7560, %v7872
        %v7874 = vpop.f32.mrb[0].mxu0
        %v7875 = vadd.f32 %v7562, %v7874
        %7876 = vdwg.mxu0
        %7877 = vmatprep.subr.bf16.mxu0 %v7124
        %7878 = vmatpush1.bf16.msra.mxu0 %v7123
        %7879 = vmatprep.subr.bf16.mxu0 %v7126
        %7880 = vmatpush1.bf16.msra.mxu0 %v7125
        %7881 = vmatprep.subr.bf16.mxu0 %v7128
        %7882 = vmatpush1.bf16.msra.mxu0 %v7127
        %7883 = vmatprep.subr.bf16.mxu0 %v7130
        %7884 = vmatpush1.bf16.msra.mxu0 %v7129
        %7885 = vmatprep.subr.bf16.mxu0 %v7132
        %7886 = vmatpush1.bf16.msra.mxu0 %v7131
        %7887 = vmatprep.subr.bf16.mxu0 %v7134
        %7888 = vmatpush1.bf16.msra.mxu0 %v7133
        %7889 = vmatprep.subr.bf16.mxu0 %v7136
        %7890 = vmatpush1.bf16.msra.mxu0 %v7135
        %7891 = vmatprep.subr.bf16.mxu0 %v7138
        %7892 = vmatpush1.bf16.msra.mxu0 %v7137
        %7893 = vmatprep.subr.bf16.mxu0 %v7140
        %7894 = vmatpush1.bf16.msra.mxu0 %v7139
        %7895 = vmatprep.subr.bf16.mxu0 %v7142
        %7896 = vmatpush1.bf16.msra.mxu0 %v7141
        %7897 = vmatprep.subr.bf16.mxu0 %v7144
        %7898 = vmatpush1.bf16.msra.mxu0 %v7143
        %7899 = vmatprep.subr.bf16.mxu0 %v7146
        %7900 = vmatpush1.bf16.msra.mxu0 %v7145
        %7901 = vmatprep.subr.bf16.mxu0 %v7148
        %7902 = vmatpush1.bf16.msra.mxu0 %v7147
        %7903 = vmatprep.subr.bf16.mxu0 %v7150
        %7904 = vmatpush1.bf16.msra.mxu0 %v7149
        %7905 = vmatprep.subr.bf16.mxu0 %v7152
        %7906 = vmatpush1.bf16.msra.mxu0 %v7151
        %7907 = vmatprep.subr.bf16.mxu0 %v7154
        %7908 = vmatpush1.bf16.msra.mxu0 %v7153
        %7909 = vmatprep.mubr.bf16.mxu0 %v6440
        %7910 = vmatmul.mubr.bf16.gmra.mrb[0].mxu0 %v6439
        %v7911 = vpop.f32.mrb[0].mxu0
        %v7912 = vadd.f32 %v7599, %v7911
        %v7913 = vpop.f32.mrb[0].mxu0
        %v7914 = vadd.f32 %v7601, %v7913
        %v7915 = vpop.f32.mrb[0].mxu0
        %v7916 = vadd.f32 %v7603, %v7915
        %v7917 = vpop.f32.mrb[0].mxu0
        %v7918 = vadd.f32 %v7605, %v7917
        %7919 = vmatprep.mubr.bf16.mxu0 %v6446
        %7920 = vmatmul.mubr.bf16.gmra.mrb[0].mxu0 %v6445
        %v7921 = vpop.f32.mrb[0].mxu0
        %v7922 = vadd.f32 %v7609, %v7921
        %v7923 = vpop.f32.mrb[0].mxu0
        %v7924 = vadd.f32 %v7611, %v7923
        %v7925 = vpop.f32.mrb[0].mxu0
        %v7926 = vadd.f32 %v7613, %v7925
        %v7927 = vpop.f32.mrb[0].mxu0
        %v7928 = vadd.f32 %v7615, %v7927
        %7929 = vmatprep.mubr.bf16.mxu0 %v6452
        %7930 = vmatmul.mubr.bf16.gmra.mrb[0].mxu0 %v6451
        %v7931 = vpop.f32.mrb[0].mxu0
        %v7932 = vadd.f32 %v7619, %v7931
        %v7933 = vpop.f32.mrb[0].mxu0
        %v7934 = vadd.f32 %v7621, %v7933
        %v7935 = vpop.f32.mrb[0].mxu0
        %v7936 = vadd.f32 %v7623, %v7935
        %v7937 = vpop.f32.mrb[0].mxu0
        %v7938 = vadd.f32 %v7625, %v7937
        %7939 = vmatprep.mubr.bf16.mxu0 %v6458
        %7940 = vmatmul.mubr.bf16.gmra.mrb[0].mxu0 %v6457
        %v7941 = vpop.f32.mrb[0].mxu0
        %v7942 = vadd.f32 %v7629, %v7941
        %v7943 = vpop.f32.mrb[0].mxu0
        %v7944 = vadd.f32 %v7631, %v7943
        %v7945 = vpop.f32.mrb[0].mxu0
        %v7946 = vadd.f32 %v7633, %v7945
        %v7947 = vpop.f32.mrb[0].mxu0
        %v7948 = vadd.f32 %v7635, %v7947
        %7949 = vmatprep.mubr.bf16.mxu0 %v6464
        %7950 = vmatmul.mubr.bf16.gmra.mrb[0].mxu0 %v6463
        %v7951 = vpop.f32.mrb[0].mxu0
        %v7952 = vadd.f32 %v7639, %v7951
        %v7953 = vpop.f32.mrb[0].mxu0
        %v7954 = vadd.f32 %v7641, %v7953
        %v7955 = vpop.f32.mrb[0].mxu0
        %v7956 = vadd.f32 %v7643, %v7955
        %v7957 = vpop.f32.mrb[0].mxu0
        %v7958 = vadd.f32 %v7645, %v7957
        %7959 = vmatprep.mubr.bf16.mxu0 %v6470
        %7960 = vmatmul.mubr.bf16.gmra.mrb[0].mxu0 %v6469
        %v7961 = vpop.f32.mrb[0].mxu0
        %v7962 = vadd.f32 %v7649, %v7961
        %v7963 = vpop.f32.mrb[0].mxu0
        %v7964 = vadd.f32 %v7651, %v7963
        %v7965 = vpop.f32.mrb[0].mxu0
        %v7966 = vadd.f32 %v7653, %v7965
        %v7967 = vpop.f32.mrb[0].mxu0
        %v7968 = vadd.f32 %v7655, %v7967
        %7969 = vmatprep.mubr.bf16.mxu0 %v6476
        %7970 = vmatmul.mubr.bf16.gmra.mrb[0].mxu0 %v6475
        %v7971 = vpop.f32.mrb[0].mxu0
        %v7972 = vadd.f32 %v7659, %v7971
        %v7973 = vpop.f32.mrb[0].mxu0
        %v7974 = vadd.f32 %v7661, %v7973
        %v7975 = vpop.f32.mrb[0].mxu0
        %v7976 = vadd.f32 %v7663, %v7975
        %v7977 = vpop.f32.mrb[0].mxu0
        %v7978 = vadd.f32 %v7665, %v7977
        %7979 = vmatprep.mubr.bf16.mxu0 %v6482
        %7980 = vmatmul.mubr.bf16.gmra.mrb[0].mxu0 %v6481
        %v7981 = vpop.f32.mrb[0].mxu0
        %v7982 = vadd.f32 %v7669, %v7981
        %v7983 = vpop.f32.mrb[0].mxu0
        %v7984 = vadd.f32 %v7671, %v7983
        %v7985 = vpop.f32.mrb[0].mxu0
        %v7986 = vadd.f32 %v7673, %v7985
        %v7987 = vpop.f32.mrb[0].mxu0
        %v7988 = vadd.f32 %v7675, %v7987
        %7989 = vmatprep.mubr.bf16.mxu0 %v6488
        %7990 = vmatmul.mubr.bf16.gmra.mrb[0].mxu0 %v6487
        %v7991 = vpop.f32.mrb[0].mxu0
        %v7992 = vadd.f32 %v7679, %v7991
        %v7993 = vpop.f32.mrb[0].mxu0
        %v7994 = vadd.f32 %v7681, %v7993
        %v7995 = vpop.f32.mrb[0].mxu0
        %v7996 = vadd.f32 %v7683, %v7995
        %v7997 = vpop.f32.mrb[0].mxu0
        %v7998 = vadd.f32 %v7685, %v7997
        %7999 = vmatprep.mubr.bf16.mxu0 %v6494
        %8000 = vmatmul.mubr.bf16.gmra.mrb[0].mxu0 %v6493
        %v8001 = vpop.f32.mrb[0].mxu0
        %v8002 = vadd.f32 %v7689, %v8001
        %v8003 = vpop.f32.mrb[0].mxu0
        %v8004 = vadd.f32 %v7691, %v8003
        %v8005 = vpop.f32.mrb[0].mxu0
        %v8006 = vadd.f32 %v7693, %v8005
        %v8007 = vpop.f32.mrb[0].mxu0
        %v8008 = vadd.f32 %v7695, %v8007
        %8009 = vmatprep.mubr.bf16.mxu0 %v6500
        %8010 = vmatmul.mubr.bf16.gmra.mrb[0].mxu0 %v6499
        %v8011 = vpop.f32.mrb[0].mxu0
        %v8012 = vadd.f32 %v7699, %v8011
        %v8013 = vpop.f32.mrb[0].mxu0
        %v8014 = vadd.f32 %v7701, %v8013
        %v8015 = vpop.f32.mrb[0].mxu0
        %v8016 = vadd.f32 %v7703, %v8015
        %v8017 = vpop.f32.mrb[0].mxu0
        %v8018 = vadd.f32 %v7705, %v8017
        %8019 = vmatprep.mubr.bf16.mxu0 %v6506
        %8020 = vmatmul.mubr.bf16.gmra.mrb[0].mxu0 %v6505
        %v8021 = vpop.f32.mrb[0].mxu0
        %v8022 = vadd.f32 %v7709, %v8021
        %v8023 = vpop.f32.mrb[0].mxu0
        %v8024 = vadd.f32 %v7711, %v8023
        %v8025 = vpop.f32.mrb[0].mxu0
        %v8026 = vadd.f32 %v7713, %v8025
        %v8027 = vpop.f32.mrb[0].mxu0
        %v8028 = vadd.f32 %v7715, %v8027
        %8029 = vmatprep.mubr.bf16.mxu0 %v6512
        %8030 = vmatmul.mubr.bf16.gmra.mrb[0].mxu0 %v6511
        %v8031 = vpop.f32.mrb[0].mxu0
        %v8032 = vadd.f32 %v7719, %v8031
        %v8033 = vpop.f32.mrb[0].mxu0
        %v8034 = vadd.f32 %v7721, %v8033
        %v8035 = vpop.f32.mrb[0].mxu0
        %v8036 = vadd.f32 %v7723, %v8035
        %v8037 = vpop.f32.mrb[0].mxu0
        %v8038 = vadd.f32 %v7725, %v8037
        %8039 = vmatprep.mubr.bf16.mxu0 %v6518
        %8040 = vmatmul.mubr.bf16.gmra.mrb[0].mxu0 %v6517
        %v8041 = vpop.f32.mrb[0].mxu0
        %v8042 = vadd.f32 %v7729, %v8041
        %v8043 = vpop.f32.mrb[0].mxu0
        %v8044 = vadd.f32 %v7731, %v8043
        %v8045 = vpop.f32.mrb[0].mxu0
        %v8046 = vadd.f32 %v7733, %v8045
        %v8047 = vpop.f32.mrb[0].mxu0
        %v8048 = vadd.f32 %v7735, %v8047
        %8049 = vmatprep.mubr.bf16.mxu0 %v6524
        %8050 = vmatmul.mubr.bf16.gmra.mrb[0].mxu0 %v6523
        %v8051 = vpop.f32.mrb[0].mxu0
        %v8052 = vadd.f32 %v7739, %v8051
        %v8053 = vpop.f32.mrb[0].mxu0
        %v8054 = vadd.f32 %v7741, %v8053
        %v8055 = vpop.f32.mrb[0].mxu0
        %v8056 = vadd.f32 %v7743, %v8055
        %v8057 = vpop.f32.mrb[0].mxu0
        %v8058 = vadd.f32 %v7745, %v8057
        %8059 = vmatprep.mubr.bf16.mxu0 %v6530
        %8060 = vmatmul.mubr.bf16.gmra.mrb[0].mxu0 %v6529
        %v8061 = vpop.f32.mrb[0].mxu0
        %v8062 = vadd.f32 %v7749, %v8061
        %v8063 = vpop.f32.mrb[0].mxu0
        %v8064 = vadd.f32 %v7751, %v8063
        %v8065 = vpop.f32.mrb[0].mxu0
        %v8066 = vadd.f32 %v7753, %v8065
        %v8067 = vpop.f32.mrb[0].mxu0
        %v8068 = vadd.f32 %v7755, %v8067
        %8069 = vmatprep.mubr.bf16.mxu0 %v6536
        %8070 = vmatmul.mubr.bf16.gmra.mrb[0].mxu0 %v6535
        %v8071 = vpop.f32.mrb[0].mxu0
        %v8072 = vadd.f32 %v7759, %v8071
        %v8073 = vpop.f32.mrb[0].mxu0
        %v8074 = vadd.f32 %v7761, %v8073
        %v8075 = vpop.f32.mrb[0].mxu0
        %v8076 = vadd.f32 %v7763, %v8075
        %v8077 = vpop.f32.mrb[0].mxu0
        %v8078 = vadd.f32 %v7765, %v8077
        %8079 = vmatprep.mubr.bf16.mxu0 %v6542
        %8080 = vmatmul.mubr.bf16.gmra.mrb[0].mxu0 %v6541
        %v8081 = vpop.f32.mrb[0].mxu0
        %v8082 = vadd.f32 %v7769, %v8081
        %v8083 = vpop.f32.mrb[0].mxu0
        %v8084 = vadd.f32 %v7771, %v8083
        %v8085 = vpop.f32.mrb[0].mxu0
        %v8086 = vadd.f32 %v7773, %v8085
        %v8087 = vpop.f32.mrb[0].mxu0
        %v8088 = vadd.f32 %v7775, %v8087
        %8089 = vmatprep.mubr.bf16.mxu0 %v6548
        %8090 = vmatmul.mubr.bf16.gmra.mrb[0].mxu0 %v6547
        %v8091 = vpop.f32.mrb[0].mxu0
        %v8092 = vadd.f32 %v7779, %v8091
        %v8093 = vpop.f32.mrb[0].mxu0
        %v8094 = vadd.f32 %v7781, %v8093
        %v8095 = vpop.f32.mrb[0].mxu0
        %v8096 = vadd.f32 %v7783, %v8095
        %v8097 = vpop.f32.mrb[0].mxu0
        %v8098 = vadd.f32 %v7785, %v8097
        %8099 = vmatprep.mubr.bf16.mxu0 %v6554
        %8100 = vmatmul.mubr.bf16.gmra.mrb[0].mxu0 %v6553
        %v8101 = vpop.f32.mrb[0].mxu0
        %v8102 = vadd.f32 %v7789, %v8101
        %v8103 = vpop.f32.mrb[0].mxu0
        %v8104 = vadd.f32 %v7791, %v8103
        %v8105 = vpop.f32.mrb[0].mxu0
        %v8106 = vadd.f32 %v7793, %v8105
        %v8107 = vpop.f32.mrb[0].mxu0
        %v8108 = vadd.f32 %v7795, %v8107
        %8109 = vmatprep.mubr.bf16.mxu0 %v6560
        %8110 = vmatmul.mubr.bf16.gmra.mrb[0].mxu0 %v6559
        %v8111 = vpop.f32.mrb[0].mxu0
        %v8112 = vadd.f32 %v7799, %v8111
        %v8113 = vpop.f32.mrb[0].mxu0
        %v8114 = vadd.f32 %v7801, %v8113
        %v8115 = vpop.f32.mrb[0].mxu0
        %v8116 = vadd.f32 %v7803, %v8115
        %v8117 = vpop.f32.mrb[0].mxu0
        %v8118 = vadd.f32 %v7805, %v8117
        %8119 = vmatprep.mubr.bf16.mxu0 %v6566
        %8120 = vmatmul.mubr.bf16.gmra.mrb[0].mxu0 %v6565
        %v8121 = vpop.f32.mrb[0].mxu0
        %v8122 = vadd.f32 %v7809, %v8121
        %v8123 = vpop.f32.mrb[0].mxu0
        %v8124 = vadd.f32 %v7811, %v8123
        %v8125 = vpop.f32.mrb[0].mxu0
        %v8126 = vadd.f32 %v7813, %v8125
        %v8127 = vpop.f32.mrb[0].mxu0
        %v8128 = vadd.f32 %v7815, %v8127
        %8129 = vmatprep.mubr.bf16.mxu0 %v6572
        %8130 = vmatmul.mubr.bf16.gmra.mrb[0].mxu0 %v6571
        %v8131 = vpop.f32.mrb[0].mxu0
        %v8132 = vadd.f32 %v7819, %v8131
        %v8133 = vpop.f32.mrb[0].mxu0
        %v8134 = vadd.f32 %v7821, %v8133
        %v8135 = vpop.f32.mrb[0].mxu0
        %v8136 = vadd.f32 %v7823, %v8135
        %v8137 = vpop.f32.mrb[0].mxu0
        %v8138 = vadd.f32 %v7825, %v8137
        %8139 = vmatprep.mubr.bf16.mxu0 %v6578
        %8140 = vmatmul.mubr.bf16.gmra.mrb[0].mxu0 %v6577
        %v8141 = vpop.f32.mrb[0].mxu0
        %v8142 = vadd.f32 %v7829, %v8141
        %v8143 = vpop.f32.mrb[0].mxu0
        %v8144 = vadd.f32 %v7831, %v8143
        %v8145 = vpop.f32.mrb[0].mxu0
        %v8146 = vadd.f32 %v7833, %v8145
        %v8147 = vpop.f32.mrb[0].mxu0
        %v8148 = vadd.f32 %v7835, %v8147
        %8149 = vmatprep.mubr.bf16.mxu0 %v6584
        %8150 = vmatmul.mubr.bf16.gmra.mrb[0].mxu0 %v6583
        %v8151 = vpop.f32.mrb[0].mxu0
        %v8152 = vadd.f32 %v7839, %v8151
        %v8153 = vpop.f32.mrb[0].mxu0
        %v8154 = vadd.f32 %v7841, %v8153
        %v8155 = vpop.f32.mrb[0].mxu0
        %v8156 = vadd.f32 %v7843, %v8155
        %v8157 = vpop.f32.mrb[0].mxu0
        %v8158 = vadd.f32 %v7845, %v8157
        %8159 = vmatprep.mubr.bf16.mxu0 %v6590
        %8160 = vmatmul.mubr.bf16.gmra.mrb[0].mxu0 %v6589
        %v8161 = vpop.f32.mrb[0].mxu0
        %v8162 = vadd.f32 %v7849, %v8161
        %v8163 = vpop.f32.mrb[0].mxu0
        %v8164 = vadd.f32 %v7851, %v8163
        %v8165 = vpop.f32.mrb[0].mxu0
        %v8166 = vadd.f32 %v7853, %v8165
        %v8167 = vpop.f32.mrb[0].mxu0
        %v8168 = vadd.f32 %v7855, %v8167
        %8169 = vmatprep.mubr.bf16.mxu0 %v6596
        %8170 = vmatmul.mubr.bf16.gmra.mrb[0].mxu0 %v6595
        %v8171 = vpop.f32.mrb[0].mxu0
        %v8172 = vadd.f32 %v7859, %v8171
        %v8173 = vpop.f32.mrb[0].mxu0
        %v8174 = vadd.f32 %v7861, %v8173
        %v8175 = vpop.f32.mrb[0].mxu0
        %v8176 = vadd.f32 %v7863, %v8175
        %v8177 = vpop.f32.mrb[0].mxu0
        %v8178 = vadd.f32 %v7865, %v8177
        %8179 = vmatprep.mubr.bf16.mxu0 %v6602
        %8180 = vmatmul.mubr.bf16.gmra.mrb[0].mxu0 %v6601
        %v8181 = vpop.f32.mrb[0].mxu0
        %v8182 = vadd.f32 %v7869, %v8181
        %v8183 = vpop.f32.mrb[0].mxu0
        %v8184 = vadd.f32 %v7871, %v8183
        %v8185 = vpop.f32.mrb[0].mxu0
        %v8186 = vadd.f32 %v7873, %v8185
        %v8187 = vpop.f32.mrb[0].mxu0
        %v8188 = vadd.f32 %v7875, %v8187
        %8189 = vdwg.mxu0
        %v8190 = vld [vmem:[%s151] sm:$0xff]
        %v8191 = vld [vmem:[%s151 + $0x8] sm:$0xff]
        %v8192 = vld [vmem:[%s151 + $0x10] sm:$0xff]
        %v8193 = vld [vmem:[%s151 + $0x18] sm:$0xff]
        %v8194 = vld [vmem:[%s151 + $0x20] sm:$0xff]
        %v8195 = vld [vmem:[%s151 + $0x28] sm:$0xff]
        %v8196 = vld [vmem:[%s151 + $0x30] sm:$0xff]
        %v8197 = vld [vmem:[%s151 + $0x38] sm:$0xff]
        %v8198 = vld [vmem:[%s151 + $0x40] sm:$0xff]
        %v8199 = vld [vmem:[%s151 + $0x48] sm:$0xff]
        %v8200 = vld [vmem:[%s151 + $0x50] sm:$0xff]
        %v8201 = vld [vmem:[%s151 + $0x58] sm:$0xff]
        %v8202 = vld [vmem:[%s151 + $0x60] sm:$0xff]
        %v8203 = vld [vmem:[%s151 + $0x68] sm:$0xff]
        %v8204 = vld [vmem:[%s151 + $0x70] sm:$0xff]
        %v8205 = vld [vmem:[%s151 + $0x78] sm:$0xff]
        %v8206 = vld [vmem:[%s151 + $0x80] sm:$0xff]
        %v8207 = vld [vmem:[%s151 + $0x88] sm:$0xff]
        %v8208 = vld [vmem:[%s151 + $0x90] sm:$0xff]
        %v8209 = vld [vmem:[%s151 + $0x98] sm:$0xff]
        %v8210 = vld [vmem:[%s151 + $0xa0] sm:$0xff]
        %v8211 = vld [vmem:[%s151 + $0xa8] sm:$0xff]
        %v8212 = vld [vmem:[%s151 + $0xb0] sm:$0xff]
        %v8213 = vld [vmem:[%s151 + $0xb8] sm:$0xff]
        %v8214 = vld [vmem:[%s151 + $0xc0] sm:$0xff]
        %v8215 = vld [vmem:[%s151 + $0xc8] sm:$0xff]
        %v8216 = vld [vmem:[%s151 + $0xd0] sm:$0xff]
        %v8217 = vld [vmem:[%s151 + $0xd8] sm:$0xff]
        %v8218 = vld [vmem:[%s151 + $0xe0] sm:$0xff]
        %v8219 = vld [vmem:[%s151 + $0xe8] sm:$0xff]
        %v8220 = vld [vmem:[%s151 + $0xf0] sm:$0xff]
        %v8221 = vld [vmem:[%s151 + $0xf8] sm:$0xff]
        %v8222 = vld [vmem:[%s151 + $0x100] sm:$0xff]
        %v8223 = vld [vmem:[%s151 + $0x108] sm:$0xff]
        %v8224 = vld [vmem:[%s151 + $0x110] sm:$0xff]
        %v8225 = vld [vmem:[%s151 + $0x118] sm:$0xff]
        %v8226 = vld [vmem:[%s151 + $0x120] sm:$0xff]
        %v8227 = vld [vmem:[%s151 + $0x128] sm:$0xff]
        %v8228 = vld [vmem:[%s151 + $0x130] sm:$0xff]
        %v8229 = vld [vmem:[%s151 + $0x138] sm:$0xff]
        %v8230 = vld [vmem:[%s151 + $0x140] sm:$0xff]
        %v8231 = vld [vmem:[%s151 + $0x148] sm:$0xff]
        %v8232 = vld [vmem:[%s151 + $0x150] sm:$0xff]
        %v8233 = vld [vmem:[%s151 + $0x158] sm:$0xff]
        %v8234 = vld [vmem:[%s151 + $0x160] sm:$0xff]
        %v8235 = vld [vmem:[%s151 + $0x168] sm:$0xff]
        %v8236 = vld [vmem:[%s151 + $0x170] sm:$0xff]
        %v8237 = vld [vmem:[%s151 + $0x178] sm:$0xff]
        %v8238 = vld [vmem:[%s151 + $0x180] sm:$0xff]
        %v8239 = vld [vmem:[%s151 + $0x188] sm:$0xff]
        %v8240 = vld [vmem:[%s151 + $0x190] sm:$0xff]
        %v8241 = vld [vmem:[%s151 + $0x198] sm:$0xff]
        %v8242 = vld [vmem:[%s151 + $0x1a0] sm:$0xff]
        %v8243 = vld [vmem:[%s151 + $0x1a8] sm:$0xff]
        %v8244 = vld [vmem:[%s151 + $0x1b0] sm:$0xff]
        %v8245 = vld [vmem:[%s151 + $0x1b8] sm:$0xff]
        %v8246 = vld [vmem:[%s151 + $0x1c0] sm:$0xff]
        %v8247 = vld [vmem:[%s151 + $0x1c8] sm:$0xff]
        %v8248 = vld [vmem:[%s151 + $0x1d0] sm:$0xff]
        %v8249 = vld [vmem:[%s151 + $0x1d8] sm:$0xff]
        %v8250 = vld [vmem:[%s151 + $0x1e0] sm:$0xff]
        %v8251 = vld [vmem:[%s151 + $0x1e8] sm:$0xff]
        %v8252 = vld [vmem:[%s151 + $0x1f0] sm:$0xff]
        %v8253 = vld [vmem:[%s151 + $0x1f8] sm:$0xff]
        %v8254 = vld [vmem:[%s151 + $0x200] sm:$0xff]
        %v8255 = vld [vmem:[%s151 + $0x208] sm:$0xff]
        %v8256 = vld [vmem:[%s151 + $0x210] sm:$0xff]
        %v8257 = vld [vmem:[%s151 + $0x218] sm:$0xff]
        %v8258 = vld [vmem:[%s151 + $0x220] sm:$0xff]
        %v8259 = vld [vmem:[%s151 + $0x228] sm:$0xff]
        %v8260 = vld [vmem:[%s151 + $0x230] sm:$0xff]
        %v8261 = vld [vmem:[%s151 + $0x238] sm:$0xff]
        %v8262 = vld [vmem:[%s151 + $0x240] sm:$0xff]
        %v8263 = vld [vmem:[%s151 + $0x248] sm:$0xff]
        %v8264 = vld [vmem:[%s151 + $0x250] sm:$0xff]
        %v8265 = vld [vmem:[%s151 + $0x258] sm:$0xff]
        %v8266 = vld [vmem:[%s151 + $0x260] sm:$0xff]
        %v8267 = vld [vmem:[%s151 + $0x268] sm:$0xff]
        %v8268 = vld [vmem:[%s151 + $0x270] sm:$0xff]
        %v8269 = vld [vmem:[%s151 + $0x278] sm:$0xff]
        %v8270 = vld [vmem:[%s151 + $0x280] sm:$0xff]
        %v8271 = vld [vmem:[%s151 + $0x288] sm:$0xff]
        %v8272 = vld [vmem:[%s151 + $0x290] sm:$0xff]
        %v8273 = vld [vmem:[%s151 + $0x298] sm:$0xff]
        %v8274 = vld [vmem:[%s151 + $0x2a0] sm:$0xff]
        %v8275 = vld [vmem:[%s151 + $0x2a8] sm:$0xff]
        %v8276 = vld [vmem:[%s151 + $0x2b0] sm:$0xff]
        %v8277 = vld [vmem:[%s151 + $0x2b8] sm:$0xff]
        %v8278 = vld [vmem:[%s151 + $0x2c0] sm:$0xff]
        %v8279 = vld [vmem:[%s151 + $0x2c8] sm:$0xff]
        %v8280 = vld [vmem:[%s151 + $0x2d0] sm:$0xff]
        %v8281 = vld [vmem:[%s151 + $0x2d8] sm:$0xff]
        %v8282 = vld [vmem:[%s151 + $0x2e0] sm:$0xff]
        %v8283 = vld [vmem:[%s151 + $0x2e8] sm:$0xff]
        %v8284 = vld [vmem:[%s151 + $0x2f0] sm:$0xff]
        %v8285 = vld [vmem:[%s151 + $0x2f8] sm:$0xff]
        %v8286 = vld [vmem:[%s151 + $0x300] sm:$0xff]
        %v8287 = vld [vmem:[%s151 + $0x308] sm:$0xff]
        %v8288 = vld [vmem:[%s151 + $0x310] sm:$0xff]
        %v8289 = vld [vmem:[%s151 + $0x318] sm:$0xff]
        %v8290 = vld [vmem:[%s151 + $0x320] sm:$0xff]
        %v8291 = vld [vmem:[%s151 + $0x328] sm:$0xff]
        %v8292 = vld [vmem:[%s151 + $0x330] sm:$0xff]
        %v8293 = vld [vmem:[%s151 + $0x338] sm:$0xff]
        %v8294 = vld [vmem:[%s151 + $0x340] sm:$0xff]
        %v8295 = vld [vmem:[%s151 + $0x348] sm:$0xff]
        %v8296 = vld [vmem:[%s151 + $0x350] sm:$0xff]
        %v8297 = vld [vmem:[%s151 + $0x358] sm:$0xff]
        %v8298 = vld [vmem:[%s151 + $0x360] sm:$0xff]
        %v8299 = vld [vmem:[%s151 + $0x368] sm:$0xff]
        %v8300 = vld [vmem:[%s151 + $0x370] sm:$0xff]
        %v8301 = vld [vmem:[%s151 + $0x378] sm:$0xff]
        %v8302 = vadd.f32 %v8190, %v7912
        %v8303 = vadd.f32 %v8191, %v7914
        %v8304 = vadd.f32 %v8192, %v7916
        %v8305 = vadd.f32 %v8193, %v7918
        %v8306 = vadd.f32 %v8194, %v7922
        %v8307 = vadd.f32 %v8195, %v7924
        %v8308 = vadd.f32 %v8196, %v7926
        %v8309 = vadd.f32 %v8197, %v7928
        %v8310 = vadd.f32 %v8198, %v7932
        %v8311 = vadd.f32 %v8199, %v7934
        %v8312 = vadd.f32 %v8200, %v7936
        %v8313 = vadd.f32 %v8201, %v7938
        %v8314 = vadd.f32 %v8202, %v7942
        %v8315 = vadd.f32 %v8203, %v7944
        %v8316 = vadd.f32 %v8204, %v7946
        %v8317 = vadd.f32 %v8205, %v7948
        %v8318 = vadd.f32 %v8206, %v7952
        %v8319 = vadd.f32 %v8207, %v7954
        %v8320 = vadd.f32 %v8208, %v7956
        %v8321 = vadd.f32 %v8209, %v7958
        %v8322 = vadd.f32 %v8210, %v7962
        %v8323 = vadd.f32 %v8211, %v7964
        %v8324 = vadd.f32 %v8212, %v7966
        %v8325 = vadd.f32 %v8213, %v7968
        %v8326 = vadd.f32 %v8214, %v7972
        %v8327 = vadd.f32 %v8215, %v7974
        %v8328 = vadd.f32 %v8216, %v7976
        %v8329 = vadd.f32 %v8217, %v7978
        %v8330 = vadd.f32 %v8218, %v7982
        %v8331 = vadd.f32 %v8219, %v7984
        %v8332 = vadd.f32 %v8220, %v7986
        %v8333 = vadd.f32 %v8221, %v7988
        %v8334 = vadd.f32 %v8222, %v7992
        %v8335 = vadd.f32 %v8223, %v7994
        %v8336 = vadd.f32 %v8224, %v7996
        %v8337 = vadd.f32 %v8225, %v7998
        %v8338 = vadd.f32 %v8226, %v8002
        %v8339 = vadd.f32 %v8227, %v8004
        %v8340 = vadd.f32 %v8228, %v8006
        %v8341 = vadd.f32 %v8229, %v8008
        %v8342 = vadd.f32 %v8230, %v8012
        %v8343 = vadd.f32 %v8231, %v8014
        %v8344 = vadd.f32 %v8232, %v8016
        %v8345 = vadd.f32 %v8233, %v8018
        %v8346 = vadd.f32 %v8234, %v8022
        %v8347 = vadd.f32 %v8235, %v8024
        %v8348 = vadd.f32 %v8236, %v8026
        %v8349 = vadd.f32 %v8237, %v8028
        %v8350 = vadd.f32 %v8238, %v8032
        %v8351 = vadd.f32 %v8239, %v8034
        %v8352 = vadd.f32 %v8240, %v8036
        %v8353 = vadd.f32 %v8241, %v8038
        %v8354 = vadd.f32 %v8242, %v8042
        %v8355 = vadd.f32 %v8243, %v8044
        %v8356 = vadd.f32 %v8244, %v8046
        %v8357 = vadd.f32 %v8245, %v8048
        %v8358 = vadd.f32 %v8246, %v8052
        %v8359 = vadd.f32 %v8247, %v8054
        %v8360 = vadd.f32 %v8248, %v8056
        %v8361 = vadd.f32 %v8249, %v8058
        %v8362 = vadd.f32 %v8250, %v8062
        %v8363 = vadd.f32 %v8251, %v8064
        %v8364 = vadd.f32 %v8252, %v8066
        %v8365 = vadd.f32 %v8253, %v8068
        %v8366 = vadd.f32 %v8254, %v8072
        %v8367 = vadd.f32 %v8255, %v8074
        %v8368 = vadd.f32 %v8256, %v8076
        %v8369 = vadd.f32 %v8257, %v8078
        %v8370 = vadd.f32 %v8258, %v8082
        %v8371 = vadd.f32 %v8259, %v8084
        %v8372 = vadd.f32 %v8260, %v8086
        %v8373 = vadd.f32 %v8261, %v8088
        %v8374 = vadd.f32 %v8262, %v8092
        %v8375 = vadd.f32 %v8263, %v8094
        %v8376 = vadd.f32 %v8264, %v8096
        %v8377 = vadd.f32 %v8265, %v8098
        %v8378 = vadd.f32 %v8266, %v8102
        %v8379 = vadd.f32 %v8267, %v8104
        %v8380 = vadd.f32 %v8268, %v8106
        %v8381 = vadd.f32 %v8269, %v8108
        %v8382 = vadd.f32 %v8270, %v8112
        %v8383 = vadd.f32 %v8271, %v8114
        %v8384 = vadd.f32 %v8272, %v8116
        %v8385 = vadd.f32 %v8273, %v8118
        %v8386 = vadd.f32 %v8274, %v8122
        %v8387 = vadd.f32 %v8275, %v8124
        %v8388 = vadd.f32 %v8276, %v8126
        %v8389 = vadd.f32 %v8277, %v8128
        %v8390 = vadd.f32 %v8278, %v8132
        %v8391 = vadd.f32 %v8279, %v8134
        %v8392 = vadd.f32 %v8280, %v8136
        %v8393 = vadd.f32 %v8281, %v8138
        %v8394 = vadd.f32 %v8282, %v8142
        %v8395 = vadd.f32 %v8283, %v8144
        %v8396 = vadd.f32 %v8284, %v8146
        %v8397 = vadd.f32 %v8285, %v8148
        %v8398 = vadd.f32 %v8286, %v8152
        %v8399 = vadd.f32 %v8287, %v8154
        %v8400 = vadd.f32 %v8288, %v8156
        %v8401 = vadd.f32 %v8289, %v8158
        %v8402 = vadd.f32 %v8290, %v8162
        %v8403 = vadd.f32 %v8291, %v8164
        %v8404 = vadd.f32 %v8292, %v8166
        %v8405 = vadd.f32 %v8293, %v8168
        %v8406 = vadd.f32 %v8294, %v8172
        %v8407 = vadd.f32 %v8295, %v8174
        %v8408 = vadd.f32 %v8296, %v8176
        %v8409 = vadd.f32 %v8297, %v8178
        %v8410 = vadd.f32 %v8298, %v8182
        %v8411 = vadd.f32 %v8299, %v8184
        %v8412 = vadd.f32 %v8300, %v8186
        %v8413 = vadd.f32 %v8301, %v8188
        %8414 = vst [vmem:[%s151] sm:$0xff] %v8302
        %8415 = vst [vmem:[%s151 + $0x8] sm:$0xff] %v8303
        %8416 = vst [vmem:[%s151 + $0x10] sm:$0xff] %v8304
        %8417 = vst [vmem:[%s151 + $0x18] sm:$0xff] %v8305
        %8418 = vst [vmem:[%s151 + $0x20] sm:$0xff] %v8306
        %8419 = vst [vmem:[%s151 + $0x28] sm:$0xff] %v8307
        %8420 = vst [vmem:[%s151 + $0x30] sm:$0xff] %v8308
        %8421 = vst [vmem:[%s151 + $0x38] sm:$0xff] %v8309
        %8422 = vst [vmem:[%s151 + $0x40] sm:$0xff] %v8310
        %8423 = vst [vmem:[%s151 + $0x48] sm:$0xff] %v8311
        %8424 = vst [vmem:[%s151 + $0x50] sm:$0xff] %v8312
        %8425 = vst [vmem:[%s151 + $0x58] sm:$0xff] %v8313
        %8426 = vst [vmem:[%s151 + $0x60] sm:$0xff] %v8314
        %8427 = vst [vmem:[%s151 + $0x68] sm:$0xff] %v8315
        %8428 = vst [vmem:[%s151 + $0x70] sm:$0xff] %v8316
        %8429 = vst [vmem:[%s151 + $0x78] sm:$0xff] %v8317
        %8430 = vst [vmem:[%s151 + $0x80] sm:$0xff] %v8318
        %8431 = vst [vmem:[%s151 + $0x88] sm:$0xff] %v8319
        %8432 = vst [vmem:[%s151 + $0x90] sm:$0xff] %v8320
        %8433 = vst [vmem:[%s151 + $0x98] sm:$0xff] %v8321
        %8434 = vst [vmem:[%s151 + $0xa0] sm:$0xff] %v8322
        %8435 = vst [vmem:[%s151 + $0xa8] sm:$0xff] %v8323
        %8436 = vst [vmem:[%s151 + $0xb0] sm:$0xff] %v8324
        %8437 = vst [vmem:[%s151 + $0xb8] sm:$0xff] %v8325
        %8438 = vst [vmem:[%s151 + $0xc0] sm:$0xff] %v8326
        %8439 = vst [vmem:[%s151 + $0xc8] sm:$0xff] %v8327
        %8440 = vst [vmem:[%s151 + $0xd0] sm:$0xff] %v8328
        %8441 = vst [vmem:[%s151 + $0xd8] sm:$0xff] %v8329
        %8442 = vst [vmem:[%s151 + $0xe0] sm:$0xff] %v8330
        %8443 = vst [vmem:[%s151 + $0xe8] sm:$0xff] %v8331
        %8444 = vst [vmem:[%s151 + $0xf0] sm:$0xff] %v8332
        %8445 = vst [vmem:[%s151 + $0xf8] sm:$0xff] %v8333
        %8446 = vst [vmem:[%s151 + $0x100] sm:$0xff] %v8334
        %8447 = vst [vmem:[%s151 + $0x108] sm:$0xff] %v8335
        %8448 = vst [vmem:[%s151 + $0x110] sm:$0xff] %v8336
        %8449 = vst [vmem:[%s151 + $0x118] sm:$0xff] %v8337
        %8450 = vst [vmem:[%s151 + $0x120] sm:$0xff] %v8338
        %8451 = vst [vmem:[%s151 + $0x128] sm:$0xff] %v8339
        %8452 = vst [vmem:[%s151 + $0x130] sm:$0xff] %v8340
        %8453 = vst [vmem:[%s151 + $0x138] sm:$0xff] %v8341
        %8454 = vst [vmem:[%s151 + $0x140] sm:$0xff] %v8342
        %8455 = vst [vmem:[%s151 + $0x148] sm:$0xff] %v8343
        %8456 = vst [vmem:[%s151 + $0x150] sm:$0xff] %v8344
        %8457 = vst [vmem:[%s151 + $0x158] sm:$0xff] %v8345
        %8458 = vst [vmem:[%s151 + $0x160] sm:$0xff] %v8346
        %8459 = vst [vmem:[%s151 + $0x168] sm:$0xff] %v8347
        %8460 = vst [vmem:[%s151 + $0x170] sm:$0xff] %v8348
        %8461 = vst [vmem:[%s151 + $0x178] sm:$0xff] %v8349
        %8462 = vst [vmem:[%s151 + $0x180] sm:$0xff] %v8350
        %8463 = vst [vmem:[%s151 + $0x188] sm:$0xff] %v8351
        %8464 = vst [vmem:[%s151 + $0x190] sm:$0xff] %v8352
        %8465 = vst [vmem:[%s151 + $0x198] sm:$0xff] %v8353
        %8466 = vst [vmem:[%s151 + $0x1a0] sm:$0xff] %v8354
        %8467 = vst [vmem:[%s151 + $0x1a8] sm:$0xff] %v8355
        %8468 = vst [vmem:[%s151 + $0x1b0] sm:$0xff] %v8356
        %8469 = vst [vmem:[%s151 + $0x1b8] sm:$0xff] %v8357
        %8470 = vst [vmem:[%s151 + $0x1c0] sm:$0xff] %v8358
        %8471 = vst [vmem:[%s151 + $0x1c8] sm:$0xff] %v8359
        %8472 = vst [vmem:[%s151 + $0x1d0] sm:$0xff] %v8360
        %8473 = vst [vmem:[%s151 + $0x1d8] sm:$0xff] %v8361
        %8474 = vst [vmem:[%s151 + $0x1e0] sm:$0xff] %v8362
        %8475 = vst [vmem:[%s151 + $0x1e8] sm:$0xff] %v8363
        %8476 = vst [vmem:[%s151 + $0x1f0] sm:$0xff] %v8364
        %8477 = vst [vmem:[%s151 + $0x1f8] sm:$0xff] %v8365
        %8478 = vst [vmem:[%s151 + $0x200] sm:$0xff] %v8366
        %8479 = vst [vmem:[%s151 + $0x208] sm:$0xff] %v8367
        %8480 = vst [vmem:[%s151 + $0x210] sm:$0xff] %v8368
        %8481 = vst [vmem:[%s151 + $0x218] sm:$0xff] %v8369
        %8482 = vst [vmem:[%s151 + $0x220] sm:$0xff] %v8370
        %8483 = vst [vmem:[%s151 + $0x228] sm:$0xff] %v8371
        %8484 = vst [vmem:[%s151 + $0x230] sm:$0xff] %v8372
        %8485 = vst [vmem:[%s151 + $0x238] sm:$0xff] %v8373
        %8486 = vst [vmem:[%s151 + $0x240] sm:$0xff] %v8374
        %8487 = vst [vmem:[%s151 + $0x248] sm:$0xff] %v8375
        %8488 = vst [vmem:[%s151 + $0x250] sm:$0xff] %v8376
        %8489 = vst [vmem:[%s151 + $0x258] sm:$0xff] %v8377
        %8490 = vst [vmem:[%s151 + $0x260] sm:$0xff] %v8378
        %8491 = vst [vmem:[%s151 + $0x268] sm:$0xff] %v8379
        %8492 = vst [vmem:[%s151 + $0x270] sm:$0xff] %v8380
        %8493 = vst [vmem:[%s151 + $0x278] sm:$0xff] %v8381
        %8494 = vst [vmem:[%s151 + $0x280] sm:$0xff] %v8382
        %8495 = vst [vmem:[%s151 + $0x288] sm:$0xff] %v8383
        %8496 = vst [vmem:[%s151 + $0x290] sm:$0xff] %v8384
        %8497 = vst [vmem:[%s151 + $0x298] sm:$0xff] %v8385
        %8498 = vst [vmem:[%s151 + $0x2a0] sm:$0xff] %v8386
        %8499 = vst [vmem:[%s151 + $0x2a8] sm:$0xff] %v8387
        %8500 = vst [vmem:[%s151 + $0x2b0] sm:$0xff] %v8388
        %8501 = vst [vmem:[%s151 + $0x2b8] sm:$0xff] %v8389
        %8502 = vst [vmem:[%s151 + $0x2c0] sm:$0xff] %v8390
        %8503 = vst [vmem:[%s151 + $0x2c8] sm:$0xff] %v8391
        %8504 = vst [vmem:[%s151 + $0x2d0] sm:$0xff] %v8392
        %8505 = vst [vmem:[%s151 + $0x2d8] sm:$0xff] %v8393
        %8506 = vst [vmem:[%s151 + $0x2e0] sm:$0xff] %v8394
        %8507 = vst [vmem:[%s151 + $0x2e8] sm:$0xff] %v8395
        %8508 = vst [vmem:[%s151 + $0x2f0] sm:$0xff] %v8396
        %8509 = vst [vmem:[%s151 + $0x2f8] sm:$0xff] %v8397
        %8510 = vst [vmem:[%s151 + $0x300] sm:$0xff] %v8398
        %8511 = vst [vmem:[%s151 + $0x308] sm:$0xff] %v8399
        %8512 = vst [vmem:[%s151 + $0x310] sm:$0xff] %v8400
        %8513 = vst [vmem:[%s151 + $0x318] sm:$0xff] %v8401
        %8514 = vst [vmem:[%s151 + $0x320] sm:$0xff] %v8402
        %8515 = vst [vmem:[%s151 + $0x328] sm:$0xff] %v8403
        %8516 = vst [vmem:[%s151 + $0x330] sm:$0xff] %v8404
        %8517 = vst [vmem:[%s151 + $0x338] sm:$0xff] %v8405
        %8518 = vst [vmem:[%s151 + $0x340] sm:$0xff] %v8406
        %8519 = vst [vmem:[%s151 + $0x348] sm:$0xff] %v8407
        %8520 = vst [vmem:[%s151 + $0x350] sm:$0xff] %v8408
        %8521 = vst [vmem:[%s151 + $0x358] sm:$0xff] %v8409
        %8522 = vst [vmem:[%s151 + $0x360] sm:$0xff] %v8410
        %8523 = vst [vmem:[%s151 + $0x368] sm:$0xff] %v8411
        %8524 = vst [vmem:[%s151 + $0x370] sm:$0xff] %v8412
        %8525 = vst [vmem:[%s151 + $0x378] sm:$0xff] %v8413
        %s8526 = sand.u32 %s68, 1
        %s8527 = scalar_lea.sflag [#allocation4], %s8526
        %s8528 = sand.u32 %s68, 1
        %s8529 = smul.addr %s8528, 896
        %s8530 = scalar_lea.vmem [#allocation7], %s8529
        // Predicated region
        $region37: #{tpu_custom_call.1} parent=27 // pred_check
          %p8531 = pneg %p78
        $region38: #{tpu_custom_call.1} parent=27 // pred_check_branch
          %8533 = sbr.rel (%p8531) target = $region40
        $region39: #{tpu_custom_call.1} parent=27 // pred_region
          %s8534 = smul.u32 56, %s18
          %s8536 = ssub.s32 14336, 14336
          %8537 = vsyncadd %s8527, %s8536
          %s8538 = smul.addr %s8534, 2
          %s8539 = smul.addr %s8538, 128
          %s8540 = scalar_lea.hbm %s2, %s8539
          %s8541 = sshll.u32 %s8530, 4
          %s8542 = int_to_ptr.vmem [resolvable:$true] %s8541
          %8547 = dma.vmem_to_hbm [thread:$0]  %s8542, 14336, %s8540, %s8527, 256, 256, 16
        $region40: #{tpu_custom_call.1} parent=27 // pred_fallthru
          _
      $region28: #{tpu_custom_call.1} parent=5 // pred_fallthru
        _
      %p8548 = scmp.le.s32.totalorder 2, %s13
      // Predicated region
      $region41: #{tpu_custom_call.1} parent=5 // pred_check
        %p8549 = pneg %p8548
      $region42: #{tpu_custom_call.1} parent=5 // pred_check_branch
        %8551 = sbr.rel (%p8549) target = $region44
      $region43: #{tpu_custom_call.1} parent=5 // pred_region
        %s8552 = ssub.s32 %s13, 2
        // Predicated region
        $region45: #{tpu_custom_call.1} parent=43 // pred_check
          %p8553 = pneg %p84
        $region46: #{tpu_custom_call.1} parent=43 // pred_check_branch
          %8555 = sbr.rel (%p8553) target = $region48
        $region47: #{tpu_custom_call.1} parent=43 // pred_region
          %s8556 = sand.u32 %s69, 1
          %s8557 = scalar_lea.sflag [#allocation4], %s8556
          %s8558 = sand.u32 %s69, 1
          %s8559 = smul.addr %s8558, 896
          %s8560 = scalar_lea.vmem [#allocation7], %s8559
          %8561 = dma.done %s8557, 14336
        $region48: #{tpu_custom_call.1} parent=43 // pred_fallthru
          _
      $region44: #{tpu_custom_call.1} parent=5 // pred_fallthru
        _
    $region6: #{tpu_custom_call.1} parent=1 // loop_footer
      %s17 = sadd.s32 1, %s13
    $region7: #{tpu_custom_call.1} parent=1 // loop_footer_branch
      %12 = sbr.rel target = $region3
    $region8: #{tpu_custom_call.1} parent=1 // loop_exit
      _
    %8562 = vsyncpa [#allocation3], 1
    %s8563 = scalar_lea.sflag [#allocation3], 1
    %8564 = vsyncpa %s8563, 1
    %8565 = vsyncpa [#allocation6], 1
    %8566 = vsyncpa [#allocation4], 1
    %s8567 = scalar_lea.sflag [#allocation4], 1
    %8568 = vsyncpa %s8567, 1

</llo_original>
